<compile_context>
chip_gen: v5e
topology: v5e:2x2
jax: 0.10.0
libtpu: 0.0.40
codegen_flags: <defaults>
</compile_context>

<pallas_src>
import jax
import jax.numpy as jnp
from jax import lax
from jax.experimental import pallas as pl
from jax.experimental.pallas import tpu as pltpu

LN_EPS = 1e-6


# ----------------------------- in-kernel math helpers -----------------------------
def _gelu_tanh(x):
    # tanh-approximate GELU (max ~1e-3 abs error vs erf GELU); tanh lowers to the EUP slot so
    # it co-issues under the surrounding MXU/VPU work.  Intentional approximation.
    c = 0.7978845608028654  # sqrt(2/pi)
    return 0.5 * x * (1.0 + jnp.tanh(c * (x + 0.044715 * x * x * x)))


# ----------------------------- fused ConvNeXt block kernel -----------------------------
def _block_kernel(x_hbm, dw_ref, dwb_ref, w1_ref, b1_ref, w2_ref, b2_ref,
                  gamma_ref, o_ref, xrows, xpad, sem):
    """One (batch, H-tile) grid step.

    xrows: (TH+6, W, C)   DMA landing buffer holding the tile + halo rows (real columns only).
    xpad : (TH+6, W+6, C) zero-padded tile the 49 depthwise taps read from.
    """
    THp, Wp, C = xpad.shape
    TH, W = THp - 6, Wp - 6
    b = pl.program_id(0)
    ht = pl.program_id(1)
    nh = pl.num_programs(1)
    row0 = ht * TH

    # ---- HBM -> VMEM: tile body + up/down 3-row halos (only where they exist) ----
    body = pltpu.make_async_copy(x_hbm.at[b, pl.ds(row0, TH)],
                                 xrows.at[pl.ds(3, TH)], sem.at[0])
    body.start()

    @pl.when(ht > 0)
    def _():
        pltpu.make_async_copy(x_hbm.at[b, pl.ds(row0 - 3, 3)],
                              xrows.at[pl.ds(0, 3)], sem.at[1]).start()

    @pl.when(ht < nh - 1)
    def _():
        pltpu.make_async_copy(x_hbm.at[b, pl.ds(row0 + TH, 3)],
                              xrows.at[pl.ds(TH + 3, 3)], sem.at[2]).start()

    # ---- zero-fill padding the DMAs never write (disjoint regions, overlaps the copies) ----
    @pl.when(ht == 0)                                    # rows above the image
    def _():
        xrows[0:3, :, :] = jnp.zeros((3, W, C), jnp.float32)

    @pl.when(ht == nh - 1)                               # rows below the image
    def _():
        xrows[TH + 3:TH + 6, :, :] = jnp.zeros((3, W, C), jnp.float32)

    xpad[:, 0:3, :] = jnp.zeros((THp, 3, C), jnp.float32)           # left  W-pad
    xpad[:, W + 3:W + 6, :] = jnp.zeros((THp, 3, C), jnp.float32)   # right W-pad

    # ---- wait for the tile, then assemble the W-padded tile (8-row chunks) ----
    body.wait()

    @pl.when(ht > 0)
    def _():
        pltpu.make_async_copy(x_hbm.at[b, pl.ds(row0 - 3, 3)],
                              xrows.at[pl.ds(0, 3)], sem.at[1]).wait()

    @pl.when(ht < nh - 1)
    def _():
        pltpu.make_async_copy(x_hbm.at[b, pl.ds(row0 + TH, 3)],
                              xrows.at[pl.ds(TH + 3, 3)], sem.at[2]).wait()

    for r0 in range(0, THp, 8):
        rr = min(8, THp - r0)
        xpad[r0:r0 + rr, 3:3 + W, :] = xrows[r0:r0 + rr, :, :]

    # ---- per 8-row slab: dwconv -> LN -> pwconv1 -> GELU -> pwconv2 -> gamma -> residual ----
    s0 = 0
    while s0 < TH:
        rows = min(8, TH - s0)

        # depthwise 7x7: the (rows, W, C) partial sum stays in vregs across all 49 taps;
        # one aligned full-width load per (slab, ky), kx shifts are value slices of it.
        acc = jnp.zeros((rows, W, C), jnp.float32)
        for ky in range(7):
            xr = xpad[s0 + ky:s0 + ky + rows, :, :]       # (rows, W+6, C), aligned columns
            for kx in range(7):
                acc = acc + xr[:, kx:kx + W, :] * dw_ref[ky * 7 + kx, :]
        y = acc + dwb_ref[...]                            # + (1, C) bias

        # channels_last LayerNorm (affine folded into w1/b1) over C, tokens = (rows*W, C)
        t = y.reshape(rows * W, C)
        mu = jnp.mean(t, axis=-1, keepdims=True)
        xc = t - mu
        var = jnp.mean(xc * xc, axis=-1, keepdims=True)
        yn = xc * lax.rsqrt(var + LN_EPS)

        # pwconv1 -> tanh-GELU -> pwconv2 (bf16 MXU operands, f32 accumulate)
        h = jnp.dot(yn.astype(jnp.bfloat16), w1_ref[...],
                    preferred_element_type=jnp.float32) + b1_ref[...]
        h = _gelu_tanh(h)
        z = jnp.dot(h.astype(jnp.bfloat16), w2_ref[...],
                    preferred_element_type=jnp.float32) + b2_ref[...]

        # residual is the already-resident (aligned) center rows of the tile
        resid = xrows[s0 + 3:s0 + 3 + rows, :, :].reshape(rows * W, C)
        out = resid + gamma_ref[...] * z
        o_ref[s0:s0 + rows, :, :] = out.reshape(rows, W, C)
        s0 += rows


# ----------------------------- wrapper -----------------------------
def _pick_tile_h(H):
    """Prefer >=2 H-tiles (grid pipelining / both v7x TCs), 8-row-slab friendly sizes."""
    for th in (16, 8, 32):
        if H % th == 0 and H // th >= 2:
            return th
    for th in (16, 8, 32):
        if H % th == 0:
            return th
    return H


def _vmem_limit_bytes(TH, W, C):
    f32, bf16 = 4, 2
    xrows = (TH + 6) * W * C * f32
    xpad = (TH + 6) * (W + 6) * C * f32
    out_buf = 2 * TH * W * C * f32                            # double-buffered output block
    weights = 2 * ((49 * C + 7 * C) * f32 + 2 * (4 * C * C) * bf16)
    slab = 4 * (8 * W * 4 * C) * f32                          # f32 h / GELU temporaries + slack
    est = xrows + xpad + out_buf + weights + slab + (4 << 20)
    return int(min(max(est, 16 << 20), 48 << 20))


def convnext_block(x_nchw, p, *, tile_h=None):
    """ConvNeXt Block forward; NCHW in/out exactly like the PyTorch module."""
    x = jnp.transpose(x_nchw, (0, 2, 3, 1)).astype(jnp.float32)        # NHWC
    B, H, W, C = x.shape

    th = _pick_tile_h(H) if tile_h is None else tile_h
    assert H % th == 0, f"tile_h={th} must divide H={H}"
    nh = H // th

    # Fold the LayerNorm affine into pwconv1: (g*xhat + b) @ W1 + b1 == xhat @ (g*W1) + (b@W1 + b1)
    w1f = p['w1'].astype(jnp.float32)
    w1_fold = (p['ln_g'].reshape(-1, 1) * w1f).astype(jnp.bfloat16)
    b1_fold = (p['b1'] + p['ln_b'] @ w1f).astype(jnp.float32)
    dw49 = p['dw_w'].reshape(49, C).astype(jnp.float32)

    out = pl.pallas_call(
        _block_kernel,
        grid=(B, nh),
        in_specs=[
            pl.BlockSpec(memory_space=pl.ANY),                          # x (B,H,W,C) stays in HBM
            pl.BlockSpec((49, C), lambda b, h: (0, 0)),                 # dw taps (49, C)
            pl.BlockSpec((1, C), lambda b, h: (0, 0)),                  # dw bias
            pl.BlockSpec((C, 4 * C), lambda b, h: (0, 0)),              # w1 (LN-folded, bf16)
            pl.BlockSpec((1, 4 * C), lambda b, h: (0, 0)),              # b1 (LN-folded)
            pl.BlockSpec((4 * C, C), lambda b, h: (0, 0)),              # w2 (bf16)
            pl.BlockSpec((1, C), lambda b, h: (0, 0)),                  # b2
            pl.BlockSpec((1, C), lambda b, h: (0, 0)),                  # layer-scale gamma
        ],
        out_specs=pl.BlockSpec((None, th, W, C), lambda b, h: (b, h, 0, 0)),
        out_shape=jax.ShapeDtypeStruct((B, H, W, C), jnp.float32),
        scratch_shapes=[
            pltpu.VMEM((th + 6, W, C), jnp.float32),                    # DMA landing (real cols)
            pltpu.VMEM((th + 6, W + 6, C), jnp.float32),                # zero-padded tile
            pltpu.SemaphoreType.DMA((3,)),
        ],
        compiler_params=pltpu.CompilerParams(
            dimension_semantics=("parallel", "parallel"),
            vmem_limit_bytes=_vmem_limit_bytes(th, W, C)),
    )(x, dw49, p['dw_b'], w1_fold, b1_fold, p['w2'], p['b2'], p['gamma'])
    return jnp.transpose(out, (0, 3, 1, 2))


# ----------------------------- pure-JAX reference (exact GELU, f32) -----------------------------
def block_reference(x_nchw, p):
    x = jnp.transpose(x_nchw, (0, 2, 3, 1)).astype(jnp.float32)
    B, H, W, C = x.shape
    xpad = jnp.pad(x, ((0, 0), (3, 3), (3, 3), (0, 0)))
    dw = p['dw_w'].astype(jnp.float32)
    acc = jnp.zeros_like(x)
    for ky in range(7):
        for kx in range(7):
            acc = acc + xpad[:, ky:ky + H, kx:kx + W, :] * dw[ky, kx]
    y = acc + p['dw_b']
    mu = y.mean(-1, keepdims=True)
    var = ((y - mu) ** 2).mean(-1, keepdims=True)
    yn = (y - mu) / jnp.sqrt(var + LN_EPS) * p['ln_g'] + p['ln_b']
    h = yn @ p['w1'].astype(jnp.float32) + p['b1']
    h = 0.5 * h * (1.0 + lax.erf(h * 0.7071067811865476))               # exact GELU
    z = h @ p['w2'].astype(jnp.float32) + p['b2']
    out = x + p['gamma'] * z
    return jnp.transpose(out, (0, 3, 1, 2))


# ----------------------------- deterministic parameter init -----------------------------
def init_block_params(key, dim):
    ks = jax.random.split(key, 8)
    tn = lambda k, shape, std=0.02: (
        std * jax.random.truncated_normal(k, -2.0, 2.0, shape)).astype(jnp.float32)
    return {
        # torch Conv2d(dim, dim, 7, padding=3, groups=dim).weight is (dim,1,7,7) -> stored (7,7,dim)
        'dw_w': tn(ks[0], (7, 7, dim)),
        'dw_b': tn(ks[1], (1, dim)),
        # LayerNorm init is ones/zeros; "trained"-like values here so the w1/b1 folding is
        # actually exercised by the numerical check.
        'ln_g': (1.0 + 0.1 * jax.random.truncated_normal(ks[2], -2.0, 2.0, (1, dim))
                 ).astype(jnp.float32),
        'ln_b': tn(ks[3], (1, dim), std=0.05),
        # torch Linear(dim, 4*dim).weight is (4*dim, dim) -> stored transposed, bf16 for the MXU
        'w1': tn(ks[4], (dim, 4 * dim)).astype(jnp.bfloat16),
        'b1': tn(ks[5], (1, 4 * dim)),
        'w2': tn(ks[6], (4 * dim, dim)).astype(jnp.bfloat16),
        'b2': tn(ks[7], (1, dim)),
        # Module init is layer_scale_init_value*ones (1e-6); a non-trivial "trained" value is used
        # here so the numerical check exercises the scaled branch.
        'gamma': jnp.full((1, dim), 0.5, jnp.float32),
    }


# ----------------------------- main -----------------------------
if __name__ == "__main__":
    key = jax.random.PRNGKey(0)
    kx_, kp_ = jax.random.split(key)
    B, C, H, W = 2, 128, 16, 16                     # small, lane-dense (C == 128 lanes)
    x = jax.random.normal(kx_, (B, C, H, W), dtype=jnp.float32)
    params = init_block_params(kp_, C)

    fwd = jax.jit(convnext_block)
    out = jax.block_until_ready(fwd(x, params))

    ref = block_reference(x, params)
    assert out.shape == (B, C, H, W)
    assert bool(jnp.all(jnp.isfinite(out)))
    max_err = float(jnp.max(jnp.abs(out - ref)))
    assert max_err < 5e-2, f"max abs err {max_err}"
    print("KERNEL_OK")
</pallas_src>

<mosaic_0001>
module attributes {stable_mosaic.version = 11 : i64} {
  func.func @_block_kernel(%arg0: i32, %arg1: i32, %arg2: memref<2x16x16x128xf32, #tpu.memory_space<any>>, %arg3: memref<49x128xf32, #tpu.memory_space<vmem>>, %arg4: memref<1x128xf32, #tpu.memory_space<vmem>>, %arg5: memref<128x512xbf16, #tpu.memory_space<vmem>>, %arg6: memref<1x512xf32, #tpu.memory_space<vmem>>, %arg7: memref<512x128xbf16, #tpu.memory_space<vmem>>, %arg8: memref<1x128xf32, #tpu.memory_space<vmem>>, %arg9: memref<1x128xf32, #tpu.memory_space<vmem>>, %arg10: memref<1x8x16x128xf32, #tpu.memory_space<vmem>>, %arg11: memref<14x16x128xf32, #tpu.memory_space<vmem>>, %arg12: memref<14x22x128xf32, #tpu.memory_space<vmem>>, %arg13: memref<3x!tpu.dma_semaphore, #tpu.memory_space<semaphore_mem>>) attributes {dimension_semantics = [#tpu.dimension_semantics<parallel>, #tpu.dimension_semantics<parallel>], iteration_bounds = array<i64: 2, 2>, scalar_prefetch = 0 : i64, scratch_operands = 3 : i64, tpu.core_type = #tpu.core_type<tc>, window_params = [{}, {pipeline_mode = #tpu.pipeline_mode<synchronous>, transform_indices = @transform_1, window_bounds = array<i64: 49, 128>}, {pipeline_mode = #tpu.pipeline_mode<synchronous>, transform_indices = @transform_2, window_bounds = array<i64: 1, 128>}, {pipeline_mode = #tpu.pipeline_mode<synchronous>, transform_indices = @transform_3, window_bounds = array<i64: 128, 512>}, {pipeline_mode = #tpu.pipeline_mode<synchronous>, transform_indices = @transform_4, window_bounds = array<i64: 1, 512>}, {pipeline_mode = #tpu.pipeline_mode<synchronous>, transform_indices = @transform_5, window_bounds = array<i64: 512, 128>}, {pipeline_mode = #tpu.pipeline_mode<synchronous>, transform_indices = @transform_6, window_bounds = array<i64: 1, 128>}, {pipeline_mode = #tpu.pipeline_mode<synchronous>, transform_indices = @transform_7, window_bounds = array<i64: 1, 128>}, {transform_indices = @transform_8, window_bounds = array<i64: 1, 8, 16, 128>}]} {
    %c8_i32 = arith.constant 8 : i32
    %0 = arith.muli %arg1, %c8_i32 : i32
    %c0_i32 = arith.constant 0 : i32
    %c0_i32_0 = arith.constant 0 : i32
    %c0_i32_1 = arith.constant 0 : i32
    %1 = tpu.memref_slice %arg2[%arg0, %0, %c0_i32_0, %c0_i32_1] : memref<2x16x16x128xf32, #tpu.memory_space<any>> -> memref<1x8x16x128xf32, #tpu.memory_space<any>>
    %2 = tpu.memref_squeeze %1 : memref<1x8x16x128xf32, #tpu.memory_space<any>> -> memref<8x16x128xf32, #tpu.memory_space<any>>
    %c3_i32 = arith.constant 3 : i32
    %c0_i32_2 = arith.constant 0 : i32
    %c0_i32_3 = arith.constant 0 : i32
    %3 = tpu.memref_slice %arg11[%c3_i32, %c0_i32_2, %c0_i32_3] : memref<14x16x128xf32, #tpu.memory_space<vmem>> -> memref<8x16x128xf32, #tpu.memory_space<vmem>>
    %4 = tpu.memref_slice %arg13[%c0_i32] : memref<3x!tpu.dma_semaphore, #tpu.memory_space<semaphore_mem>> -> memref<1x!tpu.dma_semaphore, #tpu.memory_space<semaphore_mem>>
    %5 = tpu.memref_squeeze %4 : memref<1x!tpu.dma_semaphore, #tpu.memory_space<semaphore_mem>> -> memref<!tpu.dma_semaphore, #tpu.memory_space<semaphore_mem>>
    tpu.enqueue_dma source(%2 : memref<8x16x128xf32, #tpu.memory_space<any>>) target(%3 : memref<8x16x128xf32, #tpu.memory_space<vmem>>) target_semaphore(%5 : memref<!tpu.dma_semaphore, #tpu.memory_space<semaphore_mem>>)
    %c0_i32_4 = arith.constant 0 : i32
    %6 = arith.cmpi sgt, %arg1, %c0_i32_4 : i32
    %7 = arith.extui %6 : i1 to i32
    %c0_i32_5 = arith.constant 0 : i32
    %8 = arith.cmpi ne, %7, %c0_i32_5 : i32
    scf.if %8 {
      %c3_i32_141 = arith.constant 3 : i32
      %444 = arith.subi %0, %c3_i32_141 : i32
      %c1_i32_142 = arith.constant 1 : i32
      %c0_i32_143 = arith.constant 0 : i32
      %c0_i32_144 = arith.constant 0 : i32
      %445 = tpu.memref_slice %arg2[%arg0, %444, %c0_i32_143, %c0_i32_144] : memref<2x16x16x128xf32, #tpu.memory_space<any>> -> memref<1x3x16x128xf32, #tpu.memory_space<any>>
      %446 = tpu.memref_squeeze %445 : memref<1x3x16x128xf32, #tpu.memory_space<any>> -> memref<3x16x128xf32, #tpu.memory_space<any>>
      %c0_i32_145 = arith.constant 0 : i32
      %c0_i32_146 = arith.constant 0 : i32
      %c0_i32_147 = arith.constant 0 : i32
      %447 = tpu.memref_slice %arg11[%c0_i32_145, %c0_i32_146, %c0_i32_147] : memref<14x16x128xf32, #tpu.memory_space<vmem>> -> memref<3x16x128xf32, #tpu.memory_space<vmem>>
      %448 = tpu.memref_slice %arg13[%c1_i32_142] : memref<3x!tpu.dma_semaphore, #tpu.memory_space<semaphore_mem>> -> memref<1x!tpu.dma_semaphore, #tpu.memory_space<semaphore_mem>>
      %449 = tpu.memref_squeeze %448 : memref<1x!tpu.dma_semaphore, #tpu.memory_space<semaphore_mem>> -> memref<!tpu.dma_semaphore, #tpu.memory_space<semaphore_mem>>
      tpu.enqueue_dma source(%446 : memref<3x16x128xf32, #tpu.memory_space<any>>) target(%447 : memref<3x16x128xf32, #tpu.memory_space<vmem>>) target_semaphore(%449 : memref<!tpu.dma_semaphore, #tpu.memory_space<semaphore_mem>>)
    } else {
    }
    %c1_i32 = arith.constant 1 : i32
    %9 = arith.cmpi slt, %arg1, %c1_i32 : i32
    %10 = arith.extui %9 : i1 to i32
    %c0_i32_6 = arith.constant 0 : i32
    %11 = arith.cmpi ne, %10, %c0_i32_6 : i32
    scf.if %11 {
      %c8_i32_141 = arith.constant 8 : i32
      %444 = arith.addi %0, %c8_i32_141 : i32
      %c2_i32 = arith.constant 2 : i32
      %c0_i32_142 = arith.constant 0 : i32
      %c0_i32_143 = arith.constant 0 : i32
      %445 = tpu.memref_slice %arg2[%arg0, %444, %c0_i32_142, %c0_i32_143] : memref<2x16x16x128xf32, #tpu.memory_space<any>> -> memref<1x3x16x128xf32, #tpu.memory_space<any>>
      %446 = tpu.memref_squeeze %445 : memref<1x3x16x128xf32, #tpu.memory_space<any>> -> memref<3x16x128xf32, #tpu.memory_space<any>>
      %c11_i32 = arith.constant 11 : i32
      %c0_i32_144 = arith.constant 0 : i32
      %c0_i32_145 = arith.constant 0 : i32
      %447 = tpu.memref_slice %arg11[%c11_i32, %c0_i32_144, %c0_i32_145] : memref<14x16x128xf32, #tpu.memory_space<vmem>> -> memref<3x16x128xf32, #tpu.memory_space<vmem>>
      %448 = tpu.memref_slice %arg13[%c2_i32] : memref<3x!tpu.dma_semaphore, #tpu.memory_space<semaphore_mem>> -> memref<1x!tpu.dma_semaphore, #tpu.memory_space<semaphore_mem>>
      %449 = tpu.memref_squeeze %448 : memref<1x!tpu.dma_semaphore, #tpu.memory_space<semaphore_mem>> -> memref<!tpu.dma_semaphore, #tpu.memory_space<semaphore_mem>>
      tpu.enqueue_dma source(%446 : memref<3x16x128xf32, #tpu.memory_space<any>>) target(%447 : memref<3x16x128xf32, #tpu.memory_space<vmem>>) target_semaphore(%449 : memref<!tpu.dma_semaphore, #tpu.memory_space<semaphore_mem>>)
    } else {
    }
    %c0_i32_7 = arith.constant 0 : i32
    %12 = arith.cmpi eq, %arg1, %c0_i32_7 : i32
    %13 = arith.extui %12 : i1 to i32
    %c0_i32_8 = arith.constant 0 : i32
    %14 = arith.cmpi ne, %13, %c0_i32_8 : i32
    scf.if %14 {
      %cst_141 = arith.constant 0.000000e+00 : f32
      %444 = vector.broadcast %cst_141 : f32 to vector<3x16x128xf32>
      %c0_142 = arith.constant 0 : index
      %c0_143 = arith.constant 0 : index
      %c0_144 = arith.constant 0 : index
      %445 = vector.load %arg11[%c0_142, %c0_143, %c0_144] : memref<14x16x128xf32, #tpu.memory_space<vmem>>, vector<3x16x128xf32>
      tpu.vector_store %arg11[%c0_142, %c0_143, %c0_144], %444 {strides = array<i32>} : memref<14x16x128xf32, #tpu.memory_space<vmem>>, vector<3x16x128xf32>,
    } else {
    }
    %c1_i32_9 = arith.constant 1 : i32
    %15 = arith.cmpi eq, %arg1, %c1_i32_9 : i32
    %16 = arith.extui %15 : i1 to i32
    %c0_i32_10 = arith.constant 0 : i32
    %17 = arith.cmpi ne, %16, %c0_i32_10 : i32
    scf.if %17 {
      %cst_141 = arith.constant 0.000000e+00 : f32
      %444 = vector.broadcast %cst_141 : f32 to vector<3x16x128xf32>
      %c11_142 = arith.constant 11 : index
      %c0_143 = arith.constant 0 : index
      %c0_144 = arith.constant 0 : index
      %445 = vector.load %arg11[%c11_142, %c0_143, %c0_144] : memref<14x16x128xf32, #tpu.memory_space<vmem>>, vector<3x16x128xf32>
      tpu.vector_store %arg11[%c11_142, %c0_143, %c0_144], %444 {strides = array<i32>} : memref<14x16x128xf32, #tpu.memory_space<vmem>>, vector<3x16x128xf32>,
    } else {
    }
    %cst = arith.constant 0.000000e+00 : f32
    %18 = vector.broadcast %cst : f32 to vector<14x3x128xf32>
    %c0 = arith.constant 0 : index
    %c0_11 = arith.constant 0 : index
    %c0_12 = arith.constant 0 : index
    %19 = vector.load %arg12[%c0, %c0_11, %c0_12] : memref<14x22x128xf32, #tpu.memory_space<vmem>>, vector<14x3x128xf32>
    tpu.vector_store %arg12[%c0, %c0_11, %c0_12], %18 {strides = array<i32>} : memref<14x22x128xf32, #tpu.memory_space<vmem>>, vector<14x3x128xf32>,
    %cst_13 = arith.constant 0.000000e+00 : f32
    %20 = vector.broadcast %cst_13 : f32 to vector<14x3x128xf32>
    %c0_14 = arith.constant 0 : index
    %c19 = arith.constant 19 : index
    %c0_15 = arith.constant 0 : index
    %21 = vector.load %arg12[%c0_14, %c19, %c0_15] : memref<14x22x128xf32, #tpu.memory_space<vmem>>, vector<14x3x128xf32>
    tpu.vector_store %arg12[%c0_14, %c19, %c0_15], %20 {strides = array<i32>} : memref<14x22x128xf32, #tpu.memory_space<vmem>>, vector<14x3x128xf32>,
    %c0_i32_16 = arith.constant 0 : i32
    %c0_i32_17 = arith.constant 0 : i32
    %c0_i32_18 = arith.constant 0 : i32
    %22 = tpu.memref_slice %arg2[%arg0, %0, %c0_i32_17, %c0_i32_18] : memref<2x16x16x128xf32, #tpu.memory_space<any>> -> memref<1x8x16x128xf32, #tpu.memory_space<any>>
    %23 = tpu.memref_squeeze %22 : memref<1x8x16x128xf32, #tpu.memory_space<any>> -> memref<8x16x128xf32, #tpu.memory_space<any>>
    %c3_i32_19 = arith.constant 3 : i32
    %c0_i32_20 = arith.constant 0 : i32
    %c0_i32_21 = arith.constant 0 : i32
    %24 = tpu.memref_slice %arg11[%c3_i32_19, %c0_i32_20, %c0_i32_21] : memref<14x16x128xf32, #tpu.memory_space<vmem>> -> memref<8x16x128xf32, #tpu.memory_space<vmem>>
    %25 = tpu.memref_slice %arg13[%c0_i32_16] : memref<3x!tpu.dma_semaphore, #tpu.memory_space<semaphore_mem>> -> memref<1x!tpu.dma_semaphore, #tpu.memory_space<semaphore_mem>>
    %26 = tpu.memref_squeeze %25 : memref<1x!tpu.dma_semaphore, #tpu.memory_space<semaphore_mem>> -> memref<!tpu.dma_semaphore, #tpu.memory_space<semaphore_mem>>
    tpu.wait_dma2 semaphore(%26 : memref<!tpu.dma_semaphore, #tpu.memory_space<semaphore_mem>>) src(%23 : memref<8x16x128xf32, #tpu.memory_space<any>>) dst(%24 : memref<8x16x128xf32, #tpu.memory_space<vmem>>)
    %c0_i32_22 = arith.constant 0 : i32
    %27 = arith.cmpi sgt, %arg1, %c0_i32_22 : i32
    %28 = arith.extui %27 : i1 to i32
    %c0_i32_23 = arith.constant 0 : i32
    %29 = arith.cmpi ne, %28, %c0_i32_23 : i32
    scf.if %29 {
      %c3_i32_141 = arith.constant 3 : i32
      %444 = arith.subi %0, %c3_i32_141 : i32
      %c1_i32_142 = arith.constant 1 : i32
      %c0_i32_143 = arith.constant 0 : i32
      %c0_i32_144 = arith.constant 0 : i32
      %445 = tpu.memref_slice %arg2[%arg0, %444, %c0_i32_143, %c0_i32_144] : memref<2x16x16x128xf32, #tpu.memory_space<any>> -> memref<1x3x16x128xf32, #tpu.memory_space<any>>
      %446 = tpu.memref_squeeze %445 : memref<1x3x16x128xf32, #tpu.memory_space<any>> -> memref<3x16x128xf32, #tpu.memory_space<any>>
      %c0_i32_145 = arith.constant 0 : i32
      %c0_i32_146 = arith.constant 0 : i32
      %c0_i32_147 = arith.constant 0 : i32
      %447 = tpu.memref_slice %arg11[%c0_i32_145, %c0_i32_146, %c0_i32_147] : memref<14x16x128xf32, #tpu.memory_space<vmem>> -> memref<3x16x128xf32, #tpu.memory_space<vmem>>
      %448 = tpu.memref_slice %arg13[%c1_i32_142] : memref<3x!tpu.dma_semaphore, #tpu.memory_space<semaphore_mem>> -> memref<1x!tpu.dma_semaphore, #tpu.memory_space<semaphore_mem>>
      %449 = tpu.memref_squeeze %448 : memref<1x!tpu.dma_semaphore, #tpu.memory_space<semaphore_mem>> -> memref<!tpu.dma_semaphore, #tpu.memory_space<semaphore_mem>>
      tpu.wait_dma2 semaphore(%449 : memref<!tpu.dma_semaphore, #tpu.memory_space<semaphore_mem>>) src(%446 : memref<3x16x128xf32, #tpu.memory_space<any>>) dst(%447 : memref<3x16x128xf32, #tpu.memory_space<vmem>>)
    } else {
    }
    %c1_i32_24 = arith.constant 1 : i32
    %30 = arith.cmpi slt, %arg1, %c1_i32_24 : i32
    %31 = arith.extui %30 : i1 to i32
    %c0_i32_25 = arith.constant 0 : i32
    %32 = arith.cmpi ne, %31, %c0_i32_25 : i32
    scf.if %32 {
      %c8_i32_141 = arith.constant 8 : i32
      %444 = arith.addi %0, %c8_i32_141 : i32
      %c2_i32 = arith.constant 2 : i32
      %c0_i32_142 = arith.constant 0 : i32
      %c0_i32_143 = arith.constant 0 : i32
      %445 = tpu.memref_slice %arg2[%arg0, %444, %c0_i32_142, %c0_i32_143] : memref<2x16x16x128xf32, #tpu.memory_space<any>> -> memref<1x3x16x128xf32, #tpu.memory_space<any>>
      %446 = tpu.memref_squeeze %445 : memref<1x3x16x128xf32, #tpu.memory_space<any>> -> memref<3x16x128xf32, #tpu.memory_space<any>>
      %c11_i32 = arith.constant 11 : i32
      %c0_i32_144 = arith.constant 0 : i32
      %c0_i32_145 = arith.constant 0 : i32
      %447 = tpu.memref_slice %arg11[%c11_i32, %c0_i32_144, %c0_i32_145] : memref<14x16x128xf32, #tpu.memory_space<vmem>> -> memref<3x16x128xf32, #tpu.memory_space<vmem>>
      %448 = tpu.memref_slice %arg13[%c2_i32] : memref<3x!tpu.dma_semaphore, #tpu.memory_space<semaphore_mem>> -> memref<1x!tpu.dma_semaphore, #tpu.memory_space<semaphore_mem>>
      %449 = tpu.memref_squeeze %448 : memref<1x!tpu.dma_semaphore, #tpu.memory_space<semaphore_mem>> -> memref<!tpu.dma_semaphore, #tpu.memory_space<semaphore_mem>>
      tpu.wait_dma2 semaphore(%449 : memref<!tpu.dma_semaphore, #tpu.memory_space<semaphore_mem>>) src(%446 : memref<3x16x128xf32, #tpu.memory_space<any>>) dst(%447 : memref<3x16x128xf32, #tpu.memory_space<vmem>>)
    } else {
    }
    %c0_26 = arith.constant 0 : index
    %c0_27 = arith.constant 0 : index
    %c0_28 = arith.constant 0 : index
    %33 = vector.load %arg11[%c0_26, %c0_27, %c0_28] : memref<14x16x128xf32, #tpu.memory_space<vmem>>, vector<8x16x128xf32>
    %c0_29 = arith.constant 0 : index
    %c3 = arith.constant 3 : index
    %c0_30 = arith.constant 0 : index
    %34 = vector.load %arg12[%c0_29, %c3, %c0_30] : memref<14x22x128xf32, #tpu.memory_space<vmem>>, vector<8x16x128xf32>
    tpu.vector_store %arg12[%c0_29, %c3, %c0_30], %33 {strides = array<i32>} : memref<14x22x128xf32, #tpu.memory_space<vmem>>, vector<8x16x128xf32>,
    %c8 = arith.constant 8 : index
    %c0_31 = arith.constant 0 : index
    %c0_32 = arith.constant 0 : index
    %35 = vector.load %arg11[%c8, %c0_31, %c0_32] : memref<14x16x128xf32, #tpu.memory_space<vmem>>, vector<6x16x128xf32>
    %c8_33 = arith.constant 8 : index
    %c3_34 = arith.constant 3 : index
    %c0_35 = arith.constant 0 : index
    %36 = vector.load %arg12[%c8_33, %c3_34, %c0_35] : memref<14x22x128xf32, #tpu.memory_space<vmem>>, vector<6x16x128xf32>
    tpu.vector_store %arg12[%c8_33, %c3_34, %c0_35], %35 {strides = array<i32>} : memref<14x22x128xf32, #tpu.memory_space<vmem>>, vector<6x16x128xf32>,
    %cst_36 = arith.constant 0.000000e+00 : f32
    %37 = vector.broadcast %cst_36 : f32 to vector<8x16x128xf32>
    %c0_37 = arith.constant 0 : index
    %c0_38 = arith.constant 0 : index
    %c0_39 = arith.constant 0 : index
    %38 = vector.load %arg12[%c0_37, %c0_38, %c0_39] : memref<14x22x128xf32, #tpu.memory_space<vmem>>, vector<8x22x128xf32>
    %39 = vector.extract_strided_slice %38 {offsets = [0, 0, 0], sizes = [8, 16, 128], strides = [1, 1, 1]} : vector<8x22x128xf32> to vector<8x16x128xf32>
    %c0_40 = arith.constant 0 : index
    %c0_41 = arith.constant 0 : index
    %40 = vector.load %arg3[%c0_40, %c0_41] : memref<49x128xf32, #tpu.memory_space<vmem>>, vector<1x128xf32>
    %41 = vector.shape_cast %40 : vector<1x128xf32> to vector<128xf32>
    %42 = vector.shape_cast %41 : vector<128xf32> to vector<1x1x128xf32>
    %43 = vector.broadcast %42 : vector<1x1x128xf32> to vector<8x16x128xf32>
    %44 = arith.mulf %39, %43 : vector<8x16x128xf32>
    %45 = arith.addf %37, %44 : vector<8x16x128xf32>
    %46 = vector.extract_strided_slice %38 {offsets = [0, 1, 0], sizes = [8, 16, 128], strides = [1, 1, 1]} : vector<8x22x128xf32> to vector<8x16x128xf32>
    %c1 = arith.constant 1 : index
    %c0_42 = arith.constant 0 : index
    %47 = vector.load %arg3[%c1, %c0_42] : memref<49x128xf32, #tpu.memory_space<vmem>>, vector<1x128xf32>
    %48 = vector.shape_cast %47 : vector<1x128xf32> to vector<128xf32>
    %49 = vector.shape_cast %48 : vector<128xf32> to vector<1x1x128xf32>
    %50 = vector.broadcast %49 : vector<1x1x128xf32> to vector<8x16x128xf32>
    %51 = arith.mulf %46, %50 : vector<8x16x128xf32>
    %52 = arith.addf %45, %51 : vector<8x16x128xf32>
    %53 = vector.extract_strided_slice %38 {offsets = [0, 2, 0], sizes = [8, 16, 128], strides = [1, 1, 1]} : vector<8x22x128xf32> to vector<8x16x128xf32>
    %c2 = arith.constant 2 : index
    %c0_43 = arith.constant 0 : index
    %54 = vector.load %arg3[%c2, %c0_43] : memref<49x128xf32, #tpu.memory_space<vmem>>, vector<1x128xf32>
    %55 = vector.shape_cast %54 : vector<1x128xf32> to vector<128xf32>
    %56 = vector.shape_cast %55 : vector<128xf32> to vector<1x1x128xf32>
    %57 = vector.broadcast %56 : vector<1x1x128xf32> to vector<8x16x128xf32>
    %58 = arith.mulf %53, %57 : vector<8x16x128xf32>
    %59 = arith.addf %52, %58 : vector<8x16x128xf32>
    %60 = vector.extract_strided_slice %38 {offsets = [0, 3, 0], sizes = [8, 16, 128], strides = [1, 1, 1]} : vector<8x22x128xf32> to vector<8x16x128xf32>
    %c3_44 = arith.constant 3 : index
    %c0_45 = arith.constant 0 : index
    %61 = vector.load %arg3[%c3_44, %c0_45] : memref<49x128xf32, #tpu.memory_space<vmem>>, vector<1x128xf32>
    %62 = vector.shape_cast %61 : vector<1x128xf32> to vector<128xf32>
    %63 = vector.shape_cast %62 : vector<128xf32> to vector<1x1x128xf32>
    %64 = vector.broadcast %63 : vector<1x1x128xf32> to vector<8x16x128xf32>
    %65 = arith.mulf %60, %64 : vector<8x16x128xf32>
    %66 = arith.addf %59, %65 : vector<8x16x128xf32>
    %67 = vector.extract_strided_slice %38 {offsets = [0, 4, 0], sizes = [8, 16, 128], strides = [1, 1, 1]} : vector<8x22x128xf32> to vector<8x16x128xf32>
    %c4 = arith.constant 4 : index
    %c0_46 = arith.constant 0 : index
    %68 = vector.load %arg3[%c4, %c0_46] : memref<49x128xf32, #tpu.memory_space<vmem>>, vector<1x128xf32>
    %69 = vector.shape_cast %68 : vector<1x128xf32> to vector<128xf32>
    %70 = vector.shape_cast %69 : vector<128xf32> to vector<1x1x128xf32>
    %71 = vector.broadcast %70 : vector<1x1x128xf32> to vector<8x16x128xf32>
    %72 = arith.mulf %67, %71 : vector<8x16x128xf32>
    %73 = arith.addf %66, %72 : vector<8x16x128xf32>
    %74 = vector.extract_strided_slice %38 {offsets = [0, 5, 0], sizes = [8, 16, 128], strides = [1, 1, 1]} : vector<8x22x128xf32> to vector<8x16x128xf32>
    %c5 = arith.constant 5 : index
    %c0_47 = arith.constant 0 : index
    %75 = vector.load %arg3[%c5, %c0_47] : memref<49x128xf32, #tpu.memory_space<vmem>>, vector<1x128xf32>
    %76 = vector.shape_cast %75 : vector<1x128xf32> to vector<128xf32>
    %77 = vector.shape_cast %76 : vector<128xf32> to vector<1x1x128xf32>
    %78 = vector.broadcast %77 : vector<1x1x128xf32> to vector<8x16x128xf32>
    %79 = arith.mulf %74, %78 : vector<8x16x128xf32>
    %80 = arith.addf %73, %79 : vector<8x16x128xf32>
    %81 = vector.extract_strided_slice %38 {offsets = [0, 6, 0], sizes = [8, 16, 128], strides = [1, 1, 1]} : vector<8x22x128xf32> to vector<8x16x128xf32>
    %c6 = arith.constant 6 : index
    %c0_48 = arith.constant 0 : index
    %82 = vector.load %arg3[%c6, %c0_48] : memref<49x128xf32, #tpu.memory_space<vmem>>, vector<1x128xf32>
    %83 = vector.shape_cast %82 : vector<1x128xf32> to vector<128xf32>
    %84 = vector.shape_cast %83 : vector<128xf32> to vector<1x1x128xf32>
    %85 = vector.broadcast %84 : vector<1x1x128xf32> to vector<8x16x128xf32>
    %86 = arith.mulf %81, %85 : vector<8x16x128xf32>
    %87 = arith.addf %80, %86 : vector<8x16x128xf32>
    %c1_49 = arith.constant 1 : index
    %c0_50 = arith.constant 0 : index
    %c0_51 = arith.constant 0 : index
    %88 = vector.load %arg12[%c1_49, %c0_50, %c0_51] : memref<14x22x128xf32, #tpu.memory_space<vmem>>, vector<8x22x128xf32>
    %89 = vector.extract_strided_slice %88 {offsets = [0, 0, 0], sizes = [8, 16, 128], strides = [1, 1, 1]} : vector<8x22x128xf32> to vector<8x16x128xf32>
    %c7 = arith.constant 7 : index
    %c0_52 = arith.constant 0 : index
    %90 = vector.load %arg3[%c7, %c0_52] : memref<49x128xf32, #tpu.memory_space<vmem>>, vector<1x128xf32>
    %91 = vector.shape_cast %90 : vector<1x128xf32> to vector<128xf32>
    %92 = vector.shape_cast %91 : vector<128xf32> to vector<1x1x128xf32>
    %93 = vector.broadcast %92 : vector<1x1x128xf32> to vector<8x16x128xf32>
    %94 = arith.mulf %89, %93 : vector<8x16x128xf32>
    %95 = arith.addf %87, %94 : vector<8x16x128xf32>
    %96 = vector.extract_strided_slice %88 {offsets = [0, 1, 0], sizes = [8, 16, 128], strides = [1, 1, 1]} : vector<8x22x128xf32> to vector<8x16x128xf32>
    %c8_53 = arith.constant 8 : index
    %c0_54 = arith.constant 0 : index
    %97 = vector.load %arg3[%c8_53, %c0_54] : memref<49x128xf32, #tpu.memory_space<vmem>>, vector<1x128xf32>
    %98 = vector.shape_cast %97 : vector<1x128xf32> to vector<128xf32>
    %99 = vector.shape_cast %98 : vector<128xf32> to vector<1x1x128xf32>
    %100 = vector.broadcast %99 : vector<1x1x128xf32> to vector<8x16x128xf32>
    %101 = arith.mulf %96, %100 : vector<8x16x128xf32>
    %102 = arith.addf %95, %101 : vector<8x16x128xf32>
    %103 = vector.extract_strided_slice %88 {offsets = [0, 2, 0], sizes = [8, 16, 128], strides = [1, 1, 1]} : vector<8x22x128xf32> to vector<8x16x128xf32>
    %c9 = arith.constant 9 : index
    %c0_55 = arith.constant 0 : index
    %104 = vector.load %arg3[%c9, %c0_55] : memref<49x128xf32, #tpu.memory_space<vmem>>, vector<1x128xf32>
    %105 = vector.shape_cast %104 : vector<1x128xf32> to vector<128xf32>
    %106 = vector.shape_cast %105 : vector<128xf32> to vector<1x1x128xf32>
    %107 = vector.broadcast %106 : vector<1x1x128xf32> to vector<8x16x128xf32>
    %108 = arith.mulf %103, %107 : vector<8x16x128xf32>
    %109 = arith.addf %102, %108 : vector<8x16x128xf32>
    %110 = vector.extract_strided_slice %88 {offsets = [0, 3, 0], sizes = [8, 16, 128], strides = [1, 1, 1]} : vector<8x22x128xf32> to vector<8x16x128xf32>
    %c10 = arith.constant 10 : index
    %c0_56 = arith.constant 0 : index
    %111 = vector.load %arg3[%c10, %c0_56] : memref<49x128xf32, #tpu.memory_space<vmem>>, vector<1x128xf32>
    %112 = vector.shape_cast %111 : vector<1x128xf32> to vector<128xf32>
    %113 = vector.shape_cast %112 : vector<128xf32> to vector<1x1x128xf32>
    %114 = vector.broadcast %113 : vector<1x1x128xf32> to vector<8x16x128xf32>
    %115 = arith.mulf %110, %114 : vector<8x16x128xf32>
    %116 = arith.addf %109, %115 : vector<8x16x128xf32>
    %117 = vector.extract_strided_slice %88 {offsets = [0, 4, 0], sizes = [8, 16, 128], strides = [1, 1, 1]} : vector<8x22x128xf32> to vector<8x16x128xf32>
    %c11 = arith.constant 11 : index
    %c0_57 = arith.constant 0 : index
    %118 = vector.load %arg3[%c11, %c0_57] : memref<49x128xf32, #tpu.memory_space<vmem>>, vector<1x128xf32>
    %119 = vector.shape_cast %118 : vector<1x128xf32> to vector<128xf32>
    %120 = vector.shape_cast %119 : vector<128xf32> to vector<1x1x128xf32>
    %121 = vector.broadcast %120 : vector<1x1x128xf32> to vector<8x16x128xf32>
    %122 = arith.mulf %117, %121 : vector<8x16x128xf32>
    %123 = arith.addf %116, %122 : vector<8x16x128xf32>
    %124 = vector.extract_strided_slice %88 {offsets = [0, 5, 0], sizes = [8, 16, 128], strides = [1, 1, 1]} : vector<8x22x128xf32> to vector<8x16x128xf32>
    %c12 = arith.constant 12 : index
    %c0_58 = arith.constant 0 : index
    %125 = vector.load %arg3[%c12, %c0_58] : memref<49x128xf32, #tpu.memory_space<vmem>>, vector<1x128xf32>
    %126 = vector.shape_cast %125 : vector<1x128xf32> to vector<128xf32>
    %127 = vector.shape_cast %126 : vector<128xf32> to vector<1x1x128xf32>
    %128 = vector.broadcast %127 : vector<1x1x128xf32> to vector<8x16x128xf32>
    %129 = arith.mulf %124, %128 : vector<8x16x128xf32>
    %130 = arith.addf %123, %129 : vector<8x16x128xf32>
    %131 = vector.extract_strided_slice %88 {offsets = [0, 6, 0], sizes = [8, 16, 128], strides = [1, 1, 1]} : vector<8x22x128xf32> to vector<8x16x128xf32>
    %c13 = arith.constant 13 : index
    %c0_59 = arith.constant 0 : index
    %132 = vector.load %arg3[%c13, %c0_59] : memref<49x128xf32, #tpu.memory_space<vmem>>, vector<1x128xf32>
    %133 = vector.shape_cast %132 : vector<1x128xf32> to vector<128xf32>
    %134 = vector.shape_cast %133 : vector<128xf32> to vector<1x1x128xf32>
    %135 = vector.broadcast %134 : vector<1x1x128xf32> to vector<8x16x128xf32>
    %136 = arith.mulf %131, %135 : vector<8x16x128xf32>
    %137 = arith.addf %130, %136 : vector<8x16x128xf32>
    %c2_60 = arith.constant 2 : index
    %c0_61 = arith.constant 0 : index
    %c0_62 = arith.constant 0 : index
    %138 = vector.load %arg12[%c2_60, %c0_61, %c0_62] : memref<14x22x128xf32, #tpu.memory_space<vmem>>, vector<8x22x128xf32>
    %139 = vector.extract_strided_slice %138 {offsets = [0, 0, 0], sizes = [8, 16, 128], strides = [1, 1, 1]} : vector<8x22x128xf32> to vector<8x16x128xf32>
    %c14 = arith.constant 14 : index
    %c0_63 = arith.constant 0 : index
    %140 = vector.load %arg3[%c14, %c0_63] : memref<49x128xf32, #tpu.memory_space<vmem>>, vector<1x128xf32>
    %141 = vector.shape_cast %140 : vector<1x128xf32> to vector<128xf32>
    %142 = vector.shape_cast %141 : vector<128xf32> to vector<1x1x128xf32>
    %143 = vector.broadcast %142 : vector<1x1x128xf32> to vector<8x16x128xf32>
    %144 = arith.mulf %139, %143 : vector<8x16x128xf32>
    %145 = arith.addf %137, %144 : vector<8x16x128xf32>
    %146 = vector.extract_strided_slice %138 {offsets = [0, 1, 0], sizes = [8, 16, 128], strides = [1, 1, 1]} : vector<8x22x128xf32> to vector<8x16x128xf32>
    %c15 = arith.constant 15 : index
    %c0_64 = arith.constant 0 : index
    %147 = vector.load %arg3[%c15, %c0_64] : memref<49x128xf32, #tpu.memory_space<vmem>>, vector<1x128xf32>
    %148 = vector.shape_cast %147 : vector<1x128xf32> to vector<128xf32>
    %149 = vector.shape_cast %148 : vector<128xf32> to vector<1x1x128xf32>
    %150 = vector.broadcast %149 : vector<1x1x128xf32> to vector<8x16x128xf32>
    %151 = arith.mulf %146, %150 : vector<8x16x128xf32>
    %152 = arith.addf %145, %151 : vector<8x16x128xf32>
    %153 = vector.extract_strided_slice %138 {offsets = [0, 2, 0], sizes = [8, 16, 128], strides = [1, 1, 1]} : vector<8x22x128xf32> to vector<8x16x128xf32>
    %c16 = arith.constant 16 : index
    %c0_65 = arith.constant 0 : index
    %154 = vector.load %arg3[%c16, %c0_65] : memref<49x128xf32, #tpu.memory_space<vmem>>, vector<1x128xf32>
    %155 = vector.shape_cast %154 : vector<1x128xf32> to vector<128xf32>
    %156 = vector.shape_cast %155 : vector<128xf32> to vector<1x1x128xf32>
    %157 = vector.broadcast %156 : vector<1x1x128xf32> to vector<8x16x128xf32>
    %158 = arith.mulf %153, %157 : vector<8x16x128xf32>
    %159 = arith.addf %152, %158 : vector<8x16x128xf32>
    %160 = vector.extract_strided_slice %138 {offsets = [0, 3, 0], sizes = [8, 16, 128], strides = [1, 1, 1]} : vector<8x22x128xf32> to vector<8x16x128xf32>
    %c17 = arith.constant 17 : index
    %c0_66 = arith.constant 0 : index
    %161 = vector.load %arg3[%c17, %c0_66] : memref<49x128xf32, #tpu.memory_space<vmem>>, vector<1x128xf32>
    %162 = vector.shape_cast %161 : vector<1x128xf32> to vector<128xf32>
    %163 = vector.shape_cast %162 : vector<128xf32> to vector<1x1x128xf32>
    %164 = vector.broadcast %163 : vector<1x1x128xf32> to vector<8x16x128xf32>
    %165 = arith.mulf %160, %164 : vector<8x16x128xf32>
    %166 = arith.addf %159, %165 : vector<8x16x128xf32>
    %167 = vector.extract_strided_slice %138 {offsets = [0, 4, 0], sizes = [8, 16, 128], strides = [1, 1, 1]} : vector<8x22x128xf32> to vector<8x16x128xf32>
    %c18 = arith.constant 18 : index
    %c0_67 = arith.constant 0 : index
    %168 = vector.load %arg3[%c18, %c0_67] : memref<49x128xf32, #tpu.memory_space<vmem>>, vector<1x128xf32>
    %169 = vector.shape_cast %168 : vector<1x128xf32> to vector<128xf32>
    %170 = vector.shape_cast %169 : vector<128xf32> to vector<1x1x128xf32>
    %171 = vector.broadcast %170 : vector<1x1x128xf32> to vector<8x16x128xf32>
    %172 = arith.mulf %167, %171 : vector<8x16x128xf32>
    %173 = arith.addf %166, %172 : vector<8x16x128xf32>
    %174 = vector.extract_strided_slice %138 {offsets = [0, 5, 0], sizes = [8, 16, 128], strides = [1, 1, 1]} : vector<8x22x128xf32> to vector<8x16x128xf32>
    %c19_68 = arith.constant 19 : index
    %c0_69 = arith.constant 0 : index
    %175 = vector.load %arg3[%c19_68, %c0_69] : memref<49x128xf32, #tpu.memory_space<vmem>>, vector<1x128xf32>
    %176 = vector.shape_cast %175 : vector<1x128xf32> to vector<128xf32>
    %177 = vector.shape_cast %176 : vector<128xf32> to vector<1x1x128xf32>
    %178 = vector.broadcast %177 : vector<1x1x128xf32> to vector<8x16x128xf32>
    %179 = arith.mulf %174, %178 : vector<8x16x128xf32>
    %180 = arith.addf %173, %179 : vector<8x16x128xf32>
    %181 = vector.extract_strided_slice %138 {offsets = [0, 6, 0], sizes = [8, 16, 128], strides = [1, 1, 1]} : vector<8x22x128xf32> to vector<8x16x128xf32>
    %c20 = arith.constant 20 : index
    %c0_70 = arith.constant 0 : index
    %182 = vector.load %arg3[%c20, %c0_70] : memref<49x128xf32, #tpu.memory_space<vmem>>, vector<1x128xf32>
    %183 = vector.shape_cast %182 : vector<1x128xf32> to vector<128xf32>
    %184 = vector.shape_cast %183 : vector<128xf32> to vector<1x1x128xf32>
    %185 = vector.broadcast %184 : vector<1x1x128xf32> to vector<8x16x128xf32>
    %186 = arith.mulf %181, %185 : vector<8x16x128xf32>
    %187 = arith.addf %180, %186 : vector<8x16x128xf32>
    %c3_71 = arith.constant 3 : index
    %c0_72 = arith.constant 0 : index
    %c0_73 = arith.constant 0 : index
    %188 = vector.load %arg12[%c3_71, %c0_72, %c0_73] : memref<14x22x128xf32, #tpu.memory_space<vmem>>, vector<8x22x128xf32>
    %189 = vector.extract_strided_slice %188 {offsets = [0, 0, 0], sizes = [8, 16, 128], strides = [1, 1, 1]} : vector<8x22x128xf32> to vector<8x16x128xf32>
    %c21 = arith.constant 21 : index
    %c0_74 = arith.constant 0 : index
    %190 = vector.load %arg3[%c21, %c0_74] : memref<49x128xf32, #tpu.memory_space<vmem>>, vector<1x128xf32>
    %191 = vector.shape_cast %190 : vector<1x128xf32> to vector<128xf32>
    %192 = vector.shape_cast %191 : vector<128xf32> to vector<1x1x128xf32>
    %193 = vector.broadcast %192 : vector<1x1x128xf32> to vector<8x16x128xf32>
    %194 = arith.mulf %189, %193 : vector<8x16x128xf32>
    %195 = arith.addf %187, %194 : vector<8x16x128xf32>
    %196 = vector.extract_strided_slice %188 {offsets = [0, 1, 0], sizes = [8, 16, 128], strides = [1, 1, 1]} : vector<8x22x128xf32> to vector<8x16x128xf32>
    %c22 = arith.constant 22 : index
    %c0_75 = arith.constant 0 : index
    %197 = vector.load %arg3[%c22, %c0_75] : memref<49x128xf32, #tpu.memory_space<vmem>>, vector<1x128xf32>
    %198 = vector.shape_cast %197 : vector<1x128xf32> to vector<128xf32>
    %199 = vector.shape_cast %198 : vector<128xf32> to vector<1x1x128xf32>
    %200 = vector.broadcast %199 : vector<1x1x128xf32> to vector<8x16x128xf32>
    %201 = arith.mulf %196, %200 : vector<8x16x128xf32>
    %202 = arith.addf %195, %201 : vector<8x16x128xf32>
    %203 = vector.extract_strided_slice %188 {offsets = [0, 2, 0], sizes = [8, 16, 128], strides = [1, 1, 1]} : vector<8x22x128xf32> to vector<8x16x128xf32>
    %c23 = arith.constant 23 : index
    %c0_76 = arith.constant 0 : index
    %204 = vector.load %arg3[%c23, %c0_76] : memref<49x128xf32, #tpu.memory_space<vmem>>, vector<1x128xf32>
    %205 = vector.shape_cast %204 : vector<1x128xf32> to vector<128xf32>
    %206 = vector.shape_cast %205 : vector<128xf32> to vector<1x1x128xf32>
    %207 = vector.broadcast %206 : vector<1x1x128xf32> to vector<8x16x128xf32>
    %208 = arith.mulf %203, %207 : vector<8x16x128xf32>
    %209 = arith.addf %202, %208 : vector<8x16x128xf32>
    %210 = vector.extract_strided_slice %188 {offsets = [0, 3, 0], sizes = [8, 16, 128], strides = [1, 1, 1]} : vector<8x22x128xf32> to vector<8x16x128xf32>
    %c24 = arith.constant 24 : index
    %c0_77 = arith.constant 0 : index
    %211 = vector.load %arg3[%c24, %c0_77] : memref<49x128xf32, #tpu.memory_space<vmem>>, vector<1x128xf32>
    %212 = vector.shape_cast %211 : vector<1x128xf32> to vector<128xf32>
    %213 = vector.shape_cast %212 : vector<128xf32> to vector<1x1x128xf32>
    %214 = vector.broadcast %213 : vector<1x1x128xf32> to vector<8x16x128xf32>
    %215 = arith.mulf %210, %214 : vector<8x16x128xf32>
    %216 = arith.addf %209, %215 : vector<8x16x128xf32>
    %217 = vector.extract_strided_slice %188 {offsets = [0, 4, 0], sizes = [8, 16, 128], strides = [1, 1, 1]} : vector<8x22x128xf32> to vector<8x16x128xf32>
    %c25 = arith.constant 25 : index
    %c0_78 = arith.constant 0 : index
    %218 = vector.load %arg3[%c25, %c0_78] : memref<49x128xf32, #tpu.memory_space<vmem>>, vector<1x128xf32>
    %219 = vector.shape_cast %218 : vector<1x128xf32> to vector<128xf32>
    %220 = vector.shape_cast %219 : vector<128xf32> to vector<1x1x128xf32>
    %221 = vector.broadcast %220 : vector<1x1x128xf32> to vector<8x16x128xf32>
    %222 = arith.mulf %217, %221 : vector<8x16x128xf32>
    %223 = arith.addf %216, %222 : vector<8x16x128xf32>
    %224 = vector.extract_strided_slice %188 {offsets = [0, 5, 0], sizes = [8, 16, 128], strides = [1, 1, 1]} : vector<8x22x128xf32> to vector<8x16x128xf32>
    %c26 = arith.constant 26 : index
    %c0_79 = arith.constant 0 : index
    %225 = vector.load %arg3[%c26, %c0_79] : memref<49x128xf32, #tpu.memory_space<vmem>>, vector<1x128xf32>
    %226 = vector.shape_cast %225 : vector<1x128xf32> to vector<128xf32>
    %227 = vector.shape_cast %226 : vector<128xf32> to vector<1x1x128xf32>
    %228 = vector.broadcast %227 : vector<1x1x128xf32> to vector<8x16x128xf32>
    %229 = arith.mulf %224, %228 : vector<8x16x128xf32>
    %230 = arith.addf %223, %229 : vector<8x16x128xf32>
    %231 = vector.extract_strided_slice %188 {offsets = [0, 6, 0], sizes = [8, 16, 128], strides = [1, 1, 1]} : vector<8x22x128xf32> to vector<8x16x128xf32>
    %c27 = arith.constant 27 : index
    %c0_80 = arith.constant 0 : index
    %232 = vector.load %arg3[%c27, %c0_80] : memref<49x128xf32, #tpu.memory_space<vmem>>, vector<1x128xf32>
    %233 = vector.shape_cast %232 : vector<1x128xf32> to vector<128xf32>
    %234 = vector.shape_cast %233 : vector<128xf32> to vector<1x1x128xf32>
    %235 = vector.broadcast %234 : vector<1x1x128xf32> to vector<8x16x128xf32>
    %236 = arith.mulf %231, %235 : vector<8x16x128xf32>
    %237 = arith.addf %230, %236 : vector<8x16x128xf32>
    %c4_81 = arith.constant 4 : index
    %c0_82 = arith.constant 0 : index
    %c0_83 = arith.constant 0 : index
    %238 = vector.load %arg12[%c4_81, %c0_82, %c0_83] : memref<14x22x128xf32, #tpu.memory_space<vmem>>, vector<8x22x128xf32>
    %239 = vector.extract_strided_slice %238 {offsets = [0, 0, 0], sizes = [8, 16, 128], strides = [1, 1, 1]} : vector<8x22x128xf32> to vector<8x16x128xf32>
    %c28 = arith.constant 28 : index
    %c0_84 = arith.constant 0 : index
    %240 = vector.load %arg3[%c28, %c0_84] : memref<49x128xf32, #tpu.memory_space<vmem>>, vector<1x128xf32>
    %241 = vector.shape_cast %240 : vector<1x128xf32> to vector<128xf32>
    %242 = vector.shape_cast %241 : vector<128xf32> to vector<1x1x128xf32>
    %243 = vector.broadcast %242 : vector<1x1x128xf32> to vector<8x16x128xf32>
    %244 = arith.mulf %239, %243 : vector<8x16x128xf32>
    %245 = arith.addf %237, %244 : vector<8x16x128xf32>
    %246 = vector.extract_strided_slice %238 {offsets = [0, 1, 0], sizes = [8, 16, 128], strides = [1, 1, 1]} : vector<8x22x128xf32> to vector<8x16x128xf32>
    %c29 = arith.constant 29 : index
    %c0_85 = arith.constant 0 : index
    %247 = vector.load %arg3[%c29, %c0_85] : memref<49x128xf32, #tpu.memory_space<vmem>>, vector<1x128xf32>
    %248 = vector.shape_cast %247 : vector<1x128xf32> to vector<128xf32>
    %249 = vector.shape_cast %248 : vector<128xf32> to vector<1x1x128xf32>
    %250 = vector.broadcast %249 : vector<1x1x128xf32> to vector<8x16x128xf32>
    %251 = arith.mulf %246, %250 : vector<8x16x128xf32>
    %252 = arith.addf %245, %251 : vector<8x16x128xf32>
    %253 = vector.extract_strided_slice %238 {offsets = [0, 2, 0], sizes = [8, 16, 128], strides = [1, 1, 1]} : vector<8x22x128xf32> to vector<8x16x128xf32>
    %c30 = arith.constant 30 : index
    %c0_86 = arith.constant 0 : index
    %254 = vector.load %arg3[%c30, %c0_86] : memref<49x128xf32, #tpu.memory_space<vmem>>, vector<1x128xf32>
    %255 = vector.shape_cast %254 : vector<1x128xf32> to vector<128xf32>
    %256 = vector.shape_cast %255 : vector<128xf32> to vector<1x1x128xf32>
    %257 = vector.broadcast %256 : vector<1x1x128xf32> to vector<8x16x128xf32>
    %258 = arith.mulf %253, %257 : vector<8x16x128xf32>
    %259 = arith.addf %252, %258 : vector<8x16x128xf32>
    %260 = vector.extract_strided_slice %238 {offsets = [0, 3, 0], sizes = [8, 16, 128], strides = [1, 1, 1]} : vector<8x22x128xf32> to vector<8x16x128xf32>
    %c31 = arith.constant 31 : index
    %c0_87 = arith.constant 0 : index
    %261 = vector.load %arg3[%c31, %c0_87] : memref<49x128xf32, #tpu.memory_space<vmem>>, vector<1x128xf32>
    %262 = vector.shape_cast %261 : vector<1x128xf32> to vector<128xf32>
    %263 = vector.shape_cast %262 : vector<128xf32> to vector<1x1x128xf32>
    %264 = vector.broadcast %263 : vector<1x1x128xf32> to vector<8x16x128xf32>
    %265 = arith.mulf %260, %264 : vector<8x16x128xf32>
    %266 = arith.addf %259, %265 : vector<8x16x128xf32>
    %267 = vector.extract_strided_slice %238 {offsets = [0, 4, 0], sizes = [8, 16, 128], strides = [1, 1, 1]} : vector<8x22x128xf32> to vector<8x16x128xf32>
    %c32 = arith.constant 32 : index
    %c0_88 = arith.constant 0 : index
    %268 = vector.load %arg3[%c32, %c0_88] : memref<49x128xf32, #tpu.memory_space<vmem>>, vector<1x128xf32>
    %269 = vector.shape_cast %268 : vector<1x128xf32> to vector<128xf32>
    %270 = vector.shape_cast %269 : vector<128xf32> to vector<1x1x128xf32>
    %271 = vector.broadcast %270 : vector<1x1x128xf32> to vector<8x16x128xf32>
    %272 = arith.mulf %267, %271 : vector<8x16x128xf32>
    %273 = arith.addf %266, %272 : vector<8x16x128xf32>
    %274 = vector.extract_strided_slice %238 {offsets = [0, 5, 0], sizes = [8, 16, 128], strides = [1, 1, 1]} : vector<8x22x128xf32> to vector<8x16x128xf32>
    %c33 = arith.constant 33 : index
    %c0_89 = arith.constant 0 : index
    %275 = vector.load %arg3[%c33, %c0_89] : memref<49x128xf32, #tpu.memory_space<vmem>>, vector<1x128xf32>
    %276 = vector.shape_cast %275 : vector<1x128xf32> to vector<128xf32>
    %277 = vector.shape_cast %276 : vector<128xf32> to vector<1x1x128xf32>
    %278 = vector.broadcast %277 : vector<1x1x128xf32> to vector<8x16x128xf32>
    %279 = arith.mulf %274, %278 : vector<8x16x128xf32>
    %280 = arith.addf %273, %279 : vector<8x16x128xf32>
    %281 = vector.extract_strided_slice %238 {offsets = [0, 6, 0], sizes = [8, 16, 128], strides = [1, 1, 1]} : vector<8x22x128xf32> to vector<8x16x128xf32>
    %c34 = arith.constant 34 : index
    %c0_90 = arith.constant 0 : index
    %282 = vector.load %arg3[%c34, %c0_90] : memref<49x128xf32, #tpu.memory_space<vmem>>, vector<1x128xf32>
    %283 = vector.shape_cast %282 : vector<1x128xf32> to vector<128xf32>
    %284 = vector.shape_cast %283 : vector<128xf32> to vector<1x1x128xf32>
    %285 = vector.broadcast %284 : vector<1x1x128xf32> to vector<8x16x128xf32>
    %286 = arith.mulf %281, %285 : vector<8x16x128xf32>
    %287 = arith.addf %280, %286 : vector<8x16x128xf32>
    %c5_91 = arith.constant 5 : index
    %c0_92 = arith.constant 0 : index
    %c0_93 = arith.constant 0 : index
    %288 = vector.load %arg12[%c5_91, %c0_92, %c0_93] : memref<14x22x128xf32, #tpu.memory_space<vmem>>, vector<8x22x128xf32>
    %289 = vector.extract_strided_slice %288 {offsets = [0, 0, 0], sizes = [8, 16, 128], strides = [1, 1, 1]} : vector<8x22x128xf32> to vector<8x16x128xf32>
    %c35 = arith.constant 35 : index
    %c0_94 = arith.constant 0 : index
    %290 = vector.load %arg3[%c35, %c0_94] : memref<49x128xf32, #tpu.memory_space<vmem>>, vector<1x128xf32>
    %291 = vector.shape_cast %290 : vector<1x128xf32> to vector<128xf32>
    %292 = vector.shape_cast %291 : vector<128xf32> to vector<1x1x128xf32>
    %293 = vector.broadcast %292 : vector<1x1x128xf32> to vector<8x16x128xf32>
    %294 = arith.mulf %289, %293 : vector<8x16x128xf32>
    %295 = arith.addf %287, %294 : vector<8x16x128xf32>
    %296 = vector.extract_strided_slice %288 {offsets = [0, 1, 0], sizes = [8, 16, 128], strides = [1, 1, 1]} : vector<8x22x128xf32> to vector<8x16x128xf32>
    %c36 = arith.constant 36 : index
    %c0_95 = arith.constant 0 : index
    %297 = vector.load %arg3[%c36, %c0_95] : memref<49x128xf32, #tpu.memory_space<vmem>>, vector<1x128xf32>
    %298 = vector.shape_cast %297 : vector<1x128xf32> to vector<128xf32>
    %299 = vector.shape_cast %298 : vector<128xf32> to vector<1x1x128xf32>
    %300 = vector.broadcast %299 : vector<1x1x128xf32> to vector<8x16x128xf32>
    %301 = arith.mulf %296, %300 : vector<8x16x128xf32>
    %302 = arith.addf %295, %301 : vector<8x16x128xf32>
    %303 = vector.extract_strided_slice %288 {offsets = [0, 2, 0], sizes = [8, 16, 128], strides = [1, 1, 1]} : vector<8x22x128xf32> to vector<8x16x128xf32>
    %c37 = arith.constant 37 : index
    %c0_96 = arith.constant 0 : index
    %304 = vector.load %arg3[%c37, %c0_96] : memref<49x128xf32, #tpu.memory_space<vmem>>, vector<1x128xf32>
    %305 = vector.shape_cast %304 : vector<1x128xf32> to vector<128xf32>
    %306 = vector.shape_cast %305 : vector<128xf32> to vector<1x1x128xf32>
    %307 = vector.broadcast %306 : vector<1x1x128xf32> to vector<8x16x128xf32>
    %308 = arith.mulf %303, %307 : vector<8x16x128xf32>
    %309 = arith.addf %302, %308 : vector<8x16x128xf32>
    %310 = vector.extract_strided_slice %288 {offsets = [0, 3, 0], sizes = [8, 16, 128], strides = [1, 1, 1]} : vector<8x22x128xf32> to vector<8x16x128xf32>
    %c38 = arith.constant 38 : index
    %c0_97 = arith.constant 0 : index
    %311 = vector.load %arg3[%c38, %c0_97] : memref<49x128xf32, #tpu.memory_space<vmem>>, vector<1x128xf32>
    %312 = vector.shape_cast %311 : vector<1x128xf32> to vector<128xf32>
    %313 = vector.shape_cast %312 : vector<128xf32> to vector<1x1x128xf32>
    %314 = vector.broadcast %313 : vector<1x1x128xf32> to vector<8x16x128xf32>
    %315 = arith.mulf %310, %314 : vector<8x16x128xf32>
    %316 = arith.addf %309, %315 : vector<8x16x128xf32>
    %317 = vector.extract_strided_slice %288 {offsets = [0, 4, 0], sizes = [8, 16, 128], strides = [1, 1, 1]} : vector<8x22x128xf32> to vector<8x16x128xf32>
    %c39 = arith.constant 39 : index
    %c0_98 = arith.constant 0 : index
    %318 = vector.load %arg3[%c39, %c0_98] : memref<49x128xf32, #tpu.memory_space<vmem>>, vector<1x128xf32>
    %319 = vector.shape_cast %318 : vector<1x128xf32> to vector<128xf32>
    %320 = vector.shape_cast %319 : vector<128xf32> to vector<1x1x128xf32>
    %321 = vector.broadcast %320 : vector<1x1x128xf32> to vector<8x16x128xf32>
    %322 = arith.mulf %317, %321 : vector<8x16x128xf32>
    %323 = arith.addf %316, %322 : vector<8x16x128xf32>
    %324 = vector.extract_strided_slice %288 {offsets = [0, 5, 0], sizes = [8, 16, 128], strides = [1, 1, 1]} : vector<8x22x128xf32> to vector<8x16x128xf32>
    %c40 = arith.constant 40 : index
    %c0_99 = arith.constant 0 : index
    %325 = vector.load %arg3[%c40, %c0_99] : memref<49x128xf32, #tpu.memory_space<vmem>>, vector<1x128xf32>
    %326 = vector.shape_cast %325 : vector<1x128xf32> to vector<128xf32>
    %327 = vector.shape_cast %326 : vector<128xf32> to vector<1x1x128xf32>
    %328 = vector.broadcast %327 : vector<1x1x128xf32> to vector<8x16x128xf32>
    %329 = arith.mulf %324, %328 : vector<8x16x128xf32>
    %330 = arith.addf %323, %329 : vector<8x16x128xf32>
    %331 = vector.extract_strided_slice %288 {offsets = [0, 6, 0], sizes = [8, 16, 128], strides = [1, 1, 1]} : vector<8x22x128xf32> to vector<8x16x128xf32>
    %c41 = arith.constant 41 : index
    %c0_100 = arith.constant 0 : index
    %332 = vector.load %arg3[%c41, %c0_100] : memref<49x128xf32, #tpu.memory_space<vmem>>, vector<1x128xf32>
    %333 = vector.shape_cast %332 : vector<1x128xf32> to vector<128xf32>
    %334 = vector.shape_cast %333 : vector<128xf32> to vector<1x1x128xf32>
    %335 = vector.broadcast %334 : vector<1x1x128xf32> to vector<8x16x128xf32>
    %336 = arith.mulf %331, %335 : vector<8x16x128xf32>
    %337 = arith.addf %330, %336 : vector<8x16x128xf32>
    %c6_101 = arith.constant 6 : index
    %c0_102 = arith.constant 0 : index
    %c0_103 = arith.constant 0 : index
    %338 = vector.load %arg12[%c6_101, %c0_102, %c0_103] : memref<14x22x128xf32, #tpu.memory_space<vmem>>, vector<8x22x128xf32>
    %339 = vector.extract_strided_slice %338 {offsets = [0, 0, 0], sizes = [8, 16, 128], strides = [1, 1, 1]} : vector<8x22x128xf32> to vector<8x16x128xf32>
    %c42 = arith.constant 42 : index
    %c0_104 = arith.constant 0 : index
    %340 = vector.load %arg3[%c42, %c0_104] : memref<49x128xf32, #tpu.memory_space<vmem>>, vector<1x128xf32>
    %341 = vector.shape_cast %340 : vector<1x128xf32> to vector<128xf32>
    %342 = vector.shape_cast %341 : vector<128xf32> to vector<1x1x128xf32>
    %343 = vector.broadcast %342 : vector<1x1x128xf32> to vector<8x16x128xf32>
    %344 = arith.mulf %339, %343 : vector<8x16x128xf32>
    %345 = arith.addf %337, %344 : vector<8x16x128xf32>
    %346 = vector.extract_strided_slice %338 {offsets = [0, 1, 0], sizes = [8, 16, 128], strides = [1, 1, 1]} : vector<8x22x128xf32> to vector<8x16x128xf32>
    %c43 = arith.constant 43 : index
    %c0_105 = arith.constant 0 : index
    %347 = vector.load %arg3[%c43, %c0_105] : memref<49x128xf32, #tpu.memory_space<vmem>>, vector<1x128xf32>
    %348 = vector.shape_cast %347 : vector<1x128xf32> to vector<128xf32>
    %349 = vector.shape_cast %348 : vector<128xf32> to vector<1x1x128xf32>
    %350 = vector.broadcast %349 : vector<1x1x128xf32> to vector<8x16x128xf32>
    %351 = arith.mulf %346, %350 : vector<8x16x128xf32>
    %352 = arith.addf %345, %351 : vector<8x16x128xf32>
    %353 = vector.extract_strided_slice %338 {offsets = [0, 2, 0], sizes = [8, 16, 128], strides = [1, 1, 1]} : vector<8x22x128xf32> to vector<8x16x128xf32>
    %c44 = arith.constant 44 : index
    %c0_106 = arith.constant 0 : index
    %354 = vector.load %arg3[%c44, %c0_106] : memref<49x128xf32, #tpu.memory_space<vmem>>, vector<1x128xf32>
    %355 = vector.shape_cast %354 : vector<1x128xf32> to vector<128xf32>
    %356 = vector.shape_cast %355 : vector<128xf32> to vector<1x1x128xf32>
    %357 = vector.broadcast %356 : vector<1x1x128xf32> to vector<8x16x128xf32>
    %358 = arith.mulf %353, %357 : vector<8x16x128xf32>
    %359 = arith.addf %352, %358 : vector<8x16x128xf32>
    %360 = vector.extract_strided_slice %338 {offsets = [0, 3, 0], sizes = [8, 16, 128], strides = [1, 1, 1]} : vector<8x22x128xf32> to vector<8x16x128xf32>
    %c45 = arith.constant 45 : index
    %c0_107 = arith.constant 0 : index
    %361 = vector.load %arg3[%c45, %c0_107] : memref<49x128xf32, #tpu.memory_space<vmem>>, vector<1x128xf32>
    %362 = vector.shape_cast %361 : vector<1x128xf32> to vector<128xf32>
    %363 = vector.shape_cast %362 : vector<128xf32> to vector<1x1x128xf32>
    %364 = vector.broadcast %363 : vector<1x1x128xf32> to vector<8x16x128xf32>
    %365 = arith.mulf %360, %364 : vector<8x16x128xf32>
    %366 = arith.addf %359, %365 : vector<8x16x128xf32>
    %367 = vector.extract_strided_slice %338 {offsets = [0, 4, 0], sizes = [8, 16, 128], strides = [1, 1, 1]} : vector<8x22x128xf32> to vector<8x16x128xf32>
    %c46 = arith.constant 46 : index
    %c0_108 = arith.constant 0 : index
    %368 = vector.load %arg3[%c46, %c0_108] : memref<49x128xf32, #tpu.memory_space<vmem>>, vector<1x128xf32>
    %369 = vector.shape_cast %368 : vector<1x128xf32> to vector<128xf32>
    %370 = vector.shape_cast %369 : vector<128xf32> to vector<1x1x128xf32>
    %371 = vector.broadcast %370 : vector<1x1x128xf32> to vector<8x16x128xf32>
    %372 = arith.mulf %367, %371 : vector<8x16x128xf32>
    %373 = arith.addf %366, %372 : vector<8x16x128xf32>
    %374 = vector.extract_strided_slice %338 {offsets = [0, 5, 0], sizes = [8, 16, 128], strides = [1, 1, 1]} : vector<8x22x128xf32> to vector<8x16x128xf32>
    %c47 = arith.constant 47 : index
    %c0_109 = arith.constant 0 : index
    %375 = vector.load %arg3[%c47, %c0_109] : memref<49x128xf32, #tpu.memory_space<vmem>>, vector<1x128xf32>
    %376 = vector.shape_cast %375 : vector<1x128xf32> to vector<128xf32>
    %377 = vector.shape_cast %376 : vector<128xf32> to vector<1x1x128xf32>
    %378 = vector.broadcast %377 : vector<1x1x128xf32> to vector<8x16x128xf32>
    %379 = arith.mulf %374, %378 : vector<8x16x128xf32>
    %380 = arith.addf %373, %379 : vector<8x16x128xf32>
    %381 = vector.extract_strided_slice %338 {offsets = [0, 6, 0], sizes = [8, 16, 128], strides = [1, 1, 1]} : vector<8x22x128xf32> to vector<8x16x128xf32>
    %c48 = arith.constant 48 : index
    %c0_110 = arith.constant 0 : index
    %382 = vector.load %arg3[%c48, %c0_110] : memref<49x128xf32, #tpu.memory_space<vmem>>, vector<1x128xf32>
    %383 = vector.shape_cast %382 : vector<1x128xf32> to vector<128xf32>
    %384 = vector.shape_cast %383 : vector<128xf32> to vector<1x1x128xf32>
    %385 = vector.broadcast %384 : vector<1x1x128xf32> to vector<8x16x128xf32>
    %386 = arith.mulf %381, %385 : vector<8x16x128xf32>
    %387 = arith.addf %380, %386 : vector<8x16x128xf32>
    %c0_111 = arith.constant 0 : index
    %c0_112 = arith.constant 0 : index
    %388 = vector.load %arg4[%c0_111, %c0_112] : memref<1x128xf32, #tpu.memory_space<vmem>>, vector<1x128xf32>
    %389 = vector.shape_cast %388 : vector<1x128xf32> to vector<1x1x128xf32>
    %390 = vector.broadcast %389 : vector<1x1x128xf32> to vector<8x16x128xf32>
    %391 = arith.addf %387, %390 : vector<8x16x128xf32>
    %392 = vector.shape_cast %391 : vector<8x16x128xf32> to vector<128x128xf32>
    %cst_113 = arith.constant dense<0.000000e+00> : vector<128xf32>
    %393 = vector.multi_reduction <add>, %392, %cst_113 [1] : vector<128x128xf32> to vector<128xf32>
    %394 = vector.shape_cast %393 : vector<128xf32> to vector<128x1xf32>
    %cst_114 = arith.constant 1.280000e+02 : f32
    %395 = vector.broadcast %cst_114 : f32 to vector<128x1xf32>
    %396 = arith.divf %394, %395 : vector<128x1xf32>
    %397 = vector.broadcast %396 : vector<128x1xf32> to vector<128x128xf32>
    %398 = arith.subf %392, %397 : vector<128x128xf32>
    %399 = arith.mulf %398, %398 : vector<128x128xf32>
    %cst_115 = arith.constant dense<0.000000e+00> : vector<128xf32>
    %400 = vector.multi_reduction <add>, %399, %cst_115 [1] : vector<128x128xf32> to vector<128xf32>
    %401 = vector.shape_cast %400 : vector<128xf32> to vector<128x1xf32>
    %cst_116 = arith.constant 1.280000e+02 : f32
    %402 = vector.broadcast %cst_116 : f32 to vector<128x1xf32>
    %403 = arith.divf %401, %402 : vector<128x1xf32>
    %cst_117 = arith.constant 9.99999997E-7 : f32
    %404 = vector.broadcast %cst_117 : f32 to vector<128x1xf32>
    %405 = arith.addf %403, %404 : vector<128x1xf32>
    %406 = math.rsqrt %405 : vector<128x1xf32>
    %407 = vector.broadcast %406 : vector<128x1xf32> to vector<128x128xf32>
    %408 = arith.mulf %398, %407 : vector<128x128xf32>
    %409 = arith.truncf %408 : vector<128x128xf32> to vector<128x128xbf16>
    %c0_118 = arith.constant 0 : index
    %c0_119 = arith.constant 0 : index
    %410 = vector.load %arg5[%c0_118, %c0_119] : memref<128x512xbf16, #tpu.memory_space<vmem>>, vector<128x512xbf16>
    %cst_120 = arith.constant dense<0.000000e+00> : vector<128x512xf32>
    %411 = tpu.matmul %409, %410, %cst_120 {dimension_numbers = #tpu.dot_dimension_numbers<[1], [0], [0], [1], [0, 0, 1, 1], [], []>} : vector<128x128xbf16>, vector<128x512xbf16>, vector<128x512xf32> -> vector<128x512xf32>
    %c0_121 = arith.constant 0 : index
    %c0_122 = arith.constant 0 : index
    %412 = vector.load %arg6[%c0_121, %c0_122] : memref<1x512xf32, #tpu.memory_space<vmem>>, vector<1x512xf32>
    %413 = vector.broadcast %412 : vector<1x512xf32> to vector<128x512xf32>
    %414 = arith.addf %411, %413 : vector<128x512xf32>
    %cst_123 = arith.constant 5.000000e-01 : f32
    %415 = vector.broadcast %cst_123 : f32 to vector<128x512xf32>
    %416 = arith.mulf %415, %414 : vector<128x512xf32>
    %cst_124 = arith.constant 4.471500e-02 : f32
    %417 = vector.broadcast %cst_124 : f32 to vector<128x512xf32>
    %418 = arith.mulf %417, %414 : vector<128x512xf32>
    %419 = arith.mulf %418, %414 : vector<128x512xf32>
    %420 = arith.mulf %419, %414 : vector<128x512xf32>
    %421 = arith.addf %414, %420 : vector<128x512xf32>
    %cst_125 = arith.constant 0.797884583 : f32
    %422 = vector.broadcast %cst_125 : f32 to vector<128x512xf32>
    %423 = arith.mulf %422, %421 : vector<128x512xf32>
    %424 = math.tanh %423 : vector<128x512xf32>
    %cst_126 = arith.constant 1.000000e+00 : f32
    %425 = vector.broadcast %cst_126 : f32 to vector<128x512xf32>
    %426 = arith.addf %425, %424 : vector<128x512xf32>
    %427 = arith.mulf %416, %426 : vector<128x512xf32>
    %428 = arith.truncf %427 : vector<128x512xf32> to vector<128x512xbf16>
    %c0_127 = arith.constant 0 : index
    %c0_128 = arith.constant 0 : index
    %429 = vector.load %arg7[%c0_127, %c0_128] : memref<512x128xbf16, #tpu.memory_space<vmem>>, vector<512x128xbf16>
    %cst_129 = arith.constant dense<0.000000e+00> : vector<128x128xf32>
    %430 = tpu.matmul %428, %429, %cst_129 {dimension_numbers = #tpu.dot_dimension_numbers<[1], [0], [0], [1], [0, 0, 1, 1], [], []>} : vector<128x512xbf16>, vector<512x128xbf16>, vector<128x128xf32> -> vector<128x128xf32>
    %c0_130 = arith.constant 0 : index
    %c0_131 = arith.constant 0 : index
    %431 = vector.load %arg8[%c0_130, %c0_131] : memref<1x128xf32, #tpu.memory_space<vmem>>, vector<1x128xf32>
    %432 = vector.broadcast %431 : vector<1x128xf32> to vector<128x128xf32>
    %433 = arith.addf %430, %432 : vector<128x128xf32>
    %c3_132 = arith.constant 3 : index
    %c0_133 = arith.constant 0 : index
    %c0_134 = arith.constant 0 : index
    %434 = vector.load %arg11[%c3_132, %c0_133, %c0_134] : memref<14x16x128xf32, #tpu.memory_space<vmem>>, vector<8x16x128xf32>
    %435 = vector.shape_cast %434 : vector<8x16x128xf32> to vector<128x128xf32>
    %c0_135 = arith.constant 0 : index
    %c0_136 = arith.constant 0 : index
    %436 = vector.load %arg9[%c0_135, %c0_136] : memref<1x128xf32, #tpu.memory_space<vmem>>, vector<1x128xf32>
    %437 = vector.broadcast %436 : vector<1x128xf32> to vector<128x128xf32>
    %438 = arith.mulf %437, %433 : vector<128x128xf32>
    %439 = arith.addf %435, %438 : vector<128x128xf32>
    %440 = vector.shape_cast %439 : vector<128x128xf32> to vector<8x16x128xf32>
    %c0_137 = arith.constant 0 : index
    %c0_138 = arith.constant 0 : index
    %c0_139 = arith.constant 0 : index
    %c0_140 = arith.constant 0 : index
    %441 = vector.load %arg10[%c0_137, %c0_138, %c0_139, %c0_140] : memref<1x8x16x128xf32, #tpu.memory_space<vmem>>, vector<1x8x16x128xf32>
    %442 = vector.shape_cast %441 : vector<1x8x16x128xf32> to vector<8x16x128xf32>
    %443 = vector.shape_cast %440 : vector<8x16x128xf32> to vector<1x8x16x128xf32>
    tpu.vector_store %arg10[%c0_137, %c0_138, %c0_139, %c0_140], %443 {strides = array<i32>} : memref<1x8x16x128xf32, #tpu.memory_space<vmem>>, vector<1x8x16x128xf32>,
    return
  }
  func.func @transform_1(%arg0: i32, %arg1: i32) -> (i32, i32) {
    %c0_i32 = arith.constant 0 : i32
    %c0_i32_0 = arith.constant 0 : i32
    %c0_i32_1 = arith.constant 0 : i32
    return %c0_i32, %c0_i32_0 : i32, i32
  }
  func.func @transform_2(%arg0: i32, %arg1: i32) -> (i32, i32) {
    %c0_i32 = arith.constant 0 : i32
    %c0_i32_0 = arith.constant 0 : i32
    %c0_i32_1 = arith.constant 0 : i32
    return %c0_i32, %c0_i32_0 : i32, i32
  }
  func.func @transform_3(%arg0: i32, %arg1: i32) -> (i32, i32) {
    %c0_i32 = arith.constant 0 : i32
    %c0_i32_0 = arith.constant 0 : i32
    %c0_i32_1 = arith.constant 0 : i32
    return %c0_i32, %c0_i32_0 : i32, i32
  }
  func.func @transform_4(%arg0: i32, %arg1: i32) -> (i32, i32) {
    %c0_i32 = arith.constant 0 : i32
    %c0_i32_0 = arith.constant 0 : i32
    %c0_i32_1 = arith.constant 0 : i32
    return %c0_i32, %c0_i32_0 : i32, i32
  }
  func.func @transform_5(%arg0: i32, %arg1: i32) -> (i32, i32) {
    %c0_i32 = arith.constant 0 : i32
    %c0_i32_0 = arith.constant 0 : i32
    %c0_i32_1 = arith.constant 0 : i32
    return %c0_i32, %c0_i32_0 : i32, i32
  }
  func.func @transform_6(%arg0: i32, %arg1: i32) -> (i32, i32) {
    %c0_i32 = arith.constant 0 : i32
    %c0_i32_0 = arith.constant 0 : i32
    %c0_i32_1 = arith.constant 0 : i32
    return %c0_i32, %c0_i32_0 : i32, i32
  }
  func.func @transform_7(%arg0: i32, %arg1: i32) -> (i32, i32) {
    %c0_i32 = arith.constant 0 : i32
    %c0_i32_0 = arith.constant 0 : i32
    %c0_i32_1 = arith.constant 0 : i32
    return %c0_i32, %c0_i32_0 : i32, i32
  }
  func.func @transform_8(%arg0: i32, %arg1: i32) -> (i32, i32, i32, i32) {
    %c0_i32 = arith.constant 0 : i32
    %c0_i32_0 = arith.constant 0 : i32
    %c0_i32_1 = arith.constant 0 : i32
    return %arg0, %arg1, %c0_i32, %c0_i32_0 : i32, i32, i32, i32
  }
}

</mosaic_0001>

<llo_original>
// kernel: convnext_block.1
$region0: #{convnext_block.1}
  #allocation0 [shape = 'u32[]', space=smem, size = 0x4, offset = 0x4, fixed_abs, tag = 'smem constant byte address 0x4 - core index']
  #allocation1 [shape = 'u32[72,128]{1,0:T(1,128)}', space=vmem, size = 0x9000, scoped, tag = 'internal scratch']
  #allocation2 [shape = 'f32[14,16,128]{2,1,0:T(8,128)}', space=vmem, size = 0x1c000, scoped, tag = 'scratch operand']
  #allocation3 [shape = 'f32[14,22,128]{2,1,0:T(8,128)}', space=vmem, size = 0x2a000, scoped, tag = 'scratch operand']
  #allocation4 [shape = 's32[3]{0}', space=sflag, size = 0xc, scoped, tag = 'scratch operand']
  #allocation9 [shape = 's32[]', space=sflag, size = 0x4, offset = 0, fixed_abs, tag = 'sflag constant byte address 0x0 - dummy sync flag']
  #allocation10 [shape = 's32[]', space=sflag, size = 0x4, offset = 0, fixed_abs, tag = 'sflag constant byte address 0x0 - dummy sync flag']
  #allocation11 [shape = 's32[]', space=sflag, size = 0x4, offset = 0, fixed_abs, tag = 'sflag constant byte address 0x0 - dummy sync flag']
  %s0 = inlined_call_operand.vmem [shape: f32[2,16,16,128], index: 0, kind: input, shape index: {}]
  %s1 = inlined_call_operand.vmem [shape: f32[49,128], index: 1, kind: input, shape index: {}]
  %s2 = inlined_call_operand.vmem [shape: f32[1,128], index: 2, kind: input, shape index: {}]
  %s3 = inlined_call_operand.vmem [shape: bf16[128,512], index: 3, kind: input, shape index: {}]
  %s4 = inlined_call_operand.vmem [shape: f32[1,512], index: 4, kind: input, shape index: {}]
  %s5 = inlined_call_operand.hbm [shape: bf16[512,128], index: 5, kind: input, shape index: {}]
  %s6 = inlined_call_operand.vmem [shape: f32[1,128], index: 6, kind: input, shape index: {}]
  %s7 = inlined_call_operand.vmem [shape: f32[1,128], index: 7, kind: input, shape index: {}]
  %s8 = inlined_call_operand.hbm [shape: f32[2,16,16,128], index: 8, kind: output, shape index: {}]
  %s9 = sld [smem:[#allocation0]]
  $region146: #{convnext_block.1} parent=0
    _
  %s11 = ssub.s32 1, %s9
  %s12 = scalar_select 0, %s11, %s9
  $region1: #{convnext_block.1} parent=0
    #allocation5 [shape = 'u8[131072]{0}', space=vmem, size = 0x20000, scoped, tag = 'input window, operand 5, single buffered']
    #allocation6 [shape = 's32[2]{0}', space=sflag, size = 0x8, scoped, tag = 'scoped memory for convnext_block.1']
    #allocation7 [shape = 's32[2]{0}', space=sflag, size = 0x8, scoped, tag = 'scoped memory for convnext_block.1']
    #allocation8 [shape = 'u8[131072]{0}', space=vmem, size = 0x20000, scoped, tag = 'output window, operand 0']
    %13 = vsyncpa [#allocation6], 0
    %14 = vsyncpa [#allocation7], 0
    %s15 = scalar_lea.sflag [#allocation7], 1
    %16 = vsyncpa %s15, 0
    loop: start=0, step=1, limit=6
    $region2: #{convnext_block.1} parent=1 // loop_pre_header
      _
    $region3: #{convnext_block.1} parent=1 // loop_header
      %s18 = sphi 0, %s22
      %p19 = scmp.ge.s32.totalorder %s18, 6
      %s25 = sphi 0, %s37
      %s26 = sphi 0, %s33
      %s27 = sphi 0, %s25
      %s28 = sphi 0, %s26
      %s29 = sphi 0, %s27
      %s30 = sphi 0, %s28
      %s38 = sphi 0, %s38
      %s40 = sphi 0, %s38
      %s41 = sphi 0, %s40
      %s55 = sphi 0, %s41
      %s59 = sphi 0, %s59
      %s61 = sphi 0, %s59
      %s62 = sphi 0, %s61
      %s76 = sphi 0, %s62
      %s80 = sphi 0, %s80
      %s82 = sphi 0, %s80
      %s83 = sphi 0, %s82
      %s97 = sphi 0, %s83
      %s101 = sphi 0, %s101
      %s103 = sphi 0, %s101
      %s104 = sphi 0, %s103
      %s118 = sphi 0, %s104
      %s122 = sphi 0, %s122
      %s124 = sphi 0, %s122
      %s125 = sphi 0, %s124
      %s139 = sphi 0, %s125
      %s143 = sphi 0, %s143
      %s145 = sphi 0, %s143
      %s146 = sphi 0, %s145
      %s160 = sphi 0, %s146
      %s164 = sphi 0, %s164
      %s166 = sphi 0, %s164
      %s167 = sphi 0, %s166
      %s181 = sphi 0, %s167
      %s189 = sphi 0, %s191
      %s192 = sphi 0, %s189
      %s193 = sphi 0, %s192
      %s209 = sphi 0, %s193
    $region4: #{convnext_block.1} parent=1 // loop_header_branch
      %21 = sbr.rel (%p19) target = $region8
    $region5: #{convnext_block.1} parent=1 // loop_body
      %s23 = ssub.s32 %s18, 1
      %s24 = ssub.s32 %s18, 2
      %s31 = sadd.s32 1, %s26
      %p32 = scmp.ge.s32.totalorder %s31, 2
      %s33 = scalar_select %p32, 0, %s31
      %s34 = sadd.s32 1, %s25
      %s35 = scalar_select %p32, %s34, %s25
      %p36 = scmp.ge.s32.totalorder %s35, 2
      %s37 = scalar_select %p36, 0, %s35
      %s39 = sadd.s32 %s38, 1
      %p42 = scmp.eq.s32.totalorder %s18, 3
      %p43 = scmp.ne.s32.totalorder %s38, %s40
      %p44 = scmp.eq.s32.totalorder %s18, 0
      %p45 = por %p43, %p44
      %p46 = scmp.ne.s32.totalorder %s38, %s40
      %p47 = scmp.eq.s32.totalorder %s23, 3
      %p48 = por %p46, %p47
      %p49 = scmp.ne.s32.totalorder %s40, %s41
      %p50 = scmp.eq.s32.totalorder %s23, 0
      %p51 = por %p49, %p50
      %p52 = scmp.ne.s32.totalorder %s40, %s41
      %p53 = scmp.eq.s32.totalorder %s24, 3
      %p54 = por %p52, %p53
      %p56 = scmp.ne.s32.totalorder %s41, %s55
      %p57 = scmp.eq.s32.totalorder %s24, 0
      %p58 = por %p56, %p57
      %s60 = sadd.s32 %s59, 1
      %p63 = scmp.eq.s32.totalorder %s18, 3
      %p64 = scmp.ne.s32.totalorder %s59, %s61
      %p65 = scmp.eq.s32.totalorder %s18, 0
      %p66 = por %p64, %p65
      %p67 = scmp.ne.s32.totalorder %s59, %s61
      %p68 = scmp.eq.s32.totalorder %s23, 3
      %p69 = por %p67, %p68
      %p70 = scmp.ne.s32.totalorder %s61, %s62
      %p71 = scmp.eq.s32.totalorder %s23, 0
      %p72 = por %p70, %p71
      %p73 = scmp.ne.s32.totalorder %s61, %s62
      %p74 = scmp.eq.s32.totalorder %s24, 3
      %p75 = por %p73, %p74
      %p77 = scmp.ne.s32.totalorder %s62, %s76
      %p78 = scmp.eq.s32.totalorder %s24, 0
      %p79 = por %p77, %p78
      %s81 = sadd.s32 %s80, 1
      %p84 = scmp.eq.s32.totalorder %s18, 3
      %p85 = scmp.ne.s32.totalorder %s80, %s82
      %p86 = scmp.eq.s32.totalorder %s18, 0
      %p87 = por %p85, %p86
      %p88 = scmp.ne.s32.totalorder %s80, %s82
      %p89 = scmp.eq.s32.totalorder %s23, 3
      %p90 = por %p88, %p89
      %p91 = scmp.ne.s32.totalorder %s82, %s83
      %p92 = scmp.eq.s32.totalorder %s23, 0
      %p93 = por %p91, %p92
      %p94 = scmp.ne.s32.totalorder %s82, %s83
      %p95 = scmp.eq.s32.totalorder %s24, 3
      %p96 = por %p94, %p95
      %p98 = scmp.ne.s32.totalorder %s83, %s97
      %p99 = scmp.eq.s32.totalorder %s24, 0
      %p100 = por %p98, %p99
      %s102 = sadd.s32 %s101, 1
      %p105 = scmp.eq.s32.totalorder %s18, 3
      %p106 = scmp.ne.s32.totalorder %s101, %s103
      %p107 = scmp.eq.s32.totalorder %s18, 0
      %p108 = por %p106, %p107
      %p109 = scmp.ne.s32.totalorder %s101, %s103
      %p110 = scmp.eq.s32.totalorder %s23, 3
      %p111 = por %p109, %p110
      %p112 = scmp.ne.s32.totalorder %s103, %s104
      %p113 = scmp.eq.s32.totalorder %s23, 0
      %p114 = por %p112, %p113
      %p115 = scmp.ne.s32.totalorder %s103, %s104
      %p116 = scmp.eq.s32.totalorder %s24, 3
      %p117 = por %p115, %p116
      %p119 = scmp.ne.s32.totalorder %s104, %s118
      %p120 = scmp.eq.s32.totalorder %s24, 0
      %p121 = por %p119, %p120
      %s123 = sadd.s32 %s122, 1
      %p126 = scmp.eq.s32.totalorder %s18, 3
      %p127 = scmp.ne.s32.totalorder %s122, %s124
      %p128 = scmp.eq.s32.totalorder %s18, 0
      %p129 = por %p127, %p128
      %p130 = scmp.ne.s32.totalorder %s122, %s124
      %p131 = scmp.eq.s32.totalorder %s23, 3
      %p132 = por %p130, %p131
      %p133 = scmp.ne.s32.totalorder %s124, %s125
      %p134 = scmp.eq.s32.totalorder %s23, 0
      %p135 = por %p133, %p134
      %p136 = scmp.ne.s32.totalorder %s124, %s125
      %p137 = scmp.eq.s32.totalorder %s24, 3
      %p138 = por %p136, %p137
      %p140 = scmp.ne.s32.totalorder %s125, %s139
      %p141 = scmp.eq.s32.totalorder %s24, 0
      %p142 = por %p140, %p141
      %s144 = sadd.s32 %s143, 1
      %p147 = scmp.eq.s32.totalorder %s18, 3
      %p148 = scmp.ne.s32.totalorder %s143, %s145
      %p149 = scmp.eq.s32.totalorder %s18, 0
      %p150 = por %p148, %p149
      %p151 = scmp.ne.s32.totalorder %s143, %s145
      %p152 = scmp.eq.s32.totalorder %s23, 3
      %p153 = por %p151, %p152
      %p154 = scmp.ne.s32.totalorder %s145, %s146
      %p155 = scmp.eq.s32.totalorder %s23, 0
      %p156 = por %p154, %p155
      %p157 = scmp.ne.s32.totalorder %s145, %s146
      %p158 = scmp.eq.s32.totalorder %s24, 3
      %p159 = por %p157, %p158
      %p161 = scmp.ne.s32.totalorder %s146, %s160
      %p162 = scmp.eq.s32.totalorder %s24, 0
      %p163 = por %p161, %p162
      %s165 = sadd.s32 %s164, 1
      %p168 = scmp.eq.s32.totalorder %s18, 3
      %p169 = scmp.ne.s32.totalorder %s164, %s166
      %p170 = scmp.eq.s32.totalorder %s18, 0
      %p171 = por %p169, %p170
      %p172 = scmp.ne.s32.totalorder %s164, %s166
      %p173 = scmp.eq.s32.totalorder %s23, 3
      %p174 = por %p172, %p173
      %p175 = scmp.ne.s32.totalorder %s166, %s167
      %p176 = scmp.eq.s32.totalorder %s23, 0
      %p177 = por %p175, %p176
      %p178 = scmp.ne.s32.totalorder %s166, %s167
      %p179 = scmp.eq.s32.totalorder %s24, 3
      %p180 = por %p178, %p179
      %p182 = scmp.ne.s32.totalorder %s167, %s181
      %p183 = scmp.eq.s32.totalorder %s24, 0
      %p184 = por %p182, %p183
      %s185 = ssub.s32 %s25, %s37
      %s186 = ssub.s32 %s26, %s33
      %s187 = sor.u32 %s185, %s186
      %p188 = scmp.eq.s32.totalorder %s187, 0
      %s190 = sadd.s32 %s189, 1
      %s191 = scalar_select %p188, %s189, %s190
      %p194 = pneg %p188
      %p195 = scmp.eq.s32.totalorder %s18, 3
      %p196 = por %p194, %p195
      %p197 = scmp.ne.s32.totalorder %s189, %s192
      %p198 = scmp.eq.s32.totalorder %s18, 0
      %p199 = por %p197, %p198
      %p200 = scmp.ne.s32.totalorder %s189, %s192
      %p201 = scmp.eq.s32.totalorder %s23, 3
      %p202 = por %p200, %p201
      %p203 = scmp.ne.s32.totalorder %s192, %s193
      %p204 = scmp.eq.s32.totalorder %s23, 0
      %p205 = por %p203, %p204
      %p206 = scmp.ne.s32.totalorder %s192, %s193
      %p207 = scmp.eq.s32.totalorder %s24, 3
      %p208 = por %p206, %p207
      %p210 = scmp.ne.s32.totalorder %s193, %s209
      %p211 = scmp.eq.s32.totalorder %s24, 0
      %p212 = por %p210, %p211
      %p213 = scmp.le.s32.totalorder 1, %s18
      %p214 = scmp.lt.s32.totalorder %s18, 5
      %p215 = pnand %p213, %p214
      %p216 = pneg %p215
      // Predicated region
      $region9: #{convnext_block.1} parent=5 // pred_check
        _
      $region10: #{convnext_block.1} parent=5 // pred_check_branch
        %218 = sbr.rel (%p215) target = $region12
      $region11: #{convnext_block.1} parent=5 // pred_region
        %s219 = ssub.s32 %s18, 1
        // Predicated region
        $region13: #{convnext_block.1} parent=11 // pred_check
          %p220 = pneg %p51
        $region14: #{convnext_block.1} parent=11 // pred_check_branch
          %222 = sbr.rel (%p220) target = $region16
        $region15: #{convnext_block.1} parent=11 // pred_region
          _
        $region16: #{convnext_block.1} parent=11 // pred_fallthru
          _
        // Predicated region
        $region17: #{convnext_block.1} parent=11 // pred_check
          %p223 = pneg %p72
        $region18: #{convnext_block.1} parent=11 // pred_check_branch
          %225 = sbr.rel (%p223) target = $region20
        $region19: #{convnext_block.1} parent=11 // pred_region
          _
        $region20: #{convnext_block.1} parent=11 // pred_fallthru
          _
        // Predicated region
        $region21: #{convnext_block.1} parent=11 // pred_check
          %p226 = pneg %p93
        $region22: #{convnext_block.1} parent=11 // pred_check_branch
          %228 = sbr.rel (%p226) target = $region24
        $region23: #{convnext_block.1} parent=11 // pred_region
          _
        $region24: #{convnext_block.1} parent=11 // pred_fallthru
          _
        // Predicated region
        $region25: #{convnext_block.1} parent=11 // pred_check
          %p229 = pneg %p114
        $region26: #{convnext_block.1} parent=11 // pred_check_branch
          %231 = sbr.rel (%p229) target = $region28
        $region27: #{convnext_block.1} parent=11 // pred_region
          _
        $region28: #{convnext_block.1} parent=11 // pred_fallthru
          _
        // Predicated region
        $region29: #{convnext_block.1} parent=11 // pred_check
          %p232 = pneg %p135
        $region30: #{convnext_block.1} parent=11 // pred_check_branch
          %234 = sbr.rel (%p232) target = $region32
        $region31: #{convnext_block.1} parent=11 // pred_region
          %236 = vsyncadd [#allocation6], 0
          %s237 = sshll.u32 %s5, 4
          %s238 = int_to_ptr.hbm [resolvable:$true] %s237
          %s239 = sshll.u32 [#allocation5], 4
          %s240 = int_to_ptr.vmem [resolvable:$true] %s239
          %245 = dma.hbm_to_vmem [thread:$0]  %s238, 4096, %s240, [#allocation6], 64, 64, 4
        $region32: #{convnext_block.1} parent=11 // pred_fallthru
          _
        // Predicated region
        $region33: #{convnext_block.1} parent=11 // pred_check
          %p246 = pneg %p156
        $region34: #{convnext_block.1} parent=11 // pred_check_branch
          %248 = sbr.rel (%p246) target = $region36
        $region35: #{convnext_block.1} parent=11 // pred_region
          _
        $region36: #{convnext_block.1} parent=11 // pred_fallthru
          _
        // Predicated region
        $region37: #{convnext_block.1} parent=11 // pred_check
          %p249 = pneg %p177
        $region38: #{convnext_block.1} parent=11 // pred_check_branch
          %251 = sbr.rel (%p249) target = $region40
        $region39: #{convnext_block.1} parent=11 // pred_region
          _
        $region40: #{convnext_block.1} parent=11 // pred_fallthru
          _
      $region12: #{convnext_block.1} parent=5 // pred_fallthru
        _
      %p252 = scmp.lt.s32.totalorder %s18, 4
      // Predicated region
      $region41: #{convnext_block.1} parent=5 // pred_check
        %p253 = pneg %p252
      $region42: #{convnext_block.1} parent=5 // pred_check_branch
        %255 = sbr.rel (%p253) target = $region44
      $region43: #{convnext_block.1} parent=5 // pred_region
        _
      $region44: #{convnext_block.1} parent=5 // pred_fallthru
        _
      %p256 = scmp.le.s32.totalorder 1, %s18
      %p257 = scmp.lt.s32.totalorder %s18, 5
      %p258 = pnand %p256, %p257
      %p259 = pneg %p258
      // Predicated region
      $region45: #{convnext_block.1} parent=5 // pred_check
        _
      $region46: #{convnext_block.1} parent=5 // pred_check_branch
        %261 = sbr.rel (%p258) target = $region48
      $region47: #{convnext_block.1} parent=5 // pred_region
        %s262 = ssub.s32 %s18, 1
        // Predicated region
        $region49: #{convnext_block.1} parent=47 // pred_check
          %p263 = pneg %p135
        $region50: #{convnext_block.1} parent=47 // pred_check_branch
          %265 = sbr.rel (%p263) target = $region52
        $region51: #{convnext_block.1} parent=47 // pred_region
          %267 = dma.done [#allocation6], 4096
        $region52: #{convnext_block.1} parent=47 // pred_fallthru
          _
        %p268 = pneg %p51
        %p269 = pneg %p48
        %p270 = pneg %p72
        %p271 = pneg %p69
        %p272 = pneg %p93
        %p273 = pneg %p90
        %p274 = pneg %p114
        %p275 = pneg %p111
        %p276 = pneg %p135
        %p277 = pneg %p132
        %p278 = pneg %p156
        %p279 = pneg %p153
        %p280 = pneg %p177
        %p281 = pneg %p174
        %p282 = pneg %p205
        %p283 = pneg %p202
        %s284 = sand.u32 %s192, 1
        %s285 = scalar_lea.sflag [#allocation7], %s284
        %s286 = sand.u32 %s192, 1
        %s287 = smul.addr %s286, 128
        %s288 = scalar_lea.vmem [#allocation8], %s287
        %s289 = smul.u32 8, %s28
        %s290 = smul.u32 %s28, 8
        %s291 = smul.u32 %s290, 16
        %s292 = smul.u32 %s27, 256
        %s293 = sadd.s32 %s291, %s292
        %s294 = scalar_lea.vmem %s0, %s293
        %s295 = scalar_lea.vmem [#allocation2], 48
        // Predicated region
        $region53: #{convnext_block.1} parent=47 // pred_check
          _
        $region54: #{convnext_block.1} parent=47 // pred_check_branch
          %297 = sbr.rel (0) target = $region56
        $region55: #{convnext_block.1} parent=47 // pred_region
          loop: start=0, step=1, limit=1
          $region57: #{convnext_block.1} parent=55 // loop_pre_header
            _
          $region58: #{convnext_block.1} parent=55 // loop_header
            %s299 = sphi 0, %s303
            %p300 = scmp.ge.s32.totalorder %s299, 1
            %s304 = sphi %s294, %s294
            %s305 = sphi %s295, %s295
          $region59: #{convnext_block.1} parent=55 // loop_header_branch
            %302 = sbr.rel (%p300) target = $region63
          $region60: #{convnext_block.1} parent=55 // loop_body
            %v306 = vld [vmem:[%s304] sm:$0xff]
            %307 = vst [vmem:[%s305] sm:$0xff] %v306
            %v308 = vld [vmem:[%s304 + $0x8] sm:$0xff]
            %309 = vst [vmem:[%s305 + $0x8] sm:$0xff] %v308
            %v310 = vld [vmem:[%s304 + $0x10] sm:$0xff]
            %311 = vst [vmem:[%s305 + $0x10] sm:$0xff] %v310
            %v312 = vld [vmem:[%s304 + $0x18] sm:$0xff]
            %313 = vst [vmem:[%s305 + $0x18] sm:$0xff] %v312
            %v314 = vld [vmem:[%s304 + $0x20] sm:$0xff]
            %315 = vst [vmem:[%s305 + $0x20] sm:$0xff] %v314
            %v316 = vld [vmem:[%s304 + $0x28] sm:$0xff]
            %317 = vst [vmem:[%s305 + $0x28] sm:$0xff] %v316
            %v318 = vld [vmem:[%s304 + $0x30] sm:$0xff]
            %319 = vst [vmem:[%s305 + $0x30] sm:$0xff] %v318
            %v320 = vld [vmem:[%s304 + $0x38] sm:$0xff]
            %321 = vst [vmem:[%s305 + $0x38] sm:$0xff] %v320
            %v322 = vld [vmem:[%s304 + $0x40] sm:$0xff]
            %323 = vst [vmem:[%s305 + $0x40] sm:$0xff] %v322
            %v324 = vld [vmem:[%s304 + $0x48] sm:$0xff]
            %325 = vst [vmem:[%s305 + $0x48] sm:$0xff] %v324
            %v326 = vld [vmem:[%s304 + $0x50] sm:$0xff]
            %327 = vst [vmem:[%s305 + $0x50] sm:$0xff] %v326
            %v328 = vld [vmem:[%s304 + $0x58] sm:$0xff]
            %329 = vst [vmem:[%s305 + $0x58] sm:$0xff] %v328
            %v330 = vld [vmem:[%s304 + $0x60] sm:$0xff]
            %331 = vst [vmem:[%s305 + $0x60] sm:$0xff] %v330
            %v332 = vld [vmem:[%s304 + $0x68] sm:$0xff]
            %333 = vst [vmem:[%s305 + $0x68] sm:$0xff] %v332
            %v334 = vld [vmem:[%s304 + $0x70] sm:$0xff]
            %335 = vst [vmem:[%s305 + $0x70] sm:$0xff] %v334
            %v336 = vld [vmem:[%s304 + $0x78] sm:$0xff]
            %337 = vst [vmem:[%s305 + $0x78] sm:$0xff] %v336
          $region61: #{convnext_block.1} parent=55 // loop_footer
            %s303 = sadd.s32 1, %s299
          $region62: #{convnext_block.1} parent=55 // loop_footer_branch
            %298 = sbr.rel target = $region58
          $region63: #{convnext_block.1} parent=55 // loop_exit
            _
        $region56: #{convnext_block.1} parent=47 // pred_fallthru
          _
        // Predicated region
        $region64: #{convnext_block.1} parent=47 // pred_check
          _
        $region65: #{convnext_block.1} parent=47 // pred_check_branch
          %339 = sbr.rel target = $region67
        $region66: #{convnext_block.1} parent=47 // pred_region
          _
        $region67: #{convnext_block.1} parent=47 // pred_fallthru
          _
        // Predicated region
        $region68: #{convnext_block.1} parent=47 // pred_check
          _
        $region69: #{convnext_block.1} parent=47 // pred_check_branch
          %342 = sbr.rel (0) target = $region71
        $region70: #{convnext_block.1} parent=47 // pred_region
          %343 = vsyncadd [#allocation4], 2048
        $region71: #{convnext_block.1} parent=47 // pred_fallthru
          _
        %p344 = scmp.gt.s32.totalorder %s28, 0
        // Predicated region
        $region72: #{convnext_block.1} parent=47 // pred_check
          %p345 = pneg %p344
        $region73: #{convnext_block.1} parent=47 // pred_check_branch
          %347 = sbr.rel (%p345) target = $region75
        $region74: #{convnext_block.1} parent=47 // pred_region
          %s348 = ssub.s32 %s290, 3
          %s349 = smul.u32 %s348, 16
          %s350 = sadd.s32 %s349, %s292
          %s351 = scalar_lea.vmem %s0, %s350
          %s352 = scalar_lea.sflag [#allocation4], 1
          // Predicated region
          $region76: #{convnext_block.1} parent=74 // pred_check
            _
          $region77: #{convnext_block.1} parent=74 // pred_check_branch
            %354 = sbr.rel (0) target = $region79
          $region78: #{convnext_block.1} parent=74 // pred_region
            loop: start=0, step=1, limit=1
            $region80: #{convnext_block.1} parent=78 // loop_pre_header
              _
            $region81: #{convnext_block.1} parent=78 // loop_header
              %s356 = sphi 0, %s360
              %p357 = scmp.ge.s32.totalorder %s356, 1
              %s361 = sphi %s351, %s351
              %s362 = sphi [#allocation2], [#allocation2]
            $region82: #{convnext_block.1} parent=78 // loop_header_branch
              %359 = sbr.rel (%p357) target = $region86
            $region83: #{convnext_block.1} parent=78 // loop_body
              %v363 = vld [vmem:[%s361] sm:$0xff]
              %364 = vst [vmem:[%s362] sm:$0xff] %v363
              %v365 = vld [vmem:[%s361 + $0x8] sm:$0xff]
              %366 = vst [vmem:[%s362 + $0x8] sm:$0xff] %v365
              %v367 = vld [vmem:[%s361 + $0x10] sm:$0xff]
              %368 = vst [vmem:[%s362 + $0x10] sm:$0xff] %v367
              %v369 = vld [vmem:[%s361 + $0x18] sm:$0xff]
              %370 = vst [vmem:[%s362 + $0x18] sm:$0xff] %v369
              %v371 = vld [vmem:[%s361 + $0x20] sm:$0xff]
              %372 = vst [vmem:[%s362 + $0x20] sm:$0xff] %v371
              %v373 = vld [vmem:[%s361 + $0x28] sm:$0xff]
              %374 = vst [vmem:[%s362 + $0x28] sm:$0xff] %v373
            $region84: #{convnext_block.1} parent=78 // loop_footer
              %s360 = sadd.s32 1, %s356
            $region85: #{convnext_block.1} parent=78 // loop_footer_branch
              %355 = sbr.rel target = $region81
            $region86: #{convnext_block.1} parent=78 // loop_exit
              _
          $region79: #{convnext_block.1} parent=74 // pred_fallthru
            _
          // Predicated region
          $region87: #{convnext_block.1} parent=74 // pred_check
            _
          $region88: #{convnext_block.1} parent=74 // pred_check_branch
            %376 = sbr.rel target = $region90
          $region89: #{convnext_block.1} parent=74 // pred_region
            _
          $region90: #{convnext_block.1} parent=74 // pred_fallthru
            _
          // Predicated region
          $region91: #{convnext_block.1} parent=74 // pred_check
            _
          $region92: #{convnext_block.1} parent=74 // pred_check_branch
            %379 = sbr.rel (0) target = $region94
          $region93: #{convnext_block.1} parent=74 // pred_region
            %380 = vsyncadd %s352, 768
          $region94: #{convnext_block.1} parent=74 // pred_fallthru
            _
        $region75: #{convnext_block.1} parent=47 // pred_fallthru
          _
        %p381 = scmp.lt.s32.totalorder %s28, 1
        // Predicated region
        $region95: #{convnext_block.1} parent=47 // pred_check
          %p382 = pneg %p381
        $region96: #{convnext_block.1} parent=47 // pred_check_branch
          %384 = sbr.rel (%p382) target = $region98
        $region97: #{convnext_block.1} parent=47 // pred_region
          %s385 = sadd.s32 %s290, 8
          %s386 = smul.u32 %s385, 16
          %s387 = sadd.s32 %s386, %s292
          %s388 = scalar_lea.vmem %s0, %s387
          %s389 = scalar_lea.vmem [#allocation2], 176
          %s390 = scalar_lea.sflag [#allocation4], 2
          // Predicated region
          $region99: #{convnext_block.1} parent=97 // pred_check
            _
          $region100: #{convnext_block.1} parent=97 // pred_check_branch
            %392 = sbr.rel (0) target = $region102
          $region101: #{convnext_block.1} parent=97 // pred_region
            loop: start=0, step=1, limit=1
            $region103: #{convnext_block.1} parent=101 // loop_pre_header
              _
            $region104: #{convnext_block.1} parent=101 // loop_header
              %s394 = sphi 0, %s398
              %p395 = scmp.ge.s32.totalorder %s394, 1
              %s399 = sphi %s388, %s388
              %s400 = sphi %s389, %s389
            $region105: #{convnext_block.1} parent=101 // loop_header_branch
              %397 = sbr.rel (%p395) target = $region109
            $region106: #{convnext_block.1} parent=101 // loop_body
              %v401 = vld [vmem:[%s399] sm:$0xff]
              %402 = vst [vmem:[%s400] sm:$0xff] %v401
              %v403 = vld [vmem:[%s399 + $0x8] sm:$0xff]
              %404 = vst [vmem:[%s400 + $0x8] sm:$0xff] %v403
              %v405 = vld [vmem:[%s399 + $0x10] sm:$0xff]
              %406 = vst [vmem:[%s400 + $0x10] sm:$0xff] %v405
              %v407 = vld [vmem:[%s399 + $0x18] sm:$0xff]
              %408 = vst [vmem:[%s400 + $0x18] sm:$0xff] %v407
              %v409 = vld [vmem:[%s399 + $0x20] sm:$0xff]
              %410 = vst [vmem:[%s400 + $0x20] sm:$0xff] %v409
              %v411 = vld [vmem:[%s399 + $0x28] sm:$0xff]
              %412 = vst [vmem:[%s400 + $0x28] sm:$0xff] %v411
            $region107: #{convnext_block.1} parent=101 // loop_footer
              %s398 = sadd.s32 1, %s394
            $region108: #{convnext_block.1} parent=101 // loop_footer_branch
              %393 = sbr.rel target = $region104
            $region109: #{convnext_block.1} parent=101 // loop_exit
              _
          $region102: #{convnext_block.1} parent=97 // pred_fallthru
            _
          // Predicated region
          $region110: #{convnext_block.1} parent=97 // pred_check
            _
          $region111: #{convnext_block.1} parent=97 // pred_check_branch
            %414 = sbr.rel target = $region113
          $region112: #{convnext_block.1} parent=97 // pred_region
            _
          $region113: #{convnext_block.1} parent=97 // pred_fallthru
            _
          // Predicated region
          $region114: #{convnext_block.1} parent=97 // pred_check
            _
          $region115: #{convnext_block.1} parent=97 // pred_check_branch
            %417 = sbr.rel (0) target = $region117
          $region116: #{convnext_block.1} parent=97 // pred_region
            %418 = vsyncadd %s390, 768
          $region117: #{convnext_block.1} parent=97 // pred_fallthru
            _
        $region98: #{convnext_block.1} parent=47 // pred_fallthru
          _
        %p419 = scmp.eq.s32.totalorder %s28, 0
        // Predicated region
        $region118: #{convnext_block.1} parent=47 // pred_check
          %p420 = pneg %p419
        $region119: #{convnext_block.1} parent=47 // pred_check_branch
          %422 = sbr.rel (%p420) target = $region121
        $region120: #{convnext_block.1} parent=47 // pred_region
          %423 = vst [vmem:[#allocation2] sm:$0xff] 0.0
          %424 = vst [vmem:[#allocation2 + $0x8] sm:$0xff] 0.0
          %425 = vst [vmem:[#allocation2 + $0x10] sm:$0xff] 0.0
          %426 = vst [vmem:[#allocation2 + $0x18] sm:$0xff] 0.0
          %427 = vst [vmem:[#allocation2 + $0x20] sm:$0xff] 0.0
          %428 = vst [vmem:[#allocation2 + $0x28] sm:$0xff] 0.0
        $region121: #{convnext_block.1} parent=47 // pred_fallthru
          _
        %p429 = scmp.eq.s32.totalorder %s28, 1
        // Predicated region
        $region122: #{convnext_block.1} parent=47 // pred_check
          %p430 = pneg %p429
        $region123: #{convnext_block.1} parent=47 // pred_check_branch
          %432 = sbr.rel (%p430) target = $region125
        $region124: #{convnext_block.1} parent=47 // pred_region
          %s433 = scalar_lea.vmem [#allocation2], 176
          %434 = vst [vmem:[%s433] sm:$0xff] 0.0
          %435 = vst [vmem:[%s433 + $0x8] sm:$0xff] 0.0
          %436 = vst [vmem:[%s433 + $0x10] sm:$0xff] 0.0
          %437 = vst [vmem:[%s433 + $0x18] sm:$0xff] 0.0
          %438 = vst [vmem:[%s433 + $0x20] sm:$0xff] 0.0
          %439 = vst [vmem:[%s433 + $0x28] sm:$0xff] 0.0
        $region125: #{convnext_block.1} parent=47 // pred_fallthru
          _
        %440 = vst [vmem:[#allocation3] sm:$0x7] 0.0
        %441 = vst [vmem:[#allocation3 + $0x18] sm:$0x7] 0.0
        %442 = vst [vmem:[#allocation3 + $0x30] sm:$0x7] 0.0
        %443 = vst [vmem:[#allocation3 + $0x48] sm:$0x7] 0.0
        %444 = vst [vmem:[#allocation3 + $0x60] sm:$0x7] 0.0
        %445 = vst [vmem:[#allocation3 + $0x78] sm:$0x7] 0.0
        %446 = vst [vmem:[#allocation3 + $0x90] sm:$0x7] 0.0
        %447 = vst [vmem:[#allocation3 + $0xa8] sm:$0x7] 0.0
        %448 = vst [vmem:[#allocation3 + $0xc0] sm:$0x7] 0.0
        %449 = vst [vmem:[#allocation3 + $0xd8] sm:$0x7] 0.0
        %450 = vst [vmem:[#allocation3 + $0xf0] sm:$0x7] 0.0
        %451 = vst [vmem:[#allocation3 + $0x108] sm:$0x7] 0.0
        %452 = vst [vmem:[#allocation3 + $0x120] sm:$0x7] 0.0
        %453 = vst [vmem:[#allocation3 + $0x138] sm:$0x7] 0.0
        %454 = vst [vmem:[#allocation3 + $0x13] sm:$0x7] 0.0
        %455 = vst [vmem:[#allocation3 + $0x2b] sm:$0x7] 0.0
        %456 = vst [vmem:[#allocation3 + $0x43] sm:$0x7] 0.0
        %457 = vst [vmem:[#allocation3 + $0x5b] sm:$0x7] 0.0
        %458 = vst [vmem:[#allocation3 + $0x73] sm:$0x7] 0.0
        %459 = vst [vmem:[#allocation3 + $0x8b] sm:$0x7] 0.0
        %460 = vst [vmem:[#allocation3 + $0xa3] sm:$0x7] 0.0
        %461 = vst [vmem:[#allocation3 + $0xbb] sm:$0x7] 0.0
        %462 = vst [vmem:[#allocation3 + $0xd3] sm:$0x7] 0.0
        %463 = vst [vmem:[#allocation3 + $0xeb] sm:$0x7] 0.0
        %464 = vst [vmem:[#allocation3 + $0x103] sm:$0x7] 0.0
        %465 = vst [vmem:[#allocation3 + $0x11b] sm:$0x7] 0.0
        %466 = vst [vmem:[#allocation3 + $0x133] sm:$0x7] 0.0
        %467 = vst [vmem:[#allocation3 + $0x14b] sm:$0x7] 0.0
        %s468 = smul.u32 8, 16
        %s469 = smul.u32 %s468, 1
        %s470 = sshll.u32 %s469, 4
        %471 = dma.done [#allocation4], %s470
        // Predicated region
        $region126: #{convnext_block.1} parent=47 // pred_check
          %p472 = pneg %p344
        $region127: #{convnext_block.1} parent=47 // pred_check_branch
          %474 = sbr.rel (%p472) target = $region129
        $region128: #{convnext_block.1} parent=47 // pred_region
          %s475 = scalar_lea.sflag [#allocation4], 1
          %s476 = smul.u32 3, 16
          %s477 = smul.u32 %s476, 1
          %s478 = sshll.u32 %s477, 4
          %479 = dma.done %s475, %s478
        $region129: #{convnext_block.1} parent=47 // pred_fallthru
          _
        // Predicated region
        $region130: #{convnext_block.1} parent=47 // pred_check
          %p480 = pneg %p381
        $region131: #{convnext_block.1} parent=47 // pred_check_branch
          %482 = sbr.rel (%p480) target = $region133
        $region132: #{convnext_block.1} parent=47 // pred_region
          %s483 = scalar_lea.sflag [#allocation4], 2
          %s484 = smul.u32 3, 16
          %s485 = smul.u32 %s484, 1
          %s486 = sshll.u32 %s485, 4
          %487 = dma.done %s483, %s486
        $region133: #{convnext_block.1} parent=47 // pred_fallthru
          _
        %v488 = vld [vmem:[#allocation2] sm:$0xff]
        %v489 = vld [vmem:[#allocation2 + $0x8] sm:$0xff]
        %v490 = vld [vmem:[#allocation2 + $0x10] sm:$0xff]
        %v491 = vld [vmem:[#allocation2 + $0x18] sm:$0xff]
        %v492 = vld [vmem:[#allocation2 + $0x20] sm:$0xff]
        %v493 = vld [vmem:[#allocation2 + $0x28] sm:$0xff]
        %v494 = vld [vmem:[#allocation2 + $0x30] sm:$0xff]
        %v495 = vld [vmem:[#allocation2 + $0x38] sm:$0xff]
        %v496 = vld [vmem:[#allocation2 + $0x40] sm:$0xff]
        %v497 = vld [vmem:[#allocation2 + $0x48] sm:$0xff]
        %v498 = vld [vmem:[#allocation2 + $0x50] sm:$0xff]
        %v499 = vld [vmem:[#allocation2 + $0x58] sm:$0xff]
        %v500 = vld [vmem:[#allocation2 + $0x60] sm:$0xff]
        %v501 = vld [vmem:[#allocation2 + $0x68] sm:$0xff]
        %v502 = vld [vmem:[#allocation2 + $0x70] sm:$0xff]
        %v503 = vld [vmem:[#allocation2 + $0x78] sm:$0xff]
        %504 = vst [vmem:[#allocation3 + $0x3] sm:$0xff] %v488
        %505 = vst [vmem:[#allocation3 + $0xb] sm:$0xff] %v489
        %506 = vst [vmem:[#allocation3 + $0x1b] sm:$0xff] %v490
        %507 = vst [vmem:[#allocation3 + $0x23] sm:$0xff] %v491
        %508 = vst [vmem:[#allocation3 + $0x33] sm:$0xff] %v492
        %509 = vst [vmem:[#allocation3 + $0x3b] sm:$0xff] %v493
        %510 = vst [vmem:[#allocation3 + $0x4b] sm:$0xff] %v494
        %511 = vst [vmem:[#allocation3 + $0x53] sm:$0xff] %v495
        %512 = vst [vmem:[#allocation3 + $0x63] sm:$0xff] %v496
        %513 = vst [vmem:[#allocation3 + $0x6b] sm:$0xff] %v497
        %514 = vst [vmem:[#allocation3 + $0x7b] sm:$0xff] %v498
        %515 = vst [vmem:[#allocation3 + $0x83] sm:$0xff] %v499
        %516 = vst [vmem:[#allocation3 + $0x93] sm:$0xff] %v500
        %517 = vst [vmem:[#allocation3 + $0x9b] sm:$0xff] %v501
        %518 = vst [vmem:[#allocation3 + $0xab] sm:$0xff] %v502
        %519 = vst [vmem:[#allocation3 + $0xb3] sm:$0xff] %v503
        %s520 = scalar_lea.vmem [#allocation2], 128
        %v521 = vld [vmem:[%s520] sm:$0xff]
        %v522 = vld [vmem:[%s520 + $0x8] sm:$0xff]
        %v523 = vld [vmem:[%s520 + $0x10] sm:$0xff]
        %v524 = vld [vmem:[%s520 + $0x18] sm:$0xff]
        %v525 = vld [vmem:[%s520 + $0x20] sm:$0xff]
        %v526 = vld [vmem:[%s520 + $0x28] sm:$0xff]
        %v527 = vld [vmem:[%s520 + $0x30] sm:$0xff]
        %v528 = vld [vmem:[%s520 + $0x38] sm:$0xff]
        %v529 = vld [vmem:[%s520 + $0x40] sm:$0xff]
        %v530 = vld [vmem:[%s520 + $0x48] sm:$0xff]
        %v531 = vld [vmem:[%s520 + $0x50] sm:$0xff]
        %v532 = vld [vmem:[%s520 + $0x58] sm:$0xff]
        %s533 = scalar_lea.vmem [#allocation3], 192
        %534 = vst [vmem:[%s533 + $0x3] sm:$0xff] %v521
        %535 = vst [vmem:[%s533 + $0xb] sm:$0xff] %v522
        %536 = vst [vmem:[%s533 + $0x1b] sm:$0xff] %v523
        %537 = vst [vmem:[%s533 + $0x23] sm:$0xff] %v524
        %538 = vst [vmem:[%s533 + $0x33] sm:$0xff] %v525
        %539 = vst [vmem:[%s533 + $0x3b] sm:$0xff] %v526
        %540 = vst [vmem:[%s533 + $0x4b] sm:$0xff] %v527
        %541 = vst [vmem:[%s533 + $0x53] sm:$0xff] %v528
        %542 = vst [vmem:[%s533 + $0x63] sm:$0xff] %v529
        %543 = vst [vmem:[%s533 + $0x6b] sm:$0xff] %v530
        %544 = vst [vmem:[%s533 + $0x7b] sm:$0xff] %v531
        %545 = vst [vmem:[%s533 + $0x83] sm:$0xff] %v532
        %v546 = vld [vmem:[#allocation3] sm:$0xff]
        %v547 = vld [vmem:[#allocation3 + $0x8] sm:$0xff]
        %v548 = vld [vmem:[#allocation3 + $0x10] sm:$0x3f]
        %v549 = vld [vmem:[#allocation3 + $0x18] sm:$0xff]
        %v550 = vld [vmem:[#allocation3 + $0x20] sm:$0xff]
        %v551 = vld [vmem:[#allocation3 + $0x28] sm:$0x3f]
        %v552 = vld [vmem:[#allocation3 + $0x30] sm:$0xff]
        %v553 = vld [vmem:[#allocation3 + $0x38] sm:$0xff]
        %v554 = vld [vmem:[#allocation3 + $0x40] sm:$0x3f]
        %v555 = vld [vmem:[#allocation3 + $0x48] sm:$0xff]
        %v556 = vld [vmem:[#allocation3 + $0x50] sm:$0xff]
        %v557 = vld [vmem:[#allocation3 + $0x58] sm:$0x3f]
        %v558 = vld [vmem:[#allocation3 + $0x60] sm:$0xff]
        %v559 = vld [vmem:[#allocation3 + $0x68] sm:$0xff]
        %v560 = vld [vmem:[#allocation3 + $0x70] sm:$0x3f]
        %v561 = vld [vmem:[#allocation3 + $0x78] sm:$0xff]
        %v562 = vld [vmem:[#allocation3 + $0x80] sm:$0xff]
        %v563 = vld [vmem:[#allocation3 + $0x88] sm:$0x3f]
        %v564 = vld [vmem:[#allocation3 + $0x90] sm:$0xff]
        %v565 = vld [vmem:[#allocation3 + $0x98] sm:$0xff]
        %v566 = vld [vmem:[#allocation3 + $0xa0] sm:$0x3f]
        %v567 = vld [vmem:[#allocation3 + $0xa8] sm:$0xff]
        %v568 = vld [vmem:[#allocation3 + $0xb0] sm:$0xff]
        %v569 = vld [vmem:[#allocation3 + $0xb8] sm:$0x3f]
        %v570 = vld [vmem:[%s1] sm:$0x1]
        %v571 = vperm.slane %v570, 0
        %v572 = vmul.f32 %v546, %v571
        %v573 = vmul.f32 %v547, %v571
        %v574 = vmul.f32 %v549, %v571
        %v575 = vmul.f32 %v550, %v571
        %v576 = vmul.f32 %v552, %v571
        %v577 = vmul.f32 %v553, %v571
        %v578 = vmul.f32 %v555, %v571
        %v579 = vmul.f32 %v556, %v571
        %v580 = vmul.f32 %v558, %v571
        %v581 = vmul.f32 %v559, %v571
        %v582 = vmul.f32 %v561, %v571
        %v583 = vmul.f32 %v562, %v571
        %v584 = vmul.f32 %v564, %v571
        %v585 = vmul.f32 %v565, %v571
        %v586 = vmul.f32 %v567, %v571
        %v587 = vmul.f32 %v568, %v571
        %v588 = vadd.f32 %v572, 0.0
        %v589 = vadd.f32 %v573, 0.0
        %v590 = vadd.f32 %v574, 0.0
        %v591 = vadd.f32 %v575, 0.0
        %v592 = vadd.f32 %v576, 0.0
        %v593 = vadd.f32 %v577, 0.0
        %v594 = vadd.f32 %v578, 0.0
        %v595 = vadd.f32 %v579, 0.0
        %v596 = vadd.f32 %v580, 0.0
        %v597 = vadd.f32 %v581, 0.0
        %v598 = vadd.f32 %v582, 0.0
        %v599 = vadd.f32 %v583, 0.0
        %v600 = vadd.f32 %v584, 0.0
        %v601 = vadd.f32 %v585, 0.0
        %v602 = vadd.f32 %v586, 0.0
        %v603 = vadd.f32 %v587, 0.0
        %v604 = vld [vmem:[%s1 + $0x1] sm:$0x1]
        %v605 = vperm.slane %v604, 0
        %v606 = vmul.f32 %v546, %v605
        %v607 = vmul.f32 %v547, %v605
        %v608 = vmul.f32 %v548, %v605
        %v609 = vmul.f32 %v549, %v605
        %v610 = vmul.f32 %v550, %v605
        %v611 = vmul.f32 %v551, %v605
        %v612 = vmul.f32 %v552, %v605
        %v613 = vmul.f32 %v553, %v605
        %v614 = vmul.f32 %v554, %v605
        %v615 = vmul.f32 %v555, %v605
        %v616 = vmul.f32 %v556, %v605
        %v617 = vmul.f32 %v557, %v605
        %v618 = vmul.f32 %v558, %v605
        %v619 = vmul.f32 %v559, %v605
        %v620 = vmul.f32 %v560, %v605
        %v621 = vmul.f32 %v561, %v605
        %v622 = vmul.f32 %v562, %v605
        %v623 = vmul.f32 %v563, %v605
        %v624 = vmul.f32 %v564, %v605
        %v625 = vmul.f32 %v565, %v605
        %v626 = vmul.f32 %v566, %v605
        %v627 = vmul.f32 %v567, %v605
        %v628 = vmul.f32 %v568, %v605
        %v629 = vmul.f32 %v569, %v605
        %vm654 = vcmask 1046528
        %v655 = vrot.slane %v606, 1
        %v656 = vrot.slane %v607, 1
        %v657 = vsel %vm654, %v655, %v656
        %v658 = vrot.slane %v608, 1
        %v659 = vsel %vm654, %v656, %v658
        %v660 = vrot.slane %v609, 1
        %v661 = vrot.slane %v610, 1
        %v662 = vsel %vm654, %v660, %v661
        %v663 = vrot.slane %v611, 1
        %v664 = vsel %vm654, %v661, %v663
        %v665 = vrot.slane %v612, 1
        %v666 = vrot.slane %v613, 1
        %v667 = vsel %vm654, %v665, %v666
        %v668 = vrot.slane %v614, 1
        %v669 = vsel %vm654, %v666, %v668
        %v670 = vrot.slane %v615, 1
        %v671 = vrot.slane %v616, 1
        %v672 = vsel %vm654, %v670, %v671
        %v673 = vrot.slane %v617, 1
        %v674 = vsel %vm654, %v671, %v673
        %v675 = vrot.slane %v618, 1
        %v676 = vrot.slane %v619, 1
        %v677 = vsel %vm654, %v675, %v676
        %v678 = vrot.slane %v620, 1
        %v679 = vsel %vm654, %v676, %v678
        %v680 = vrot.slane %v621, 1
        %v681 = vrot.slane %v622, 1
        %v682 = vsel %vm654, %v680, %v681
        %v683 = vrot.slane %v623, 1
        %v684 = vsel %vm654, %v681, %v683
        %v685 = vrot.slane %v624, 1
        %v686 = vrot.slane %v625, 1
        %v687 = vsel %vm654, %v685, %v686
        %v688 = vrot.slane %v626, 1
        %v689 = vsel %vm654, %v686, %v688
        %v690 = vrot.slane %v627, 1
        %v691 = vrot.slane %v628, 1
        %v692 = vsel %vm654, %v690, %v691
        %v693 = vrot.slane %v629, 1
        %v694 = vsel %vm654, %v691, %v693
        %v711 = vadd.f32 %v588, %v657
        %v712 = vadd.f32 %v589, %v659
        %v713 = vadd.f32 %v590, %v662
        %v714 = vadd.f32 %v591, %v664
        %v715 = vadd.f32 %v592, %v667
        %v716 = vadd.f32 %v593, %v669
        %v717 = vadd.f32 %v594, %v672
        %v718 = vadd.f32 %v595, %v674
        %v719 = vadd.f32 %v596, %v677
        %v720 = vadd.f32 %v597, %v679
        %v721 = vadd.f32 %v598, %v682
        %v722 = vadd.f32 %v599, %v684
        %v723 = vadd.f32 %v600, %v687
        %v724 = vadd.f32 %v601, %v689
        %v725 = vadd.f32 %v602, %v692
        %v726 = vadd.f32 %v603, %v694
        %v727 = vld [vmem:[%s1 + $0x2] sm:$0x1]
        %v728 = vperm.slane %v727, 0
        %v729 = vmul.f32 %v546, %v728
        %v730 = vmul.f32 %v547, %v728
        %v731 = vmul.f32 %v548, %v728
        %v732 = vmul.f32 %v549, %v728
        %v733 = vmul.f32 %v550, %v728
        %v734 = vmul.f32 %v551, %v728
        %v735 = vmul.f32 %v552, %v728
        %v736 = vmul.f32 %v553, %v728
        %v737 = vmul.f32 %v554, %v728
        %v738 = vmul.f32 %v555, %v728
        %v739 = vmul.f32 %v556, %v728
        %v740 = vmul.f32 %v557, %v728
        %v741 = vmul.f32 %v558, %v728
        %v742 = vmul.f32 %v559, %v728
        %v743 = vmul.f32 %v560, %v728
        %v744 = vmul.f32 %v561, %v728
        %v745 = vmul.f32 %v562, %v728
        %v746 = vmul.f32 %v563, %v728
        %v747 = vmul.f32 %v564, %v728
        %v748 = vmul.f32 %v565, %v728
        %v749 = vmul.f32 %v566, %v728
        %v750 = vmul.f32 %v567, %v728
        %v751 = vmul.f32 %v568, %v728
        %v752 = vmul.f32 %v569, %v728
        %vm777 = vcmask 1045504
        %v778 = vrot.slane %v729, 2
        %v779 = vrot.slane %v730, 2
        %v780 = vsel %vm777, %v778, %v779
        %v781 = vrot.slane %v731, 2
        %v782 = vsel %vm777, %v779, %v781
        %v783 = vrot.slane %v732, 2
        %v784 = vrot.slane %v733, 2
        %v785 = vsel %vm777, %v783, %v784
        %v786 = vrot.slane %v734, 2
        %v787 = vsel %vm777, %v784, %v786
        %v788 = vrot.slane %v735, 2
        %v789 = vrot.slane %v736, 2
        %v790 = vsel %vm777, %v788, %v789
        %v791 = vrot.slane %v737, 2
        %v792 = vsel %vm777, %v789, %v791
        %v793 = vrot.slane %v738, 2
        %v794 = vrot.slane %v739, 2
        %v795 = vsel %vm777, %v793, %v794
        %v796 = vrot.slane %v740, 2
        %v797 = vsel %vm777, %v794, %v796
        %v798 = vrot.slane %v741, 2
        %v799 = vrot.slane %v742, 2
        %v800 = vsel %vm777, %v798, %v799
        %v801 = vrot.slane %v743, 2
        %v802 = vsel %vm777, %v799, %v801
        %v803 = vrot.slane %v744, 2
        %v804 = vrot.slane %v745, 2
        %v805 = vsel %vm777, %v803, %v804
        %v806 = vrot.slane %v746, 2
        %v807 = vsel %vm777, %v804, %v806
        %v808 = vrot.slane %v747, 2
        %v809 = vrot.slane %v748, 2
        %v810 = vsel %vm777, %v808, %v809
        %v811 = vrot.slane %v749, 2
        %v812 = vsel %vm777, %v809, %v811
        %v813 = vrot.slane %v750, 2
        %v814 = vrot.slane %v751, 2
        %v815 = vsel %vm777, %v813, %v814
        %v816 = vrot.slane %v752, 2
        %v817 = vsel %vm777, %v814, %v816
        %v834 = vadd.f32 %v711, %v780
        %v835 = vadd.f32 %v712, %v782
        %v836 = vadd.f32 %v713, %v785
        %v837 = vadd.f32 %v714, %v787
        %v838 = vadd.f32 %v715, %v790
        %v839 = vadd.f32 %v716, %v792
        %v840 = vadd.f32 %v717, %v795
        %v841 = vadd.f32 %v718, %v797
        %v842 = vadd.f32 %v719, %v800
        %v843 = vadd.f32 %v720, %v802
        %v844 = vadd.f32 %v721, %v805
        %v845 = vadd.f32 %v722, %v807
        %v846 = vadd.f32 %v723, %v810
        %v847 = vadd.f32 %v724, %v812
        %v848 = vadd.f32 %v725, %v815
        %v849 = vadd.f32 %v726, %v817
        %v850 = vld [vmem:[%s1 + $0x3] sm:$0x1]
        %v851 = vperm.slane %v850, 0
        %v852 = vmul.f32 %v546, %v851
        %v853 = vmul.f32 %v547, %v851
        %v854 = vmul.f32 %v548, %v851
        %v855 = vmul.f32 %v549, %v851
        %v856 = vmul.f32 %v550, %v851
        %v857 = vmul.f32 %v551, %v851
        %v858 = vmul.f32 %v552, %v851
        %v859 = vmul.f32 %v553, %v851
        %v860 = vmul.f32 %v554, %v851
        %v861 = vmul.f32 %v555, %v851
        %v862 = vmul.f32 %v556, %v851
        %v863 = vmul.f32 %v557, %v851
        %v864 = vmul.f32 %v558, %v851
        %v865 = vmul.f32 %v559, %v851
        %v866 = vmul.f32 %v560, %v851
        %v867 = vmul.f32 %v561, %v851
        %v868 = vmul.f32 %v562, %v851
        %v869 = vmul.f32 %v563, %v851
        %v870 = vmul.f32 %v564, %v851
        %v871 = vmul.f32 %v565, %v851
        %v872 = vmul.f32 %v566, %v851
        %v873 = vmul.f32 %v567, %v851
        %v874 = vmul.f32 %v568, %v851
        %v875 = vmul.f32 %v569, %v851
        %vm900 = vcmask 1044480
        %v901 = vrot.slane %v852, 3
        %v902 = vrot.slane %v853, 3
        %v903 = vsel %vm900, %v901, %v902
        %v904 = vrot.slane %v854, 3
        %v905 = vsel %vm900, %v902, %v904
        %v906 = vrot.slane %v855, 3
        %v907 = vrot.slane %v856, 3
        %v908 = vsel %vm900, %v906, %v907
        %v909 = vrot.slane %v857, 3
        %v910 = vsel %vm900, %v907, %v909
        %v911 = vrot.slane %v858, 3
        %v912 = vrot.slane %v859, 3
        %v913 = vsel %vm900, %v911, %v912
        %v914 = vrot.slane %v860, 3
        %v915 = vsel %vm900, %v912, %v914
        %v916 = vrot.slane %v861, 3
        %v917 = vrot.slane %v862, 3
        %v918 = vsel %vm900, %v916, %v917
        %v919 = vrot.slane %v863, 3
        %v920 = vsel %vm900, %v917, %v919
        %v921 = vrot.slane %v864, 3
        %v922 = vrot.slane %v865, 3
        %v923 = vsel %vm900, %v921, %v922
        %v924 = vrot.slane %v866, 3
        %v925 = vsel %vm900, %v922, %v924
        %v926 = vrot.slane %v867, 3
        %v927 = vrot.slane %v868, 3
        %v928 = vsel %vm900, %v926, %v927
        %v929 = vrot.slane %v869, 3
        %v930 = vsel %vm900, %v927, %v929
        %v931 = vrot.slane %v870, 3
        %v932 = vrot.slane %v871, 3
        %v933 = vsel %vm900, %v931, %v932
        %v934 = vrot.slane %v872, 3
        %v935 = vsel %vm900, %v932, %v934
        %v936 = vrot.slane %v873, 3
        %v937 = vrot.slane %v874, 3
        %v938 = vsel %vm900, %v936, %v937
        %v939 = vrot.slane %v875, 3
        %v940 = vsel %vm900, %v937, %v939
        %v957 = vadd.f32 %v834, %v903
        %v958 = vadd.f32 %v835, %v905
        %v959 = vadd.f32 %v836, %v908
        %v960 = vadd.f32 %v837, %v910
        %v961 = vadd.f32 %v838, %v913
        %v962 = vadd.f32 %v839, %v915
        %v963 = vadd.f32 %v840, %v918
        %v964 = vadd.f32 %v841, %v920
        %v965 = vadd.f32 %v842, %v923
        %v966 = vadd.f32 %v843, %v925
        %v967 = vadd.f32 %v844, %v928
        %v968 = vadd.f32 %v845, %v930
        %v969 = vadd.f32 %v846, %v933
        %v970 = vadd.f32 %v847, %v935
        %v971 = vadd.f32 %v848, %v938
        %v972 = vadd.f32 %v849, %v940
        %v973 = vld [vmem:[%s1 + $0x4] sm:$0x1]
        %v974 = vperm.slane %v973, 0
        %v975 = vmul.f32 %v546, %v974
        %v976 = vmul.f32 %v547, %v974
        %v977 = vmul.f32 %v548, %v974
        %v978 = vmul.f32 %v549, %v974
        %v979 = vmul.f32 %v550, %v974
        %v980 = vmul.f32 %v551, %v974
        %v981 = vmul.f32 %v552, %v974
        %v982 = vmul.f32 %v553, %v974
        %v983 = vmul.f32 %v554, %v974
        %v984 = vmul.f32 %v555, %v974
        %v985 = vmul.f32 %v556, %v974
        %v986 = vmul.f32 %v557, %v974
        %v987 = vmul.f32 %v558, %v974
        %v988 = vmul.f32 %v559, %v974
        %v989 = vmul.f32 %v560, %v974
        %v990 = vmul.f32 %v561, %v974
        %v991 = vmul.f32 %v562, %v974
        %v992 = vmul.f32 %v563, %v974
        %v993 = vmul.f32 %v564, %v974
        %v994 = vmul.f32 %v565, %v974
        %v995 = vmul.f32 %v566, %v974
        %v996 = vmul.f32 %v567, %v974
        %v997 = vmul.f32 %v568, %v974
        %v998 = vmul.f32 %v569, %v974
        %vm1023 = vcmask 1043456
        %v1024 = vrot.slane %v975, 4
        %v1025 = vrot.slane %v976, 4
        %v1026 = vsel %vm1023, %v1024, %v1025
        %v1027 = vrot.slane %v977, 4
        %v1028 = vsel %vm1023, %v1025, %v1027
        %v1029 = vrot.slane %v978, 4
        %v1030 = vrot.slane %v979, 4
        %v1031 = vsel %vm1023, %v1029, %v1030
        %v1032 = vrot.slane %v980, 4
        %v1033 = vsel %vm1023, %v1030, %v1032
        %v1034 = vrot.slane %v981, 4
        %v1035 = vrot.slane %v982, 4
        %v1036 = vsel %vm1023, %v1034, %v1035
        %v1037 = vrot.slane %v983, 4
        %v1038 = vsel %vm1023, %v1035, %v1037
        %v1039 = vrot.slane %v984, 4
        %v1040 = vrot.slane %v985, 4
        %v1041 = vsel %vm1023, %v1039, %v1040
        %v1042 = vrot.slane %v986, 4
        %v1043 = vsel %vm1023, %v1040, %v1042
        %v1044 = vrot.slane %v987, 4
        %v1045 = vrot.slane %v988, 4
        %v1046 = vsel %vm1023, %v1044, %v1045
        %v1047 = vrot.slane %v989, 4
        %v1048 = vsel %vm1023, %v1045, %v1047
        %v1049 = vrot.slane %v990, 4
        %v1050 = vrot.slane %v991, 4
        %v1051 = vsel %vm1023, %v1049, %v1050
        %v1052 = vrot.slane %v992, 4
        %v1053 = vsel %vm1023, %v1050, %v1052
        %v1054 = vrot.slane %v993, 4
        %v1055 = vrot.slane %v994, 4
        %v1056 = vsel %vm1023, %v1054, %v1055
        %v1057 = vrot.slane %v995, 4
        %v1058 = vsel %vm1023, %v1055, %v1057
        %v1059 = vrot.slane %v996, 4
        %v1060 = vrot.slane %v997, 4
        %v1061 = vsel %vm1023, %v1059, %v1060
        %v1062 = vrot.slane %v998, 4
        %v1063 = vsel %vm1023, %v1060, %v1062
        %v1080 = vadd.f32 %v957, %v1026
        %v1081 = vadd.f32 %v958, %v1028
        %v1082 = vadd.f32 %v959, %v1031
        %v1083 = vadd.f32 %v960, %v1033
        %v1084 = vadd.f32 %v961, %v1036
        %v1085 = vadd.f32 %v962, %v1038
        %v1086 = vadd.f32 %v963, %v1041
        %v1087 = vadd.f32 %v964, %v1043
        %v1088 = vadd.f32 %v965, %v1046
        %v1089 = vadd.f32 %v966, %v1048
        %v1090 = vadd.f32 %v967, %v1051
        %v1091 = vadd.f32 %v968, %v1053
        %v1092 = vadd.f32 %v969, %v1056
        %v1093 = vadd.f32 %v970, %v1058
        %v1094 = vadd.f32 %v971, %v1061
        %v1095 = vadd.f32 %v972, %v1063
        %v1096 = vld [vmem:[%s1 + $0x5] sm:$0x1]
        %v1097 = vperm.slane %v1096, 0
        %v1098 = vmul.f32 %v546, %v1097
        %v1099 = vmul.f32 %v547, %v1097
        %v1100 = vmul.f32 %v548, %v1097
        %v1101 = vmul.f32 %v549, %v1097
        %v1102 = vmul.f32 %v550, %v1097
        %v1103 = vmul.f32 %v551, %v1097
        %v1104 = vmul.f32 %v552, %v1097
        %v1105 = vmul.f32 %v553, %v1097
        %v1106 = vmul.f32 %v554, %v1097
        %v1107 = vmul.f32 %v555, %v1097
        %v1108 = vmul.f32 %v556, %v1097
        %v1109 = vmul.f32 %v557, %v1097
        %v1110 = vmul.f32 %v558, %v1097
        %v1111 = vmul.f32 %v559, %v1097
        %v1112 = vmul.f32 %v560, %v1097
        %v1113 = vmul.f32 %v561, %v1097
        %v1114 = vmul.f32 %v562, %v1097
        %v1115 = vmul.f32 %v563, %v1097
        %v1116 = vmul.f32 %v564, %v1097
        %v1117 = vmul.f32 %v565, %v1097
        %v1118 = vmul.f32 %v566, %v1097
        %v1119 = vmul.f32 %v567, %v1097
        %v1120 = vmul.f32 %v568, %v1097
        %v1121 = vmul.f32 %v569, %v1097
        %vm1146 = vcmask 1042432
        %v1147 = vrot.slane %v1098, 5
        %v1148 = vrot.slane %v1099, 5
        %v1149 = vsel %vm1146, %v1147, %v1148
        %v1150 = vrot.slane %v1100, 5
        %v1151 = vsel %vm1146, %v1148, %v1150
        %v1152 = vrot.slane %v1101, 5
        %v1153 = vrot.slane %v1102, 5
        %v1154 = vsel %vm1146, %v1152, %v1153
        %v1155 = vrot.slane %v1103, 5
        %v1156 = vsel %vm1146, %v1153, %v1155
        %v1157 = vrot.slane %v1104, 5
        %v1158 = vrot.slane %v1105, 5
        %v1159 = vsel %vm1146, %v1157, %v1158
        %v1160 = vrot.slane %v1106, 5
        %v1161 = vsel %vm1146, %v1158, %v1160
        %v1162 = vrot.slane %v1107, 5
        %v1163 = vrot.slane %v1108, 5
        %v1164 = vsel %vm1146, %v1162, %v1163
        %v1165 = vrot.slane %v1109, 5
        %v1166 = vsel %vm1146, %v1163, %v1165
        %v1167 = vrot.slane %v1110, 5
        %v1168 = vrot.slane %v1111, 5
        %v1169 = vsel %vm1146, %v1167, %v1168
        %v1170 = vrot.slane %v1112, 5
        %v1171 = vsel %vm1146, %v1168, %v1170
        %v1172 = vrot.slane %v1113, 5
        %v1173 = vrot.slane %v1114, 5
        %v1174 = vsel %vm1146, %v1172, %v1173
        %v1175 = vrot.slane %v1115, 5
        %v1176 = vsel %vm1146, %v1173, %v1175
        %v1177 = vrot.slane %v1116, 5
        %v1178 = vrot.slane %v1117, 5
        %v1179 = vsel %vm1146, %v1177, %v1178
        %v1180 = vrot.slane %v1118, 5
        %v1181 = vsel %vm1146, %v1178, %v1180
        %v1182 = vrot.slane %v1119, 5
        %v1183 = vrot.slane %v1120, 5
        %v1184 = vsel %vm1146, %v1182, %v1183
        %v1185 = vrot.slane %v1121, 5
        %v1186 = vsel %vm1146, %v1183, %v1185
        %v1203 = vadd.f32 %v1080, %v1149
        %v1204 = vadd.f32 %v1081, %v1151
        %v1205 = vadd.f32 %v1082, %v1154
        %v1206 = vadd.f32 %v1083, %v1156
        %v1207 = vadd.f32 %v1084, %v1159
        %v1208 = vadd.f32 %v1085, %v1161
        %v1209 = vadd.f32 %v1086, %v1164
        %v1210 = vadd.f32 %v1087, %v1166
        %v1211 = vadd.f32 %v1088, %v1169
        %v1212 = vadd.f32 %v1089, %v1171
        %v1213 = vadd.f32 %v1090, %v1174
        %v1214 = vadd.f32 %v1091, %v1176
        %v1215 = vadd.f32 %v1092, %v1179
        %v1216 = vadd.f32 %v1093, %v1181
        %v1217 = vadd.f32 %v1094, %v1184
        %v1218 = vadd.f32 %v1095, %v1186
        %v1219 = vld [vmem:[%s1 + $0x6] sm:$0x1]
        %v1220 = vperm.slane %v1219, 0
        %v1221 = vmul.f32 %v546, %v1220
        %v1222 = vmul.f32 %v547, %v1220
        %v1223 = vmul.f32 %v548, %v1220
        %v1224 = vmul.f32 %v549, %v1220
        %v1225 = vmul.f32 %v550, %v1220
        %v1226 = vmul.f32 %v551, %v1220
        %v1227 = vmul.f32 %v552, %v1220
        %v1228 = vmul.f32 %v553, %v1220
        %v1229 = vmul.f32 %v554, %v1220
        %v1230 = vmul.f32 %v555, %v1220
        %v1231 = vmul.f32 %v556, %v1220
        %v1232 = vmul.f32 %v557, %v1220
        %v1233 = vmul.f32 %v558, %v1220
        %v1234 = vmul.f32 %v559, %v1220
        %v1235 = vmul.f32 %v560, %v1220
        %v1236 = vmul.f32 %v561, %v1220
        %v1237 = vmul.f32 %v562, %v1220
        %v1238 = vmul.f32 %v563, %v1220
        %v1239 = vmul.f32 %v564, %v1220
        %v1240 = vmul.f32 %v565, %v1220
        %v1241 = vmul.f32 %v566, %v1220
        %v1242 = vmul.f32 %v567, %v1220
        %v1243 = vmul.f32 %v568, %v1220
        %v1244 = vmul.f32 %v569, %v1220
        %vm1269 = vcmask 1041408
        %v1270 = vrot.slane %v1221, 6
        %v1271 = vrot.slane %v1222, 6
        %v1272 = vsel %vm1269, %v1270, %v1271
        %v1273 = vrot.slane %v1223, 6
        %v1274 = vsel %vm1269, %v1271, %v1273
        %v1275 = vrot.slane %v1224, 6
        %v1276 = vrot.slane %v1225, 6
        %v1277 = vsel %vm1269, %v1275, %v1276
        %v1278 = vrot.slane %v1226, 6
        %v1279 = vsel %vm1269, %v1276, %v1278
        %v1280 = vrot.slane %v1227, 6
        %v1281 = vrot.slane %v1228, 6
        %v1282 = vsel %vm1269, %v1280, %v1281
        %v1283 = vrot.slane %v1229, 6
        %v1284 = vsel %vm1269, %v1281, %v1283
        %v1285 = vrot.slane %v1230, 6
        %v1286 = vrot.slane %v1231, 6
        %v1287 = vsel %vm1269, %v1285, %v1286
        %v1288 = vrot.slane %v1232, 6
        %v1289 = vsel %vm1269, %v1286, %v1288
        %v1290 = vrot.slane %v1233, 6
        %v1291 = vrot.slane %v1234, 6
        %v1292 = vsel %vm1269, %v1290, %v1291
        %v1293 = vrot.slane %v1235, 6
        %v1294 = vsel %vm1269, %v1291, %v1293
        %v1295 = vrot.slane %v1236, 6
        %v1296 = vrot.slane %v1237, 6
        %v1297 = vsel %vm1269, %v1295, %v1296
        %v1298 = vrot.slane %v1238, 6
        %v1299 = vsel %vm1269, %v1296, %v1298
        %v1300 = vrot.slane %v1239, 6
        %v1301 = vrot.slane %v1240, 6
        %v1302 = vsel %vm1269, %v1300, %v1301
        %v1303 = vrot.slane %v1241, 6
        %v1304 = vsel %vm1269, %v1301, %v1303
        %v1305 = vrot.slane %v1242, 6
        %v1306 = vrot.slane %v1243, 6
        %v1307 = vsel %vm1269, %v1305, %v1306
        %v1308 = vrot.slane %v1244, 6
        %v1309 = vsel %vm1269, %v1306, %v1308
        %v1326 = vadd.f32 %v1203, %v1272
        %v1327 = vadd.f32 %v1204, %v1274
        %v1328 = vadd.f32 %v1205, %v1277
        %v1329 = vadd.f32 %v1206, %v1279
        %v1330 = vadd.f32 %v1207, %v1282
        %v1331 = vadd.f32 %v1208, %v1284
        %v1332 = vadd.f32 %v1209, %v1287
        %v1333 = vadd.f32 %v1210, %v1289
        %v1334 = vadd.f32 %v1211, %v1292
        %v1335 = vadd.f32 %v1212, %v1294
        %v1336 = vadd.f32 %v1213, %v1297
        %v1337 = vadd.f32 %v1214, %v1299
        %v1338 = vadd.f32 %v1215, %v1302
        %v1339 = vadd.f32 %v1216, %v1304
        %v1340 = vadd.f32 %v1217, %v1307
        %v1341 = vadd.f32 %v1218, %v1309
        %s1342 = scalar_lea.vmem [#allocation3], 24
        %v1343 = vld [vmem:[%s1342] sm:$0xff]
        %v1344 = vld [vmem:[%s1342 + $0x8] sm:$0xff]
        %v1345 = vld [vmem:[%s1342 + $0x10] sm:$0x3f]
        %v1346 = vld [vmem:[%s1342 + $0x18] sm:$0xff]
        %v1347 = vld [vmem:[%s1342 + $0x20] sm:$0xff]
        %v1348 = vld [vmem:[%s1342 + $0x28] sm:$0x3f]
        %v1349 = vld [vmem:[%s1342 + $0x30] sm:$0xff]
        %v1350 = vld [vmem:[%s1342 + $0x38] sm:$0xff]
        %v1351 = vld [vmem:[%s1342 + $0x40] sm:$0x3f]
        %v1352 = vld [vmem:[%s1342 + $0x48] sm:$0xff]
        %v1353 = vld [vmem:[%s1342 + $0x50] sm:$0xff]
        %v1354 = vld [vmem:[%s1342 + $0x58] sm:$0x3f]
        %v1355 = vld [vmem:[%s1342 + $0x60] sm:$0xff]
        %v1356 = vld [vmem:[%s1342 + $0x68] sm:$0xff]
        %v1357 = vld [vmem:[%s1342 + $0x70] sm:$0x3f]
        %v1358 = vld [vmem:[%s1342 + $0x78] sm:$0xff]
        %v1359 = vld [vmem:[%s1342 + $0x80] sm:$0xff]
        %v1360 = vld [vmem:[%s1342 + $0x88] sm:$0x3f]
        %v1361 = vld [vmem:[%s1342 + $0x90] sm:$0xff]
        %v1362 = vld [vmem:[%s1342 + $0x98] sm:$0xff]
        %v1363 = vld [vmem:[%s1342 + $0xa0] sm:$0x3f]
        %v1364 = vld [vmem:[%s1342 + $0xa8] sm:$0xff]
        %v1365 = vld [vmem:[%s1342 + $0xb0] sm:$0xff]
        %v1366 = vld [vmem:[%s1342 + $0xb8] sm:$0x3f]
        %v1367 = vld [vmem:[%s1 + $0x7] sm:$0x1]
        %v1368 = vperm.slane %v1367, 0
        %v1369 = vmul.f32 %v1343, %v1368
        %v1370 = vmul.f32 %v1344, %v1368
        %v1371 = vmul.f32 %v1346, %v1368
        %v1372 = vmul.f32 %v1347, %v1368
        %v1373 = vmul.f32 %v1349, %v1368
        %v1374 = vmul.f32 %v1350, %v1368
        %v1375 = vmul.f32 %v1352, %v1368
        %v1376 = vmul.f32 %v1353, %v1368
        %v1377 = vmul.f32 %v1355, %v1368
        %v1378 = vmul.f32 %v1356, %v1368
        %v1379 = vmul.f32 %v1358, %v1368
        %v1380 = vmul.f32 %v1359, %v1368
        %v1381 = vmul.f32 %v1361, %v1368
        %v1382 = vmul.f32 %v1362, %v1368
        %v1383 = vmul.f32 %v1364, %v1368
        %v1384 = vmul.f32 %v1365, %v1368
        %v1385 = vadd.f32 %v1326, %v1369
        %v1386 = vadd.f32 %v1327, %v1370
        %v1387 = vadd.f32 %v1328, %v1371
        %v1388 = vadd.f32 %v1329, %v1372
        %v1389 = vadd.f32 %v1330, %v1373
        %v1390 = vadd.f32 %v1331, %v1374
        %v1391 = vadd.f32 %v1332, %v1375
        %v1392 = vadd.f32 %v1333, %v1376
        %v1393 = vadd.f32 %v1334, %v1377
        %v1394 = vadd.f32 %v1335, %v1378
        %v1395 = vadd.f32 %v1336, %v1379
        %v1396 = vadd.f32 %v1337, %v1380
        %v1397 = vadd.f32 %v1338, %v1381
        %v1398 = vadd.f32 %v1339, %v1382
        %v1399 = vadd.f32 %v1340, %v1383
        %v1400 = vadd.f32 %v1341, %v1384
        %v1401 = vld [vmem:[%s1 + $0x8] sm:$0x1]
        %v1402 = vperm.slane %v1401, 0
        %v1403 = vmul.f32 %v1343, %v1402
        %v1404 = vmul.f32 %v1344, %v1402
        %v1405 = vmul.f32 %v1345, %v1402
        %v1406 = vmul.f32 %v1346, %v1402
        %v1407 = vmul.f32 %v1347, %v1402
        %v1408 = vmul.f32 %v1348, %v1402
        %v1409 = vmul.f32 %v1349, %v1402
        %v1410 = vmul.f32 %v1350, %v1402
        %v1411 = vmul.f32 %v1351, %v1402
        %v1412 = vmul.f32 %v1352, %v1402
        %v1413 = vmul.f32 %v1353, %v1402
        %v1414 = vmul.f32 %v1354, %v1402
        %v1415 = vmul.f32 %v1355, %v1402
        %v1416 = vmul.f32 %v1356, %v1402
        %v1417 = vmul.f32 %v1357, %v1402
        %v1418 = vmul.f32 %v1358, %v1402
        %v1419 = vmul.f32 %v1359, %v1402
        %v1420 = vmul.f32 %v1360, %v1402
        %v1421 = vmul.f32 %v1361, %v1402
        %v1422 = vmul.f32 %v1362, %v1402
        %v1423 = vmul.f32 %v1363, %v1402
        %v1424 = vmul.f32 %v1364, %v1402
        %v1425 = vmul.f32 %v1365, %v1402
        %v1426 = vmul.f32 %v1366, %v1402
        %v1451 = vrot.slane %v1403, 1
        %v1452 = vrot.slane %v1404, 1
        %v1453 = vsel %vm654, %v1451, %v1452
        %v1454 = vrot.slane %v1405, 1
        %v1455 = vsel %vm654, %v1452, %v1454
        %v1456 = vrot.slane %v1406, 1
        %v1457 = vrot.slane %v1407, 1
        %v1458 = vsel %vm654, %v1456, %v1457
        %v1459 = vrot.slane %v1408, 1
        %v1460 = vsel %vm654, %v1457, %v1459
        %v1461 = vrot.slane %v1409, 1
        %v1462 = vrot.slane %v1410, 1
        %v1463 = vsel %vm654, %v1461, %v1462
        %v1464 = vrot.slane %v1411, 1
        %v1465 = vsel %vm654, %v1462, %v1464
        %v1466 = vrot.slane %v1412, 1
        %v1467 = vrot.slane %v1413, 1
        %v1468 = vsel %vm654, %v1466, %v1467
        %v1469 = vrot.slane %v1414, 1
        %v1470 = vsel %vm654, %v1467, %v1469
        %v1471 = vrot.slane %v1415, 1
        %v1472 = vrot.slane %v1416, 1
        %v1473 = vsel %vm654, %v1471, %v1472
        %v1474 = vrot.slane %v1417, 1
        %v1475 = vsel %vm654, %v1472, %v1474
        %v1476 = vrot.slane %v1418, 1
        %v1477 = vrot.slane %v1419, 1
        %v1478 = vsel %vm654, %v1476, %v1477
        %v1479 = vrot.slane %v1420, 1
        %v1480 = vsel %vm654, %v1477, %v1479
        %v1481 = vrot.slane %v1421, 1
        %v1482 = vrot.slane %v1422, 1
        %v1483 = vsel %vm654, %v1481, %v1482
        %v1484 = vrot.slane %v1423, 1
        %v1485 = vsel %vm654, %v1482, %v1484
        %v1486 = vrot.slane %v1424, 1
        %v1487 = vrot.slane %v1425, 1
        %v1488 = vsel %vm654, %v1486, %v1487
        %v1489 = vrot.slane %v1426, 1
        %v1490 = vsel %vm654, %v1487, %v1489
        %v1507 = vadd.f32 %v1385, %v1453
        %v1508 = vadd.f32 %v1386, %v1455
        %v1509 = vadd.f32 %v1387, %v1458
        %v1510 = vadd.f32 %v1388, %v1460
        %v1511 = vadd.f32 %v1389, %v1463
        %v1512 = vadd.f32 %v1390, %v1465
        %v1513 = vadd.f32 %v1391, %v1468
        %v1514 = vadd.f32 %v1392, %v1470
        %v1515 = vadd.f32 %v1393, %v1473
        %v1516 = vadd.f32 %v1394, %v1475
        %v1517 = vadd.f32 %v1395, %v1478
        %v1518 = vadd.f32 %v1396, %v1480
        %v1519 = vadd.f32 %v1397, %v1483
        %v1520 = vadd.f32 %v1398, %v1485
        %v1521 = vadd.f32 %v1399, %v1488
        %v1522 = vadd.f32 %v1400, %v1490
        %v1523 = vld [vmem:[%s1 + $0x9] sm:$0x1]
        %v1524 = vperm.slane %v1523, 0
        %v1525 = vmul.f32 %v1343, %v1524
        %v1526 = vmul.f32 %v1344, %v1524
        %v1527 = vmul.f32 %v1345, %v1524
        %v1528 = vmul.f32 %v1346, %v1524
        %v1529 = vmul.f32 %v1347, %v1524
        %v1530 = vmul.f32 %v1348, %v1524
        %v1531 = vmul.f32 %v1349, %v1524
        %v1532 = vmul.f32 %v1350, %v1524
        %v1533 = vmul.f32 %v1351, %v1524
        %v1534 = vmul.f32 %v1352, %v1524
        %v1535 = vmul.f32 %v1353, %v1524
        %v1536 = vmul.f32 %v1354, %v1524
        %v1537 = vmul.f32 %v1355, %v1524
        %v1538 = vmul.f32 %v1356, %v1524
        %v1539 = vmul.f32 %v1357, %v1524
        %v1540 = vmul.f32 %v1358, %v1524
        %v1541 = vmul.f32 %v1359, %v1524
        %v1542 = vmul.f32 %v1360, %v1524
        %v1543 = vmul.f32 %v1361, %v1524
        %v1544 = vmul.f32 %v1362, %v1524
        %v1545 = vmul.f32 %v1363, %v1524
        %v1546 = vmul.f32 %v1364, %v1524
        %v1547 = vmul.f32 %v1365, %v1524
        %v1548 = vmul.f32 %v1366, %v1524
        %v1573 = vrot.slane %v1525, 2
        %v1574 = vrot.slane %v1526, 2
        %v1575 = vsel %vm777, %v1573, %v1574
        %v1576 = vrot.slane %v1527, 2
        %v1577 = vsel %vm777, %v1574, %v1576
        %v1578 = vrot.slane %v1528, 2
        %v1579 = vrot.slane %v1529, 2
        %v1580 = vsel %vm777, %v1578, %v1579
        %v1581 = vrot.slane %v1530, 2
        %v1582 = vsel %vm777, %v1579, %v1581
        %v1583 = vrot.slane %v1531, 2
        %v1584 = vrot.slane %v1532, 2
        %v1585 = vsel %vm777, %v1583, %v1584
        %v1586 = vrot.slane %v1533, 2
        %v1587 = vsel %vm777, %v1584, %v1586
        %v1588 = vrot.slane %v1534, 2
        %v1589 = vrot.slane %v1535, 2
        %v1590 = vsel %vm777, %v1588, %v1589
        %v1591 = vrot.slane %v1536, 2
        %v1592 = vsel %vm777, %v1589, %v1591
        %v1593 = vrot.slane %v1537, 2
        %v1594 = vrot.slane %v1538, 2
        %v1595 = vsel %vm777, %v1593, %v1594
        %v1596 = vrot.slane %v1539, 2
        %v1597 = vsel %vm777, %v1594, %v1596
        %v1598 = vrot.slane %v1540, 2
        %v1599 = vrot.slane %v1541, 2
        %v1600 = vsel %vm777, %v1598, %v1599
        %v1601 = vrot.slane %v1542, 2
        %v1602 = vsel %vm777, %v1599, %v1601
        %v1603 = vrot.slane %v1543, 2
        %v1604 = vrot.slane %v1544, 2
        %v1605 = vsel %vm777, %v1603, %v1604
        %v1606 = vrot.slane %v1545, 2
        %v1607 = vsel %vm777, %v1604, %v1606
        %v1608 = vrot.slane %v1546, 2
        %v1609 = vrot.slane %v1547, 2
        %v1610 = vsel %vm777, %v1608, %v1609
        %v1611 = vrot.slane %v1548, 2
        %v1612 = vsel %vm777, %v1609, %v1611
        %v1629 = vadd.f32 %v1507, %v1575
        %v1630 = vadd.f32 %v1508, %v1577
        %v1631 = vadd.f32 %v1509, %v1580
        %v1632 = vadd.f32 %v1510, %v1582
        %v1633 = vadd.f32 %v1511, %v1585
        %v1634 = vadd.f32 %v1512, %v1587
        %v1635 = vadd.f32 %v1513, %v1590
        %v1636 = vadd.f32 %v1514, %v1592
        %v1637 = vadd.f32 %v1515, %v1595
        %v1638 = vadd.f32 %v1516, %v1597
        %v1639 = vadd.f32 %v1517, %v1600
        %v1640 = vadd.f32 %v1518, %v1602
        %v1641 = vadd.f32 %v1519, %v1605
        %v1642 = vadd.f32 %v1520, %v1607
        %v1643 = vadd.f32 %v1521, %v1610
        %v1644 = vadd.f32 %v1522, %v1612
        %v1645 = vld [vmem:[%s1 + $0xa] sm:$0x1]
        %v1646 = vperm.slane %v1645, 0
        %v1647 = vmul.f32 %v1343, %v1646
        %v1648 = vmul.f32 %v1344, %v1646
        %v1649 = vmul.f32 %v1345, %v1646
        %v1650 = vmul.f32 %v1346, %v1646
        %v1651 = vmul.f32 %v1347, %v1646
        %v1652 = vmul.f32 %v1348, %v1646
        %v1653 = vmul.f32 %v1349, %v1646
        %v1654 = vmul.f32 %v1350, %v1646
        %v1655 = vmul.f32 %v1351, %v1646
        %v1656 = vmul.f32 %v1352, %v1646
        %v1657 = vmul.f32 %v1353, %v1646
        %v1658 = vmul.f32 %v1354, %v1646
        %v1659 = vmul.f32 %v1355, %v1646
        %v1660 = vmul.f32 %v1356, %v1646
        %v1661 = vmul.f32 %v1357, %v1646
        %v1662 = vmul.f32 %v1358, %v1646
        %v1663 = vmul.f32 %v1359, %v1646
        %v1664 = vmul.f32 %v1360, %v1646
        %v1665 = vmul.f32 %v1361, %v1646
        %v1666 = vmul.f32 %v1362, %v1646
        %v1667 = vmul.f32 %v1363, %v1646
        %v1668 = vmul.f32 %v1364, %v1646
        %v1669 = vmul.f32 %v1365, %v1646
        %v1670 = vmul.f32 %v1366, %v1646
        %v1695 = vrot.slane %v1647, 3
        %v1696 = vrot.slane %v1648, 3
        %v1697 = vsel %vm900, %v1695, %v1696
        %v1698 = vrot.slane %v1649, 3
        %v1699 = vsel %vm900, %v1696, %v1698
        %v1700 = vrot.slane %v1650, 3
        %v1701 = vrot.slane %v1651, 3
        %v1702 = vsel %vm900, %v1700, %v1701
        %v1703 = vrot.slane %v1652, 3
        %v1704 = vsel %vm900, %v1701, %v1703
        %v1705 = vrot.slane %v1653, 3
        %v1706 = vrot.slane %v1654, 3
        %v1707 = vsel %vm900, %v1705, %v1706
        %v1708 = vrot.slane %v1655, 3
        %v1709 = vsel %vm900, %v1706, %v1708
        %v1710 = vrot.slane %v1656, 3
        %v1711 = vrot.slane %v1657, 3
        %v1712 = vsel %vm900, %v1710, %v1711
        %v1713 = vrot.slane %v1658, 3
        %v1714 = vsel %vm900, %v1711, %v1713
        %v1715 = vrot.slane %v1659, 3
        %v1716 = vrot.slane %v1660, 3
        %v1717 = vsel %vm900, %v1715, %v1716
        %v1718 = vrot.slane %v1661, 3
        %v1719 = vsel %vm900, %v1716, %v1718
        %v1720 = vrot.slane %v1662, 3
        %v1721 = vrot.slane %v1663, 3
        %v1722 = vsel %vm900, %v1720, %v1721
        %v1723 = vrot.slane %v1664, 3
        %v1724 = vsel %vm900, %v1721, %v1723
        %v1725 = vrot.slane %v1665, 3
        %v1726 = vrot.slane %v1666, 3
        %v1727 = vsel %vm900, %v1725, %v1726
        %v1728 = vrot.slane %v1667, 3
        %v1729 = vsel %vm900, %v1726, %v1728
        %v1730 = vrot.slane %v1668, 3
        %v1731 = vrot.slane %v1669, 3
        %v1732 = vsel %vm900, %v1730, %v1731
        %v1733 = vrot.slane %v1670, 3
        %v1734 = vsel %vm900, %v1731, %v1733
        %v1751 = vadd.f32 %v1629, %v1697
        %v1752 = vadd.f32 %v1630, %v1699
        %v1753 = vadd.f32 %v1631, %v1702
        %v1754 = vadd.f32 %v1632, %v1704
        %v1755 = vadd.f32 %v1633, %v1707
        %v1756 = vadd.f32 %v1634, %v1709
        %v1757 = vadd.f32 %v1635, %v1712
        %v1758 = vadd.f32 %v1636, %v1714
        %v1759 = vadd.f32 %v1637, %v1717
        %v1760 = vadd.f32 %v1638, %v1719
        %v1761 = vadd.f32 %v1639, %v1722
        %v1762 = vadd.f32 %v1640, %v1724
        %v1763 = vadd.f32 %v1641, %v1727
        %v1764 = vadd.f32 %v1642, %v1729
        %v1765 = vadd.f32 %v1643, %v1732
        %v1766 = vadd.f32 %v1644, %v1734
        %v1767 = vld [vmem:[%s1 + $0xb] sm:$0x1]
        %v1768 = vperm.slane %v1767, 0
        %v1769 = vmul.f32 %v1343, %v1768
        %v1770 = vmul.f32 %v1344, %v1768
        %v1771 = vmul.f32 %v1345, %v1768
        %v1772 = vmul.f32 %v1346, %v1768
        %v1773 = vmul.f32 %v1347, %v1768
        %v1774 = vmul.f32 %v1348, %v1768
        %v1775 = vmul.f32 %v1349, %v1768
        %v1776 = vmul.f32 %v1350, %v1768
        %v1777 = vmul.f32 %v1351, %v1768
        %v1778 = vmul.f32 %v1352, %v1768
        %v1779 = vmul.f32 %v1353, %v1768
        %v1780 = vmul.f32 %v1354, %v1768
        %v1781 = vmul.f32 %v1355, %v1768
        %v1782 = vmul.f32 %v1356, %v1768
        %v1783 = vmul.f32 %v1357, %v1768
        %v1784 = vmul.f32 %v1358, %v1768
        %v1785 = vmul.f32 %v1359, %v1768
        %v1786 = vmul.f32 %v1360, %v1768
        %v1787 = vmul.f32 %v1361, %v1768
        %v1788 = vmul.f32 %v1362, %v1768
        %v1789 = vmul.f32 %v1363, %v1768
        %v1790 = vmul.f32 %v1364, %v1768
        %v1791 = vmul.f32 %v1365, %v1768
        %v1792 = vmul.f32 %v1366, %v1768
        %v1817 = vrot.slane %v1769, 4
        %v1818 = vrot.slane %v1770, 4
        %v1819 = vsel %vm1023, %v1817, %v1818
        %v1820 = vrot.slane %v1771, 4
        %v1821 = vsel %vm1023, %v1818, %v1820
        %v1822 = vrot.slane %v1772, 4
        %v1823 = vrot.slane %v1773, 4
        %v1824 = vsel %vm1023, %v1822, %v1823
        %v1825 = vrot.slane %v1774, 4
        %v1826 = vsel %vm1023, %v1823, %v1825
        %v1827 = vrot.slane %v1775, 4
        %v1828 = vrot.slane %v1776, 4
        %v1829 = vsel %vm1023, %v1827, %v1828
        %v1830 = vrot.slane %v1777, 4
        %v1831 = vsel %vm1023, %v1828, %v1830
        %v1832 = vrot.slane %v1778, 4
        %v1833 = vrot.slane %v1779, 4
        %v1834 = vsel %vm1023, %v1832, %v1833
        %v1835 = vrot.slane %v1780, 4
        %v1836 = vsel %vm1023, %v1833, %v1835
        %v1837 = vrot.slane %v1781, 4
        %v1838 = vrot.slane %v1782, 4
        %v1839 = vsel %vm1023, %v1837, %v1838
        %v1840 = vrot.slane %v1783, 4
        %v1841 = vsel %vm1023, %v1838, %v1840
        %v1842 = vrot.slane %v1784, 4
        %v1843 = vrot.slane %v1785, 4
        %v1844 = vsel %vm1023, %v1842, %v1843
        %v1845 = vrot.slane %v1786, 4
        %v1846 = vsel %vm1023, %v1843, %v1845
        %v1847 = vrot.slane %v1787, 4
        %v1848 = vrot.slane %v1788, 4
        %v1849 = vsel %vm1023, %v1847, %v1848
        %v1850 = vrot.slane %v1789, 4
        %v1851 = vsel %vm1023, %v1848, %v1850
        %v1852 = vrot.slane %v1790, 4
        %v1853 = vrot.slane %v1791, 4
        %v1854 = vsel %vm1023, %v1852, %v1853
        %v1855 = vrot.slane %v1792, 4
        %v1856 = vsel %vm1023, %v1853, %v1855
        %v1873 = vadd.f32 %v1751, %v1819
        %v1874 = vadd.f32 %v1752, %v1821
        %v1875 = vadd.f32 %v1753, %v1824
        %v1876 = vadd.f32 %v1754, %v1826
        %v1877 = vadd.f32 %v1755, %v1829
        %v1878 = vadd.f32 %v1756, %v1831
        %v1879 = vadd.f32 %v1757, %v1834
        %v1880 = vadd.f32 %v1758, %v1836
        %v1881 = vadd.f32 %v1759, %v1839
        %v1882 = vadd.f32 %v1760, %v1841
        %v1883 = vadd.f32 %v1761, %v1844
        %v1884 = vadd.f32 %v1762, %v1846
        %v1885 = vadd.f32 %v1763, %v1849
        %v1886 = vadd.f32 %v1764, %v1851
        %v1887 = vadd.f32 %v1765, %v1854
        %v1888 = vadd.f32 %v1766, %v1856
        %v1889 = vld [vmem:[%s1 + $0xc] sm:$0x1]
        %v1890 = vperm.slane %v1889, 0
        %v1891 = vmul.f32 %v1343, %v1890
        %v1892 = vmul.f32 %v1344, %v1890
        %v1893 = vmul.f32 %v1345, %v1890
        %v1894 = vmul.f32 %v1346, %v1890
        %v1895 = vmul.f32 %v1347, %v1890
        %v1896 = vmul.f32 %v1348, %v1890
        %v1897 = vmul.f32 %v1349, %v1890
        %v1898 = vmul.f32 %v1350, %v1890
        %v1899 = vmul.f32 %v1351, %v1890
        %v1900 = vmul.f32 %v1352, %v1890
        %v1901 = vmul.f32 %v1353, %v1890
        %v1902 = vmul.f32 %v1354, %v1890
        %v1903 = vmul.f32 %v1355, %v1890
        %v1904 = vmul.f32 %v1356, %v1890
        %v1905 = vmul.f32 %v1357, %v1890
        %v1906 = vmul.f32 %v1358, %v1890
        %v1907 = vmul.f32 %v1359, %v1890
        %v1908 = vmul.f32 %v1360, %v1890
        %v1909 = vmul.f32 %v1361, %v1890
        %v1910 = vmul.f32 %v1362, %v1890
        %v1911 = vmul.f32 %v1363, %v1890
        %v1912 = vmul.f32 %v1364, %v1890
        %v1913 = vmul.f32 %v1365, %v1890
        %v1914 = vmul.f32 %v1366, %v1890
        %v1939 = vrot.slane %v1891, 5
        %v1940 = vrot.slane %v1892, 5
        %v1941 = vsel %vm1146, %v1939, %v1940
        %v1942 = vrot.slane %v1893, 5
        %v1943 = vsel %vm1146, %v1940, %v1942
        %v1944 = vrot.slane %v1894, 5
        %v1945 = vrot.slane %v1895, 5
        %v1946 = vsel %vm1146, %v1944, %v1945
        %v1947 = vrot.slane %v1896, 5
        %v1948 = vsel %vm1146, %v1945, %v1947
        %v1949 = vrot.slane %v1897, 5
        %v1950 = vrot.slane %v1898, 5
        %v1951 = vsel %vm1146, %v1949, %v1950
        %v1952 = vrot.slane %v1899, 5
        %v1953 = vsel %vm1146, %v1950, %v1952
        %v1954 = vrot.slane %v1900, 5
        %v1955 = vrot.slane %v1901, 5
        %v1956 = vsel %vm1146, %v1954, %v1955
        %v1957 = vrot.slane %v1902, 5
        %v1958 = vsel %vm1146, %v1955, %v1957
        %v1959 = vrot.slane %v1903, 5
        %v1960 = vrot.slane %v1904, 5
        %v1961 = vsel %vm1146, %v1959, %v1960
        %v1962 = vrot.slane %v1905, 5
        %v1963 = vsel %vm1146, %v1960, %v1962
        %v1964 = vrot.slane %v1906, 5
        %v1965 = vrot.slane %v1907, 5
        %v1966 = vsel %vm1146, %v1964, %v1965
        %v1967 = vrot.slane %v1908, 5
        %v1968 = vsel %vm1146, %v1965, %v1967
        %v1969 = vrot.slane %v1909, 5
        %v1970 = vrot.slane %v1910, 5
        %v1971 = vsel %vm1146, %v1969, %v1970
        %v1972 = vrot.slane %v1911, 5
        %v1973 = vsel %vm1146, %v1970, %v1972
        %v1974 = vrot.slane %v1912, 5
        %v1975 = vrot.slane %v1913, 5
        %v1976 = vsel %vm1146, %v1974, %v1975
        %v1977 = vrot.slane %v1914, 5
        %v1978 = vsel %vm1146, %v1975, %v1977
        %v1995 = vadd.f32 %v1873, %v1941
        %v1996 = vadd.f32 %v1874, %v1943
        %v1997 = vadd.f32 %v1875, %v1946
        %v1998 = vadd.f32 %v1876, %v1948
        %v1999 = vadd.f32 %v1877, %v1951
        %v2000 = vadd.f32 %v1878, %v1953
        %v2001 = vadd.f32 %v1879, %v1956
        %v2002 = vadd.f32 %v1880, %v1958
        %v2003 = vadd.f32 %v1881, %v1961
        %v2004 = vadd.f32 %v1882, %v1963
        %v2005 = vadd.f32 %v1883, %v1966
        %v2006 = vadd.f32 %v1884, %v1968
        %v2007 = vadd.f32 %v1885, %v1971
        %v2008 = vadd.f32 %v1886, %v1973
        %v2009 = vadd.f32 %v1887, %v1976
        %v2010 = vadd.f32 %v1888, %v1978
        %v2011 = vld [vmem:[%s1 + $0xd] sm:$0x1]
        %v2012 = vperm.slane %v2011, 0
        %v2013 = vmul.f32 %v1343, %v2012
        %v2014 = vmul.f32 %v1344, %v2012
        %v2015 = vmul.f32 %v1345, %v2012
        %v2016 = vmul.f32 %v1346, %v2012
        %v2017 = vmul.f32 %v1347, %v2012
        %v2018 = vmul.f32 %v1348, %v2012
        %v2019 = vmul.f32 %v1349, %v2012
        %v2020 = vmul.f32 %v1350, %v2012
        %v2021 = vmul.f32 %v1351, %v2012
        %v2022 = vmul.f32 %v1352, %v2012
        %v2023 = vmul.f32 %v1353, %v2012
        %v2024 = vmul.f32 %v1354, %v2012
        %v2025 = vmul.f32 %v1355, %v2012
        %v2026 = vmul.f32 %v1356, %v2012
        %v2027 = vmul.f32 %v1357, %v2012
        %v2028 = vmul.f32 %v1358, %v2012
        %v2029 = vmul.f32 %v1359, %v2012
        %v2030 = vmul.f32 %v1360, %v2012
        %v2031 = vmul.f32 %v1361, %v2012
        %v2032 = vmul.f32 %v1362, %v2012
        %v2033 = vmul.f32 %v1363, %v2012
        %v2034 = vmul.f32 %v1364, %v2012
        %v2035 = vmul.f32 %v1365, %v2012
        %v2036 = vmul.f32 %v1366, %v2012
        %v2061 = vrot.slane %v2013, 6
        %v2062 = vrot.slane %v2014, 6
        %v2063 = vsel %vm1269, %v2061, %v2062
        %v2064 = vrot.slane %v2015, 6
        %v2065 = vsel %vm1269, %v2062, %v2064
        %v2066 = vrot.slane %v2016, 6
        %v2067 = vrot.slane %v2017, 6
        %v2068 = vsel %vm1269, %v2066, %v2067
        %v2069 = vrot.slane %v2018, 6
        %v2070 = vsel %vm1269, %v2067, %v2069
        %v2071 = vrot.slane %v2019, 6
        %v2072 = vrot.slane %v2020, 6
        %v2073 = vsel %vm1269, %v2071, %v2072
        %v2074 = vrot.slane %v2021, 6
        %v2075 = vsel %vm1269, %v2072, %v2074
        %v2076 = vrot.slane %v2022, 6
        %v2077 = vrot.slane %v2023, 6
        %v2078 = vsel %vm1269, %v2076, %v2077
        %v2079 = vrot.slane %v2024, 6
        %v2080 = vsel %vm1269, %v2077, %v2079
        %v2081 = vrot.slane %v2025, 6
        %v2082 = vrot.slane %v2026, 6
        %v2083 = vsel %vm1269, %v2081, %v2082
        %v2084 = vrot.slane %v2027, 6
        %v2085 = vsel %vm1269, %v2082, %v2084
        %v2086 = vrot.slane %v2028, 6
        %v2087 = vrot.slane %v2029, 6
        %v2088 = vsel %vm1269, %v2086, %v2087
        %v2089 = vrot.slane %v2030, 6
        %v2090 = vsel %vm1269, %v2087, %v2089
        %v2091 = vrot.slane %v2031, 6
        %v2092 = vrot.slane %v2032, 6
        %v2093 = vsel %vm1269, %v2091, %v2092
        %v2094 = vrot.slane %v2033, 6
        %v2095 = vsel %vm1269, %v2092, %v2094
        %v2096 = vrot.slane %v2034, 6
        %v2097 = vrot.slane %v2035, 6
        %v2098 = vsel %vm1269, %v2096, %v2097
        %v2099 = vrot.slane %v2036, 6
        %v2100 = vsel %vm1269, %v2097, %v2099
        %v2117 = vadd.f32 %v1995, %v2063
        %v2118 = vadd.f32 %v1996, %v2065
        %v2119 = vadd.f32 %v1997, %v2068
        %v2120 = vadd.f32 %v1998, %v2070
        %v2121 = vadd.f32 %v1999, %v2073
        %v2122 = vadd.f32 %v2000, %v2075
        %v2123 = vadd.f32 %v2001, %v2078
        %v2124 = vadd.f32 %v2002, %v2080
        %v2125 = vadd.f32 %v2003, %v2083
        %v2126 = vadd.f32 %v2004, %v2085
        %v2127 = vadd.f32 %v2005, %v2088
        %v2128 = vadd.f32 %v2006, %v2090
        %v2129 = vadd.f32 %v2007, %v2093
        %v2130 = vadd.f32 %v2008, %v2095
        %v2131 = vadd.f32 %v2009, %v2098
        %v2132 = vadd.f32 %v2010, %v2100
        %s2133 = scalar_lea.vmem [#allocation3], 48
        %v2134 = vld [vmem:[%s2133] sm:$0xff]
        %v2135 = vld [vmem:[%s2133 + $0x8] sm:$0xff]
        %v2136 = vld [vmem:[%s2133 + $0x10] sm:$0x3f]
        %v2137 = vld [vmem:[%s2133 + $0x18] sm:$0xff]
        %v2138 = vld [vmem:[%s2133 + $0x20] sm:$0xff]
        %v2139 = vld [vmem:[%s2133 + $0x28] sm:$0x3f]
        %v2140 = vld [vmem:[%s2133 + $0x30] sm:$0xff]
        %v2141 = vld [vmem:[%s2133 + $0x38] sm:$0xff]
        %v2142 = vld [vmem:[%s2133 + $0x40] sm:$0x3f]
        %v2143 = vld [vmem:[%s2133 + $0x48] sm:$0xff]
        %v2144 = vld [vmem:[%s2133 + $0x50] sm:$0xff]
        %v2145 = vld [vmem:[%s2133 + $0x58] sm:$0x3f]
        %v2146 = vld [vmem:[%s2133 + $0x60] sm:$0xff]
        %v2147 = vld [vmem:[%s2133 + $0x68] sm:$0xff]
        %v2148 = vld [vmem:[%s2133 + $0x70] sm:$0x3f]
        %v2149 = vld [vmem:[%s2133 + $0x78] sm:$0xff]
        %v2150 = vld [vmem:[%s2133 + $0x80] sm:$0xff]
        %v2151 = vld [vmem:[%s2133 + $0x88] sm:$0x3f]
        %v2152 = vld [vmem:[%s2133 + $0x90] sm:$0xff]
        %v2153 = vld [vmem:[%s2133 + $0x98] sm:$0xff]
        %v2154 = vld [vmem:[%s2133 + $0xa0] sm:$0x3f]
        %v2155 = vld [vmem:[%s2133 + $0xa8] sm:$0xff]
        %v2156 = vld [vmem:[%s2133 + $0xb0] sm:$0xff]
        %v2157 = vld [vmem:[%s2133 + $0xb8] sm:$0x3f]
        %v2158 = vld [vmem:[%s1 + $0xe] sm:$0x1]
        %v2159 = vperm.slane %v2158, 0
        %v2160 = vmul.f32 %v2134, %v2159
        %v2161 = vmul.f32 %v2135, %v2159
        %v2162 = vmul.f32 %v2137, %v2159
        %v2163 = vmul.f32 %v2138, %v2159
        %v2164 = vmul.f32 %v2140, %v2159
        %v2165 = vmul.f32 %v2141, %v2159
        %v2166 = vmul.f32 %v2143, %v2159
        %v2167 = vmul.f32 %v2144, %v2159
        %v2168 = vmul.f32 %v2146, %v2159
        %v2169 = vmul.f32 %v2147, %v2159
        %v2170 = vmul.f32 %v2149, %v2159
        %v2171 = vmul.f32 %v2150, %v2159
        %v2172 = vmul.f32 %v2152, %v2159
        %v2173 = vmul.f32 %v2153, %v2159
        %v2174 = vmul.f32 %v2155, %v2159
        %v2175 = vmul.f32 %v2156, %v2159
        %v2176 = vadd.f32 %v2117, %v2160
        %v2177 = vadd.f32 %v2118, %v2161
        %v2178 = vadd.f32 %v2119, %v2162
        %v2179 = vadd.f32 %v2120, %v2163
        %v2180 = vadd.f32 %v2121, %v2164
        %v2181 = vadd.f32 %v2122, %v2165
        %v2182 = vadd.f32 %v2123, %v2166
        %v2183 = vadd.f32 %v2124, %v2167
        %v2184 = vadd.f32 %v2125, %v2168
        %v2185 = vadd.f32 %v2126, %v2169
        %v2186 = vadd.f32 %v2127, %v2170
        %v2187 = vadd.f32 %v2128, %v2171
        %v2188 = vadd.f32 %v2129, %v2172
        %v2189 = vadd.f32 %v2130, %v2173
        %v2190 = vadd.f32 %v2131, %v2174
        %v2191 = vadd.f32 %v2132, %v2175
        %v2192 = vld [vmem:[%s1 + $0xf] sm:$0x1]
        %v2193 = vperm.slane %v2192, 0
        %v2194 = vmul.f32 %v2134, %v2193
        %v2195 = vmul.f32 %v2135, %v2193
        %v2196 = vmul.f32 %v2136, %v2193
        %v2197 = vmul.f32 %v2137, %v2193
        %v2198 = vmul.f32 %v2138, %v2193
        %v2199 = vmul.f32 %v2139, %v2193
        %v2200 = vmul.f32 %v2140, %v2193
        %v2201 = vmul.f32 %v2141, %v2193
        %v2202 = vmul.f32 %v2142, %v2193
        %v2203 = vmul.f32 %v2143, %v2193
        %v2204 = vmul.f32 %v2144, %v2193
        %v2205 = vmul.f32 %v2145, %v2193
        %v2206 = vmul.f32 %v2146, %v2193
        %v2207 = vmul.f32 %v2147, %v2193
        %v2208 = vmul.f32 %v2148, %v2193
        %v2209 = vmul.f32 %v2149, %v2193
        %v2210 = vmul.f32 %v2150, %v2193
        %v2211 = vmul.f32 %v2151, %v2193
        %v2212 = vmul.f32 %v2152, %v2193
        %v2213 = vmul.f32 %v2153, %v2193
        %v2214 = vmul.f32 %v2154, %v2193
        %v2215 = vmul.f32 %v2155, %v2193
        %v2216 = vmul.f32 %v2156, %v2193
        %v2217 = vmul.f32 %v2157, %v2193
        %v2242 = vrot.slane %v2194, 1
        %v2243 = vrot.slane %v2195, 1
        %v2244 = vsel %vm654, %v2242, %v2243
        %v2245 = vrot.slane %v2196, 1
        %v2246 = vsel %vm654, %v2243, %v2245
        %v2247 = vrot.slane %v2197, 1
        %v2248 = vrot.slane %v2198, 1
        %v2249 = vsel %vm654, %v2247, %v2248
        %v2250 = vrot.slane %v2199, 1
        %v2251 = vsel %vm654, %v2248, %v2250
        %v2252 = vrot.slane %v2200, 1
        %v2253 = vrot.slane %v2201, 1
        %v2254 = vsel %vm654, %v2252, %v2253
        %v2255 = vrot.slane %v2202, 1
        %v2256 = vsel %vm654, %v2253, %v2255
        %v2257 = vrot.slane %v2203, 1
        %v2258 = vrot.slane %v2204, 1
        %v2259 = vsel %vm654, %v2257, %v2258
        %v2260 = vrot.slane %v2205, 1
        %v2261 = vsel %vm654, %v2258, %v2260
        %v2262 = vrot.slane %v2206, 1
        %v2263 = vrot.slane %v2207, 1
        %v2264 = vsel %vm654, %v2262, %v2263
        %v2265 = vrot.slane %v2208, 1
        %v2266 = vsel %vm654, %v2263, %v2265
        %v2267 = vrot.slane %v2209, 1
        %v2268 = vrot.slane %v2210, 1
        %v2269 = vsel %vm654, %v2267, %v2268
        %v2270 = vrot.slane %v2211, 1
        %v2271 = vsel %vm654, %v2268, %v2270
        %v2272 = vrot.slane %v2212, 1
        %v2273 = vrot.slane %v2213, 1
        %v2274 = vsel %vm654, %v2272, %v2273
        %v2275 = vrot.slane %v2214, 1
        %v2276 = vsel %vm654, %v2273, %v2275
        %v2277 = vrot.slane %v2215, 1
        %v2278 = vrot.slane %v2216, 1
        %v2279 = vsel %vm654, %v2277, %v2278
        %v2280 = vrot.slane %v2217, 1
        %v2281 = vsel %vm654, %v2278, %v2280
        %v2298 = vadd.f32 %v2176, %v2244
        %v2299 = vadd.f32 %v2177, %v2246
        %v2300 = vadd.f32 %v2178, %v2249
        %v2301 = vadd.f32 %v2179, %v2251
        %v2302 = vadd.f32 %v2180, %v2254
        %v2303 = vadd.f32 %v2181, %v2256
        %v2304 = vadd.f32 %v2182, %v2259
        %v2305 = vadd.f32 %v2183, %v2261
        %v2306 = vadd.f32 %v2184, %v2264
        %v2307 = vadd.f32 %v2185, %v2266
        %v2308 = vadd.f32 %v2186, %v2269
        %v2309 = vadd.f32 %v2187, %v2271
        %v2310 = vadd.f32 %v2188, %v2274
        %v2311 = vadd.f32 %v2189, %v2276
        %v2312 = vadd.f32 %v2190, %v2279
        %v2313 = vadd.f32 %v2191, %v2281
        %v2314 = vld [vmem:[%s1 + $0x10] sm:$0x1]
        %v2315 = vperm.slane %v2314, 0
        %v2316 = vmul.f32 %v2134, %v2315
        %v2317 = vmul.f32 %v2135, %v2315
        %v2318 = vmul.f32 %v2136, %v2315
        %v2319 = vmul.f32 %v2137, %v2315
        %v2320 = vmul.f32 %v2138, %v2315
        %v2321 = vmul.f32 %v2139, %v2315
        %v2322 = vmul.f32 %v2140, %v2315
        %v2323 = vmul.f32 %v2141, %v2315
        %v2324 = vmul.f32 %v2142, %v2315
        %v2325 = vmul.f32 %v2143, %v2315
        %v2326 = vmul.f32 %v2144, %v2315
        %v2327 = vmul.f32 %v2145, %v2315
        %v2328 = vmul.f32 %v2146, %v2315
        %v2329 = vmul.f32 %v2147, %v2315
        %v2330 = vmul.f32 %v2148, %v2315
        %v2331 = vmul.f32 %v2149, %v2315
        %v2332 = vmul.f32 %v2150, %v2315
        %v2333 = vmul.f32 %v2151, %v2315
        %v2334 = vmul.f32 %v2152, %v2315
        %v2335 = vmul.f32 %v2153, %v2315
        %v2336 = vmul.f32 %v2154, %v2315
        %v2337 = vmul.f32 %v2155, %v2315
        %v2338 = vmul.f32 %v2156, %v2315
        %v2339 = vmul.f32 %v2157, %v2315
        %v2364 = vrot.slane %v2316, 2
        %v2365 = vrot.slane %v2317, 2
        %v2366 = vsel %vm777, %v2364, %v2365
        %v2367 = vrot.slane %v2318, 2
        %v2368 = vsel %vm777, %v2365, %v2367
        %v2369 = vrot.slane %v2319, 2
        %v2370 = vrot.slane %v2320, 2
        %v2371 = vsel %vm777, %v2369, %v2370
        %v2372 = vrot.slane %v2321, 2
        %v2373 = vsel %vm777, %v2370, %v2372
        %v2374 = vrot.slane %v2322, 2
        %v2375 = vrot.slane %v2323, 2
        %v2376 = vsel %vm777, %v2374, %v2375
        %v2377 = vrot.slane %v2324, 2
        %v2378 = vsel %vm777, %v2375, %v2377
        %v2379 = vrot.slane %v2325, 2
        %v2380 = vrot.slane %v2326, 2
        %v2381 = vsel %vm777, %v2379, %v2380
        %v2382 = vrot.slane %v2327, 2
        %v2383 = vsel %vm777, %v2380, %v2382
        %v2384 = vrot.slane %v2328, 2
        %v2385 = vrot.slane %v2329, 2
        %v2386 = vsel %vm777, %v2384, %v2385
        %v2387 = vrot.slane %v2330, 2
        %v2388 = vsel %vm777, %v2385, %v2387
        %v2389 = vrot.slane %v2331, 2
        %v2390 = vrot.slane %v2332, 2
        %v2391 = vsel %vm777, %v2389, %v2390
        %v2392 = vrot.slane %v2333, 2
        %v2393 = vsel %vm777, %v2390, %v2392
        %v2394 = vrot.slane %v2334, 2
        %v2395 = vrot.slane %v2335, 2
        %v2396 = vsel %vm777, %v2394, %v2395
        %v2397 = vrot.slane %v2336, 2
        %v2398 = vsel %vm777, %v2395, %v2397
        %v2399 = vrot.slane %v2337, 2
        %v2400 = vrot.slane %v2338, 2
        %v2401 = vsel %vm777, %v2399, %v2400
        %v2402 = vrot.slane %v2339, 2
        %v2403 = vsel %vm777, %v2400, %v2402
        %v2420 = vadd.f32 %v2298, %v2366
        %v2421 = vadd.f32 %v2299, %v2368
        %v2422 = vadd.f32 %v2300, %v2371
        %v2423 = vadd.f32 %v2301, %v2373
        %v2424 = vadd.f32 %v2302, %v2376
        %v2425 = vadd.f32 %v2303, %v2378
        %v2426 = vadd.f32 %v2304, %v2381
        %v2427 = vadd.f32 %v2305, %v2383
        %v2428 = vadd.f32 %v2306, %v2386
        %v2429 = vadd.f32 %v2307, %v2388
        %v2430 = vadd.f32 %v2308, %v2391
        %v2431 = vadd.f32 %v2309, %v2393
        %v2432 = vadd.f32 %v2310, %v2396
        %v2433 = vadd.f32 %v2311, %v2398
        %v2434 = vadd.f32 %v2312, %v2401
        %v2435 = vadd.f32 %v2313, %v2403
        %v2436 = vld [vmem:[%s1 + $0x11] sm:$0x1]
        %v2437 = vperm.slane %v2436, 0
        %v2438 = vmul.f32 %v2134, %v2437
        %v2439 = vmul.f32 %v2135, %v2437
        %v2440 = vmul.f32 %v2136, %v2437
        %v2441 = vmul.f32 %v2137, %v2437
        %v2442 = vmul.f32 %v2138, %v2437
        %v2443 = vmul.f32 %v2139, %v2437
        %v2444 = vmul.f32 %v2140, %v2437
        %v2445 = vmul.f32 %v2141, %v2437
        %v2446 = vmul.f32 %v2142, %v2437
        %v2447 = vmul.f32 %v2143, %v2437
        %v2448 = vmul.f32 %v2144, %v2437
        %v2449 = vmul.f32 %v2145, %v2437
        %v2450 = vmul.f32 %v2146, %v2437
        %v2451 = vmul.f32 %v2147, %v2437
        %v2452 = vmul.f32 %v2148, %v2437
        %v2453 = vmul.f32 %v2149, %v2437
        %v2454 = vmul.f32 %v2150, %v2437
        %v2455 = vmul.f32 %v2151, %v2437
        %v2456 = vmul.f32 %v2152, %v2437
        %v2457 = vmul.f32 %v2153, %v2437
        %v2458 = vmul.f32 %v2154, %v2437
        %v2459 = vmul.f32 %v2155, %v2437
        %v2460 = vmul.f32 %v2156, %v2437
        %v2461 = vmul.f32 %v2157, %v2437
        %v2486 = vrot.slane %v2438, 3
        %v2487 = vrot.slane %v2439, 3
        %v2488 = vsel %vm900, %v2486, %v2487
        %v2489 = vrot.slane %v2440, 3
        %v2490 = vsel %vm900, %v2487, %v2489
        %v2491 = vrot.slane %v2441, 3
        %v2492 = vrot.slane %v2442, 3
        %v2493 = vsel %vm900, %v2491, %v2492
        %v2494 = vrot.slane %v2443, 3
        %v2495 = vsel %vm900, %v2492, %v2494
        %v2496 = vrot.slane %v2444, 3
        %v2497 = vrot.slane %v2445, 3
        %v2498 = vsel %vm900, %v2496, %v2497
        %v2499 = vrot.slane %v2446, 3
        %v2500 = vsel %vm900, %v2497, %v2499
        %v2501 = vrot.slane %v2447, 3
        %v2502 = vrot.slane %v2448, 3
        %v2503 = vsel %vm900, %v2501, %v2502
        %v2504 = vrot.slane %v2449, 3
        %v2505 = vsel %vm900, %v2502, %v2504
        %v2506 = vrot.slane %v2450, 3
        %v2507 = vrot.slane %v2451, 3
        %v2508 = vsel %vm900, %v2506, %v2507
        %v2509 = vrot.slane %v2452, 3
        %v2510 = vsel %vm900, %v2507, %v2509
        %v2511 = vrot.slane %v2453, 3
        %v2512 = vrot.slane %v2454, 3
        %v2513 = vsel %vm900, %v2511, %v2512
        %v2514 = vrot.slane %v2455, 3
        %v2515 = vsel %vm900, %v2512, %v2514
        %v2516 = vrot.slane %v2456, 3
        %v2517 = vrot.slane %v2457, 3
        %v2518 = vsel %vm900, %v2516, %v2517
        %v2519 = vrot.slane %v2458, 3
        %v2520 = vsel %vm900, %v2517, %v2519
        %v2521 = vrot.slane %v2459, 3
        %v2522 = vrot.slane %v2460, 3
        %v2523 = vsel %vm900, %v2521, %v2522
        %v2524 = vrot.slane %v2461, 3
        %v2525 = vsel %vm900, %v2522, %v2524
        %v2542 = vadd.f32 %v2420, %v2488
        %v2543 = vadd.f32 %v2421, %v2490
        %v2544 = vadd.f32 %v2422, %v2493
        %v2545 = vadd.f32 %v2423, %v2495
        %v2546 = vadd.f32 %v2424, %v2498
        %v2547 = vadd.f32 %v2425, %v2500
        %v2548 = vadd.f32 %v2426, %v2503
        %v2549 = vadd.f32 %v2427, %v2505
        %v2550 = vadd.f32 %v2428, %v2508
        %v2551 = vadd.f32 %v2429, %v2510
        %v2552 = vadd.f32 %v2430, %v2513
        %v2553 = vadd.f32 %v2431, %v2515
        %v2554 = vadd.f32 %v2432, %v2518
        %v2555 = vadd.f32 %v2433, %v2520
        %v2556 = vadd.f32 %v2434, %v2523
        %v2557 = vadd.f32 %v2435, %v2525
        %v2558 = vld [vmem:[%s1 + $0x12] sm:$0x1]
        %v2559 = vperm.slane %v2558, 0
        %v2560 = vmul.f32 %v2134, %v2559
        %v2561 = vmul.f32 %v2135, %v2559
        %v2562 = vmul.f32 %v2136, %v2559
        %v2563 = vmul.f32 %v2137, %v2559
        %v2564 = vmul.f32 %v2138, %v2559
        %v2565 = vmul.f32 %v2139, %v2559
        %v2566 = vmul.f32 %v2140, %v2559
        %v2567 = vmul.f32 %v2141, %v2559
        %v2568 = vmul.f32 %v2142, %v2559
        %v2569 = vmul.f32 %v2143, %v2559
        %v2570 = vmul.f32 %v2144, %v2559
        %v2571 = vmul.f32 %v2145, %v2559
        %v2572 = vmul.f32 %v2146, %v2559
        %v2573 = vmul.f32 %v2147, %v2559
        %v2574 = vmul.f32 %v2148, %v2559
        %v2575 = vmul.f32 %v2149, %v2559
        %v2576 = vmul.f32 %v2150, %v2559
        %v2577 = vmul.f32 %v2151, %v2559
        %v2578 = vmul.f32 %v2152, %v2559
        %v2579 = vmul.f32 %v2153, %v2559
        %v2580 = vmul.f32 %v2154, %v2559
        %v2581 = vmul.f32 %v2155, %v2559
        %v2582 = vmul.f32 %v2156, %v2559
        %v2583 = vmul.f32 %v2157, %v2559
        %v2608 = vrot.slane %v2560, 4
        %v2609 = vrot.slane %v2561, 4
        %v2610 = vsel %vm1023, %v2608, %v2609
        %v2611 = vrot.slane %v2562, 4
        %v2612 = vsel %vm1023, %v2609, %v2611
        %v2613 = vrot.slane %v2563, 4
        %v2614 = vrot.slane %v2564, 4
        %v2615 = vsel %vm1023, %v2613, %v2614
        %v2616 = vrot.slane %v2565, 4
        %v2617 = vsel %vm1023, %v2614, %v2616
        %v2618 = vrot.slane %v2566, 4
        %v2619 = vrot.slane %v2567, 4
        %v2620 = vsel %vm1023, %v2618, %v2619
        %v2621 = vrot.slane %v2568, 4
        %v2622 = vsel %vm1023, %v2619, %v2621
        %v2623 = vrot.slane %v2569, 4
        %v2624 = vrot.slane %v2570, 4
        %v2625 = vsel %vm1023, %v2623, %v2624
        %v2626 = vrot.slane %v2571, 4
        %v2627 = vsel %vm1023, %v2624, %v2626
        %v2628 = vrot.slane %v2572, 4
        %v2629 = vrot.slane %v2573, 4
        %v2630 = vsel %vm1023, %v2628, %v2629
        %v2631 = vrot.slane %v2574, 4
        %v2632 = vsel %vm1023, %v2629, %v2631
        %v2633 = vrot.slane %v2575, 4
        %v2634 = vrot.slane %v2576, 4
        %v2635 = vsel %vm1023, %v2633, %v2634
        %v2636 = vrot.slane %v2577, 4
        %v2637 = vsel %vm1023, %v2634, %v2636
        %v2638 = vrot.slane %v2578, 4
        %v2639 = vrot.slane %v2579, 4
        %v2640 = vsel %vm1023, %v2638, %v2639
        %v2641 = vrot.slane %v2580, 4
        %v2642 = vsel %vm1023, %v2639, %v2641
        %v2643 = vrot.slane %v2581, 4
        %v2644 = vrot.slane %v2582, 4
        %v2645 = vsel %vm1023, %v2643, %v2644
        %v2646 = vrot.slane %v2583, 4
        %v2647 = vsel %vm1023, %v2644, %v2646
        %v2664 = vadd.f32 %v2542, %v2610
        %v2665 = vadd.f32 %v2543, %v2612
        %v2666 = vadd.f32 %v2544, %v2615
        %v2667 = vadd.f32 %v2545, %v2617
        %v2668 = vadd.f32 %v2546, %v2620
        %v2669 = vadd.f32 %v2547, %v2622
        %v2670 = vadd.f32 %v2548, %v2625
        %v2671 = vadd.f32 %v2549, %v2627
        %v2672 = vadd.f32 %v2550, %v2630
        %v2673 = vadd.f32 %v2551, %v2632
        %v2674 = vadd.f32 %v2552, %v2635
        %v2675 = vadd.f32 %v2553, %v2637
        %v2676 = vadd.f32 %v2554, %v2640
        %v2677 = vadd.f32 %v2555, %v2642
        %v2678 = vadd.f32 %v2556, %v2645
        %v2679 = vadd.f32 %v2557, %v2647
        %v2680 = vld [vmem:[%s1 + $0x13] sm:$0x1]
        %v2681 = vperm.slane %v2680, 0
        %v2682 = vmul.f32 %v2134, %v2681
        %v2683 = vmul.f32 %v2135, %v2681
        %v2684 = vmul.f32 %v2136, %v2681
        %v2685 = vmul.f32 %v2137, %v2681
        %v2686 = vmul.f32 %v2138, %v2681
        %v2687 = vmul.f32 %v2139, %v2681
        %v2688 = vmul.f32 %v2140, %v2681
        %v2689 = vmul.f32 %v2141, %v2681
        %v2690 = vmul.f32 %v2142, %v2681
        %v2691 = vmul.f32 %v2143, %v2681
        %v2692 = vmul.f32 %v2144, %v2681
        %v2693 = vmul.f32 %v2145, %v2681
        %v2694 = vmul.f32 %v2146, %v2681
        %v2695 = vmul.f32 %v2147, %v2681
        %v2696 = vmul.f32 %v2148, %v2681
        %v2697 = vmul.f32 %v2149, %v2681
        %v2698 = vmul.f32 %v2150, %v2681
        %v2699 = vmul.f32 %v2151, %v2681
        %v2700 = vmul.f32 %v2152, %v2681
        %v2701 = vmul.f32 %v2153, %v2681
        %v2702 = vmul.f32 %v2154, %v2681
        %v2703 = vmul.f32 %v2155, %v2681
        %v2704 = vmul.f32 %v2156, %v2681
        %v2705 = vmul.f32 %v2157, %v2681
        %v2730 = vrot.slane %v2682, 5
        %v2731 = vrot.slane %v2683, 5
        %v2732 = vsel %vm1146, %v2730, %v2731
        %v2733 = vrot.slane %v2684, 5
        %v2734 = vsel %vm1146, %v2731, %v2733
        %v2735 = vrot.slane %v2685, 5
        %v2736 = vrot.slane %v2686, 5
        %v2737 = vsel %vm1146, %v2735, %v2736
        %v2738 = vrot.slane %v2687, 5
        %v2739 = vsel %vm1146, %v2736, %v2738
        %v2740 = vrot.slane %v2688, 5
        %v2741 = vrot.slane %v2689, 5
        %v2742 = vsel %vm1146, %v2740, %v2741
        %v2743 = vrot.slane %v2690, 5
        %v2744 = vsel %vm1146, %v2741, %v2743
        %v2745 = vrot.slane %v2691, 5
        %v2746 = vrot.slane %v2692, 5
        %v2747 = vsel %vm1146, %v2745, %v2746
        %v2748 = vrot.slane %v2693, 5
        %v2749 = vsel %vm1146, %v2746, %v2748
        %v2750 = vrot.slane %v2694, 5
        %v2751 = vrot.slane %v2695, 5
        %v2752 = vsel %vm1146, %v2750, %v2751
        %v2753 = vrot.slane %v2696, 5
        %v2754 = vsel %vm1146, %v2751, %v2753
        %v2755 = vrot.slane %v2697, 5
        %v2756 = vrot.slane %v2698, 5
        %v2757 = vsel %vm1146, %v2755, %v2756
        %v2758 = vrot.slane %v2699, 5
        %v2759 = vsel %vm1146, %v2756, %v2758
        %v2760 = vrot.slane %v2700, 5
        %v2761 = vrot.slane %v2701, 5
        %v2762 = vsel %vm1146, %v2760, %v2761
        %v2763 = vrot.slane %v2702, 5
        %v2764 = vsel %vm1146, %v2761, %v2763
        %v2765 = vrot.slane %v2703, 5
        %v2766 = vrot.slane %v2704, 5
        %v2767 = vsel %vm1146, %v2765, %v2766
        %v2768 = vrot.slane %v2705, 5
        %v2769 = vsel %vm1146, %v2766, %v2768
        %v2786 = vadd.f32 %v2664, %v2732
        %v2787 = vadd.f32 %v2665, %v2734
        %v2788 = vadd.f32 %v2666, %v2737
        %v2789 = vadd.f32 %v2667, %v2739
        %v2790 = vadd.f32 %v2668, %v2742
        %v2791 = vadd.f32 %v2669, %v2744
        %v2792 = vadd.f32 %v2670, %v2747
        %v2793 = vadd.f32 %v2671, %v2749
        %v2794 = vadd.f32 %v2672, %v2752
        %v2795 = vadd.f32 %v2673, %v2754
        %v2796 = vadd.f32 %v2674, %v2757
        %v2797 = vadd.f32 %v2675, %v2759
        %v2798 = vadd.f32 %v2676, %v2762
        %v2799 = vadd.f32 %v2677, %v2764
        %v2800 = vadd.f32 %v2678, %v2767
        %v2801 = vadd.f32 %v2679, %v2769
        %v2802 = vld [vmem:[%s1 + $0x14] sm:$0x1]
        %v2803 = vperm.slane %v2802, 0
        %v2804 = vmul.f32 %v2134, %v2803
        %v2805 = vmul.f32 %v2135, %v2803
        %v2806 = vmul.f32 %v2136, %v2803
        %v2807 = vmul.f32 %v2137, %v2803
        %v2808 = vmul.f32 %v2138, %v2803
        %v2809 = vmul.f32 %v2139, %v2803
        %v2810 = vmul.f32 %v2140, %v2803
        %v2811 = vmul.f32 %v2141, %v2803
        %v2812 = vmul.f32 %v2142, %v2803
        %v2813 = vmul.f32 %v2143, %v2803
        %v2814 = vmul.f32 %v2144, %v2803
        %v2815 = vmul.f32 %v2145, %v2803
        %v2816 = vmul.f32 %v2146, %v2803
        %v2817 = vmul.f32 %v2147, %v2803
        %v2818 = vmul.f32 %v2148, %v2803
        %v2819 = vmul.f32 %v2149, %v2803
        %v2820 = vmul.f32 %v2150, %v2803
        %v2821 = vmul.f32 %v2151, %v2803
        %v2822 = vmul.f32 %v2152, %v2803
        %v2823 = vmul.f32 %v2153, %v2803
        %v2824 = vmul.f32 %v2154, %v2803
        %v2825 = vmul.f32 %v2155, %v2803
        %v2826 = vmul.f32 %v2156, %v2803
        %v2827 = vmul.f32 %v2157, %v2803
        %v2852 = vrot.slane %v2804, 6
        %v2853 = vrot.slane %v2805, 6
        %v2854 = vsel %vm1269, %v2852, %v2853
        %v2855 = vrot.slane %v2806, 6
        %v2856 = vsel %vm1269, %v2853, %v2855
        %v2857 = vrot.slane %v2807, 6
        %v2858 = vrot.slane %v2808, 6
        %v2859 = vsel %vm1269, %v2857, %v2858
        %v2860 = vrot.slane %v2809, 6
        %v2861 = vsel %vm1269, %v2858, %v2860
        %v2862 = vrot.slane %v2810, 6
        %v2863 = vrot.slane %v2811, 6
        %v2864 = vsel %vm1269, %v2862, %v2863
        %v2865 = vrot.slane %v2812, 6
        %v2866 = vsel %vm1269, %v2863, %v2865
        %v2867 = vrot.slane %v2813, 6
        %v2868 = vrot.slane %v2814, 6
        %v2869 = vsel %vm1269, %v2867, %v2868
        %v2870 = vrot.slane %v2815, 6
        %v2871 = vsel %vm1269, %v2868, %v2870
        %v2872 = vrot.slane %v2816, 6
        %v2873 = vrot.slane %v2817, 6
        %v2874 = vsel %vm1269, %v2872, %v2873
        %v2875 = vrot.slane %v2818, 6
        %v2876 = vsel %vm1269, %v2873, %v2875
        %v2877 = vrot.slane %v2819, 6
        %v2878 = vrot.slane %v2820, 6
        %v2879 = vsel %vm1269, %v2877, %v2878
        %v2880 = vrot.slane %v2821, 6
        %v2881 = vsel %vm1269, %v2878, %v2880
        %v2882 = vrot.slane %v2822, 6
        %v2883 = vrot.slane %v2823, 6
        %v2884 = vsel %vm1269, %v2882, %v2883
        %v2885 = vrot.slane %v2824, 6
        %v2886 = vsel %vm1269, %v2883, %v2885
        %v2887 = vrot.slane %v2825, 6
        %v2888 = vrot.slane %v2826, 6
        %v2889 = vsel %vm1269, %v2887, %v2888
        %v2890 = vrot.slane %v2827, 6
        %v2891 = vsel %vm1269, %v2888, %v2890
        %v2908 = vadd.f32 %v2786, %v2854
        %v2909 = vadd.f32 %v2787, %v2856
        %v2910 = vadd.f32 %v2788, %v2859
        %v2911 = vadd.f32 %v2789, %v2861
        %v2912 = vadd.f32 %v2790, %v2864
        %v2913 = vadd.f32 %v2791, %v2866
        %v2914 = vadd.f32 %v2792, %v2869
        %v2915 = vadd.f32 %v2793, %v2871
        %v2916 = vadd.f32 %v2794, %v2874
        %v2917 = vadd.f32 %v2795, %v2876
        %v2918 = vadd.f32 %v2796, %v2879
        %v2919 = vadd.f32 %v2797, %v2881
        %v2920 = vadd.f32 %v2798, %v2884
        %v2921 = vadd.f32 %v2799, %v2886
        %v2922 = vadd.f32 %v2800, %v2889
        %v2923 = vadd.f32 %v2801, %v2891
        %s2924 = scalar_lea.vmem [#allocation3], 72
        %v2925 = vld [vmem:[%s2924] sm:$0xff]
        %v2926 = vld [vmem:[%s2924 + $0x8] sm:$0xff]
        %v2927 = vld [vmem:[%s2924 + $0x10] sm:$0x3f]
        %v2928 = vld [vmem:[%s2924 + $0x18] sm:$0xff]
        %v2929 = vld [vmem:[%s2924 + $0x20] sm:$0xff]
        %v2930 = vld [vmem:[%s2924 + $0x28] sm:$0x3f]
        %v2931 = vld [vmem:[%s2924 + $0x30] sm:$0xff]
        %v2932 = vld [vmem:[%s2924 + $0x38] sm:$0xff]
        %v2933 = vld [vmem:[%s2924 + $0x40] sm:$0x3f]
        %v2934 = vld [vmem:[%s2924 + $0x48] sm:$0xff]
        %v2935 = vld [vmem:[%s2924 + $0x50] sm:$0xff]
        %v2936 = vld [vmem:[%s2924 + $0x58] sm:$0x3f]
        %v2937 = vld [vmem:[%s2924 + $0x60] sm:$0xff]
        %v2938 = vld [vmem:[%s2924 + $0x68] sm:$0xff]
        %v2939 = vld [vmem:[%s2924 + $0x70] sm:$0x3f]
        %v2940 = vld [vmem:[%s2924 + $0x78] sm:$0xff]
        %v2941 = vld [vmem:[%s2924 + $0x80] sm:$0xff]
        %v2942 = vld [vmem:[%s2924 + $0x88] sm:$0x3f]
        %v2943 = vld [vmem:[%s2924 + $0x90] sm:$0xff]
        %v2944 = vld [vmem:[%s2924 + $0x98] sm:$0xff]
        %v2945 = vld [vmem:[%s2924 + $0xa0] sm:$0x3f]
        %v2946 = vld [vmem:[%s2924 + $0xa8] sm:$0xff]
        %v2947 = vld [vmem:[%s2924 + $0xb0] sm:$0xff]
        %v2948 = vld [vmem:[%s2924 + $0xb8] sm:$0x3f]
        %v2949 = vld [vmem:[%s1 + $0x15] sm:$0x1]
        %v2950 = vperm.slane %v2949, 0
        %v2951 = vmul.f32 %v2925, %v2950
        %v2952 = vmul.f32 %v2926, %v2950
        %v2953 = vmul.f32 %v2928, %v2950
        %v2954 = vmul.f32 %v2929, %v2950
        %v2955 = vmul.f32 %v2931, %v2950
        %v2956 = vmul.f32 %v2932, %v2950
        %v2957 = vmul.f32 %v2934, %v2950
        %v2958 = vmul.f32 %v2935, %v2950
        %v2959 = vmul.f32 %v2937, %v2950
        %v2960 = vmul.f32 %v2938, %v2950
        %v2961 = vmul.f32 %v2940, %v2950
        %v2962 = vmul.f32 %v2941, %v2950
        %v2963 = vmul.f32 %v2943, %v2950
        %v2964 = vmul.f32 %v2944, %v2950
        %v2965 = vmul.f32 %v2946, %v2950
        %v2966 = vmul.f32 %v2947, %v2950
        %v2967 = vadd.f32 %v2908, %v2951
        %v2968 = vadd.f32 %v2909, %v2952
        %v2969 = vadd.f32 %v2910, %v2953
        %v2970 = vadd.f32 %v2911, %v2954
        %v2971 = vadd.f32 %v2912, %v2955
        %v2972 = vadd.f32 %v2913, %v2956
        %v2973 = vadd.f32 %v2914, %v2957
        %v2974 = vadd.f32 %v2915, %v2958
        %v2975 = vadd.f32 %v2916, %v2959
        %v2976 = vadd.f32 %v2917, %v2960
        %v2977 = vadd.f32 %v2918, %v2961
        %v2978 = vadd.f32 %v2919, %v2962
        %v2979 = vadd.f32 %v2920, %v2963
        %v2980 = vadd.f32 %v2921, %v2964
        %v2981 = vadd.f32 %v2922, %v2965
        %v2982 = vadd.f32 %v2923, %v2966
        %v2983 = vld [vmem:[%s1 + $0x16] sm:$0x1]
        %v2984 = vperm.slane %v2983, 0
        %v2985 = vmul.f32 %v2925, %v2984
        %v2986 = vmul.f32 %v2926, %v2984
        %v2987 = vmul.f32 %v2927, %v2984
        %v2988 = vmul.f32 %v2928, %v2984
        %v2989 = vmul.f32 %v2929, %v2984
        %v2990 = vmul.f32 %v2930, %v2984
        %v2991 = vmul.f32 %v2931, %v2984
        %v2992 = vmul.f32 %v2932, %v2984
        %v2993 = vmul.f32 %v2933, %v2984
        %v2994 = vmul.f32 %v2934, %v2984
        %v2995 = vmul.f32 %v2935, %v2984
        %v2996 = vmul.f32 %v2936, %v2984
        %v2997 = vmul.f32 %v2937, %v2984
        %v2998 = vmul.f32 %v2938, %v2984
        %v2999 = vmul.f32 %v2939, %v2984
        %v3000 = vmul.f32 %v2940, %v2984
        %v3001 = vmul.f32 %v2941, %v2984
        %v3002 = vmul.f32 %v2942, %v2984
        %v3003 = vmul.f32 %v2943, %v2984
        %v3004 = vmul.f32 %v2944, %v2984
        %v3005 = vmul.f32 %v2945, %v2984
        %v3006 = vmul.f32 %v2946, %v2984
        %v3007 = vmul.f32 %v2947, %v2984
        %v3008 = vmul.f32 %v2948, %v2984
        %v3033 = vrot.slane %v2985, 1
        %v3034 = vrot.slane %v2986, 1
        %v3035 = vsel %vm654, %v3033, %v3034
        %v3036 = vrot.slane %v2987, 1
        %v3037 = vsel %vm654, %v3034, %v3036
        %v3038 = vrot.slane %v2988, 1
        %v3039 = vrot.slane %v2989, 1
        %v3040 = vsel %vm654, %v3038, %v3039
        %v3041 = vrot.slane %v2990, 1
        %v3042 = vsel %vm654, %v3039, %v3041
        %v3043 = vrot.slane %v2991, 1
        %v3044 = vrot.slane %v2992, 1
        %v3045 = vsel %vm654, %v3043, %v3044
        %v3046 = vrot.slane %v2993, 1
        %v3047 = vsel %vm654, %v3044, %v3046
        %v3048 = vrot.slane %v2994, 1
        %v3049 = vrot.slane %v2995, 1
        %v3050 = vsel %vm654, %v3048, %v3049
        %v3051 = vrot.slane %v2996, 1
        %v3052 = vsel %vm654, %v3049, %v3051
        %v3053 = vrot.slane %v2997, 1
        %v3054 = vrot.slane %v2998, 1
        %v3055 = vsel %vm654, %v3053, %v3054
        %v3056 = vrot.slane %v2999, 1
        %v3057 = vsel %vm654, %v3054, %v3056
        %v3058 = vrot.slane %v3000, 1
        %v3059 = vrot.slane %v3001, 1
        %v3060 = vsel %vm654, %v3058, %v3059
        %v3061 = vrot.slane %v3002, 1
        %v3062 = vsel %vm654, %v3059, %v3061
        %v3063 = vrot.slane %v3003, 1
        %v3064 = vrot.slane %v3004, 1
        %v3065 = vsel %vm654, %v3063, %v3064
        %v3066 = vrot.slane %v3005, 1
        %v3067 = vsel %vm654, %v3064, %v3066
        %v3068 = vrot.slane %v3006, 1
        %v3069 = vrot.slane %v3007, 1
        %v3070 = vsel %vm654, %v3068, %v3069
        %v3071 = vrot.slane %v3008, 1
        %v3072 = vsel %vm654, %v3069, %v3071
        %v3089 = vadd.f32 %v2967, %v3035
        %v3090 = vadd.f32 %v2968, %v3037
        %v3091 = vadd.f32 %v2969, %v3040
        %v3092 = vadd.f32 %v2970, %v3042
        %v3093 = vadd.f32 %v2971, %v3045
        %v3094 = vadd.f32 %v2972, %v3047
        %v3095 = vadd.f32 %v2973, %v3050
        %v3096 = vadd.f32 %v2974, %v3052
        %v3097 = vadd.f32 %v2975, %v3055
        %v3098 = vadd.f32 %v2976, %v3057
        %v3099 = vadd.f32 %v2977, %v3060
        %v3100 = vadd.f32 %v2978, %v3062
        %v3101 = vadd.f32 %v2979, %v3065
        %v3102 = vadd.f32 %v2980, %v3067
        %v3103 = vadd.f32 %v2981, %v3070
        %v3104 = vadd.f32 %v2982, %v3072
        %v3105 = vld [vmem:[%s1 + $0x17] sm:$0x1]
        %v3106 = vperm.slane %v3105, 0
        %v3107 = vmul.f32 %v2925, %v3106
        %v3108 = vmul.f32 %v2926, %v3106
        %v3109 = vmul.f32 %v2927, %v3106
        %v3110 = vmul.f32 %v2928, %v3106
        %v3111 = vmul.f32 %v2929, %v3106
        %v3112 = vmul.f32 %v2930, %v3106
        %v3113 = vmul.f32 %v2931, %v3106
        %v3114 = vmul.f32 %v2932, %v3106
        %v3115 = vmul.f32 %v2933, %v3106
        %v3116 = vmul.f32 %v2934, %v3106
        %v3117 = vmul.f32 %v2935, %v3106
        %v3118 = vmul.f32 %v2936, %v3106
        %v3119 = vmul.f32 %v2937, %v3106
        %v3120 = vmul.f32 %v2938, %v3106
        %v3121 = vmul.f32 %v2939, %v3106
        %v3122 = vmul.f32 %v2940, %v3106
        %v3123 = vmul.f32 %v2941, %v3106
        %v3124 = vmul.f32 %v2942, %v3106
        %v3125 = vmul.f32 %v2943, %v3106
        %v3126 = vmul.f32 %v2944, %v3106
        %v3127 = vmul.f32 %v2945, %v3106
        %v3128 = vmul.f32 %v2946, %v3106
        %v3129 = vmul.f32 %v2947, %v3106
        %v3130 = vmul.f32 %v2948, %v3106
        %v3155 = vrot.slane %v3107, 2
        %v3156 = vrot.slane %v3108, 2
        %v3157 = vsel %vm777, %v3155, %v3156
        %v3158 = vrot.slane %v3109, 2
        %v3159 = vsel %vm777, %v3156, %v3158
        %v3160 = vrot.slane %v3110, 2
        %v3161 = vrot.slane %v3111, 2
        %v3162 = vsel %vm777, %v3160, %v3161
        %v3163 = vrot.slane %v3112, 2
        %v3164 = vsel %vm777, %v3161, %v3163
        %v3165 = vrot.slane %v3113, 2
        %v3166 = vrot.slane %v3114, 2
        %v3167 = vsel %vm777, %v3165, %v3166
        %v3168 = vrot.slane %v3115, 2
        %v3169 = vsel %vm777, %v3166, %v3168
        %v3170 = vrot.slane %v3116, 2
        %v3171 = vrot.slane %v3117, 2
        %v3172 = vsel %vm777, %v3170, %v3171
        %v3173 = vrot.slane %v3118, 2
        %v3174 = vsel %vm777, %v3171, %v3173
        %v3175 = vrot.slane %v3119, 2
        %v3176 = vrot.slane %v3120, 2
        %v3177 = vsel %vm777, %v3175, %v3176
        %v3178 = vrot.slane %v3121, 2
        %v3179 = vsel %vm777, %v3176, %v3178
        %v3180 = vrot.slane %v3122, 2
        %v3181 = vrot.slane %v3123, 2
        %v3182 = vsel %vm777, %v3180, %v3181
        %v3183 = vrot.slane %v3124, 2
        %v3184 = vsel %vm777, %v3181, %v3183
        %v3185 = vrot.slane %v3125, 2
        %v3186 = vrot.slane %v3126, 2
        %v3187 = vsel %vm777, %v3185, %v3186
        %v3188 = vrot.slane %v3127, 2
        %v3189 = vsel %vm777, %v3186, %v3188
        %v3190 = vrot.slane %v3128, 2
        %v3191 = vrot.slane %v3129, 2
        %v3192 = vsel %vm777, %v3190, %v3191
        %v3193 = vrot.slane %v3130, 2
        %v3194 = vsel %vm777, %v3191, %v3193
        %v3211 = vadd.f32 %v3089, %v3157
        %v3212 = vadd.f32 %v3090, %v3159
        %v3213 = vadd.f32 %v3091, %v3162
        %v3214 = vadd.f32 %v3092, %v3164
        %v3215 = vadd.f32 %v3093, %v3167
        %v3216 = vadd.f32 %v3094, %v3169
        %v3217 = vadd.f32 %v3095, %v3172
        %v3218 = vadd.f32 %v3096, %v3174
        %v3219 = vadd.f32 %v3097, %v3177
        %v3220 = vadd.f32 %v3098, %v3179
        %v3221 = vadd.f32 %v3099, %v3182
        %v3222 = vadd.f32 %v3100, %v3184
        %v3223 = vadd.f32 %v3101, %v3187
        %v3224 = vadd.f32 %v3102, %v3189
        %v3225 = vadd.f32 %v3103, %v3192
        %v3226 = vadd.f32 %v3104, %v3194
        %v3227 = vld [vmem:[%s1 + $0x18] sm:$0x1]
        %v3228 = vperm.slane %v3227, 0
        %v3229 = vmul.f32 %v2925, %v3228
        %v3230 = vmul.f32 %v2926, %v3228
        %v3231 = vmul.f32 %v2927, %v3228
        %v3232 = vmul.f32 %v2928, %v3228
        %v3233 = vmul.f32 %v2929, %v3228
        %v3234 = vmul.f32 %v2930, %v3228
        %v3235 = vmul.f32 %v2931, %v3228
        %v3236 = vmul.f32 %v2932, %v3228
        %v3237 = vmul.f32 %v2933, %v3228
        %v3238 = vmul.f32 %v2934, %v3228
        %v3239 = vmul.f32 %v2935, %v3228
        %v3240 = vmul.f32 %v2936, %v3228
        %v3241 = vmul.f32 %v2937, %v3228
        %v3242 = vmul.f32 %v2938, %v3228
        %v3243 = vmul.f32 %v2939, %v3228
        %v3244 = vmul.f32 %v2940, %v3228
        %v3245 = vmul.f32 %v2941, %v3228
        %v3246 = vmul.f32 %v2942, %v3228
        %v3247 = vmul.f32 %v2943, %v3228
        %v3248 = vmul.f32 %v2944, %v3228
        %v3249 = vmul.f32 %v2945, %v3228
        %v3250 = vmul.f32 %v2946, %v3228
        %v3251 = vmul.f32 %v2947, %v3228
        %v3252 = vmul.f32 %v2948, %v3228
        %v3277 = vrot.slane %v3229, 3
        %v3278 = vrot.slane %v3230, 3
        %v3279 = vsel %vm900, %v3277, %v3278
        %v3280 = vrot.slane %v3231, 3
        %v3281 = vsel %vm900, %v3278, %v3280
        %v3282 = vrot.slane %v3232, 3
        %v3283 = vrot.slane %v3233, 3
        %v3284 = vsel %vm900, %v3282, %v3283
        %v3285 = vrot.slane %v3234, 3
        %v3286 = vsel %vm900, %v3283, %v3285
        %v3287 = vrot.slane %v3235, 3
        %v3288 = vrot.slane %v3236, 3
        %v3289 = vsel %vm900, %v3287, %v3288
        %v3290 = vrot.slane %v3237, 3
        %v3291 = vsel %vm900, %v3288, %v3290
        %v3292 = vrot.slane %v3238, 3
        %v3293 = vrot.slane %v3239, 3
        %v3294 = vsel %vm900, %v3292, %v3293
        %v3295 = vrot.slane %v3240, 3
        %v3296 = vsel %vm900, %v3293, %v3295
        %v3297 = vrot.slane %v3241, 3
        %v3298 = vrot.slane %v3242, 3
        %v3299 = vsel %vm900, %v3297, %v3298
        %v3300 = vrot.slane %v3243, 3
        %v3301 = vsel %vm900, %v3298, %v3300
        %v3302 = vrot.slane %v3244, 3
        %v3303 = vrot.slane %v3245, 3
        %v3304 = vsel %vm900, %v3302, %v3303
        %v3305 = vrot.slane %v3246, 3
        %v3306 = vsel %vm900, %v3303, %v3305
        %v3307 = vrot.slane %v3247, 3
        %v3308 = vrot.slane %v3248, 3
        %v3309 = vsel %vm900, %v3307, %v3308
        %v3310 = vrot.slane %v3249, 3
        %v3311 = vsel %vm900, %v3308, %v3310
        %v3312 = vrot.slane %v3250, 3
        %v3313 = vrot.slane %v3251, 3
        %v3314 = vsel %vm900, %v3312, %v3313
        %v3315 = vrot.slane %v3252, 3
        %v3316 = vsel %vm900, %v3313, %v3315
        %v3333 = vadd.f32 %v3211, %v3279
        %v3334 = vadd.f32 %v3212, %v3281
        %v3335 = vadd.f32 %v3213, %v3284
        %v3336 = vadd.f32 %v3214, %v3286
        %v3337 = vadd.f32 %v3215, %v3289
        %v3338 = vadd.f32 %v3216, %v3291
        %v3339 = vadd.f32 %v3217, %v3294
        %v3340 = vadd.f32 %v3218, %v3296
        %v3341 = vadd.f32 %v3219, %v3299
        %v3342 = vadd.f32 %v3220, %v3301
        %v3343 = vadd.f32 %v3221, %v3304
        %v3344 = vadd.f32 %v3222, %v3306
        %v3345 = vadd.f32 %v3223, %v3309
        %v3346 = vadd.f32 %v3224, %v3311
        %v3347 = vadd.f32 %v3225, %v3314
        %v3348 = vadd.f32 %v3226, %v3316
        %v3349 = vld [vmem:[%s1 + $0x19] sm:$0x1]
        %v3350 = vperm.slane %v3349, 0
        %v3351 = vmul.f32 %v2925, %v3350
        %v3352 = vmul.f32 %v2926, %v3350
        %v3353 = vmul.f32 %v2927, %v3350
        %v3354 = vmul.f32 %v2928, %v3350
        %v3355 = vmul.f32 %v2929, %v3350
        %v3356 = vmul.f32 %v2930, %v3350
        %v3357 = vmul.f32 %v2931, %v3350
        %v3358 = vmul.f32 %v2932, %v3350
        %v3359 = vmul.f32 %v2933, %v3350
        %v3360 = vmul.f32 %v2934, %v3350
        %v3361 = vmul.f32 %v2935, %v3350
        %v3362 = vmul.f32 %v2936, %v3350
        %v3363 = vmul.f32 %v2937, %v3350
        %v3364 = vmul.f32 %v2938, %v3350
        %v3365 = vmul.f32 %v2939, %v3350
        %v3366 = vmul.f32 %v2940, %v3350
        %v3367 = vmul.f32 %v2941, %v3350
        %v3368 = vmul.f32 %v2942, %v3350
        %v3369 = vmul.f32 %v2943, %v3350
        %v3370 = vmul.f32 %v2944, %v3350
        %v3371 = vmul.f32 %v2945, %v3350
        %v3372 = vmul.f32 %v2946, %v3350
        %v3373 = vmul.f32 %v2947, %v3350
        %v3374 = vmul.f32 %v2948, %v3350
        %v3399 = vrot.slane %v3351, 4
        %v3400 = vrot.slane %v3352, 4
        %v3401 = vsel %vm1023, %v3399, %v3400
        %v3402 = vrot.slane %v3353, 4
        %v3403 = vsel %vm1023, %v3400, %v3402
        %v3404 = vrot.slane %v3354, 4
        %v3405 = vrot.slane %v3355, 4
        %v3406 = vsel %vm1023, %v3404, %v3405
        %v3407 = vrot.slane %v3356, 4
        %v3408 = vsel %vm1023, %v3405, %v3407
        %v3409 = vrot.slane %v3357, 4
        %v3410 = vrot.slane %v3358, 4
        %v3411 = vsel %vm1023, %v3409, %v3410
        %v3412 = vrot.slane %v3359, 4
        %v3413 = vsel %vm1023, %v3410, %v3412
        %v3414 = vrot.slane %v3360, 4
        %v3415 = vrot.slane %v3361, 4
        %v3416 = vsel %vm1023, %v3414, %v3415
        %v3417 = vrot.slane %v3362, 4
        %v3418 = vsel %vm1023, %v3415, %v3417
        %v3419 = vrot.slane %v3363, 4
        %v3420 = vrot.slane %v3364, 4
        %v3421 = vsel %vm1023, %v3419, %v3420
        %v3422 = vrot.slane %v3365, 4
        %v3423 = vsel %vm1023, %v3420, %v3422
        %v3424 = vrot.slane %v3366, 4
        %v3425 = vrot.slane %v3367, 4
        %v3426 = vsel %vm1023, %v3424, %v3425
        %v3427 = vrot.slane %v3368, 4
        %v3428 = vsel %vm1023, %v3425, %v3427
        %v3429 = vrot.slane %v3369, 4
        %v3430 = vrot.slane %v3370, 4
        %v3431 = vsel %vm1023, %v3429, %v3430
        %v3432 = vrot.slane %v3371, 4
        %v3433 = vsel %vm1023, %v3430, %v3432
        %v3434 = vrot.slane %v3372, 4
        %v3435 = vrot.slane %v3373, 4
        %v3436 = vsel %vm1023, %v3434, %v3435
        %v3437 = vrot.slane %v3374, 4
        %v3438 = vsel %vm1023, %v3435, %v3437
        %v3455 = vadd.f32 %v3333, %v3401
        %v3456 = vadd.f32 %v3334, %v3403
        %v3457 = vadd.f32 %v3335, %v3406
        %v3458 = vadd.f32 %v3336, %v3408
        %v3459 = vadd.f32 %v3337, %v3411
        %v3460 = vadd.f32 %v3338, %v3413
        %v3461 = vadd.f32 %v3339, %v3416
        %v3462 = vadd.f32 %v3340, %v3418
        %v3463 = vadd.f32 %v3341, %v3421
        %v3464 = vadd.f32 %v3342, %v3423
        %v3465 = vadd.f32 %v3343, %v3426
        %v3466 = vadd.f32 %v3344, %v3428
        %v3467 = vadd.f32 %v3345, %v3431
        %v3468 = vadd.f32 %v3346, %v3433
        %v3469 = vadd.f32 %v3347, %v3436
        %v3470 = vadd.f32 %v3348, %v3438
        %v3471 = vld [vmem:[%s1 + $0x1a] sm:$0x1]
        %v3472 = vperm.slane %v3471, 0
        %v3473 = vmul.f32 %v2925, %v3472
        %v3474 = vmul.f32 %v2926, %v3472
        %v3475 = vmul.f32 %v2927, %v3472
        %v3476 = vmul.f32 %v2928, %v3472
        %v3477 = vmul.f32 %v2929, %v3472
        %v3478 = vmul.f32 %v2930, %v3472
        %v3479 = vmul.f32 %v2931, %v3472
        %v3480 = vmul.f32 %v2932, %v3472
        %v3481 = vmul.f32 %v2933, %v3472
        %v3482 = vmul.f32 %v2934, %v3472
        %v3483 = vmul.f32 %v2935, %v3472
        %v3484 = vmul.f32 %v2936, %v3472
        %v3485 = vmul.f32 %v2937, %v3472
        %v3486 = vmul.f32 %v2938, %v3472
        %v3487 = vmul.f32 %v2939, %v3472
        %v3488 = vmul.f32 %v2940, %v3472
        %v3489 = vmul.f32 %v2941, %v3472
        %v3490 = vmul.f32 %v2942, %v3472
        %v3491 = vmul.f32 %v2943, %v3472
        %v3492 = vmul.f32 %v2944, %v3472
        %v3493 = vmul.f32 %v2945, %v3472
        %v3494 = vmul.f32 %v2946, %v3472
        %v3495 = vmul.f32 %v2947, %v3472
        %v3496 = vmul.f32 %v2948, %v3472
        %v3521 = vrot.slane %v3473, 5
        %v3522 = vrot.slane %v3474, 5
        %v3523 = vsel %vm1146, %v3521, %v3522
        %v3524 = vrot.slane %v3475, 5
        %v3525 = vsel %vm1146, %v3522, %v3524
        %v3526 = vrot.slane %v3476, 5
        %v3527 = vrot.slane %v3477, 5
        %v3528 = vsel %vm1146, %v3526, %v3527
        %v3529 = vrot.slane %v3478, 5
        %v3530 = vsel %vm1146, %v3527, %v3529
        %v3531 = vrot.slane %v3479, 5
        %v3532 = vrot.slane %v3480, 5
        %v3533 = vsel %vm1146, %v3531, %v3532
        %v3534 = vrot.slane %v3481, 5
        %v3535 = vsel %vm1146, %v3532, %v3534
        %v3536 = vrot.slane %v3482, 5
        %v3537 = vrot.slane %v3483, 5
        %v3538 = vsel %vm1146, %v3536, %v3537
        %v3539 = vrot.slane %v3484, 5
        %v3540 = vsel %vm1146, %v3537, %v3539
        %v3541 = vrot.slane %v3485, 5
        %v3542 = vrot.slane %v3486, 5
        %v3543 = vsel %vm1146, %v3541, %v3542
        %v3544 = vrot.slane %v3487, 5
        %v3545 = vsel %vm1146, %v3542, %v3544
        %v3546 = vrot.slane %v3488, 5
        %v3547 = vrot.slane %v3489, 5
        %v3548 = vsel %vm1146, %v3546, %v3547
        %v3549 = vrot.slane %v3490, 5
        %v3550 = vsel %vm1146, %v3547, %v3549
        %v3551 = vrot.slane %v3491, 5
        %v3552 = vrot.slane %v3492, 5
        %v3553 = vsel %vm1146, %v3551, %v3552
        %v3554 = vrot.slane %v3493, 5
        %v3555 = vsel %vm1146, %v3552, %v3554
        %v3556 = vrot.slane %v3494, 5
        %v3557 = vrot.slane %v3495, 5
        %v3558 = vsel %vm1146, %v3556, %v3557
        %v3559 = vrot.slane %v3496, 5
        %v3560 = vsel %vm1146, %v3557, %v3559
        %v3577 = vadd.f32 %v3455, %v3523
        %v3578 = vadd.f32 %v3456, %v3525
        %v3579 = vadd.f32 %v3457, %v3528
        %v3580 = vadd.f32 %v3458, %v3530
        %v3581 = vadd.f32 %v3459, %v3533
        %v3582 = vadd.f32 %v3460, %v3535
        %v3583 = vadd.f32 %v3461, %v3538
        %v3584 = vadd.f32 %v3462, %v3540
        %v3585 = vadd.f32 %v3463, %v3543
        %v3586 = vadd.f32 %v3464, %v3545
        %v3587 = vadd.f32 %v3465, %v3548
        %v3588 = vadd.f32 %v3466, %v3550
        %v3589 = vadd.f32 %v3467, %v3553
        %v3590 = vadd.f32 %v3468, %v3555
        %v3591 = vadd.f32 %v3469, %v3558
        %v3592 = vadd.f32 %v3470, %v3560
        %v3593 = vld [vmem:[%s1 + $0x1b] sm:$0x1]
        %v3594 = vperm.slane %v3593, 0
        %v3595 = vmul.f32 %v2925, %v3594
        %v3596 = vmul.f32 %v2926, %v3594
        %v3597 = vmul.f32 %v2927, %v3594
        %v3598 = vmul.f32 %v2928, %v3594
        %v3599 = vmul.f32 %v2929, %v3594
        %v3600 = vmul.f32 %v2930, %v3594
        %v3601 = vmul.f32 %v2931, %v3594
        %v3602 = vmul.f32 %v2932, %v3594
        %v3603 = vmul.f32 %v2933, %v3594
        %v3604 = vmul.f32 %v2934, %v3594
        %v3605 = vmul.f32 %v2935, %v3594
        %v3606 = vmul.f32 %v2936, %v3594
        %v3607 = vmul.f32 %v2937, %v3594
        %v3608 = vmul.f32 %v2938, %v3594
        %v3609 = vmul.f32 %v2939, %v3594
        %v3610 = vmul.f32 %v2940, %v3594
        %v3611 = vmul.f32 %v2941, %v3594
        %v3612 = vmul.f32 %v2942, %v3594
        %v3613 = vmul.f32 %v2943, %v3594
        %v3614 = vmul.f32 %v2944, %v3594
        %v3615 = vmul.f32 %v2945, %v3594
        %v3616 = vmul.f32 %v2946, %v3594
        %v3617 = vmul.f32 %v2947, %v3594
        %v3618 = vmul.f32 %v2948, %v3594
        %v3643 = vrot.slane %v3595, 6
        %v3644 = vrot.slane %v3596, 6
        %v3645 = vsel %vm1269, %v3643, %v3644
        %v3646 = vrot.slane %v3597, 6
        %v3647 = vsel %vm1269, %v3644, %v3646
        %v3648 = vrot.slane %v3598, 6
        %v3649 = vrot.slane %v3599, 6
        %v3650 = vsel %vm1269, %v3648, %v3649
        %v3651 = vrot.slane %v3600, 6
        %v3652 = vsel %vm1269, %v3649, %v3651
        %v3653 = vrot.slane %v3601, 6
        %v3654 = vrot.slane %v3602, 6
        %v3655 = vsel %vm1269, %v3653, %v3654
        %v3656 = vrot.slane %v3603, 6
        %v3657 = vsel %vm1269, %v3654, %v3656
        %v3658 = vrot.slane %v3604, 6
        %v3659 = vrot.slane %v3605, 6
        %v3660 = vsel %vm1269, %v3658, %v3659
        %v3661 = vrot.slane %v3606, 6
        %v3662 = vsel %vm1269, %v3659, %v3661
        %v3663 = vrot.slane %v3607, 6
        %v3664 = vrot.slane %v3608, 6
        %v3665 = vsel %vm1269, %v3663, %v3664
        %v3666 = vrot.slane %v3609, 6
        %v3667 = vsel %vm1269, %v3664, %v3666
        %v3668 = vrot.slane %v3610, 6
        %v3669 = vrot.slane %v3611, 6
        %v3670 = vsel %vm1269, %v3668, %v3669
        %v3671 = vrot.slane %v3612, 6
        %v3672 = vsel %vm1269, %v3669, %v3671
        %v3673 = vrot.slane %v3613, 6
        %v3674 = vrot.slane %v3614, 6
        %v3675 = vsel %vm1269, %v3673, %v3674
        %v3676 = vrot.slane %v3615, 6
        %v3677 = vsel %vm1269, %v3674, %v3676
        %v3678 = vrot.slane %v3616, 6
        %v3679 = vrot.slane %v3617, 6
        %v3680 = vsel %vm1269, %v3678, %v3679
        %v3681 = vrot.slane %v3618, 6
        %v3682 = vsel %vm1269, %v3679, %v3681
        %v3699 = vadd.f32 %v3577, %v3645
        %v3700 = vadd.f32 %v3578, %v3647
        %v3701 = vadd.f32 %v3579, %v3650
        %v3702 = vadd.f32 %v3580, %v3652
        %v3703 = vadd.f32 %v3581, %v3655
        %v3704 = vadd.f32 %v3582, %v3657
        %v3705 = vadd.f32 %v3583, %v3660
        %v3706 = vadd.f32 %v3584, %v3662
        %v3707 = vadd.f32 %v3585, %v3665
        %v3708 = vadd.f32 %v3586, %v3667
        %v3709 = vadd.f32 %v3587, %v3670
        %v3710 = vadd.f32 %v3588, %v3672
        %v3711 = vadd.f32 %v3589, %v3675
        %v3712 = vadd.f32 %v3590, %v3677
        %v3713 = vadd.f32 %v3591, %v3680
        %v3714 = vadd.f32 %v3592, %v3682
        %s3715 = scalar_lea.vmem [#allocation3], 96
        %v3716 = vld [vmem:[%s3715] sm:$0xff]
        %v3717 = vld [vmem:[%s3715 + $0x8] sm:$0xff]
        %v3718 = vld [vmem:[%s3715 + $0x10] sm:$0x3f]
        %v3719 = vld [vmem:[%s3715 + $0x18] sm:$0xff]
        %v3720 = vld [vmem:[%s3715 + $0x20] sm:$0xff]
        %v3721 = vld [vmem:[%s3715 + $0x28] sm:$0x3f]
        %v3722 = vld [vmem:[%s3715 + $0x30] sm:$0xff]
        %v3723 = vld [vmem:[%s3715 + $0x38] sm:$0xff]
        %v3724 = vld [vmem:[%s3715 + $0x40] sm:$0x3f]
        %v3725 = vld [vmem:[%s3715 + $0x48] sm:$0xff]
        %v3726 = vld [vmem:[%s3715 + $0x50] sm:$0xff]
        %v3727 = vld [vmem:[%s3715 + $0x58] sm:$0x3f]
        %v3728 = vld [vmem:[%s3715 + $0x60] sm:$0xff]
        %v3729 = vld [vmem:[%s3715 + $0x68] sm:$0xff]
        %v3730 = vld [vmem:[%s3715 + $0x70] sm:$0x3f]
        %v3731 = vld [vmem:[%s3715 + $0x78] sm:$0xff]
        %v3732 = vld [vmem:[%s3715 + $0x80] sm:$0xff]
        %v3733 = vld [vmem:[%s3715 + $0x88] sm:$0x3f]
        %v3734 = vld [vmem:[%s3715 + $0x90] sm:$0xff]
        %v3735 = vld [vmem:[%s3715 + $0x98] sm:$0xff]
        %v3736 = vld [vmem:[%s3715 + $0xa0] sm:$0x3f]
        %v3737 = vld [vmem:[%s3715 + $0xa8] sm:$0xff]
        %v3738 = vld [vmem:[%s3715 + $0xb0] sm:$0xff]
        %v3739 = vld [vmem:[%s3715 + $0xb8] sm:$0x3f]
        %v3740 = vld [vmem:[%s1 + $0x1c] sm:$0x1]
        %v3741 = vperm.slane %v3740, 0
        %v3742 = vmul.f32 %v3716, %v3741
        %v3743 = vmul.f32 %v3717, %v3741
        %v3744 = vmul.f32 %v3719, %v3741
        %v3745 = vmul.f32 %v3720, %v3741
        %v3746 = vmul.f32 %v3722, %v3741
        %v3747 = vmul.f32 %v3723, %v3741
        %v3748 = vmul.f32 %v3725, %v3741
        %v3749 = vmul.f32 %v3726, %v3741
        %v3750 = vmul.f32 %v3728, %v3741
        %v3751 = vmul.f32 %v3729, %v3741
        %v3752 = vmul.f32 %v3731, %v3741
        %v3753 = vmul.f32 %v3732, %v3741
        %v3754 = vmul.f32 %v3734, %v3741
        %v3755 = vmul.f32 %v3735, %v3741
        %v3756 = vmul.f32 %v3737, %v3741
        %v3757 = vmul.f32 %v3738, %v3741
        %v3758 = vadd.f32 %v3699, %v3742
        %v3759 = vadd.f32 %v3700, %v3743
        %v3760 = vadd.f32 %v3701, %v3744
        %v3761 = vadd.f32 %v3702, %v3745
        %v3762 = vadd.f32 %v3703, %v3746
        %v3763 = vadd.f32 %v3704, %v3747
        %v3764 = vadd.f32 %v3705, %v3748
        %v3765 = vadd.f32 %v3706, %v3749
        %v3766 = vadd.f32 %v3707, %v3750
        %v3767 = vadd.f32 %v3708, %v3751
        %v3768 = vadd.f32 %v3709, %v3752
        %v3769 = vadd.f32 %v3710, %v3753
        %v3770 = vadd.f32 %v3711, %v3754
        %v3771 = vadd.f32 %v3712, %v3755
        %v3772 = vadd.f32 %v3713, %v3756
        %v3773 = vadd.f32 %v3714, %v3757
        %v3774 = vld [vmem:[%s1 + $0x1d] sm:$0x1]
        %v3775 = vperm.slane %v3774, 0
        %v3776 = vmul.f32 %v3716, %v3775
        %v3777 = vmul.f32 %v3717, %v3775
        %v3778 = vmul.f32 %v3718, %v3775
        %v3779 = vmul.f32 %v3719, %v3775
        %v3780 = vmul.f32 %v3720, %v3775
        %v3781 = vmul.f32 %v3721, %v3775
        %v3782 = vmul.f32 %v3722, %v3775
        %v3783 = vmul.f32 %v3723, %v3775
        %v3784 = vmul.f32 %v3724, %v3775
        %v3785 = vmul.f32 %v3725, %v3775
        %v3786 = vmul.f32 %v3726, %v3775
        %v3787 = vmul.f32 %v3727, %v3775
        %v3788 = vmul.f32 %v3728, %v3775
        %v3789 = vmul.f32 %v3729, %v3775
        %v3790 = vmul.f32 %v3730, %v3775
        %v3791 = vmul.f32 %v3731, %v3775
        %v3792 = vmul.f32 %v3732, %v3775
        %v3793 = vmul.f32 %v3733, %v3775
        %v3794 = vmul.f32 %v3734, %v3775
        %v3795 = vmul.f32 %v3735, %v3775
        %v3796 = vmul.f32 %v3736, %v3775
        %v3797 = vmul.f32 %v3737, %v3775
        %v3798 = vmul.f32 %v3738, %v3775
        %v3799 = vmul.f32 %v3739, %v3775
        %v3824 = vrot.slane %v3776, 1
        %v3825 = vrot.slane %v3777, 1
        %v3826 = vsel %vm654, %v3824, %v3825
        %v3827 = vrot.slane %v3778, 1
        %v3828 = vsel %vm654, %v3825, %v3827
        %v3829 = vrot.slane %v3779, 1
        %v3830 = vrot.slane %v3780, 1
        %v3831 = vsel %vm654, %v3829, %v3830
        %v3832 = vrot.slane %v3781, 1
        %v3833 = vsel %vm654, %v3830, %v3832
        %v3834 = vrot.slane %v3782, 1
        %v3835 = vrot.slane %v3783, 1
        %v3836 = vsel %vm654, %v3834, %v3835
        %v3837 = vrot.slane %v3784, 1
        %v3838 = vsel %vm654, %v3835, %v3837
        %v3839 = vrot.slane %v3785, 1
        %v3840 = vrot.slane %v3786, 1
        %v3841 = vsel %vm654, %v3839, %v3840
        %v3842 = vrot.slane %v3787, 1
        %v3843 = vsel %vm654, %v3840, %v3842
        %v3844 = vrot.slane %v3788, 1
        %v3845 = vrot.slane %v3789, 1
        %v3846 = vsel %vm654, %v3844, %v3845
        %v3847 = vrot.slane %v3790, 1
        %v3848 = vsel %vm654, %v3845, %v3847
        %v3849 = vrot.slane %v3791, 1
        %v3850 = vrot.slane %v3792, 1
        %v3851 = vsel %vm654, %v3849, %v3850
        %v3852 = vrot.slane %v3793, 1
        %v3853 = vsel %vm654, %v3850, %v3852
        %v3854 = vrot.slane %v3794, 1
        %v3855 = vrot.slane %v3795, 1
        %v3856 = vsel %vm654, %v3854, %v3855
        %v3857 = vrot.slane %v3796, 1
        %v3858 = vsel %vm654, %v3855, %v3857
        %v3859 = vrot.slane %v3797, 1
        %v3860 = vrot.slane %v3798, 1
        %v3861 = vsel %vm654, %v3859, %v3860
        %v3862 = vrot.slane %v3799, 1
        %v3863 = vsel %vm654, %v3860, %v3862
        %v3880 = vadd.f32 %v3758, %v3826
        %v3881 = vadd.f32 %v3759, %v3828
        %v3882 = vadd.f32 %v3760, %v3831
        %v3883 = vadd.f32 %v3761, %v3833
        %v3884 = vadd.f32 %v3762, %v3836
        %v3885 = vadd.f32 %v3763, %v3838
        %v3886 = vadd.f32 %v3764, %v3841
        %v3887 = vadd.f32 %v3765, %v3843
        %v3888 = vadd.f32 %v3766, %v3846
        %v3889 = vadd.f32 %v3767, %v3848
        %v3890 = vadd.f32 %v3768, %v3851
        %v3891 = vadd.f32 %v3769, %v3853
        %v3892 = vadd.f32 %v3770, %v3856
        %v3893 = vadd.f32 %v3771, %v3858
        %v3894 = vadd.f32 %v3772, %v3861
        %v3895 = vadd.f32 %v3773, %v3863
        %v3896 = vld [vmem:[%s1 + $0x1e] sm:$0x1]
        %v3897 = vperm.slane %v3896, 0
        %v3898 = vmul.f32 %v3716, %v3897
        %v3899 = vmul.f32 %v3717, %v3897
        %v3900 = vmul.f32 %v3718, %v3897
        %v3901 = vmul.f32 %v3719, %v3897
        %v3902 = vmul.f32 %v3720, %v3897
        %v3903 = vmul.f32 %v3721, %v3897
        %v3904 = vmul.f32 %v3722, %v3897
        %v3905 = vmul.f32 %v3723, %v3897
        %v3906 = vmul.f32 %v3724, %v3897
        %v3907 = vmul.f32 %v3725, %v3897
        %v3908 = vmul.f32 %v3726, %v3897
        %v3909 = vmul.f32 %v3727, %v3897
        %v3910 = vmul.f32 %v3728, %v3897
        %v3911 = vmul.f32 %v3729, %v3897
        %v3912 = vmul.f32 %v3730, %v3897
        %v3913 = vmul.f32 %v3731, %v3897
        %v3914 = vmul.f32 %v3732, %v3897
        %v3915 = vmul.f32 %v3733, %v3897
        %v3916 = vmul.f32 %v3734, %v3897
        %v3917 = vmul.f32 %v3735, %v3897
        %v3918 = vmul.f32 %v3736, %v3897
        %v3919 = vmul.f32 %v3737, %v3897
        %v3920 = vmul.f32 %v3738, %v3897
        %v3921 = vmul.f32 %v3739, %v3897
        %v3946 = vrot.slane %v3898, 2
        %v3947 = vrot.slane %v3899, 2
        %v3948 = vsel %vm777, %v3946, %v3947
        %v3949 = vrot.slane %v3900, 2
        %v3950 = vsel %vm777, %v3947, %v3949
        %v3951 = vrot.slane %v3901, 2
        %v3952 = vrot.slane %v3902, 2
        %v3953 = vsel %vm777, %v3951, %v3952
        %v3954 = vrot.slane %v3903, 2
        %v3955 = vsel %vm777, %v3952, %v3954
        %v3956 = vrot.slane %v3904, 2
        %v3957 = vrot.slane %v3905, 2
        %v3958 = vsel %vm777, %v3956, %v3957
        %v3959 = vrot.slane %v3906, 2
        %v3960 = vsel %vm777, %v3957, %v3959
        %v3961 = vrot.slane %v3907, 2
        %v3962 = vrot.slane %v3908, 2
        %v3963 = vsel %vm777, %v3961, %v3962
        %v3964 = vrot.slane %v3909, 2
        %v3965 = vsel %vm777, %v3962, %v3964
        %v3966 = vrot.slane %v3910, 2
        %v3967 = vrot.slane %v3911, 2
        %v3968 = vsel %vm777, %v3966, %v3967
        %v3969 = vrot.slane %v3912, 2
        %v3970 = vsel %vm777, %v3967, %v3969
        %v3971 = vrot.slane %v3913, 2
        %v3972 = vrot.slane %v3914, 2
        %v3973 = vsel %vm777, %v3971, %v3972
        %v3974 = vrot.slane %v3915, 2
        %v3975 = vsel %vm777, %v3972, %v3974
        %v3976 = vrot.slane %v3916, 2
        %v3977 = vrot.slane %v3917, 2
        %v3978 = vsel %vm777, %v3976, %v3977
        %v3979 = vrot.slane %v3918, 2
        %v3980 = vsel %vm777, %v3977, %v3979
        %v3981 = vrot.slane %v3919, 2
        %v3982 = vrot.slane %v3920, 2
        %v3983 = vsel %vm777, %v3981, %v3982
        %v3984 = vrot.slane %v3921, 2
        %v3985 = vsel %vm777, %v3982, %v3984
        %v4002 = vadd.f32 %v3880, %v3948
        %v4003 = vadd.f32 %v3881, %v3950
        %v4004 = vadd.f32 %v3882, %v3953
        %v4005 = vadd.f32 %v3883, %v3955
        %v4006 = vadd.f32 %v3884, %v3958
        %v4007 = vadd.f32 %v3885, %v3960
        %v4008 = vadd.f32 %v3886, %v3963
        %v4009 = vadd.f32 %v3887, %v3965
        %v4010 = vadd.f32 %v3888, %v3968
        %v4011 = vadd.f32 %v3889, %v3970
        %v4012 = vadd.f32 %v3890, %v3973
        %v4013 = vadd.f32 %v3891, %v3975
        %v4014 = vadd.f32 %v3892, %v3978
        %v4015 = vadd.f32 %v3893, %v3980
        %v4016 = vadd.f32 %v3894, %v3983
        %v4017 = vadd.f32 %v3895, %v3985
        %v4018 = vld [vmem:[%s1 + $0x1f] sm:$0x1]
        %v4019 = vperm.slane %v4018, 0
        %v4020 = vmul.f32 %v3716, %v4019
        %v4021 = vmul.f32 %v3717, %v4019
        %v4022 = vmul.f32 %v3718, %v4019
        %v4023 = vmul.f32 %v3719, %v4019
        %v4024 = vmul.f32 %v3720, %v4019
        %v4025 = vmul.f32 %v3721, %v4019
        %v4026 = vmul.f32 %v3722, %v4019
        %v4027 = vmul.f32 %v3723, %v4019
        %v4028 = vmul.f32 %v3724, %v4019
        %v4029 = vmul.f32 %v3725, %v4019
        %v4030 = vmul.f32 %v3726, %v4019
        %v4031 = vmul.f32 %v3727, %v4019
        %v4032 = vmul.f32 %v3728, %v4019
        %v4033 = vmul.f32 %v3729, %v4019
        %v4034 = vmul.f32 %v3730, %v4019
        %v4035 = vmul.f32 %v3731, %v4019
        %v4036 = vmul.f32 %v3732, %v4019
        %v4037 = vmul.f32 %v3733, %v4019
        %v4038 = vmul.f32 %v3734, %v4019
        %v4039 = vmul.f32 %v3735, %v4019
        %v4040 = vmul.f32 %v3736, %v4019
        %v4041 = vmul.f32 %v3737, %v4019
        %v4042 = vmul.f32 %v3738, %v4019
        %v4043 = vmul.f32 %v3739, %v4019
        %v4068 = vrot.slane %v4020, 3
        %v4069 = vrot.slane %v4021, 3
        %v4070 = vsel %vm900, %v4068, %v4069
        %v4071 = vrot.slane %v4022, 3
        %v4072 = vsel %vm900, %v4069, %v4071
        %v4073 = vrot.slane %v4023, 3
        %v4074 = vrot.slane %v4024, 3
        %v4075 = vsel %vm900, %v4073, %v4074
        %v4076 = vrot.slane %v4025, 3
        %v4077 = vsel %vm900, %v4074, %v4076
        %v4078 = vrot.slane %v4026, 3
        %v4079 = vrot.slane %v4027, 3
        %v4080 = vsel %vm900, %v4078, %v4079
        %v4081 = vrot.slane %v4028, 3
        %v4082 = vsel %vm900, %v4079, %v4081
        %v4083 = vrot.slane %v4029, 3
        %v4084 = vrot.slane %v4030, 3
        %v4085 = vsel %vm900, %v4083, %v4084
        %v4086 = vrot.slane %v4031, 3
        %v4087 = vsel %vm900, %v4084, %v4086
        %v4088 = vrot.slane %v4032, 3
        %v4089 = vrot.slane %v4033, 3
        %v4090 = vsel %vm900, %v4088, %v4089
        %v4091 = vrot.slane %v4034, 3
        %v4092 = vsel %vm900, %v4089, %v4091
        %v4093 = vrot.slane %v4035, 3
        %v4094 = vrot.slane %v4036, 3
        %v4095 = vsel %vm900, %v4093, %v4094
        %v4096 = vrot.slane %v4037, 3
        %v4097 = vsel %vm900, %v4094, %v4096
        %v4098 = vrot.slane %v4038, 3
        %v4099 = vrot.slane %v4039, 3
        %v4100 = vsel %vm900, %v4098, %v4099
        %v4101 = vrot.slane %v4040, 3
        %v4102 = vsel %vm900, %v4099, %v4101
        %v4103 = vrot.slane %v4041, 3
        %v4104 = vrot.slane %v4042, 3
        %v4105 = vsel %vm900, %v4103, %v4104
        %v4106 = vrot.slane %v4043, 3
        %v4107 = vsel %vm900, %v4104, %v4106
        %v4124 = vadd.f32 %v4002, %v4070
        %v4125 = vadd.f32 %v4003, %v4072
        %v4126 = vadd.f32 %v4004, %v4075
        %v4127 = vadd.f32 %v4005, %v4077
        %v4128 = vadd.f32 %v4006, %v4080
        %v4129 = vadd.f32 %v4007, %v4082
        %v4130 = vadd.f32 %v4008, %v4085
        %v4131 = vadd.f32 %v4009, %v4087
        %v4132 = vadd.f32 %v4010, %v4090
        %v4133 = vadd.f32 %v4011, %v4092
        %v4134 = vadd.f32 %v4012, %v4095
        %v4135 = vadd.f32 %v4013, %v4097
        %v4136 = vadd.f32 %v4014, %v4100
        %v4137 = vadd.f32 %v4015, %v4102
        %v4138 = vadd.f32 %v4016, %v4105
        %v4139 = vadd.f32 %v4017, %v4107
        %v4140 = vld [vmem:[%s1 + $0x20] sm:$0x1]
        %v4141 = vperm.slane %v4140, 0
        %v4142 = vmul.f32 %v3716, %v4141
        %v4143 = vmul.f32 %v3717, %v4141
        %v4144 = vmul.f32 %v3718, %v4141
        %v4145 = vmul.f32 %v3719, %v4141
        %v4146 = vmul.f32 %v3720, %v4141
        %v4147 = vmul.f32 %v3721, %v4141
        %v4148 = vmul.f32 %v3722, %v4141
        %v4149 = vmul.f32 %v3723, %v4141
        %v4150 = vmul.f32 %v3724, %v4141
        %v4151 = vmul.f32 %v3725, %v4141
        %v4152 = vmul.f32 %v3726, %v4141
        %v4153 = vmul.f32 %v3727, %v4141
        %v4154 = vmul.f32 %v3728, %v4141
        %v4155 = vmul.f32 %v3729, %v4141
        %v4156 = vmul.f32 %v3730, %v4141
        %v4157 = vmul.f32 %v3731, %v4141
        %v4158 = vmul.f32 %v3732, %v4141
        %v4159 = vmul.f32 %v3733, %v4141
        %v4160 = vmul.f32 %v3734, %v4141
        %v4161 = vmul.f32 %v3735, %v4141
        %v4162 = vmul.f32 %v3736, %v4141
        %v4163 = vmul.f32 %v3737, %v4141
        %v4164 = vmul.f32 %v3738, %v4141
        %v4165 = vmul.f32 %v3739, %v4141
        %v4190 = vrot.slane %v4142, 4
        %v4191 = vrot.slane %v4143, 4
        %v4192 = vsel %vm1023, %v4190, %v4191
        %v4193 = vrot.slane %v4144, 4
        %v4194 = vsel %vm1023, %v4191, %v4193
        %v4195 = vrot.slane %v4145, 4
        %v4196 = vrot.slane %v4146, 4
        %v4197 = vsel %vm1023, %v4195, %v4196
        %v4198 = vrot.slane %v4147, 4
        %v4199 = vsel %vm1023, %v4196, %v4198
        %v4200 = vrot.slane %v4148, 4
        %v4201 = vrot.slane %v4149, 4
        %v4202 = vsel %vm1023, %v4200, %v4201
        %v4203 = vrot.slane %v4150, 4
        %v4204 = vsel %vm1023, %v4201, %v4203
        %v4205 = vrot.slane %v4151, 4
        %v4206 = vrot.slane %v4152, 4
        %v4207 = vsel %vm1023, %v4205, %v4206
        %v4208 = vrot.slane %v4153, 4
        %v4209 = vsel %vm1023, %v4206, %v4208
        %v4210 = vrot.slane %v4154, 4
        %v4211 = vrot.slane %v4155, 4
        %v4212 = vsel %vm1023, %v4210, %v4211
        %v4213 = vrot.slane %v4156, 4
        %v4214 = vsel %vm1023, %v4211, %v4213
        %v4215 = vrot.slane %v4157, 4
        %v4216 = vrot.slane %v4158, 4
        %v4217 = vsel %vm1023, %v4215, %v4216
        %v4218 = vrot.slane %v4159, 4
        %v4219 = vsel %vm1023, %v4216, %v4218
        %v4220 = vrot.slane %v4160, 4
        %v4221 = vrot.slane %v4161, 4
        %v4222 = vsel %vm1023, %v4220, %v4221
        %v4223 = vrot.slane %v4162, 4
        %v4224 = vsel %vm1023, %v4221, %v4223
        %v4225 = vrot.slane %v4163, 4
        %v4226 = vrot.slane %v4164, 4
        %v4227 = vsel %vm1023, %v4225, %v4226
        %v4228 = vrot.slane %v4165, 4
        %v4229 = vsel %vm1023, %v4226, %v4228
        %v4246 = vadd.f32 %v4124, %v4192
        %v4247 = vadd.f32 %v4125, %v4194
        %v4248 = vadd.f32 %v4126, %v4197
        %v4249 = vadd.f32 %v4127, %v4199
        %v4250 = vadd.f32 %v4128, %v4202
        %v4251 = vadd.f32 %v4129, %v4204
        %v4252 = vadd.f32 %v4130, %v4207
        %v4253 = vadd.f32 %v4131, %v4209
        %v4254 = vadd.f32 %v4132, %v4212
        %v4255 = vadd.f32 %v4133, %v4214
        %v4256 = vadd.f32 %v4134, %v4217
        %v4257 = vadd.f32 %v4135, %v4219
        %v4258 = vadd.f32 %v4136, %v4222
        %v4259 = vadd.f32 %v4137, %v4224
        %v4260 = vadd.f32 %v4138, %v4227
        %v4261 = vadd.f32 %v4139, %v4229
        %v4262 = vld [vmem:[%s1 + $0x21] sm:$0x1]
        %v4263 = vperm.slane %v4262, 0
        %v4264 = vmul.f32 %v3716, %v4263
        %v4265 = vmul.f32 %v3717, %v4263
        %v4266 = vmul.f32 %v3718, %v4263
        %v4267 = vmul.f32 %v3719, %v4263
        %v4268 = vmul.f32 %v3720, %v4263
        %v4269 = vmul.f32 %v3721, %v4263
        %v4270 = vmul.f32 %v3722, %v4263
        %v4271 = vmul.f32 %v3723, %v4263
        %v4272 = vmul.f32 %v3724, %v4263
        %v4273 = vmul.f32 %v3725, %v4263
        %v4274 = vmul.f32 %v3726, %v4263
        %v4275 = vmul.f32 %v3727, %v4263
        %v4276 = vmul.f32 %v3728, %v4263
        %v4277 = vmul.f32 %v3729, %v4263
        %v4278 = vmul.f32 %v3730, %v4263
        %v4279 = vmul.f32 %v3731, %v4263
        %v4280 = vmul.f32 %v3732, %v4263
        %v4281 = vmul.f32 %v3733, %v4263
        %v4282 = vmul.f32 %v3734, %v4263
        %v4283 = vmul.f32 %v3735, %v4263
        %v4284 = vmul.f32 %v3736, %v4263
        %v4285 = vmul.f32 %v3737, %v4263
        %v4286 = vmul.f32 %v3738, %v4263
        %v4287 = vmul.f32 %v3739, %v4263
        %v4312 = vrot.slane %v4264, 5
        %v4313 = vrot.slane %v4265, 5
        %v4314 = vsel %vm1146, %v4312, %v4313
        %v4315 = vrot.slane %v4266, 5
        %v4316 = vsel %vm1146, %v4313, %v4315
        %v4317 = vrot.slane %v4267, 5
        %v4318 = vrot.slane %v4268, 5
        %v4319 = vsel %vm1146, %v4317, %v4318
        %v4320 = vrot.slane %v4269, 5
        %v4321 = vsel %vm1146, %v4318, %v4320
        %v4322 = vrot.slane %v4270, 5
        %v4323 = vrot.slane %v4271, 5
        %v4324 = vsel %vm1146, %v4322, %v4323
        %v4325 = vrot.slane %v4272, 5
        %v4326 = vsel %vm1146, %v4323, %v4325
        %v4327 = vrot.slane %v4273, 5
        %v4328 = vrot.slane %v4274, 5
        %v4329 = vsel %vm1146, %v4327, %v4328
        %v4330 = vrot.slane %v4275, 5
        %v4331 = vsel %vm1146, %v4328, %v4330
        %v4332 = vrot.slane %v4276, 5
        %v4333 = vrot.slane %v4277, 5
        %v4334 = vsel %vm1146, %v4332, %v4333
        %v4335 = vrot.slane %v4278, 5
        %v4336 = vsel %vm1146, %v4333, %v4335
        %v4337 = vrot.slane %v4279, 5
        %v4338 = vrot.slane %v4280, 5
        %v4339 = vsel %vm1146, %v4337, %v4338
        %v4340 = vrot.slane %v4281, 5
        %v4341 = vsel %vm1146, %v4338, %v4340
        %v4342 = vrot.slane %v4282, 5
        %v4343 = vrot.slane %v4283, 5
        %v4344 = vsel %vm1146, %v4342, %v4343
        %v4345 = vrot.slane %v4284, 5
        %v4346 = vsel %vm1146, %v4343, %v4345
        %v4347 = vrot.slane %v4285, 5
        %v4348 = vrot.slane %v4286, 5
        %v4349 = vsel %vm1146, %v4347, %v4348
        %v4350 = vrot.slane %v4287, 5
        %v4351 = vsel %vm1146, %v4348, %v4350
        %v4368 = vadd.f32 %v4246, %v4314
        %v4369 = vadd.f32 %v4247, %v4316
        %v4370 = vadd.f32 %v4248, %v4319
        %v4371 = vadd.f32 %v4249, %v4321
        %v4372 = vadd.f32 %v4250, %v4324
        %v4373 = vadd.f32 %v4251, %v4326
        %v4374 = vadd.f32 %v4252, %v4329
        %v4375 = vadd.f32 %v4253, %v4331
        %v4376 = vadd.f32 %v4254, %v4334
        %v4377 = vadd.f32 %v4255, %v4336
        %v4378 = vadd.f32 %v4256, %v4339
        %v4379 = vadd.f32 %v4257, %v4341
        %v4380 = vadd.f32 %v4258, %v4344
        %v4381 = vadd.f32 %v4259, %v4346
        %v4382 = vadd.f32 %v4260, %v4349
        %v4383 = vadd.f32 %v4261, %v4351
        %v4384 = vld [vmem:[%s1 + $0x22] sm:$0x1]
        %v4385 = vperm.slane %v4384, 0
        %v4386 = vmul.f32 %v3716, %v4385
        %v4387 = vmul.f32 %v3717, %v4385
        %v4388 = vmul.f32 %v3718, %v4385
        %v4389 = vmul.f32 %v3719, %v4385
        %v4390 = vmul.f32 %v3720, %v4385
        %v4391 = vmul.f32 %v3721, %v4385
        %v4392 = vmul.f32 %v3722, %v4385
        %v4393 = vmul.f32 %v3723, %v4385
        %v4394 = vmul.f32 %v3724, %v4385
        %v4395 = vmul.f32 %v3725, %v4385
        %v4396 = vmul.f32 %v3726, %v4385
        %v4397 = vmul.f32 %v3727, %v4385
        %v4398 = vmul.f32 %v3728, %v4385
        %v4399 = vmul.f32 %v3729, %v4385
        %v4400 = vmul.f32 %v3730, %v4385
        %v4401 = vmul.f32 %v3731, %v4385
        %v4402 = vmul.f32 %v3732, %v4385
        %v4403 = vmul.f32 %v3733, %v4385
        %v4404 = vmul.f32 %v3734, %v4385
        %v4405 = vmul.f32 %v3735, %v4385
        %v4406 = vmul.f32 %v3736, %v4385
        %v4407 = vmul.f32 %v3737, %v4385
        %v4408 = vmul.f32 %v3738, %v4385
        %v4409 = vmul.f32 %v3739, %v4385
        %v4434 = vrot.slane %v4386, 6
        %v4435 = vrot.slane %v4387, 6
        %v4436 = vsel %vm1269, %v4434, %v4435
        %v4437 = vrot.slane %v4388, 6
        %v4438 = vsel %vm1269, %v4435, %v4437
        %v4439 = vrot.slane %v4389, 6
        %v4440 = vrot.slane %v4390, 6
        %v4441 = vsel %vm1269, %v4439, %v4440
        %v4442 = vrot.slane %v4391, 6
        %v4443 = vsel %vm1269, %v4440, %v4442
        %v4444 = vrot.slane %v4392, 6
        %v4445 = vrot.slane %v4393, 6
        %v4446 = vsel %vm1269, %v4444, %v4445
        %v4447 = vrot.slane %v4394, 6
        %v4448 = vsel %vm1269, %v4445, %v4447
        %v4449 = vrot.slane %v4395, 6
        %v4450 = vrot.slane %v4396, 6
        %v4451 = vsel %vm1269, %v4449, %v4450
        %v4452 = vrot.slane %v4397, 6
        %v4453 = vsel %vm1269, %v4450, %v4452
        %v4454 = vrot.slane %v4398, 6
        %v4455 = vrot.slane %v4399, 6
        %v4456 = vsel %vm1269, %v4454, %v4455
        %v4457 = vrot.slane %v4400, 6
        %v4458 = vsel %vm1269, %v4455, %v4457
        %v4459 = vrot.slane %v4401, 6
        %v4460 = vrot.slane %v4402, 6
        %v4461 = vsel %vm1269, %v4459, %v4460
        %v4462 = vrot.slane %v4403, 6
        %v4463 = vsel %vm1269, %v4460, %v4462
        %v4464 = vrot.slane %v4404, 6
        %v4465 = vrot.slane %v4405, 6
        %v4466 = vsel %vm1269, %v4464, %v4465
        %v4467 = vrot.slane %v4406, 6
        %v4468 = vsel %vm1269, %v4465, %v4467
        %v4469 = vrot.slane %v4407, 6
        %v4470 = vrot.slane %v4408, 6
        %v4471 = vsel %vm1269, %v4469, %v4470
        %v4472 = vrot.slane %v4409, 6
        %v4473 = vsel %vm1269, %v4470, %v4472
        %v4490 = vadd.f32 %v4368, %v4436
        %v4491 = vadd.f32 %v4369, %v4438
        %v4492 = vadd.f32 %v4370, %v4441
        %v4493 = vadd.f32 %v4371, %v4443
        %v4494 = vadd.f32 %v4372, %v4446
        %v4495 = vadd.f32 %v4373, %v4448
        %v4496 = vadd.f32 %v4374, %v4451
        %v4497 = vadd.f32 %v4375, %v4453
        %v4498 = vadd.f32 %v4376, %v4456
        %v4499 = vadd.f32 %v4377, %v4458
        %v4500 = vadd.f32 %v4378, %v4461
        %v4501 = vadd.f32 %v4379, %v4463
        %v4502 = vadd.f32 %v4380, %v4466
        %v4503 = vadd.f32 %v4381, %v4468
        %v4504 = vadd.f32 %v4382, %v4471
        %v4505 = vadd.f32 %v4383, %v4473
        %s4506 = scalar_lea.vmem [#allocation3], 120
        %v4507 = vld [vmem:[%s4506] sm:$0xff]
        %v4508 = vld [vmem:[%s4506 + $0x8] sm:$0xff]
        %v4509 = vld [vmem:[%s4506 + $0x10] sm:$0x3f]
        %v4510 = vld [vmem:[%s4506 + $0x18] sm:$0xff]
        %v4511 = vld [vmem:[%s4506 + $0x20] sm:$0xff]
        %v4512 = vld [vmem:[%s4506 + $0x28] sm:$0x3f]
        %v4513 = vld [vmem:[%s4506 + $0x30] sm:$0xff]
        %v4514 = vld [vmem:[%s4506 + $0x38] sm:$0xff]
        %v4515 = vld [vmem:[%s4506 + $0x40] sm:$0x3f]
        %v4516 = vld [vmem:[%s4506 + $0x48] sm:$0xff]
        %v4517 = vld [vmem:[%s4506 + $0x50] sm:$0xff]
        %v4518 = vld [vmem:[%s4506 + $0x58] sm:$0x3f]
        %v4519 = vld [vmem:[%s4506 + $0x60] sm:$0xff]
        %v4520 = vld [vmem:[%s4506 + $0x68] sm:$0xff]
        %v4521 = vld [vmem:[%s4506 + $0x70] sm:$0x3f]
        %v4522 = vld [vmem:[%s4506 + $0x78] sm:$0xff]
        %v4523 = vld [vmem:[%s4506 + $0x80] sm:$0xff]
        %v4524 = vld [vmem:[%s4506 + $0x88] sm:$0x3f]
        %v4525 = vld [vmem:[%s4506 + $0x90] sm:$0xff]
        %v4526 = vld [vmem:[%s4506 + $0x98] sm:$0xff]
        %v4527 = vld [vmem:[%s4506 + $0xa0] sm:$0x3f]
        %v4528 = vld [vmem:[%s4506 + $0xa8] sm:$0xff]
        %v4529 = vld [vmem:[%s4506 + $0xb0] sm:$0xff]
        %v4530 = vld [vmem:[%s4506 + $0xb8] sm:$0x3f]
        %v4531 = vld [vmem:[%s1 + $0x23] sm:$0x1]
        %v4532 = vperm.slane %v4531, 0
        %v4533 = vmul.f32 %v4507, %v4532
        %v4534 = vmul.f32 %v4508, %v4532
        %v4535 = vmul.f32 %v4510, %v4532
        %v4536 = vmul.f32 %v4511, %v4532
        %v4537 = vmul.f32 %v4513, %v4532
        %v4538 = vmul.f32 %v4514, %v4532
        %v4539 = vmul.f32 %v4516, %v4532
        %v4540 = vmul.f32 %v4517, %v4532
        %v4541 = vmul.f32 %v4519, %v4532
        %v4542 = vmul.f32 %v4520, %v4532
        %v4543 = vmul.f32 %v4522, %v4532
        %v4544 = vmul.f32 %v4523, %v4532
        %v4545 = vmul.f32 %v4525, %v4532
        %v4546 = vmul.f32 %v4526, %v4532
        %v4547 = vmul.f32 %v4528, %v4532
        %v4548 = vmul.f32 %v4529, %v4532
        %v4549 = vadd.f32 %v4490, %v4533
        %v4550 = vadd.f32 %v4491, %v4534
        %v4551 = vadd.f32 %v4492, %v4535
        %v4552 = vadd.f32 %v4493, %v4536
        %v4553 = vadd.f32 %v4494, %v4537
        %v4554 = vadd.f32 %v4495, %v4538
        %v4555 = vadd.f32 %v4496, %v4539
        %v4556 = vadd.f32 %v4497, %v4540
        %v4557 = vadd.f32 %v4498, %v4541
        %v4558 = vadd.f32 %v4499, %v4542
        %v4559 = vadd.f32 %v4500, %v4543
        %v4560 = vadd.f32 %v4501, %v4544
        %v4561 = vadd.f32 %v4502, %v4545
        %v4562 = vadd.f32 %v4503, %v4546
        %v4563 = vadd.f32 %v4504, %v4547
        %v4564 = vadd.f32 %v4505, %v4548
        %v4565 = vld [vmem:[%s1 + $0x24] sm:$0x1]
        %v4566 = vperm.slane %v4565, 0
        %v4567 = vmul.f32 %v4507, %v4566
        %v4568 = vmul.f32 %v4508, %v4566
        %v4569 = vmul.f32 %v4509, %v4566
        %v4570 = vmul.f32 %v4510, %v4566
        %v4571 = vmul.f32 %v4511, %v4566
        %v4572 = vmul.f32 %v4512, %v4566
        %v4573 = vmul.f32 %v4513, %v4566
        %v4574 = vmul.f32 %v4514, %v4566
        %v4575 = vmul.f32 %v4515, %v4566
        %v4576 = vmul.f32 %v4516, %v4566
        %v4577 = vmul.f32 %v4517, %v4566
        %v4578 = vmul.f32 %v4518, %v4566
        %v4579 = vmul.f32 %v4519, %v4566
        %v4580 = vmul.f32 %v4520, %v4566
        %v4581 = vmul.f32 %v4521, %v4566
        %v4582 = vmul.f32 %v4522, %v4566
        %v4583 = vmul.f32 %v4523, %v4566
        %v4584 = vmul.f32 %v4524, %v4566
        %v4585 = vmul.f32 %v4525, %v4566
        %v4586 = vmul.f32 %v4526, %v4566
        %v4587 = vmul.f32 %v4527, %v4566
        %v4588 = vmul.f32 %v4528, %v4566
        %v4589 = vmul.f32 %v4529, %v4566
        %v4590 = vmul.f32 %v4530, %v4566
        %v4615 = vrot.slane %v4567, 1
        %v4616 = vrot.slane %v4568, 1
        %v4617 = vsel %vm654, %v4615, %v4616
        %v4618 = vrot.slane %v4569, 1
        %v4619 = vsel %vm654, %v4616, %v4618
        %v4620 = vrot.slane %v4570, 1
        %v4621 = vrot.slane %v4571, 1
        %v4622 = vsel %vm654, %v4620, %v4621
        %v4623 = vrot.slane %v4572, 1
        %v4624 = vsel %vm654, %v4621, %v4623
        %v4625 = vrot.slane %v4573, 1
        %v4626 = vrot.slane %v4574, 1
        %v4627 = vsel %vm654, %v4625, %v4626
        %v4628 = vrot.slane %v4575, 1
        %v4629 = vsel %vm654, %v4626, %v4628
        %v4630 = vrot.slane %v4576, 1
        %v4631 = vrot.slane %v4577, 1
        %v4632 = vsel %vm654, %v4630, %v4631
        %v4633 = vrot.slane %v4578, 1
        %v4634 = vsel %vm654, %v4631, %v4633
        %v4635 = vrot.slane %v4579, 1
        %v4636 = vrot.slane %v4580, 1
        %v4637 = vsel %vm654, %v4635, %v4636
        %v4638 = vrot.slane %v4581, 1
        %v4639 = vsel %vm654, %v4636, %v4638
        %v4640 = vrot.slane %v4582, 1
        %v4641 = vrot.slane %v4583, 1
        %v4642 = vsel %vm654, %v4640, %v4641
        %v4643 = vrot.slane %v4584, 1
        %v4644 = vsel %vm654, %v4641, %v4643
        %v4645 = vrot.slane %v4585, 1
        %v4646 = vrot.slane %v4586, 1
        %v4647 = vsel %vm654, %v4645, %v4646
        %v4648 = vrot.slane %v4587, 1
        %v4649 = vsel %vm654, %v4646, %v4648
        %v4650 = vrot.slane %v4588, 1
        %v4651 = vrot.slane %v4589, 1
        %v4652 = vsel %vm654, %v4650, %v4651
        %v4653 = vrot.slane %v4590, 1
        %v4654 = vsel %vm654, %v4651, %v4653
        %v4671 = vadd.f32 %v4549, %v4617
        %v4672 = vadd.f32 %v4550, %v4619
        %v4673 = vadd.f32 %v4551, %v4622
        %v4674 = vadd.f32 %v4552, %v4624
        %v4675 = vadd.f32 %v4553, %v4627
        %v4676 = vadd.f32 %v4554, %v4629
        %v4677 = vadd.f32 %v4555, %v4632
        %v4678 = vadd.f32 %v4556, %v4634
        %v4679 = vadd.f32 %v4557, %v4637
        %v4680 = vadd.f32 %v4558, %v4639
        %v4681 = vadd.f32 %v4559, %v4642
        %v4682 = vadd.f32 %v4560, %v4644
        %v4683 = vadd.f32 %v4561, %v4647
        %v4684 = vadd.f32 %v4562, %v4649
        %v4685 = vadd.f32 %v4563, %v4652
        %v4686 = vadd.f32 %v4564, %v4654
        %v4687 = vld [vmem:[%s1 + $0x25] sm:$0x1]
        %v4688 = vperm.slane %v4687, 0
        %v4689 = vmul.f32 %v4507, %v4688
        %v4690 = vmul.f32 %v4508, %v4688
        %v4691 = vmul.f32 %v4509, %v4688
        %v4692 = vmul.f32 %v4510, %v4688
        %v4693 = vmul.f32 %v4511, %v4688
        %v4694 = vmul.f32 %v4512, %v4688
        %v4695 = vmul.f32 %v4513, %v4688
        %v4696 = vmul.f32 %v4514, %v4688
        %v4697 = vmul.f32 %v4515, %v4688
        %v4698 = vmul.f32 %v4516, %v4688
        %v4699 = vmul.f32 %v4517, %v4688
        %v4700 = vmul.f32 %v4518, %v4688
        %v4701 = vmul.f32 %v4519, %v4688
        %v4702 = vmul.f32 %v4520, %v4688
        %v4703 = vmul.f32 %v4521, %v4688
        %v4704 = vmul.f32 %v4522, %v4688
        %v4705 = vmul.f32 %v4523, %v4688
        %v4706 = vmul.f32 %v4524, %v4688
        %v4707 = vmul.f32 %v4525, %v4688
        %v4708 = vmul.f32 %v4526, %v4688
        %v4709 = vmul.f32 %v4527, %v4688
        %v4710 = vmul.f32 %v4528, %v4688
        %v4711 = vmul.f32 %v4529, %v4688
        %v4712 = vmul.f32 %v4530, %v4688
        %v4737 = vrot.slane %v4689, 2
        %v4738 = vrot.slane %v4690, 2
        %v4739 = vsel %vm777, %v4737, %v4738
        %v4740 = vrot.slane %v4691, 2
        %v4741 = vsel %vm777, %v4738, %v4740
        %v4742 = vrot.slane %v4692, 2
        %v4743 = vrot.slane %v4693, 2
        %v4744 = vsel %vm777, %v4742, %v4743
        %v4745 = vrot.slane %v4694, 2
        %v4746 = vsel %vm777, %v4743, %v4745
        %v4747 = vrot.slane %v4695, 2
        %v4748 = vrot.slane %v4696, 2
        %v4749 = vsel %vm777, %v4747, %v4748
        %v4750 = vrot.slane %v4697, 2
        %v4751 = vsel %vm777, %v4748, %v4750
        %v4752 = vrot.slane %v4698, 2
        %v4753 = vrot.slane %v4699, 2
        %v4754 = vsel %vm777, %v4752, %v4753
        %v4755 = vrot.slane %v4700, 2
        %v4756 = vsel %vm777, %v4753, %v4755
        %v4757 = vrot.slane %v4701, 2
        %v4758 = vrot.slane %v4702, 2
        %v4759 = vsel %vm777, %v4757, %v4758
        %v4760 = vrot.slane %v4703, 2
        %v4761 = vsel %vm777, %v4758, %v4760
        %v4762 = vrot.slane %v4704, 2
        %v4763 = vrot.slane %v4705, 2
        %v4764 = vsel %vm777, %v4762, %v4763
        %v4765 = vrot.slane %v4706, 2
        %v4766 = vsel %vm777, %v4763, %v4765
        %v4767 = vrot.slane %v4707, 2
        %v4768 = vrot.slane %v4708, 2
        %v4769 = vsel %vm777, %v4767, %v4768
        %v4770 = vrot.slane %v4709, 2
        %v4771 = vsel %vm777, %v4768, %v4770
        %v4772 = vrot.slane %v4710, 2
        %v4773 = vrot.slane %v4711, 2
        %v4774 = vsel %vm777, %v4772, %v4773
        %v4775 = vrot.slane %v4712, 2
        %v4776 = vsel %vm777, %v4773, %v4775
        %v4793 = vadd.f32 %v4671, %v4739
        %v4794 = vadd.f32 %v4672, %v4741
        %v4795 = vadd.f32 %v4673, %v4744
        %v4796 = vadd.f32 %v4674, %v4746
        %v4797 = vadd.f32 %v4675, %v4749
        %v4798 = vadd.f32 %v4676, %v4751
        %v4799 = vadd.f32 %v4677, %v4754
        %v4800 = vadd.f32 %v4678, %v4756
        %v4801 = vadd.f32 %v4679, %v4759
        %v4802 = vadd.f32 %v4680, %v4761
        %v4803 = vadd.f32 %v4681, %v4764
        %v4804 = vadd.f32 %v4682, %v4766
        %v4805 = vadd.f32 %v4683, %v4769
        %v4806 = vadd.f32 %v4684, %v4771
        %v4807 = vadd.f32 %v4685, %v4774
        %v4808 = vadd.f32 %v4686, %v4776
        %v4809 = vld [vmem:[%s1 + $0x26] sm:$0x1]
        %v4810 = vperm.slane %v4809, 0
        %v4811 = vmul.f32 %v4507, %v4810
        %v4812 = vmul.f32 %v4508, %v4810
        %v4813 = vmul.f32 %v4509, %v4810
        %v4814 = vmul.f32 %v4510, %v4810
        %v4815 = vmul.f32 %v4511, %v4810
        %v4816 = vmul.f32 %v4512, %v4810
        %v4817 = vmul.f32 %v4513, %v4810
        %v4818 = vmul.f32 %v4514, %v4810
        %v4819 = vmul.f32 %v4515, %v4810
        %v4820 = vmul.f32 %v4516, %v4810
        %v4821 = vmul.f32 %v4517, %v4810
        %v4822 = vmul.f32 %v4518, %v4810
        %v4823 = vmul.f32 %v4519, %v4810
        %v4824 = vmul.f32 %v4520, %v4810
        %v4825 = vmul.f32 %v4521, %v4810
        %v4826 = vmul.f32 %v4522, %v4810
        %v4827 = vmul.f32 %v4523, %v4810
        %v4828 = vmul.f32 %v4524, %v4810
        %v4829 = vmul.f32 %v4525, %v4810
        %v4830 = vmul.f32 %v4526, %v4810
        %v4831 = vmul.f32 %v4527, %v4810
        %v4832 = vmul.f32 %v4528, %v4810
        %v4833 = vmul.f32 %v4529, %v4810
        %v4834 = vmul.f32 %v4530, %v4810
        %v4859 = vrot.slane %v4811, 3
        %v4860 = vrot.slane %v4812, 3
        %v4861 = vsel %vm900, %v4859, %v4860
        %v4862 = vrot.slane %v4813, 3
        %v4863 = vsel %vm900, %v4860, %v4862
        %v4864 = vrot.slane %v4814, 3
        %v4865 = vrot.slane %v4815, 3
        %v4866 = vsel %vm900, %v4864, %v4865
        %v4867 = vrot.slane %v4816, 3
        %v4868 = vsel %vm900, %v4865, %v4867
        %v4869 = vrot.slane %v4817, 3
        %v4870 = vrot.slane %v4818, 3
        %v4871 = vsel %vm900, %v4869, %v4870
        %v4872 = vrot.slane %v4819, 3
        %v4873 = vsel %vm900, %v4870, %v4872
        %v4874 = vrot.slane %v4820, 3
        %v4875 = vrot.slane %v4821, 3
        %v4876 = vsel %vm900, %v4874, %v4875
        %v4877 = vrot.slane %v4822, 3
        %v4878 = vsel %vm900, %v4875, %v4877
        %v4879 = vrot.slane %v4823, 3
        %v4880 = vrot.slane %v4824, 3
        %v4881 = vsel %vm900, %v4879, %v4880
        %v4882 = vrot.slane %v4825, 3
        %v4883 = vsel %vm900, %v4880, %v4882
        %v4884 = vrot.slane %v4826, 3
        %v4885 = vrot.slane %v4827, 3
        %v4886 = vsel %vm900, %v4884, %v4885
        %v4887 = vrot.slane %v4828, 3
        %v4888 = vsel %vm900, %v4885, %v4887
        %v4889 = vrot.slane %v4829, 3
        %v4890 = vrot.slane %v4830, 3
        %v4891 = vsel %vm900, %v4889, %v4890
        %v4892 = vrot.slane %v4831, 3
        %v4893 = vsel %vm900, %v4890, %v4892
        %v4894 = vrot.slane %v4832, 3
        %v4895 = vrot.slane %v4833, 3
        %v4896 = vsel %vm900, %v4894, %v4895
        %v4897 = vrot.slane %v4834, 3
        %v4898 = vsel %vm900, %v4895, %v4897
        %v4915 = vadd.f32 %v4793, %v4861
        %v4916 = vadd.f32 %v4794, %v4863
        %v4917 = vadd.f32 %v4795, %v4866
        %v4918 = vadd.f32 %v4796, %v4868
        %v4919 = vadd.f32 %v4797, %v4871
        %v4920 = vadd.f32 %v4798, %v4873
        %v4921 = vadd.f32 %v4799, %v4876
        %v4922 = vadd.f32 %v4800, %v4878
        %v4923 = vadd.f32 %v4801, %v4881
        %v4924 = vadd.f32 %v4802, %v4883
        %v4925 = vadd.f32 %v4803, %v4886
        %v4926 = vadd.f32 %v4804, %v4888
        %v4927 = vadd.f32 %v4805, %v4891
        %v4928 = vadd.f32 %v4806, %v4893
        %v4929 = vadd.f32 %v4807, %v4896
        %v4930 = vadd.f32 %v4808, %v4898
        %v4931 = vld [vmem:[%s1 + $0x27] sm:$0x1]
        %v4932 = vperm.slane %v4931, 0
        %v4933 = vmul.f32 %v4507, %v4932
        %v4934 = vmul.f32 %v4508, %v4932
        %v4935 = vmul.f32 %v4509, %v4932
        %v4936 = vmul.f32 %v4510, %v4932
        %v4937 = vmul.f32 %v4511, %v4932
        %v4938 = vmul.f32 %v4512, %v4932
        %v4939 = vmul.f32 %v4513, %v4932
        %v4940 = vmul.f32 %v4514, %v4932
        %v4941 = vmul.f32 %v4515, %v4932
        %v4942 = vmul.f32 %v4516, %v4932
        %v4943 = vmul.f32 %v4517, %v4932
        %v4944 = vmul.f32 %v4518, %v4932
        %v4945 = vmul.f32 %v4519, %v4932
        %v4946 = vmul.f32 %v4520, %v4932
        %v4947 = vmul.f32 %v4521, %v4932
        %v4948 = vmul.f32 %v4522, %v4932
        %v4949 = vmul.f32 %v4523, %v4932
        %v4950 = vmul.f32 %v4524, %v4932
        %v4951 = vmul.f32 %v4525, %v4932
        %v4952 = vmul.f32 %v4526, %v4932
        %v4953 = vmul.f32 %v4527, %v4932
        %v4954 = vmul.f32 %v4528, %v4932
        %v4955 = vmul.f32 %v4529, %v4932
        %v4956 = vmul.f32 %v4530, %v4932
        %v4981 = vrot.slane %v4933, 4
        %v4982 = vrot.slane %v4934, 4
        %v4983 = vsel %vm1023, %v4981, %v4982
        %v4984 = vrot.slane %v4935, 4
        %v4985 = vsel %vm1023, %v4982, %v4984
        %v4986 = vrot.slane %v4936, 4
        %v4987 = vrot.slane %v4937, 4
        %v4988 = vsel %vm1023, %v4986, %v4987
        %v4989 = vrot.slane %v4938, 4
        %v4990 = vsel %vm1023, %v4987, %v4989
        %v4991 = vrot.slane %v4939, 4
        %v4992 = vrot.slane %v4940, 4
        %v4993 = vsel %vm1023, %v4991, %v4992
        %v4994 = vrot.slane %v4941, 4
        %v4995 = vsel %vm1023, %v4992, %v4994
        %v4996 = vrot.slane %v4942, 4
        %v4997 = vrot.slane %v4943, 4
        %v4998 = vsel %vm1023, %v4996, %v4997
        %v4999 = vrot.slane %v4944, 4
        %v5000 = vsel %vm1023, %v4997, %v4999
        %v5001 = vrot.slane %v4945, 4
        %v5002 = vrot.slane %v4946, 4
        %v5003 = vsel %vm1023, %v5001, %v5002
        %v5004 = vrot.slane %v4947, 4
        %v5005 = vsel %vm1023, %v5002, %v5004
        %v5006 = vrot.slane %v4948, 4
        %v5007 = vrot.slane %v4949, 4
        %v5008 = vsel %vm1023, %v5006, %v5007
        %v5009 = vrot.slane %v4950, 4
        %v5010 = vsel %vm1023, %v5007, %v5009
        %v5011 = vrot.slane %v4951, 4
        %v5012 = vrot.slane %v4952, 4
        %v5013 = vsel %vm1023, %v5011, %v5012
        %v5014 = vrot.slane %v4953, 4
        %v5015 = vsel %vm1023, %v5012, %v5014
        %v5016 = vrot.slane %v4954, 4
        %v5017 = vrot.slane %v4955, 4
        %v5018 = vsel %vm1023, %v5016, %v5017
        %v5019 = vrot.slane %v4956, 4
        %v5020 = vsel %vm1023, %v5017, %v5019
        %v5037 = vadd.f32 %v4915, %v4983
        %v5038 = vadd.f32 %v4916, %v4985
        %v5039 = vadd.f32 %v4917, %v4988
        %v5040 = vadd.f32 %v4918, %v4990
        %v5041 = vadd.f32 %v4919, %v4993
        %v5042 = vadd.f32 %v4920, %v4995
        %v5043 = vadd.f32 %v4921, %v4998
        %v5044 = vadd.f32 %v4922, %v5000
        %v5045 = vadd.f32 %v4923, %v5003
        %v5046 = vadd.f32 %v4924, %v5005
        %v5047 = vadd.f32 %v4925, %v5008
        %v5048 = vadd.f32 %v4926, %v5010
        %v5049 = vadd.f32 %v4927, %v5013
        %v5050 = vadd.f32 %v4928, %v5015
        %v5051 = vadd.f32 %v4929, %v5018
        %v5052 = vadd.f32 %v4930, %v5020
        %v5053 = vld [vmem:[%s1 + $0x28] sm:$0x1]
        %v5054 = vperm.slane %v5053, 0
        %v5055 = vmul.f32 %v4507, %v5054
        %v5056 = vmul.f32 %v4508, %v5054
        %v5057 = vmul.f32 %v4509, %v5054
        %v5058 = vmul.f32 %v4510, %v5054
        %v5059 = vmul.f32 %v4511, %v5054
        %v5060 = vmul.f32 %v4512, %v5054
        %v5061 = vmul.f32 %v4513, %v5054
        %v5062 = vmul.f32 %v4514, %v5054
        %v5063 = vmul.f32 %v4515, %v5054
        %v5064 = vmul.f32 %v4516, %v5054
        %v5065 = vmul.f32 %v4517, %v5054
        %v5066 = vmul.f32 %v4518, %v5054
        %v5067 = vmul.f32 %v4519, %v5054
        %v5068 = vmul.f32 %v4520, %v5054
        %v5069 = vmul.f32 %v4521, %v5054
        %v5070 = vmul.f32 %v4522, %v5054
        %v5071 = vmul.f32 %v4523, %v5054
        %v5072 = vmul.f32 %v4524, %v5054
        %v5073 = vmul.f32 %v4525, %v5054
        %v5074 = vmul.f32 %v4526, %v5054
        %v5075 = vmul.f32 %v4527, %v5054
        %v5076 = vmul.f32 %v4528, %v5054
        %v5077 = vmul.f32 %v4529, %v5054
        %v5078 = vmul.f32 %v4530, %v5054
        %v5103 = vrot.slane %v5055, 5
        %v5104 = vrot.slane %v5056, 5
        %v5105 = vsel %vm1146, %v5103, %v5104
        %v5106 = vrot.slane %v5057, 5
        %v5107 = vsel %vm1146, %v5104, %v5106
        %v5108 = vrot.slane %v5058, 5
        %v5109 = vrot.slane %v5059, 5
        %v5110 = vsel %vm1146, %v5108, %v5109
        %v5111 = vrot.slane %v5060, 5
        %v5112 = vsel %vm1146, %v5109, %v5111
        %v5113 = vrot.slane %v5061, 5
        %v5114 = vrot.slane %v5062, 5
        %v5115 = vsel %vm1146, %v5113, %v5114
        %v5116 = vrot.slane %v5063, 5
        %v5117 = vsel %vm1146, %v5114, %v5116
        %v5118 = vrot.slane %v5064, 5
        %v5119 = vrot.slane %v5065, 5
        %v5120 = vsel %vm1146, %v5118, %v5119
        %v5121 = vrot.slane %v5066, 5
        %v5122 = vsel %vm1146, %v5119, %v5121
        %v5123 = vrot.slane %v5067, 5
        %v5124 = vrot.slane %v5068, 5
        %v5125 = vsel %vm1146, %v5123, %v5124
        %v5126 = vrot.slane %v5069, 5
        %v5127 = vsel %vm1146, %v5124, %v5126
        %v5128 = vrot.slane %v5070, 5
        %v5129 = vrot.slane %v5071, 5
        %v5130 = vsel %vm1146, %v5128, %v5129
        %v5131 = vrot.slane %v5072, 5
        %v5132 = vsel %vm1146, %v5129, %v5131
        %v5133 = vrot.slane %v5073, 5
        %v5134 = vrot.slane %v5074, 5
        %v5135 = vsel %vm1146, %v5133, %v5134
        %v5136 = vrot.slane %v5075, 5
        %v5137 = vsel %vm1146, %v5134, %v5136
        %v5138 = vrot.slane %v5076, 5
        %v5139 = vrot.slane %v5077, 5
        %v5140 = vsel %vm1146, %v5138, %v5139
        %v5141 = vrot.slane %v5078, 5
        %v5142 = vsel %vm1146, %v5139, %v5141
        %v5159 = vadd.f32 %v5037, %v5105
        %v5160 = vadd.f32 %v5038, %v5107
        %v5161 = vadd.f32 %v5039, %v5110
        %v5162 = vadd.f32 %v5040, %v5112
        %v5163 = vadd.f32 %v5041, %v5115
        %v5164 = vadd.f32 %v5042, %v5117
        %v5165 = vadd.f32 %v5043, %v5120
        %v5166 = vadd.f32 %v5044, %v5122
        %v5167 = vadd.f32 %v5045, %v5125
        %v5168 = vadd.f32 %v5046, %v5127
        %v5169 = vadd.f32 %v5047, %v5130
        %v5170 = vadd.f32 %v5048, %v5132
        %v5171 = vadd.f32 %v5049, %v5135
        %v5172 = vadd.f32 %v5050, %v5137
        %v5173 = vadd.f32 %v5051, %v5140
        %v5174 = vadd.f32 %v5052, %v5142
        %v5175 = vld [vmem:[%s1 + $0x29] sm:$0x1]
        %v5176 = vperm.slane %v5175, 0
        %v5177 = vmul.f32 %v4507, %v5176
        %v5178 = vmul.f32 %v4508, %v5176
        %v5179 = vmul.f32 %v4509, %v5176
        %v5180 = vmul.f32 %v4510, %v5176
        %v5181 = vmul.f32 %v4511, %v5176
        %v5182 = vmul.f32 %v4512, %v5176
        %v5183 = vmul.f32 %v4513, %v5176
        %v5184 = vmul.f32 %v4514, %v5176
        %v5185 = vmul.f32 %v4515, %v5176
        %v5186 = vmul.f32 %v4516, %v5176
        %v5187 = vmul.f32 %v4517, %v5176
        %v5188 = vmul.f32 %v4518, %v5176
        %v5189 = vmul.f32 %v4519, %v5176
        %v5190 = vmul.f32 %v4520, %v5176
        %v5191 = vmul.f32 %v4521, %v5176
        %v5192 = vmul.f32 %v4522, %v5176
        %v5193 = vmul.f32 %v4523, %v5176
        %v5194 = vmul.f32 %v4524, %v5176
        %v5195 = vmul.f32 %v4525, %v5176
        %v5196 = vmul.f32 %v4526, %v5176
        %v5197 = vmul.f32 %v4527, %v5176
        %v5198 = vmul.f32 %v4528, %v5176
        %v5199 = vmul.f32 %v4529, %v5176
        %v5200 = vmul.f32 %v4530, %v5176
        %v5225 = vrot.slane %v5177, 6
        %v5226 = vrot.slane %v5178, 6
        %v5227 = vsel %vm1269, %v5225, %v5226
        %v5228 = vrot.slane %v5179, 6
        %v5229 = vsel %vm1269, %v5226, %v5228
        %v5230 = vrot.slane %v5180, 6
        %v5231 = vrot.slane %v5181, 6
        %v5232 = vsel %vm1269, %v5230, %v5231
        %v5233 = vrot.slane %v5182, 6
        %v5234 = vsel %vm1269, %v5231, %v5233
        %v5235 = vrot.slane %v5183, 6
        %v5236 = vrot.slane %v5184, 6
        %v5237 = vsel %vm1269, %v5235, %v5236
        %v5238 = vrot.slane %v5185, 6
        %v5239 = vsel %vm1269, %v5236, %v5238
        %v5240 = vrot.slane %v5186, 6
        %v5241 = vrot.slane %v5187, 6
        %v5242 = vsel %vm1269, %v5240, %v5241
        %v5243 = vrot.slane %v5188, 6
        %v5244 = vsel %vm1269, %v5241, %v5243
        %v5245 = vrot.slane %v5189, 6
        %v5246 = vrot.slane %v5190, 6
        %v5247 = vsel %vm1269, %v5245, %v5246
        %v5248 = vrot.slane %v5191, 6
        %v5249 = vsel %vm1269, %v5246, %v5248
        %v5250 = vrot.slane %v5192, 6
        %v5251 = vrot.slane %v5193, 6
        %v5252 = vsel %vm1269, %v5250, %v5251
        %v5253 = vrot.slane %v5194, 6
        %v5254 = vsel %vm1269, %v5251, %v5253
        %v5255 = vrot.slane %v5195, 6
        %v5256 = vrot.slane %v5196, 6
        %v5257 = vsel %vm1269, %v5255, %v5256
        %v5258 = vrot.slane %v5197, 6
        %v5259 = vsel %vm1269, %v5256, %v5258
        %v5260 = vrot.slane %v5198, 6
        %v5261 = vrot.slane %v5199, 6
        %v5262 = vsel %vm1269, %v5260, %v5261
        %v5263 = vrot.slane %v5200, 6
        %v5264 = vsel %vm1269, %v5261, %v5263
        %v5281 = vadd.f32 %v5159, %v5227
        %v5282 = vadd.f32 %v5160, %v5229
        %v5283 = vadd.f32 %v5161, %v5232
        %v5284 = vadd.f32 %v5162, %v5234
        %v5285 = vadd.f32 %v5163, %v5237
        %v5286 = vadd.f32 %v5164, %v5239
        %v5287 = vadd.f32 %v5165, %v5242
        %v5288 = vadd.f32 %v5166, %v5244
        %v5289 = vadd.f32 %v5167, %v5247
        %v5290 = vadd.f32 %v5168, %v5249
        %v5291 = vadd.f32 %v5169, %v5252
        %v5292 = vadd.f32 %v5170, %v5254
        %v5293 = vadd.f32 %v5171, %v5257
        %v5294 = vadd.f32 %v5172, %v5259
        %v5295 = vadd.f32 %v5173, %v5262
        %v5296 = vadd.f32 %v5174, %v5264
        %s5297 = scalar_lea.vmem [#allocation3], 144
        %v5298 = vld [vmem:[%s5297] sm:$0xff]
        %v5299 = vld [vmem:[%s5297 + $0x8] sm:$0xff]
        %v5300 = vld [vmem:[%s5297 + $0x10] sm:$0x3f]
        %v5301 = vld [vmem:[%s5297 + $0x18] sm:$0xff]
        %v5302 = vld [vmem:[%s5297 + $0x20] sm:$0xff]
        %v5303 = vld [vmem:[%s5297 + $0x28] sm:$0x3f]
        %v5304 = vld [vmem:[%s5297 + $0x30] sm:$0xff]
        %v5305 = vld [vmem:[%s5297 + $0x38] sm:$0xff]
        %v5306 = vld [vmem:[%s5297 + $0x40] sm:$0x3f]
        %v5307 = vld [vmem:[%s5297 + $0x48] sm:$0xff]
        %v5308 = vld [vmem:[%s5297 + $0x50] sm:$0xff]
        %v5309 = vld [vmem:[%s5297 + $0x58] sm:$0x3f]
        %v5310 = vld [vmem:[%s5297 + $0x60] sm:$0xff]
        %v5311 = vld [vmem:[%s5297 + $0x68] sm:$0xff]
        %v5312 = vld [vmem:[%s5297 + $0x70] sm:$0x3f]
        %v5313 = vld [vmem:[%s5297 + $0x78] sm:$0xff]
        %v5314 = vld [vmem:[%s5297 + $0x80] sm:$0xff]
        %v5315 = vld [vmem:[%s5297 + $0x88] sm:$0x3f]
        %v5316 = vld [vmem:[%s5297 + $0x90] sm:$0xff]
        %v5317 = vld [vmem:[%s5297 + $0x98] sm:$0xff]
        %v5318 = vld [vmem:[%s5297 + $0xa0] sm:$0x3f]
        %v5319 = vld [vmem:[%s5297 + $0xa8] sm:$0xff]
        %v5320 = vld [vmem:[%s5297 + $0xb0] sm:$0xff]
        %v5321 = vld [vmem:[%s5297 + $0xb8] sm:$0x3f]
        %v5322 = vld [vmem:[%s1 + $0x2a] sm:$0x1]
        %v5323 = vperm.slane %v5322, 0
        %v5324 = vmul.f32 %v5298, %v5323
        %v5325 = vmul.f32 %v5299, %v5323
        %v5326 = vmul.f32 %v5301, %v5323
        %v5327 = vmul.f32 %v5302, %v5323
        %v5328 = vmul.f32 %v5304, %v5323
        %v5329 = vmul.f32 %v5305, %v5323
        %v5330 = vmul.f32 %v5307, %v5323
        %v5331 = vmul.f32 %v5308, %v5323
        %v5332 = vmul.f32 %v5310, %v5323
        %v5333 = vmul.f32 %v5311, %v5323
        %v5334 = vmul.f32 %v5313, %v5323
        %v5335 = vmul.f32 %v5314, %v5323
        %v5336 = vmul.f32 %v5316, %v5323
        %v5337 = vmul.f32 %v5317, %v5323
        %v5338 = vmul.f32 %v5319, %v5323
        %v5339 = vmul.f32 %v5320, %v5323
        %v5340 = vadd.f32 %v5281, %v5324
        %v5341 = vadd.f32 %v5282, %v5325
        %v5342 = vadd.f32 %v5283, %v5326
        %v5343 = vadd.f32 %v5284, %v5327
        %v5344 = vadd.f32 %v5285, %v5328
        %v5345 = vadd.f32 %v5286, %v5329
        %v5346 = vadd.f32 %v5287, %v5330
        %v5347 = vadd.f32 %v5288, %v5331
        %v5348 = vadd.f32 %v5289, %v5332
        %v5349 = vadd.f32 %v5290, %v5333
        %v5350 = vadd.f32 %v5291, %v5334
        %v5351 = vadd.f32 %v5292, %v5335
        %v5352 = vadd.f32 %v5293, %v5336
        %v5353 = vadd.f32 %v5294, %v5337
        %v5354 = vadd.f32 %v5295, %v5338
        %v5355 = vadd.f32 %v5296, %v5339
        %v5356 = vld [vmem:[%s1 + $0x2b] sm:$0x1]
        %v5357 = vperm.slane %v5356, 0
        %v5358 = vmul.f32 %v5298, %v5357
        %v5359 = vmul.f32 %v5299, %v5357
        %v5360 = vmul.f32 %v5300, %v5357
        %v5361 = vmul.f32 %v5301, %v5357
        %v5362 = vmul.f32 %v5302, %v5357
        %v5363 = vmul.f32 %v5303, %v5357
        %v5364 = vmul.f32 %v5304, %v5357
        %v5365 = vmul.f32 %v5305, %v5357
        %v5366 = vmul.f32 %v5306, %v5357
        %v5367 = vmul.f32 %v5307, %v5357
        %v5368 = vmul.f32 %v5308, %v5357
        %v5369 = vmul.f32 %v5309, %v5357
        %v5370 = vmul.f32 %v5310, %v5357
        %v5371 = vmul.f32 %v5311, %v5357
        %v5372 = vmul.f32 %v5312, %v5357
        %v5373 = vmul.f32 %v5313, %v5357
        %v5374 = vmul.f32 %v5314, %v5357
        %v5375 = vmul.f32 %v5315, %v5357
        %v5376 = vmul.f32 %v5316, %v5357
        %v5377 = vmul.f32 %v5317, %v5357
        %v5378 = vmul.f32 %v5318, %v5357
        %v5379 = vmul.f32 %v5319, %v5357
        %v5380 = vmul.f32 %v5320, %v5357
        %v5381 = vmul.f32 %v5321, %v5357
        %v5406 = vrot.slane %v5358, 1
        %v5407 = vrot.slane %v5359, 1
        %v5408 = vsel %vm654, %v5406, %v5407
        %v5409 = vrot.slane %v5360, 1
        %v5410 = vsel %vm654, %v5407, %v5409
        %v5411 = vrot.slane %v5361, 1
        %v5412 = vrot.slane %v5362, 1
        %v5413 = vsel %vm654, %v5411, %v5412
        %v5414 = vrot.slane %v5363, 1
        %v5415 = vsel %vm654, %v5412, %v5414
        %v5416 = vrot.slane %v5364, 1
        %v5417 = vrot.slane %v5365, 1
        %v5418 = vsel %vm654, %v5416, %v5417
        %v5419 = vrot.slane %v5366, 1
        %v5420 = vsel %vm654, %v5417, %v5419
        %v5421 = vrot.slane %v5367, 1
        %v5422 = vrot.slane %v5368, 1
        %v5423 = vsel %vm654, %v5421, %v5422
        %v5424 = vrot.slane %v5369, 1
        %v5425 = vsel %vm654, %v5422, %v5424
        %v5426 = vrot.slane %v5370, 1
        %v5427 = vrot.slane %v5371, 1
        %v5428 = vsel %vm654, %v5426, %v5427
        %v5429 = vrot.slane %v5372, 1
        %v5430 = vsel %vm654, %v5427, %v5429
        %v5431 = vrot.slane %v5373, 1
        %v5432 = vrot.slane %v5374, 1
        %v5433 = vsel %vm654, %v5431, %v5432
        %v5434 = vrot.slane %v5375, 1
        %v5435 = vsel %vm654, %v5432, %v5434
        %v5436 = vrot.slane %v5376, 1
        %v5437 = vrot.slane %v5377, 1
        %v5438 = vsel %vm654, %v5436, %v5437
        %v5439 = vrot.slane %v5378, 1
        %v5440 = vsel %vm654, %v5437, %v5439
        %v5441 = vrot.slane %v5379, 1
        %v5442 = vrot.slane %v5380, 1
        %v5443 = vsel %vm654, %v5441, %v5442
        %v5444 = vrot.slane %v5381, 1
        %v5445 = vsel %vm654, %v5442, %v5444
        %v5462 = vadd.f32 %v5340, %v5408
        %v5463 = vadd.f32 %v5341, %v5410
        %v5464 = vadd.f32 %v5342, %v5413
        %v5465 = vadd.f32 %v5343, %v5415
        %v5466 = vadd.f32 %v5344, %v5418
        %v5467 = vadd.f32 %v5345, %v5420
        %v5468 = vadd.f32 %v5346, %v5423
        %v5469 = vadd.f32 %v5347, %v5425
        %v5470 = vadd.f32 %v5348, %v5428
        %v5471 = vadd.f32 %v5349, %v5430
        %v5472 = vadd.f32 %v5350, %v5433
        %v5473 = vadd.f32 %v5351, %v5435
        %v5474 = vadd.f32 %v5352, %v5438
        %v5475 = vadd.f32 %v5353, %v5440
        %v5476 = vadd.f32 %v5354, %v5443
        %v5477 = vadd.f32 %v5355, %v5445
        %v5478 = vld [vmem:[%s1 + $0x2c] sm:$0x1]
        %v5479 = vperm.slane %v5478, 0
        %v5480 = vmul.f32 %v5298, %v5479
        %v5481 = vmul.f32 %v5299, %v5479
        %v5482 = vmul.f32 %v5300, %v5479
        %v5483 = vmul.f32 %v5301, %v5479
        %v5484 = vmul.f32 %v5302, %v5479
        %v5485 = vmul.f32 %v5303, %v5479
        %v5486 = vmul.f32 %v5304, %v5479
        %v5487 = vmul.f32 %v5305, %v5479
        %v5488 = vmul.f32 %v5306, %v5479
        %v5489 = vmul.f32 %v5307, %v5479
        %v5490 = vmul.f32 %v5308, %v5479
        %v5491 = vmul.f32 %v5309, %v5479
        %v5492 = vmul.f32 %v5310, %v5479
        %v5493 = vmul.f32 %v5311, %v5479
        %v5494 = vmul.f32 %v5312, %v5479
        %v5495 = vmul.f32 %v5313, %v5479
        %v5496 = vmul.f32 %v5314, %v5479
        %v5497 = vmul.f32 %v5315, %v5479
        %v5498 = vmul.f32 %v5316, %v5479
        %v5499 = vmul.f32 %v5317, %v5479
        %v5500 = vmul.f32 %v5318, %v5479
        %v5501 = vmul.f32 %v5319, %v5479
        %v5502 = vmul.f32 %v5320, %v5479
        %v5503 = vmul.f32 %v5321, %v5479
        %v5528 = vrot.slane %v5480, 2
        %v5529 = vrot.slane %v5481, 2
        %v5530 = vsel %vm777, %v5528, %v5529
        %v5531 = vrot.slane %v5482, 2
        %v5532 = vsel %vm777, %v5529, %v5531
        %v5533 = vrot.slane %v5483, 2
        %v5534 = vrot.slane %v5484, 2
        %v5535 = vsel %vm777, %v5533, %v5534
        %v5536 = vrot.slane %v5485, 2
        %v5537 = vsel %vm777, %v5534, %v5536
        %v5538 = vrot.slane %v5486, 2
        %v5539 = vrot.slane %v5487, 2
        %v5540 = vsel %vm777, %v5538, %v5539
        %v5541 = vrot.slane %v5488, 2
        %v5542 = vsel %vm777, %v5539, %v5541
        %v5543 = vrot.slane %v5489, 2
        %v5544 = vrot.slane %v5490, 2
        %v5545 = vsel %vm777, %v5543, %v5544
        %v5546 = vrot.slane %v5491, 2
        %v5547 = vsel %vm777, %v5544, %v5546
        %v5548 = vrot.slane %v5492, 2
        %v5549 = vrot.slane %v5493, 2
        %v5550 = vsel %vm777, %v5548, %v5549
        %v5551 = vrot.slane %v5494, 2
        %v5552 = vsel %vm777, %v5549, %v5551
        %v5553 = vrot.slane %v5495, 2
        %v5554 = vrot.slane %v5496, 2
        %v5555 = vsel %vm777, %v5553, %v5554
        %v5556 = vrot.slane %v5497, 2
        %v5557 = vsel %vm777, %v5554, %v5556
        %v5558 = vrot.slane %v5498, 2
        %v5559 = vrot.slane %v5499, 2
        %v5560 = vsel %vm777, %v5558, %v5559
        %v5561 = vrot.slane %v5500, 2
        %v5562 = vsel %vm777, %v5559, %v5561
        %v5563 = vrot.slane %v5501, 2
        %v5564 = vrot.slane %v5502, 2
        %v5565 = vsel %vm777, %v5563, %v5564
        %v5566 = vrot.slane %v5503, 2
        %v5567 = vsel %vm777, %v5564, %v5566
        %v5584 = vadd.f32 %v5462, %v5530
        %v5585 = vadd.f32 %v5463, %v5532
        %v5586 = vadd.f32 %v5464, %v5535
        %v5587 = vadd.f32 %v5465, %v5537
        %v5588 = vadd.f32 %v5466, %v5540
        %v5589 = vadd.f32 %v5467, %v5542
        %v5590 = vadd.f32 %v5468, %v5545
        %v5591 = vadd.f32 %v5469, %v5547
        %v5592 = vadd.f32 %v5470, %v5550
        %v5593 = vadd.f32 %v5471, %v5552
        %v5594 = vadd.f32 %v5472, %v5555
        %v5595 = vadd.f32 %v5473, %v5557
        %v5596 = vadd.f32 %v5474, %v5560
        %v5597 = vadd.f32 %v5475, %v5562
        %v5598 = vadd.f32 %v5476, %v5565
        %v5599 = vadd.f32 %v5477, %v5567
        %v5600 = vld [vmem:[%s1 + $0x2d] sm:$0x1]
        %v5601 = vperm.slane %v5600, 0
        %v5602 = vmul.f32 %v5298, %v5601
        %v5603 = vmul.f32 %v5299, %v5601
        %v5604 = vmul.f32 %v5300, %v5601
        %v5605 = vmul.f32 %v5301, %v5601
        %v5606 = vmul.f32 %v5302, %v5601
        %v5607 = vmul.f32 %v5303, %v5601
        %v5608 = vmul.f32 %v5304, %v5601
        %v5609 = vmul.f32 %v5305, %v5601
        %v5610 = vmul.f32 %v5306, %v5601
        %v5611 = vmul.f32 %v5307, %v5601
        %v5612 = vmul.f32 %v5308, %v5601
        %v5613 = vmul.f32 %v5309, %v5601
        %v5614 = vmul.f32 %v5310, %v5601
        %v5615 = vmul.f32 %v5311, %v5601
        %v5616 = vmul.f32 %v5312, %v5601
        %v5617 = vmul.f32 %v5313, %v5601
        %v5618 = vmul.f32 %v5314, %v5601
        %v5619 = vmul.f32 %v5315, %v5601
        %v5620 = vmul.f32 %v5316, %v5601
        %v5621 = vmul.f32 %v5317, %v5601
        %v5622 = vmul.f32 %v5318, %v5601
        %v5623 = vmul.f32 %v5319, %v5601
        %v5624 = vmul.f32 %v5320, %v5601
        %v5625 = vmul.f32 %v5321, %v5601
        %v5650 = vrot.slane %v5602, 3
        %v5651 = vrot.slane %v5603, 3
        %v5652 = vsel %vm900, %v5650, %v5651
        %v5653 = vrot.slane %v5604, 3
        %v5654 = vsel %vm900, %v5651, %v5653
        %v5655 = vrot.slane %v5605, 3
        %v5656 = vrot.slane %v5606, 3
        %v5657 = vsel %vm900, %v5655, %v5656
        %v5658 = vrot.slane %v5607, 3
        %v5659 = vsel %vm900, %v5656, %v5658
        %v5660 = vrot.slane %v5608, 3
        %v5661 = vrot.slane %v5609, 3
        %v5662 = vsel %vm900, %v5660, %v5661
        %v5663 = vrot.slane %v5610, 3
        %v5664 = vsel %vm900, %v5661, %v5663
        %v5665 = vrot.slane %v5611, 3
        %v5666 = vrot.slane %v5612, 3
        %v5667 = vsel %vm900, %v5665, %v5666
        %v5668 = vrot.slane %v5613, 3
        %v5669 = vsel %vm900, %v5666, %v5668
        %v5670 = vrot.slane %v5614, 3
        %v5671 = vrot.slane %v5615, 3
        %v5672 = vsel %vm900, %v5670, %v5671
        %v5673 = vrot.slane %v5616, 3
        %v5674 = vsel %vm900, %v5671, %v5673
        %v5675 = vrot.slane %v5617, 3
        %v5676 = vrot.slane %v5618, 3
        %v5677 = vsel %vm900, %v5675, %v5676
        %v5678 = vrot.slane %v5619, 3
        %v5679 = vsel %vm900, %v5676, %v5678
        %v5680 = vrot.slane %v5620, 3
        %v5681 = vrot.slane %v5621, 3
        %v5682 = vsel %vm900, %v5680, %v5681
        %v5683 = vrot.slane %v5622, 3
        %v5684 = vsel %vm900, %v5681, %v5683
        %v5685 = vrot.slane %v5623, 3
        %v5686 = vrot.slane %v5624, 3
        %v5687 = vsel %vm900, %v5685, %v5686
        %v5688 = vrot.slane %v5625, 3
        %v5689 = vsel %vm900, %v5686, %v5688
        %v5706 = vadd.f32 %v5584, %v5652
        %v5707 = vadd.f32 %v5585, %v5654
        %v5708 = vadd.f32 %v5586, %v5657
        %v5709 = vadd.f32 %v5587, %v5659
        %v5710 = vadd.f32 %v5588, %v5662
        %v5711 = vadd.f32 %v5589, %v5664
        %v5712 = vadd.f32 %v5590, %v5667
        %v5713 = vadd.f32 %v5591, %v5669
        %v5714 = vadd.f32 %v5592, %v5672
        %v5715 = vadd.f32 %v5593, %v5674
        %v5716 = vadd.f32 %v5594, %v5677
        %v5717 = vadd.f32 %v5595, %v5679
        %v5718 = vadd.f32 %v5596, %v5682
        %v5719 = vadd.f32 %v5597, %v5684
        %v5720 = vadd.f32 %v5598, %v5687
        %v5721 = vadd.f32 %v5599, %v5689
        %v5722 = vld [vmem:[%s1 + $0x2e] sm:$0x1]
        %v5723 = vperm.slane %v5722, 0
        %v5724 = vmul.f32 %v5298, %v5723
        %v5725 = vmul.f32 %v5299, %v5723
        %v5726 = vmul.f32 %v5300, %v5723
        %v5727 = vmul.f32 %v5301, %v5723
        %v5728 = vmul.f32 %v5302, %v5723
        %v5729 = vmul.f32 %v5303, %v5723
        %v5730 = vmul.f32 %v5304, %v5723
        %v5731 = vmul.f32 %v5305, %v5723
        %v5732 = vmul.f32 %v5306, %v5723
        %v5733 = vmul.f32 %v5307, %v5723
        %v5734 = vmul.f32 %v5308, %v5723
        %v5735 = vmul.f32 %v5309, %v5723
        %v5736 = vmul.f32 %v5310, %v5723
        %v5737 = vmul.f32 %v5311, %v5723
        %v5738 = vmul.f32 %v5312, %v5723
        %v5739 = vmul.f32 %v5313, %v5723
        %v5740 = vmul.f32 %v5314, %v5723
        %v5741 = vmul.f32 %v5315, %v5723
        %v5742 = vmul.f32 %v5316, %v5723
        %v5743 = vmul.f32 %v5317, %v5723
        %v5744 = vmul.f32 %v5318, %v5723
        %v5745 = vmul.f32 %v5319, %v5723
        %v5746 = vmul.f32 %v5320, %v5723
        %v5747 = vmul.f32 %v5321, %v5723
        %v5772 = vrot.slane %v5724, 4
        %v5773 = vrot.slane %v5725, 4
        %v5774 = vsel %vm1023, %v5772, %v5773
        %v5775 = vrot.slane %v5726, 4
        %v5776 = vsel %vm1023, %v5773, %v5775
        %v5777 = vrot.slane %v5727, 4
        %v5778 = vrot.slane %v5728, 4
        %v5779 = vsel %vm1023, %v5777, %v5778
        %v5780 = vrot.slane %v5729, 4
        %v5781 = vsel %vm1023, %v5778, %v5780
        %v5782 = vrot.slane %v5730, 4
        %v5783 = vrot.slane %v5731, 4
        %v5784 = vsel %vm1023, %v5782, %v5783
        %v5785 = vrot.slane %v5732, 4
        %v5786 = vsel %vm1023, %v5783, %v5785
        %v5787 = vrot.slane %v5733, 4
        %v5788 = vrot.slane %v5734, 4
        %v5789 = vsel %vm1023, %v5787, %v5788
        %v5790 = vrot.slane %v5735, 4
        %v5791 = vsel %vm1023, %v5788, %v5790
        %v5792 = vrot.slane %v5736, 4
        %v5793 = vrot.slane %v5737, 4
        %v5794 = vsel %vm1023, %v5792, %v5793
        %v5795 = vrot.slane %v5738, 4
        %v5796 = vsel %vm1023, %v5793, %v5795
        %v5797 = vrot.slane %v5739, 4
        %v5798 = vrot.slane %v5740, 4
        %v5799 = vsel %vm1023, %v5797, %v5798
        %v5800 = vrot.slane %v5741, 4
        %v5801 = vsel %vm1023, %v5798, %v5800
        %v5802 = vrot.slane %v5742, 4
        %v5803 = vrot.slane %v5743, 4
        %v5804 = vsel %vm1023, %v5802, %v5803
        %v5805 = vrot.slane %v5744, 4
        %v5806 = vsel %vm1023, %v5803, %v5805
        %v5807 = vrot.slane %v5745, 4
        %v5808 = vrot.slane %v5746, 4
        %v5809 = vsel %vm1023, %v5807, %v5808
        %v5810 = vrot.slane %v5747, 4
        %v5811 = vsel %vm1023, %v5808, %v5810
        %v5828 = vadd.f32 %v5706, %v5774
        %v5829 = vadd.f32 %v5707, %v5776
        %v5830 = vadd.f32 %v5708, %v5779
        %v5831 = vadd.f32 %v5709, %v5781
        %v5832 = vadd.f32 %v5710, %v5784
        %v5833 = vadd.f32 %v5711, %v5786
        %v5834 = vadd.f32 %v5712, %v5789
        %v5835 = vadd.f32 %v5713, %v5791
        %v5836 = vadd.f32 %v5714, %v5794
        %v5837 = vadd.f32 %v5715, %v5796
        %v5838 = vadd.f32 %v5716, %v5799
        %v5839 = vadd.f32 %v5717, %v5801
        %v5840 = vadd.f32 %v5718, %v5804
        %v5841 = vadd.f32 %v5719, %v5806
        %v5842 = vadd.f32 %v5720, %v5809
        %v5843 = vadd.f32 %v5721, %v5811
        %v5844 = vld [vmem:[%s1 + $0x2f] sm:$0x1]
        %v5845 = vperm.slane %v5844, 0
        %v5846 = vmul.f32 %v5298, %v5845
        %v5847 = vmul.f32 %v5299, %v5845
        %v5848 = vmul.f32 %v5300, %v5845
        %v5849 = vmul.f32 %v5301, %v5845
        %v5850 = vmul.f32 %v5302, %v5845
        %v5851 = vmul.f32 %v5303, %v5845
        %v5852 = vmul.f32 %v5304, %v5845
        %v5853 = vmul.f32 %v5305, %v5845
        %v5854 = vmul.f32 %v5306, %v5845
        %v5855 = vmul.f32 %v5307, %v5845
        %v5856 = vmul.f32 %v5308, %v5845
        %v5857 = vmul.f32 %v5309, %v5845
        %v5858 = vmul.f32 %v5310, %v5845
        %v5859 = vmul.f32 %v5311, %v5845
        %v5860 = vmul.f32 %v5312, %v5845
        %v5861 = vmul.f32 %v5313, %v5845
        %v5862 = vmul.f32 %v5314, %v5845
        %v5863 = vmul.f32 %v5315, %v5845
        %v5864 = vmul.f32 %v5316, %v5845
        %v5865 = vmul.f32 %v5317, %v5845
        %v5866 = vmul.f32 %v5318, %v5845
        %v5867 = vmul.f32 %v5319, %v5845
        %v5868 = vmul.f32 %v5320, %v5845
        %v5869 = vmul.f32 %v5321, %v5845
        %v5894 = vrot.slane %v5846, 5
        %v5895 = vrot.slane %v5847, 5
        %v5896 = vsel %vm1146, %v5894, %v5895
        %v5897 = vrot.slane %v5848, 5
        %v5898 = vsel %vm1146, %v5895, %v5897
        %v5899 = vrot.slane %v5849, 5
        %v5900 = vrot.slane %v5850, 5
        %v5901 = vsel %vm1146, %v5899, %v5900
        %v5902 = vrot.slane %v5851, 5
        %v5903 = vsel %vm1146, %v5900, %v5902
        %v5904 = vrot.slane %v5852, 5
        %v5905 = vrot.slane %v5853, 5
        %v5906 = vsel %vm1146, %v5904, %v5905
        %v5907 = vrot.slane %v5854, 5
        %v5908 = vsel %vm1146, %v5905, %v5907
        %v5909 = vrot.slane %v5855, 5
        %v5910 = vrot.slane %v5856, 5
        %v5911 = vsel %vm1146, %v5909, %v5910
        %v5912 = vrot.slane %v5857, 5
        %v5913 = vsel %vm1146, %v5910, %v5912
        %v5914 = vrot.slane %v5858, 5
        %v5915 = vrot.slane %v5859, 5
        %v5916 = vsel %vm1146, %v5914, %v5915
        %v5917 = vrot.slane %v5860, 5
        %v5918 = vsel %vm1146, %v5915, %v5917
        %v5919 = vrot.slane %v5861, 5
        %v5920 = vrot.slane %v5862, 5
        %v5921 = vsel %vm1146, %v5919, %v5920
        %v5922 = vrot.slane %v5863, 5
        %v5923 = vsel %vm1146, %v5920, %v5922
        %v5924 = vrot.slane %v5864, 5
        %v5925 = vrot.slane %v5865, 5
        %v5926 = vsel %vm1146, %v5924, %v5925
        %v5927 = vrot.slane %v5866, 5
        %v5928 = vsel %vm1146, %v5925, %v5927
        %v5929 = vrot.slane %v5867, 5
        %v5930 = vrot.slane %v5868, 5
        %v5931 = vsel %vm1146, %v5929, %v5930
        %v5932 = vrot.slane %v5869, 5
        %v5933 = vsel %vm1146, %v5930, %v5932
        %v5950 = vadd.f32 %v5828, %v5896
        %v5951 = vadd.f32 %v5829, %v5898
        %v5952 = vadd.f32 %v5830, %v5901
        %v5953 = vadd.f32 %v5831, %v5903
        %v5954 = vadd.f32 %v5832, %v5906
        %v5955 = vadd.f32 %v5833, %v5908
        %v5956 = vadd.f32 %v5834, %v5911
        %v5957 = vadd.f32 %v5835, %v5913
        %v5958 = vadd.f32 %v5836, %v5916
        %v5959 = vadd.f32 %v5837, %v5918
        %v5960 = vadd.f32 %v5838, %v5921
        %v5961 = vadd.f32 %v5839, %v5923
        %v5962 = vadd.f32 %v5840, %v5926
        %v5963 = vadd.f32 %v5841, %v5928
        %v5964 = vadd.f32 %v5842, %v5931
        %v5965 = vadd.f32 %v5843, %v5933
        %v5966 = vld [vmem:[%s1 + $0x30] sm:$0x1]
        %v5967 = vperm.slane %v5966, 0
        %v5968 = vmul.f32 %v5298, %v5967
        %v5969 = vmul.f32 %v5299, %v5967
        %v5970 = vmul.f32 %v5300, %v5967
        %v5971 = vmul.f32 %v5301, %v5967
        %v5972 = vmul.f32 %v5302, %v5967
        %v5973 = vmul.f32 %v5303, %v5967
        %v5974 = vmul.f32 %v5304, %v5967
        %v5975 = vmul.f32 %v5305, %v5967
        %v5976 = vmul.f32 %v5306, %v5967
        %v5977 = vmul.f32 %v5307, %v5967
        %v5978 = vmul.f32 %v5308, %v5967
        %v5979 = vmul.f32 %v5309, %v5967
        %v5980 = vmul.f32 %v5310, %v5967
        %v5981 = vmul.f32 %v5311, %v5967
        %v5982 = vmul.f32 %v5312, %v5967
        %v5983 = vmul.f32 %v5313, %v5967
        %v5984 = vmul.f32 %v5314, %v5967
        %v5985 = vmul.f32 %v5315, %v5967
        %v5986 = vmul.f32 %v5316, %v5967
        %v5987 = vmul.f32 %v5317, %v5967
        %v5988 = vmul.f32 %v5318, %v5967
        %v5989 = vmul.f32 %v5319, %v5967
        %v5990 = vmul.f32 %v5320, %v5967
        %v5991 = vmul.f32 %v5321, %v5967
        %v6016 = vrot.slane %v5968, 6
        %v6017 = vrot.slane %v5969, 6
        %v6018 = vsel %vm1269, %v6016, %v6017
        %v6019 = vrot.slane %v5970, 6
        %v6020 = vsel %vm1269, %v6017, %v6019
        %v6021 = vrot.slane %v5971, 6
        %v6022 = vrot.slane %v5972, 6
        %v6023 = vsel %vm1269, %v6021, %v6022
        %v6024 = vrot.slane %v5973, 6
        %v6025 = vsel %vm1269, %v6022, %v6024
        %v6026 = vrot.slane %v5974, 6
        %v6027 = vrot.slane %v5975, 6
        %v6028 = vsel %vm1269, %v6026, %v6027
        %v6029 = vrot.slane %v5976, 6
        %v6030 = vsel %vm1269, %v6027, %v6029
        %v6031 = vrot.slane %v5977, 6
        %v6032 = vrot.slane %v5978, 6
        %v6033 = vsel %vm1269, %v6031, %v6032
        %v6034 = vrot.slane %v5979, 6
        %v6035 = vsel %vm1269, %v6032, %v6034
        %v6036 = vrot.slane %v5980, 6
        %v6037 = vrot.slane %v5981, 6
        %v6038 = vsel %vm1269, %v6036, %v6037
        %v6039 = vrot.slane %v5982, 6
        %v6040 = vsel %vm1269, %v6037, %v6039
        %v6041 = vrot.slane %v5983, 6
        %v6042 = vrot.slane %v5984, 6
        %v6043 = vsel %vm1269, %v6041, %v6042
        %v6044 = vrot.slane %v5985, 6
        %v6045 = vsel %vm1269, %v6042, %v6044
        %v6046 = vrot.slane %v5986, 6
        %v6047 = vrot.slane %v5987, 6
        %v6048 = vsel %vm1269, %v6046, %v6047
        %v6049 = vrot.slane %v5988, 6
        %v6050 = vsel %vm1269, %v6047, %v6049
        %v6051 = vrot.slane %v5989, 6
        %v6052 = vrot.slane %v5990, 6
        %v6053 = vsel %vm1269, %v6051, %v6052
        %v6054 = vrot.slane %v5991, 6
        %v6055 = vsel %vm1269, %v6052, %v6054
        %v6072 = vadd.f32 %v5950, %v6018
        %v6073 = vadd.f32 %v5951, %v6020
        %v6074 = vadd.f32 %v5952, %v6023
        %v6075 = vadd.f32 %v5953, %v6025
        %v6076 = vadd.f32 %v5954, %v6028
        %v6077 = vadd.f32 %v5955, %v6030
        %v6078 = vadd.f32 %v5956, %v6033
        %v6079 = vadd.f32 %v5957, %v6035
        %v6080 = vadd.f32 %v5958, %v6038
        %v6081 = vadd.f32 %v5959, %v6040
        %v6082 = vadd.f32 %v5960, %v6043
        %v6083 = vadd.f32 %v5961, %v6045
        %v6084 = vadd.f32 %v5962, %v6048
        %v6085 = vadd.f32 %v5963, %v6050
        %v6086 = vadd.f32 %v5964, %v6053
        %v6087 = vadd.f32 %v5965, %v6055
        %v6088 = vld [vmem:[%s2] sm:$0x1]
        %v6090 = vperm.slane %v6088, 0
        %v6092 = vadd.f32 %v6072, %v6090
        %v6093 = vadd.f32 %v6073, %v6090
        %v6094 = vadd.f32 %v6074, %v6090
        %v6095 = vadd.f32 %v6075, %v6090
        %v6096 = vadd.f32 %v6076, %v6090
        %v6097 = vadd.f32 %v6077, %v6090
        %v6098 = vadd.f32 %v6078, %v6090
        %v6099 = vadd.f32 %v6079, %v6090
        %v6100 = vadd.f32 %v6080, %v6090
        %v6101 = vadd.f32 %v6081, %v6090
        %v6102 = vadd.f32 %v6082, %v6090
        %v6103 = vadd.f32 %v6083, %v6090
        %v6104 = vadd.f32 %v6084, %v6090
        %v6105 = vadd.f32 %v6085, %v6090
        %v6106 = vadd.f32 %v6086, %v6090
        %v6107 = vadd.f32 %v6087, %v6090
        %6108 = vadd.xlane.f32.xlu0 %v6092
        %v6109 = vpop.xlane.xlu0 %6108
        %6110 = vadd.xlane.f32.xlu0 %v6093
        %v6111 = vpop.xlane.xlu0 %6110
        %6112 = vadd.xlane.f32.xlu0 %v6094
        %v6113 = vpop.xlane.xlu0 %6112
        %6114 = vadd.xlane.f32.xlu0 %v6095
        %v6115 = vpop.xlane.xlu0 %6114
        %6116 = vadd.xlane.f32.xlu0 %v6096
        %v6117 = vpop.xlane.xlu0 %6116
        %6118 = vadd.xlane.f32.xlu0 %v6097
        %v6119 = vpop.xlane.xlu0 %6118
        %6120 = vadd.xlane.f32.xlu0 %v6098
        %v6121 = vpop.xlane.xlu0 %6120
        %6122 = vadd.xlane.f32.xlu0 %v6099
        %v6123 = vpop.xlane.xlu0 %6122
        %6124 = vadd.xlane.f32.xlu0 %v6100
        %v6125 = vpop.xlane.xlu0 %6124
        %6126 = vadd.xlane.f32.xlu0 %v6101
        %v6127 = vpop.xlane.xlu0 %6126
        %6128 = vadd.xlane.f32.xlu0 %v6102
        %v6129 = vpop.xlane.xlu0 %6128
        %6130 = vadd.xlane.f32.xlu0 %v6103
        %v6131 = vpop.xlane.xlu0 %6130
        %6132 = vadd.xlane.f32.xlu0 %v6104
        %v6133 = vpop.xlane.xlu0 %6132
        %6134 = vadd.xlane.f32.xlu0 %v6105
        %v6135 = vpop.xlane.xlu0 %6134
        %6136 = vadd.xlane.f32.xlu0 %v6106
        %v6137 = vpop.xlane.xlu0 %6136
        %6138 = vadd.xlane.f32.xlu0 %v6107
        %v6139 = vpop.xlane.xlu0 %6138
        %v6140 = vrcp.pop 128.0
        %v6141 = vmul.f32 128.0, %v6140
        %v6142 = vsub.f32 1.0, %v6141
        %v6143 = vmul.f32 %v6140, %v6142
        %v6144 = vadd.f32 %v6140, %v6143
        %vm6145 = vweird.f32 %v6140
        %v6146 = vsel %vm6145, %v6140, %v6144
        %v6147 = vmul.f32 %v6109, %v6146
        %v6148 = vmul.f32 %v6111, %v6146
        %v6149 = vmul.f32 %v6113, %v6146
        %v6150 = vmul.f32 %v6115, %v6146
        %v6151 = vmul.f32 %v6117, %v6146
        %v6152 = vmul.f32 %v6119, %v6146
        %v6153 = vmul.f32 %v6121, %v6146
        %v6154 = vmul.f32 %v6123, %v6146
        %v6155 = vmul.f32 %v6125, %v6146
        %v6156 = vmul.f32 %v6127, %v6146
        %v6157 = vmul.f32 %v6129, %v6146
        %v6158 = vmul.f32 %v6131, %v6146
        %v6159 = vmul.f32 %v6133, %v6146
        %v6160 = vmul.f32 %v6135, %v6146
        %v6161 = vmul.f32 %v6137, %v6146
        %v6162 = vmul.f32 %v6139, %v6146
        %v6163 = vsub.f32 %v6092, %v6147
        %v6164 = vsub.f32 %v6093, %v6148
        %v6165 = vsub.f32 %v6094, %v6149
        %v6166 = vsub.f32 %v6095, %v6150
        %v6167 = vsub.f32 %v6096, %v6151
        %v6168 = vsub.f32 %v6097, %v6152
        %v6169 = vsub.f32 %v6098, %v6153
        %v6170 = vsub.f32 %v6099, %v6154
        %v6171 = vsub.f32 %v6100, %v6155
        %v6172 = vsub.f32 %v6101, %v6156
        %v6173 = vsub.f32 %v6102, %v6157
        %v6174 = vsub.f32 %v6103, %v6158
        %v6175 = vsub.f32 %v6104, %v6159
        %v6176 = vsub.f32 %v6105, %v6160
        %v6177 = vsub.f32 %v6106, %v6161
        %v6178 = vsub.f32 %v6107, %v6162
        %v6179 = vmul.f32 %v6163, %v6163
        %v6180 = vmul.f32 %v6164, %v6164
        %v6181 = vmul.f32 %v6165, %v6165
        %v6182 = vmul.f32 %v6166, %v6166
        %v6183 = vmul.f32 %v6167, %v6167
        %v6184 = vmul.f32 %v6168, %v6168
        %v6185 = vmul.f32 %v6169, %v6169
        %v6186 = vmul.f32 %v6170, %v6170
        %v6187 = vmul.f32 %v6171, %v6171
        %v6188 = vmul.f32 %v6172, %v6172
        %v6189 = vmul.f32 %v6173, %v6173
        %v6190 = vmul.f32 %v6174, %v6174
        %v6191 = vmul.f32 %v6175, %v6175
        %v6192 = vmul.f32 %v6176, %v6176
        %v6193 = vmul.f32 %v6177, %v6177
        %v6194 = vmul.f32 %v6178, %v6178
        %6195 = vadd.xlane.f32.xlu0 %v6179
        %v6196 = vpop.xlane.xlu0 %6195
        %6197 = vadd.xlane.f32.xlu0 %v6180
        %v6198 = vpop.xlane.xlu0 %6197
        %6199 = vadd.xlane.f32.xlu0 %v6181
        %v6200 = vpop.xlane.xlu0 %6199
        %6201 = vadd.xlane.f32.xlu0 %v6182
        %v6202 = vpop.xlane.xlu0 %6201
        %6203 = vadd.xlane.f32.xlu0 %v6183
        %v6204 = vpop.xlane.xlu0 %6203
        %6205 = vadd.xlane.f32.xlu0 %v6184
        %v6206 = vpop.xlane.xlu0 %6205
        %6207 = vadd.xlane.f32.xlu0 %v6185
        %v6208 = vpop.xlane.xlu0 %6207
        %6209 = vadd.xlane.f32.xlu0 %v6186
        %v6210 = vpop.xlane.xlu0 %6209
        %6211 = vadd.xlane.f32.xlu0 %v6187
        %v6212 = vpop.xlane.xlu0 %6211
        %6213 = vadd.xlane.f32.xlu0 %v6188
        %v6214 = vpop.xlane.xlu0 %6213
        %6215 = vadd.xlane.f32.xlu0 %v6189
        %v6216 = vpop.xlane.xlu0 %6215
        %6217 = vadd.xlane.f32.xlu0 %v6190
        %v6218 = vpop.xlane.xlu0 %6217
        %6219 = vadd.xlane.f32.xlu0 %v6191
        %v6220 = vpop.xlane.xlu0 %6219
        %6221 = vadd.xlane.f32.xlu0 %v6192
        %v6222 = vpop.xlane.xlu0 %6221
        %6223 = vadd.xlane.f32.xlu0 %v6193
        %v6224 = vpop.xlane.xlu0 %6223
        %6225 = vadd.xlane.f32.xlu0 %v6194
        %v6226 = vpop.xlane.xlu0 %6225
        %v6227 = vmul.f32 %v6196, %v6146
        %v6228 = vmul.f32 %v6198, %v6146
        %v6229 = vmul.f32 %v6200, %v6146
        %v6230 = vmul.f32 %v6202, %v6146
        %v6231 = vmul.f32 %v6204, %v6146
        %v6232 = vmul.f32 %v6206, %v6146
        %v6233 = vmul.f32 %v6208, %v6146
        %v6234 = vmul.f32 %v6210, %v6146
        %v6235 = vmul.f32 %v6212, %v6146
        %v6236 = vmul.f32 %v6214, %v6146
        %v6237 = vmul.f32 %v6216, %v6146
        %v6238 = vmul.f32 %v6218, %v6146
        %v6239 = vmul.f32 %v6220, %v6146
        %v6240 = vmul.f32 %v6222, %v6146
        %v6241 = vmul.f32 %v6224, %v6146
        %v6242 = vmul.f32 %v6226, %v6146
        %v6243 = vadd.f32 %v6227, 1e-06
        %v6244 = vadd.f32 %v6228, 1e-06
        %v6245 = vadd.f32 %v6229, 1e-06
        %v6246 = vadd.f32 %v6230, 1e-06
        %v6247 = vadd.f32 %v6231, 1e-06
        %v6248 = vadd.f32 %v6232, 1e-06
        %v6249 = vadd.f32 %v6233, 1e-06
        %v6250 = vadd.f32 %v6234, 1e-06
        %v6251 = vadd.f32 %v6235, 1e-06
        %v6252 = vadd.f32 %v6236, 1e-06
        %v6253 = vadd.f32 %v6237, 1e-06
        %v6254 = vadd.f32 %v6238, 1e-06
        %v6255 = vadd.f32 %v6239, 1e-06
        %v6256 = vadd.f32 %v6240, 1e-06
        %v6257 = vadd.f32 %v6241, 1e-06
        %v6258 = vadd.f32 %v6242, 1e-06
        %v6259 = vrsqrt.pop %v6243
        %v6260 = vmul.f32 %v6259, %v6243
        %v6261 = vmul.f32 %v6260, %v6259
        %v6262 = vmul.f32 0.5, %v6261
        %v6263 = vsub.f32 1.5, %v6262
        %v6264 = vmul.f32 %v6259, %v6263
        %vm6265 = vweird.f32 %v6243
        %vm6266 = vweird.f32 %v6259
        %vm6267 = vmor %vm6265, %vm6266
        %v6268 = vsel %vm6267, %v6259, %v6264
        %v6269 = vrsqrt.pop %v6244
        %v6270 = vmul.f32 %v6269, %v6244
        %v6271 = vmul.f32 %v6270, %v6269
        %v6272 = vmul.f32 0.5, %v6271
        %v6273 = vsub.f32 1.5, %v6272
        %v6274 = vmul.f32 %v6269, %v6273
        %vm6275 = vweird.f32 %v6244
        %vm6276 = vweird.f32 %v6269
        %vm6277 = vmor %vm6275, %vm6276
        %v6278 = vsel %vm6277, %v6269, %v6274
        %v6279 = vrsqrt.pop %v6245
        %v6280 = vmul.f32 %v6279, %v6245
        %v6281 = vmul.f32 %v6280, %v6279
        %v6282 = vmul.f32 0.5, %v6281
        %v6283 = vsub.f32 1.5, %v6282
        %v6284 = vmul.f32 %v6279, %v6283
        %vm6285 = vweird.f32 %v6245
        %vm6286 = vweird.f32 %v6279
        %vm6287 = vmor %vm6285, %vm6286
        %v6288 = vsel %vm6287, %v6279, %v6284
        %v6289 = vrsqrt.pop %v6246
        %v6290 = vmul.f32 %v6289, %v6246
        %v6291 = vmul.f32 %v6290, %v6289
        %v6292 = vmul.f32 0.5, %v6291
        %v6293 = vsub.f32 1.5, %v6292
        %v6294 = vmul.f32 %v6289, %v6293
        %vm6295 = vweird.f32 %v6246
        %vm6296 = vweird.f32 %v6289
        %vm6297 = vmor %vm6295, %vm6296
        %v6298 = vsel %vm6297, %v6289, %v6294
        %v6299 = vrsqrt.pop %v6247
        %v6300 = vmul.f32 %v6299, %v6247
        %v6301 = vmul.f32 %v6300, %v6299
        %v6302 = vmul.f32 0.5, %v6301
        %v6303 = vsub.f32 1.5, %v6302
        %v6304 = vmul.f32 %v6299, %v6303
        %vm6305 = vweird.f32 %v6247
        %vm6306 = vweird.f32 %v6299
        %vm6307 = vmor %vm6305, %vm6306
        %v6308 = vsel %vm6307, %v6299, %v6304
        %v6309 = vrsqrt.pop %v6248
        %v6310 = vmul.f32 %v6309, %v6248
        %v6311 = vmul.f32 %v6310, %v6309
        %v6312 = vmul.f32 0.5, %v6311
        %v6313 = vsub.f32 1.5, %v6312
        %v6314 = vmul.f32 %v6309, %v6313
        %vm6315 = vweird.f32 %v6248
        %vm6316 = vweird.f32 %v6309
        %vm6317 = vmor %vm6315, %vm6316
        %v6318 = vsel %vm6317, %v6309, %v6314
        %v6319 = vrsqrt.pop %v6249
        %v6320 = vmul.f32 %v6319, %v6249
        %v6321 = vmul.f32 %v6320, %v6319
        %v6322 = vmul.f32 0.5, %v6321
        %v6323 = vsub.f32 1.5, %v6322
        %v6324 = vmul.f32 %v6319, %v6323
        %vm6325 = vweird.f32 %v6249
        %vm6326 = vweird.f32 %v6319
        %vm6327 = vmor %vm6325, %vm6326
        %v6328 = vsel %vm6327, %v6319, %v6324
        %v6329 = vrsqrt.pop %v6250
        %v6330 = vmul.f32 %v6329, %v6250
        %v6331 = vmul.f32 %v6330, %v6329
        %v6332 = vmul.f32 0.5, %v6331
        %v6333 = vsub.f32 1.5, %v6332
        %v6334 = vmul.f32 %v6329, %v6333
        %vm6335 = vweird.f32 %v6250
        %vm6336 = vweird.f32 %v6329
        %vm6337 = vmor %vm6335, %vm6336
        %v6338 = vsel %vm6337, %v6329, %v6334
        %v6339 = vrsqrt.pop %v6251
        %v6340 = vmul.f32 %v6339, %v6251
        %v6341 = vmul.f32 %v6340, %v6339
        %v6342 = vmul.f32 0.5, %v6341
        %v6343 = vsub.f32 1.5, %v6342
        %v6344 = vmul.f32 %v6339, %v6343
        %vm6345 = vweird.f32 %v6251
        %vm6346 = vweird.f32 %v6339
        %vm6347 = vmor %vm6345, %vm6346
        %v6348 = vsel %vm6347, %v6339, %v6344
        %v6349 = vrsqrt.pop %v6252
        %v6350 = vmul.f32 %v6349, %v6252
        %v6351 = vmul.f32 %v6350, %v6349
        %v6352 = vmul.f32 0.5, %v6351
        %v6353 = vsub.f32 1.5, %v6352
        %v6354 = vmul.f32 %v6349, %v6353
        %vm6355 = vweird.f32 %v6252
        %vm6356 = vweird.f32 %v6349
        %vm6357 = vmor %vm6355, %vm6356
        %v6358 = vsel %vm6357, %v6349, %v6354
        %v6359 = vrsqrt.pop %v6253
        %v6360 = vmul.f32 %v6359, %v6253
        %v6361 = vmul.f32 %v6360, %v6359
        %v6362 = vmul.f32 0.5, %v6361
        %v6363 = vsub.f32 1.5, %v6362
        %v6364 = vmul.f32 %v6359, %v6363
        %vm6365 = vweird.f32 %v6253
        %vm6366 = vweird.f32 %v6359
        %vm6367 = vmor %vm6365, %vm6366
        %v6368 = vsel %vm6367, %v6359, %v6364
        %v6369 = vrsqrt.pop %v6254
        %v6370 = vmul.f32 %v6369, %v6254
        %v6371 = vmul.f32 %v6370, %v6369
        %v6372 = vmul.f32 0.5, %v6371
        %v6373 = vsub.f32 1.5, %v6372
        %v6374 = vmul.f32 %v6369, %v6373
        %vm6375 = vweird.f32 %v6254
        %vm6376 = vweird.f32 %v6369
        %vm6377 = vmor %vm6375, %vm6376
        %v6378 = vsel %vm6377, %v6369, %v6374
        %v6379 = vrsqrt.pop %v6255
        %v6380 = vmul.f32 %v6379, %v6255
        %v6381 = vmul.f32 %v6380, %v6379
        %v6382 = vmul.f32 0.5, %v6381
        %v6383 = vsub.f32 1.5, %v6382
        %v6384 = vmul.f32 %v6379, %v6383
        %vm6385 = vweird.f32 %v6255
        %vm6386 = vweird.f32 %v6379
        %vm6387 = vmor %vm6385, %vm6386
        %v6388 = vsel %vm6387, %v6379, %v6384
        %v6389 = vrsqrt.pop %v6256
        %v6390 = vmul.f32 %v6389, %v6256
        %v6391 = vmul.f32 %v6390, %v6389
        %v6392 = vmul.f32 0.5, %v6391
        %v6393 = vsub.f32 1.5, %v6392
        %v6394 = vmul.f32 %v6389, %v6393
        %vm6395 = vweird.f32 %v6256
        %vm6396 = vweird.f32 %v6389
        %vm6397 = vmor %vm6395, %vm6396
        %v6398 = vsel %vm6397, %v6389, %v6394
        %v6399 = vrsqrt.pop %v6257
        %v6400 = vmul.f32 %v6399, %v6257
        %v6401 = vmul.f32 %v6400, %v6399
        %v6402 = vmul.f32 0.5, %v6401
        %v6403 = vsub.f32 1.5, %v6402
        %v6404 = vmul.f32 %v6399, %v6403
        %vm6405 = vweird.f32 %v6257
        %vm6406 = vweird.f32 %v6399
        %vm6407 = vmor %vm6405, %vm6406
        %v6408 = vsel %vm6407, %v6399, %v6404
        %v6409 = vrsqrt.pop %v6258
        %v6410 = vmul.f32 %v6409, %v6258
        %v6411 = vmul.f32 %v6410, %v6409
        %v6412 = vmul.f32 0.5, %v6411
        %v6413 = vsub.f32 1.5, %v6412
        %v6414 = vmul.f32 %v6409, %v6413
        %vm6415 = vweird.f32 %v6258
        %vm6416 = vweird.f32 %v6409
        %vm6417 = vmor %vm6415, %vm6416
        %v6418 = vsel %vm6417, %v6409, %v6414
        %v6419 = vmul.f32 %v6163, %v6268
        %v6420 = vmul.f32 %v6164, %v6278
        %v6421 = vmul.f32 %v6165, %v6288
        %v6422 = vmul.f32 %v6166, %v6298
        %v6423 = vmul.f32 %v6167, %v6308
        %v6424 = vmul.f32 %v6168, %v6318
        %v6425 = vmul.f32 %v6169, %v6328
        %v6426 = vmul.f32 %v6170, %v6338
        %v6427 = vmul.f32 %v6171, %v6348
        %v6428 = vmul.f32 %v6172, %v6358
        %v6429 = vmul.f32 %v6173, %v6368
        %v6430 = vmul.f32 %v6174, %v6378
        %v6431 = vmul.f32 %v6175, %v6388
        %v6432 = vmul.f32 %v6176, %v6398
        %v6433 = vmul.f32 %v6177, %v6408
        %v6434 = vmul.f32 %v6178, %v6418
        %v6435 = vpack.c.bf16 %v6420, %v6419
        %v6436 = vpack.c.bf16 %v6422, %v6421
        %v6437 = vpack.c.bf16 %v6424, %v6423
        %v6438 = vpack.c.bf16 %v6426, %v6425
        %v6439 = vpack.c.bf16 %v6428, %v6427
        %v6440 = vpack.c.bf16 %v6430, %v6429
        %v6441 = vpack.c.bf16 %v6432, %v6431
        %v6442 = vpack.c.bf16 %v6434, %v6433
        %v6443 = vld [vmem:[%s3] sm:$0xff]
        %v6444 = vld [vmem:[%s3 + $0x8] sm:$0xff]
        %v6445 = vld [vmem:[%s3 + $0x10] sm:$0xff]
        %v6446 = vld [vmem:[%s3 + $0x18] sm:$0xff]
        %v6447 = vld [vmem:[%s3 + $0x20] sm:$0xff]
        %v6448 = vld [vmem:[%s3 + $0x28] sm:$0xff]
        %v6449 = vld [vmem:[%s3 + $0x30] sm:$0xff]
        %v6450 = vld [vmem:[%s3 + $0x38] sm:$0xff]
        %v6451 = vld [vmem:[%s3 + $0x40] sm:$0xff]
        %v6452 = vld [vmem:[%s3 + $0x48] sm:$0xff]
        %v6453 = vld [vmem:[%s3 + $0x50] sm:$0xff]
        %v6454 = vld [vmem:[%s3 + $0x58] sm:$0xff]
        %v6455 = vld [vmem:[%s3 + $0x60] sm:$0xff]
        %v6456 = vld [vmem:[%s3 + $0x68] sm:$0xff]
        %v6457 = vld [vmem:[%s3 + $0x70] sm:$0xff]
        %v6458 = vld [vmem:[%s3 + $0x78] sm:$0xff]
        %v6459 = vld [vmem:[%s3 + $0x80] sm:$0xff]
        %v6460 = vld [vmem:[%s3 + $0x88] sm:$0xff]
        %v6461 = vld [vmem:[%s3 + $0x90] sm:$0xff]
        %v6462 = vld [vmem:[%s3 + $0x98] sm:$0xff]
        %v6463 = vld [vmem:[%s3 + $0xa0] sm:$0xff]
        %v6464 = vld [vmem:[%s3 + $0xa8] sm:$0xff]
        %v6465 = vld [vmem:[%s3 + $0xb0] sm:$0xff]
        %v6466 = vld [vmem:[%s3 + $0xb8] sm:$0xff]
        %v6467 = vld [vmem:[%s3 + $0xc0] sm:$0xff]
        %v6468 = vld [vmem:[%s3 + $0xc8] sm:$0xff]
        %v6469 = vld [vmem:[%s3 + $0xd0] sm:$0xff]
        %v6470 = vld [vmem:[%s3 + $0xd8] sm:$0xff]
        %v6471 = vld [vmem:[%s3 + $0xe0] sm:$0xff]
        %v6472 = vld [vmem:[%s3 + $0xe8] sm:$0xff]
        %v6473 = vld [vmem:[%s3 + $0xf0] sm:$0xff]
        %v6474 = vld [vmem:[%s3 + $0xf8] sm:$0xff]
        %v6475 = vld [vmem:[%s4] sm:$0xf]
        %v6477 = vperm.slane %v6475, 0
        %v6478 = vperm.slane %v6475, 1
        %v6479 = vperm.slane %v6475, 2
        %v6480 = vperm.slane %v6475, 3
        %v6517 = vunpack.c.l.b16 %v6443
        %v6518 = vunpack.c.h.b16 %v6443
        %v6519 = vunpack.c.l.b16 %v6444
        %v6520 = vunpack.c.h.b16 %v6444
        %v6521 = vunpack.c.l.b16 %v6445
        %v6522 = vunpack.c.h.b16 %v6445
        %v6523 = vunpack.c.l.b16 %v6446
        %v6524 = vunpack.c.h.b16 %v6446
        %v6525 = vunpack.c.l.b16 %v6447
        %v6526 = vunpack.c.h.b16 %v6447
        %v6527 = vunpack.c.l.b16 %v6448
        %v6528 = vunpack.c.h.b16 %v6448
        %v6529 = vunpack.c.l.b16 %v6449
        %v6530 = vunpack.c.h.b16 %v6449
        %v6531 = vunpack.c.l.b16 %v6450
        %v6532 = vunpack.c.h.b16 %v6450
        %v6533 = vunpack.c.l.b16 %v6451
        %v6534 = vunpack.c.h.b16 %v6451
        %v6535 = vunpack.c.l.b16 %v6452
        %v6536 = vunpack.c.h.b16 %v6452
        %v6537 = vunpack.c.l.b16 %v6453
        %v6538 = vunpack.c.h.b16 %v6453
        %v6539 = vunpack.c.l.b16 %v6454
        %v6540 = vunpack.c.h.b16 %v6454
        %v6541 = vunpack.c.l.b16 %v6455
        %v6542 = vunpack.c.h.b16 %v6455
        %v6543 = vunpack.c.l.b16 %v6456
        %v6544 = vunpack.c.h.b16 %v6456
        %v6545 = vunpack.c.l.b16 %v6457
        %v6546 = vunpack.c.h.b16 %v6457
        %v6547 = vunpack.c.l.b16 %v6458
        %v6548 = vunpack.c.h.b16 %v6458
        %v6549 = vunpack.c.l.b16 %v6459
        %v6550 = vunpack.c.h.b16 %v6459
        %v6551 = vunpack.c.l.b16 %v6460
        %v6552 = vunpack.c.h.b16 %v6460
        %v6553 = vunpack.c.l.b16 %v6461
        %v6554 = vunpack.c.h.b16 %v6461
        %v6555 = vunpack.c.l.b16 %v6462
        %v6556 = vunpack.c.h.b16 %v6462
        %v6557 = vunpack.c.l.b16 %v6463
        %v6558 = vunpack.c.h.b16 %v6463
        %v6559 = vunpack.c.l.b16 %v6464
        %v6560 = vunpack.c.h.b16 %v6464
        %v6561 = vunpack.c.l.b16 %v6465
        %v6562 = vunpack.c.h.b16 %v6465
        %v6563 = vunpack.c.l.b16 %v6466
        %v6564 = vunpack.c.h.b16 %v6466
        %v6565 = vunpack.c.l.b16 %v6467
        %v6566 = vunpack.c.h.b16 %v6467
        %v6567 = vunpack.c.l.b16 %v6468
        %v6568 = vunpack.c.h.b16 %v6468
        %v6569 = vunpack.c.l.b16 %v6469
        %v6570 = vunpack.c.h.b16 %v6469
        %v6571 = vunpack.c.l.b16 %v6470
        %v6572 = vunpack.c.h.b16 %v6470
        %v6573 = vunpack.c.l.b16 %v6471
        %v6574 = vunpack.c.h.b16 %v6471
        %v6575 = vunpack.c.l.b16 %v6472
        %v6576 = vunpack.c.h.b16 %v6472
        %v6577 = vunpack.c.l.b16 %v6473
        %v6578 = vunpack.c.h.b16 %v6473
        %v6579 = vunpack.c.l.b16 %v6474
        %v6580 = vunpack.c.h.b16 %v6474
        %v6581 = vpack.c.b16 %v6521, %v6517
        %v6582 = vpack.c.b16 %v6522, %v6518
        %v6583 = vpack.c.b16 %v6523, %v6519
        %v6584 = vpack.c.b16 %v6524, %v6520
        %v6585 = vpack.c.b16 %v6529, %v6525
        %v6586 = vpack.c.b16 %v6530, %v6526
        %v6587 = vpack.c.b16 %v6531, %v6527
        %v6588 = vpack.c.b16 %v6532, %v6528
        %v6589 = vpack.c.b16 %v6537, %v6533
        %v6590 = vpack.c.b16 %v6538, %v6534
        %v6591 = vpack.c.b16 %v6539, %v6535
        %v6592 = vpack.c.b16 %v6540, %v6536
        %v6593 = vpack.c.b16 %v6545, %v6541
        %v6594 = vpack.c.b16 %v6546, %v6542
        %v6595 = vpack.c.b16 %v6547, %v6543
        %v6596 = vpack.c.b16 %v6548, %v6544
        %v6597 = vpack.c.b16 %v6553, %v6549
        %v6598 = vpack.c.b16 %v6554, %v6550
        %v6599 = vpack.c.b16 %v6555, %v6551
        %v6600 = vpack.c.b16 %v6556, %v6552
        %v6601 = vpack.c.b16 %v6561, %v6557
        %v6602 = vpack.c.b16 %v6562, %v6558
        %v6603 = vpack.c.b16 %v6563, %v6559
        %v6604 = vpack.c.b16 %v6564, %v6560
        %v6605 = vpack.c.b16 %v6569, %v6565
        %v6606 = vpack.c.b16 %v6570, %v6566
        %v6607 = vpack.c.b16 %v6571, %v6567
        %v6608 = vpack.c.b16 %v6572, %v6568
        %v6609 = vpack.c.b16 %v6577, %v6573
        %v6610 = vpack.c.b16 %v6578, %v6574
        %v6611 = vpack.c.b16 %v6579, %v6575
        %v6612 = vpack.c.b16 %v6580, %v6576
        %6645 = vmatpush.bf16.msra.mxu0 %v6609
        %6646 = vmatpush.bf16.msra.mxu0 %v6605
        %6647 = vmatpush.bf16.msra.mxu0 %v6601
        %6648 = vmatpush.bf16.msra.mxu0 %v6597
        %6649 = vmatpush.bf16.msra.mxu0 %v6593
        %6650 = vmatpush.bf16.msra.mxu0 %v6589
        %6651 = vmatpush.bf16.msra.mxu0 %v6585
        %6652 = vmatpush.bf16.msra.mxu0 %v6581
        %6653 = vmatmul.bf16.gmra.mxu0 %v6435
        %v6654 = vpop.f32.mrf.mxu0
        %v6655 = vadd.f32 %v6477, %v6654
        %v6656 = vpop.f32.mrf.mxu0
        %v6657 = vadd.f32 %v6477, %v6656
        %6658 = vmatmul.bf16.gmra.mxu0 %v6436
        %v6659 = vpop.f32.mrf.mxu0
        %v6660 = vadd.f32 %v6477, %v6659
        %v6661 = vpop.f32.mrf.mxu0
        %v6662 = vadd.f32 %v6477, %v6661
        %6663 = vmatmul.bf16.gmra.mxu0 %v6437
        %v6664 = vpop.f32.mrf.mxu0
        %v6665 = vadd.f32 %v6477, %v6664
        %v6666 = vpop.f32.mrf.mxu0
        %v6667 = vadd.f32 %v6477, %v6666
        %6668 = vmatmul.bf16.gmra.mxu0 %v6438
        %v6669 = vpop.f32.mrf.mxu0
        %v6670 = vadd.f32 %v6477, %v6669
        %v6671 = vpop.f32.mrf.mxu0
        %v6672 = vadd.f32 %v6477, %v6671
        %6673 = vmatmul.bf16.gmra.mxu0 %v6439
        %v6674 = vpop.f32.mrf.mxu0
        %v6675 = vadd.f32 %v6477, %v6674
        %v6676 = vpop.f32.mrf.mxu0
        %v6677 = vadd.f32 %v6477, %v6676
        %6678 = vmatmul.bf16.gmra.mxu0 %v6440
        %v6679 = vpop.f32.mrf.mxu0
        %v6680 = vadd.f32 %v6477, %v6679
        %v6681 = vpop.f32.mrf.mxu0
        %v6682 = vadd.f32 %v6477, %v6681
        %6683 = vmatmul.bf16.gmra.mxu0 %v6441
        %v6684 = vpop.f32.mrf.mxu0
        %v6685 = vadd.f32 %v6477, %v6684
        %v6686 = vpop.f32.mrf.mxu0
        %v6687 = vadd.f32 %v6477, %v6686
        %6688 = vmatmul.bf16.gmra.mxu0 %v6442
        %v6689 = vpop.f32.mrf.mxu0
        %v6690 = vadd.f32 %v6477, %v6689
        %v6691 = vpop.f32.mrf.mxu0
        %v6692 = vadd.f32 %v6477, %v6691
        %6693 = vdwg.mxu0
        %6694 = vmatpush.bf16.msra.mxu0 %v6610
        %6695 = vmatpush.bf16.msra.mxu0 %v6606
        %6696 = vmatpush.bf16.msra.mxu0 %v6602
        %6697 = vmatpush.bf16.msra.mxu0 %v6598
        %6698 = vmatpush.bf16.msra.mxu0 %v6594
        %6699 = vmatpush.bf16.msra.mxu0 %v6590
        %6700 = vmatpush.bf16.msra.mxu0 %v6586
        %6701 = vmatpush.bf16.msra.mxu0 %v6582
        %6702 = vmatmul.bf16.gmra.mxu0 %v6435
        %v6703 = vpop.f32.mrf.mxu0
        %v6704 = vadd.f32 %v6478, %v6703
        %v6705 = vpop.f32.mrf.mxu0
        %v6706 = vadd.f32 %v6478, %v6705
        %6707 = vmatmul.bf16.gmra.mxu0 %v6436
        %v6708 = vpop.f32.mrf.mxu0
        %v6709 = vadd.f32 %v6478, %v6708
        %v6710 = vpop.f32.mrf.mxu0
        %v6711 = vadd.f32 %v6478, %v6710
        %6712 = vmatmul.bf16.gmra.mxu0 %v6437
        %v6713 = vpop.f32.mrf.mxu0
        %v6714 = vadd.f32 %v6478, %v6713
        %v6715 = vpop.f32.mrf.mxu0
        %v6716 = vadd.f32 %v6478, %v6715
        %6717 = vmatmul.bf16.gmra.mxu0 %v6438
        %v6718 = vpop.f32.mrf.mxu0
        %v6719 = vadd.f32 %v6478, %v6718
        %v6720 = vpop.f32.mrf.mxu0
        %v6721 = vadd.f32 %v6478, %v6720
        %6722 = vmatmul.bf16.gmra.mxu0 %v6439
        %v6723 = vpop.f32.mrf.mxu0
        %v6724 = vadd.f32 %v6478, %v6723
        %v6725 = vpop.f32.mrf.mxu0
        %v6726 = vadd.f32 %v6478, %v6725
        %6727 = vmatmul.bf16.gmra.mxu0 %v6440
        %v6728 = vpop.f32.mrf.mxu0
        %v6729 = vadd.f32 %v6478, %v6728
        %v6730 = vpop.f32.mrf.mxu0
        %v6731 = vadd.f32 %v6478, %v6730
        %6732 = vmatmul.bf16.gmra.mxu0 %v6441
        %v6733 = vpop.f32.mrf.mxu0
        %v6734 = vadd.f32 %v6478, %v6733
        %v6735 = vpop.f32.mrf.mxu0
        %v6736 = vadd.f32 %v6478, %v6735
        %6737 = vmatmul.bf16.gmra.mxu0 %v6442
        %v6738 = vpop.f32.mrf.mxu0
        %v6739 = vadd.f32 %v6478, %v6738
        %v6740 = vpop.f32.mrf.mxu0
        %v6741 = vadd.f32 %v6478, %v6740
        %6742 = vdwg.mxu0
        %6743 = vmatpush.bf16.msra.mxu0 %v6611
        %6744 = vmatpush.bf16.msra.mxu0 %v6607
        %6745 = vmatpush.bf16.msra.mxu0 %v6603
        %6746 = vmatpush.bf16.msra.mxu0 %v6599
        %6747 = vmatpush.bf16.msra.mxu0 %v6595
        %6748 = vmatpush.bf16.msra.mxu0 %v6591
        %6749 = vmatpush.bf16.msra.mxu0 %v6587
        %6750 = vmatpush.bf16.msra.mxu0 %v6583
        %6751 = vmatmul.bf16.gmra.mxu0 %v6435
        %v6752 = vpop.f32.mrf.mxu0
        %v6753 = vadd.f32 %v6479, %v6752
        %v6754 = vpop.f32.mrf.mxu0
        %v6755 = vadd.f32 %v6479, %v6754
        %6756 = vmatmul.bf16.gmra.mxu0 %v6436
        %v6757 = vpop.f32.mrf.mxu0
        %v6758 = vadd.f32 %v6479, %v6757
        %v6759 = vpop.f32.mrf.mxu0
        %v6760 = vadd.f32 %v6479, %v6759
        %6761 = vmatmul.bf16.gmra.mxu0 %v6437
        %v6762 = vpop.f32.mrf.mxu0
        %v6763 = vadd.f32 %v6479, %v6762
        %v6764 = vpop.f32.mrf.mxu0
        %v6765 = vadd.f32 %v6479, %v6764
        %6766 = vmatmul.bf16.gmra.mxu0 %v6438
        %v6767 = vpop.f32.mrf.mxu0
        %v6768 = vadd.f32 %v6479, %v6767
        %v6769 = vpop.f32.mrf.mxu0
        %v6770 = vadd.f32 %v6479, %v6769
        %6771 = vmatmul.bf16.gmra.mxu0 %v6439
        %v6772 = vpop.f32.mrf.mxu0
        %v6773 = vadd.f32 %v6479, %v6772
        %v6774 = vpop.f32.mrf.mxu0
        %v6775 = vadd.f32 %v6479, %v6774
        %6776 = vmatmul.bf16.gmra.mxu0 %v6440
        %v6777 = vpop.f32.mrf.mxu0
        %v6778 = vadd.f32 %v6479, %v6777
        %v6779 = vpop.f32.mrf.mxu0
        %v6780 = vadd.f32 %v6479, %v6779
        %6781 = vmatmul.bf16.gmra.mxu0 %v6441
        %v6782 = vpop.f32.mrf.mxu0
        %v6783 = vadd.f32 %v6479, %v6782
        %v6784 = vpop.f32.mrf.mxu0
        %v6785 = vadd.f32 %v6479, %v6784
        %6786 = vmatmul.bf16.gmra.mxu0 %v6442
        %v6787 = vpop.f32.mrf.mxu0
        %v6788 = vadd.f32 %v6479, %v6787
        %v6789 = vpop.f32.mrf.mxu0
        %v6790 = vadd.f32 %v6479, %v6789
        %6791 = vdwg.mxu0
        %6792 = vmatpush.bf16.msra.mxu0 %v6612
        %6793 = vmatpush.bf16.msra.mxu0 %v6608
        %6794 = vmatpush.bf16.msra.mxu0 %v6604
        %6795 = vmatpush.bf16.msra.mxu0 %v6600
        %6796 = vmatpush.bf16.msra.mxu0 %v6596
        %6797 = vmatpush.bf16.msra.mxu0 %v6592
        %6798 = vmatpush.bf16.msra.mxu0 %v6588
        %6799 = vmatpush.bf16.msra.mxu0 %v6584
        %6800 = vmatmul.bf16.gmra.mxu0 %v6435
        %v6801 = vpop.f32.mrf.mxu0
        %v6802 = vadd.f32 %v6480, %v6801
        %v6803 = vpop.f32.mrf.mxu0
        %v6804 = vadd.f32 %v6480, %v6803
        %6805 = vmatmul.bf16.gmra.mxu0 %v6436
        %v6806 = vpop.f32.mrf.mxu0
        %v6807 = vadd.f32 %v6480, %v6806
        %v6808 = vpop.f32.mrf.mxu0
        %v6809 = vadd.f32 %v6480, %v6808
        %6810 = vmatmul.bf16.gmra.mxu0 %v6437
        %v6811 = vpop.f32.mrf.mxu0
        %v6812 = vadd.f32 %v6480, %v6811
        %v6813 = vpop.f32.mrf.mxu0
        %v6814 = vadd.f32 %v6480, %v6813
        %6815 = vmatmul.bf16.gmra.mxu0 %v6438
        %v6816 = vpop.f32.mrf.mxu0
        %v6817 = vadd.f32 %v6480, %v6816
        %v6818 = vpop.f32.mrf.mxu0
        %v6819 = vadd.f32 %v6480, %v6818
        %6820 = vmatmul.bf16.gmra.mxu0 %v6439
        %v6821 = vpop.f32.mrf.mxu0
        %v6822 = vadd.f32 %v6480, %v6821
        %v6823 = vpop.f32.mrf.mxu0
        %v6824 = vadd.f32 %v6480, %v6823
        %6825 = vmatmul.bf16.gmra.mxu0 %v6440
        %v6826 = vpop.f32.mrf.mxu0
        %v6827 = vadd.f32 %v6480, %v6826
        %v6828 = vpop.f32.mrf.mxu0
        %v6829 = vadd.f32 %v6480, %v6828
        %6830 = vmatmul.bf16.gmra.mxu0 %v6441
        %v6831 = vpop.f32.mrf.mxu0
        %v6832 = vadd.f32 %v6480, %v6831
        %v6833 = vpop.f32.mrf.mxu0
        %v6834 = vadd.f32 %v6480, %v6833
        %6835 = vmatmul.bf16.gmra.mxu0 %v6442
        %v6836 = vpop.f32.mrf.mxu0
        %v6837 = vadd.f32 %v6480, %v6836
        %v6838 = vpop.f32.mrf.mxu0
        %v6839 = vadd.f32 %v6480, %v6838
        %6840 = vdwg.mxu0
        %v6841 = vmul.f32 %v6655, 0.5
        %v6842 = vmul.f32 %v6704, 0.5
        %v6843 = vmul.f32 %v6753, 0.5
        %v6844 = vmul.f32 %v6802, 0.5
        %v6845 = vmul.f32 %v6657, 0.5
        %v6846 = vmul.f32 %v6706, 0.5
        %v6847 = vmul.f32 %v6755, 0.5
        %v6848 = vmul.f32 %v6804, 0.5
        %v6849 = vmul.f32 %v6660, 0.5
        %v6850 = vmul.f32 %v6709, 0.5
        %v6851 = vmul.f32 %v6758, 0.5
        %v6852 = vmul.f32 %v6807, 0.5
        %v6853 = vmul.f32 %v6662, 0.5
        %v6854 = vmul.f32 %v6711, 0.5
        %v6855 = vmul.f32 %v6760, 0.5
        %v6856 = vmul.f32 %v6809, 0.5
        %v6857 = vmul.f32 %v6665, 0.5
        %v6858 = vmul.f32 %v6714, 0.5
        %v6859 = vmul.f32 %v6763, 0.5
        %v6860 = vmul.f32 %v6812, 0.5
        %v6861 = vmul.f32 %v6667, 0.5
        %v6862 = vmul.f32 %v6716, 0.5
        %v6863 = vmul.f32 %v6765, 0.5
        %v6864 = vmul.f32 %v6814, 0.5
        %v6865 = vmul.f32 %v6670, 0.5
        %v6866 = vmul.f32 %v6719, 0.5
        %v6867 = vmul.f32 %v6768, 0.5
        %v6868 = vmul.f32 %v6817, 0.5
        %v6869 = vmul.f32 %v6672, 0.5
        %v6870 = vmul.f32 %v6721, 0.5
        %v6871 = vmul.f32 %v6770, 0.5
        %v6872 = vmul.f32 %v6819, 0.5
        %v6873 = vmul.f32 %v6675, 0.5
        %v6874 = vmul.f32 %v6724, 0.5
        %v6875 = vmul.f32 %v6773, 0.5
        %v6876 = vmul.f32 %v6822, 0.5
        %v6877 = vmul.f32 %v6677, 0.5
        %v6878 = vmul.f32 %v6726, 0.5
        %v6879 = vmul.f32 %v6775, 0.5
        %v6880 = vmul.f32 %v6824, 0.5
        %v6881 = vmul.f32 %v6680, 0.5
        %v6882 = vmul.f32 %v6729, 0.5
        %v6883 = vmul.f32 %v6778, 0.5
        %v6884 = vmul.f32 %v6827, 0.5
        %v6885 = vmul.f32 %v6682, 0.5
        %v6886 = vmul.f32 %v6731, 0.5
        %v6887 = vmul.f32 %v6780, 0.5
        %v6888 = vmul.f32 %v6829, 0.5
        %v6889 = vmul.f32 %v6685, 0.5
        %v6890 = vmul.f32 %v6734, 0.5
        %v6891 = vmul.f32 %v6783, 0.5
        %v6892 = vmul.f32 %v6832, 0.5
        %v6893 = vmul.f32 %v6687, 0.5
        %v6894 = vmul.f32 %v6736, 0.5
        %v6895 = vmul.f32 %v6785, 0.5
        %v6896 = vmul.f32 %v6834, 0.5
        %v6897 = vmul.f32 %v6690, 0.5
        %v6898 = vmul.f32 %v6739, 0.5
        %v6899 = vmul.f32 %v6788, 0.5
        %v6900 = vmul.f32 %v6837, 0.5
        %v6901 = vmul.f32 %v6692, 0.5
        %v6902 = vmul.f32 %v6741, 0.5
        %v6903 = vmul.f32 %v6790, 0.5
        %v6904 = vmul.f32 %v6839, 0.5
        %v6905 = vmul.f32 %v6655, 0.044715
        %v6906 = vmul.f32 %v6704, 0.044715
        %v6907 = vmul.f32 %v6753, 0.044715
        %v6908 = vmul.f32 %v6802, 0.044715
        %v6909 = vmul.f32 %v6657, 0.044715
        %v6910 = vmul.f32 %v6706, 0.044715
        %v6911 = vmul.f32 %v6755, 0.044715
        %v6912 = vmul.f32 %v6804, 0.044715
        %v6913 = vmul.f32 %v6660, 0.044715
        %v6914 = vmul.f32 %v6709, 0.044715
        %v6915 = vmul.f32 %v6758, 0.044715
        %v6916 = vmul.f32 %v6807, 0.044715
        %v6917 = vmul.f32 %v6662, 0.044715
        %v6918 = vmul.f32 %v6711, 0.044715
        %v6919 = vmul.f32 %v6760, 0.044715
        %v6920 = vmul.f32 %v6809, 0.044715
        %v6921 = vmul.f32 %v6665, 0.044715
        %v6922 = vmul.f32 %v6714, 0.044715
        %v6923 = vmul.f32 %v6763, 0.044715
        %v6924 = vmul.f32 %v6812, 0.044715
        %v6925 = vmul.f32 %v6667, 0.044715
        %v6926 = vmul.f32 %v6716, 0.044715
        %v6927 = vmul.f32 %v6765, 0.044715
        %v6928 = vmul.f32 %v6814, 0.044715
        %v6929 = vmul.f32 %v6670, 0.044715
        %v6930 = vmul.f32 %v6719, 0.044715
        %v6931 = vmul.f32 %v6768, 0.044715
        %v6932 = vmul.f32 %v6817, 0.044715
        %v6933 = vmul.f32 %v6672, 0.044715
        %v6934 = vmul.f32 %v6721, 0.044715
        %v6935 = vmul.f32 %v6770, 0.044715
        %v6936 = vmul.f32 %v6819, 0.044715
        %v6937 = vmul.f32 %v6675, 0.044715
        %v6938 = vmul.f32 %v6724, 0.044715
        %v6939 = vmul.f32 %v6773, 0.044715
        %v6940 = vmul.f32 %v6822, 0.044715
        %v6941 = vmul.f32 %v6677, 0.044715
        %v6942 = vmul.f32 %v6726, 0.044715
        %v6943 = vmul.f32 %v6775, 0.044715
        %v6944 = vmul.f32 %v6824, 0.044715
        %v6945 = vmul.f32 %v6680, 0.044715
        %v6946 = vmul.f32 %v6729, 0.044715
        %v6947 = vmul.f32 %v6778, 0.044715
        %v6948 = vmul.f32 %v6827, 0.044715
        %v6949 = vmul.f32 %v6682, 0.044715
        %v6950 = vmul.f32 %v6731, 0.044715
        %v6951 = vmul.f32 %v6780, 0.044715
        %v6952 = vmul.f32 %v6829, 0.044715
        %v6953 = vmul.f32 %v6685, 0.044715
        %v6954 = vmul.f32 %v6734, 0.044715
        %v6955 = vmul.f32 %v6783, 0.044715
        %v6956 = vmul.f32 %v6832, 0.044715
        %v6957 = vmul.f32 %v6687, 0.044715
        %v6958 = vmul.f32 %v6736, 0.044715
        %v6959 = vmul.f32 %v6785, 0.044715
        %v6960 = vmul.f32 %v6834, 0.044715
        %v6961 = vmul.f32 %v6690, 0.044715
        %v6962 = vmul.f32 %v6739, 0.044715
        %v6963 = vmul.f32 %v6788, 0.044715
        %v6964 = vmul.f32 %v6837, 0.044715
        %v6965 = vmul.f32 %v6692, 0.044715
        %v6966 = vmul.f32 %v6741, 0.044715
        %v6967 = vmul.f32 %v6790, 0.044715
        %v6968 = vmul.f32 %v6839, 0.044715
        %v6969 = vmul.f32 %v6905, %v6655
        %v6970 = vmul.f32 %v6906, %v6704
        %v6971 = vmul.f32 %v6907, %v6753
        %v6972 = vmul.f32 %v6908, %v6802
        %v6973 = vmul.f32 %v6909, %v6657
        %v6974 = vmul.f32 %v6910, %v6706
        %v6975 = vmul.f32 %v6911, %v6755
        %v6976 = vmul.f32 %v6912, %v6804
        %v6977 = vmul.f32 %v6913, %v6660
        %v6978 = vmul.f32 %v6914, %v6709
        %v6979 = vmul.f32 %v6915, %v6758
        %v6980 = vmul.f32 %v6916, %v6807
        %v6981 = vmul.f32 %v6917, %v6662
        %v6982 = vmul.f32 %v6918, %v6711
        %v6983 = vmul.f32 %v6919, %v6760
        %v6984 = vmul.f32 %v6920, %v6809
        %v6985 = vmul.f32 %v6921, %v6665
        %v6986 = vmul.f32 %v6922, %v6714
        %v6987 = vmul.f32 %v6923, %v6763
        %v6988 = vmul.f32 %v6924, %v6812
        %v6989 = vmul.f32 %v6925, %v6667
        %v6990 = vmul.f32 %v6926, %v6716
        %v6991 = vmul.f32 %v6927, %v6765
        %v6992 = vmul.f32 %v6928, %v6814
        %v6993 = vmul.f32 %v6929, %v6670
        %v6994 = vmul.f32 %v6930, %v6719
        %v6995 = vmul.f32 %v6931, %v6768
        %v6996 = vmul.f32 %v6932, %v6817
        %v6997 = vmul.f32 %v6933, %v6672
        %v6998 = vmul.f32 %v6934, %v6721
        %v6999 = vmul.f32 %v6935, %v6770
        %v7000 = vmul.f32 %v6936, %v6819
        %v7001 = vmul.f32 %v6937, %v6675
        %v7002 = vmul.f32 %v6938, %v6724
        %v7003 = vmul.f32 %v6939, %v6773
        %v7004 = vmul.f32 %v6940, %v6822
        %v7005 = vmul.f32 %v6941, %v6677
        %v7006 = vmul.f32 %v6942, %v6726
        %v7007 = vmul.f32 %v6943, %v6775
        %v7008 = vmul.f32 %v6944, %v6824
        %v7009 = vmul.f32 %v6945, %v6680
        %v7010 = vmul.f32 %v6946, %v6729
        %v7011 = vmul.f32 %v6947, %v6778
        %v7012 = vmul.f32 %v6948, %v6827
        %v7013 = vmul.f32 %v6949, %v6682
        %v7014 = vmul.f32 %v6950, %v6731
        %v7015 = vmul.f32 %v6951, %v6780
        %v7016 = vmul.f32 %v6952, %v6829
        %v7017 = vmul.f32 %v6953, %v6685
        %v7018 = vmul.f32 %v6954, %v6734
        %v7019 = vmul.f32 %v6955, %v6783
        %v7020 = vmul.f32 %v6956, %v6832
        %v7021 = vmul.f32 %v6957, %v6687
        %v7022 = vmul.f32 %v6958, %v6736
        %v7023 = vmul.f32 %v6959, %v6785
        %v7024 = vmul.f32 %v6960, %v6834
        %v7025 = vmul.f32 %v6961, %v6690
        %v7026 = vmul.f32 %v6962, %v6739
        %v7027 = vmul.f32 %v6963, %v6788
        %v7028 = vmul.f32 %v6964, %v6837
        %v7029 = vmul.f32 %v6965, %v6692
        %v7030 = vmul.f32 %v6966, %v6741
        %v7031 = vmul.f32 %v6967, %v6790
        %v7032 = vmul.f32 %v6968, %v6839
        %v7033 = vmul.f32 %v6969, %v6655
        %v7034 = vmul.f32 %v6970, %v6704
        %v7035 = vmul.f32 %v6971, %v6753
        %v7036 = vmul.f32 %v6972, %v6802
        %v7037 = vmul.f32 %v6973, %v6657
        %v7038 = vmul.f32 %v6974, %v6706
        %v7039 = vmul.f32 %v6975, %v6755
        %v7040 = vmul.f32 %v6976, %v6804
        %v7041 = vmul.f32 %v6977, %v6660
        %v7042 = vmul.f32 %v6978, %v6709
        %v7043 = vmul.f32 %v6979, %v6758
        %v7044 = vmul.f32 %v6980, %v6807
        %v7045 = vmul.f32 %v6981, %v6662
        %v7046 = vmul.f32 %v6982, %v6711
        %v7047 = vmul.f32 %v6983, %v6760
        %v7048 = vmul.f32 %v6984, %v6809
        %v7049 = vmul.f32 %v6985, %v6665
        %v7050 = vmul.f32 %v6986, %v6714
        %v7051 = vmul.f32 %v6987, %v6763
        %v7052 = vmul.f32 %v6988, %v6812
        %v7053 = vmul.f32 %v6989, %v6667
        %v7054 = vmul.f32 %v6990, %v6716
        %v7055 = vmul.f32 %v6991, %v6765
        %v7056 = vmul.f32 %v6992, %v6814
        %v7057 = vmul.f32 %v6993, %v6670
        %v7058 = vmul.f32 %v6994, %v6719
        %v7059 = vmul.f32 %v6995, %v6768
        %v7060 = vmul.f32 %v6996, %v6817
        %v7061 = vmul.f32 %v6997, %v6672
        %v7062 = vmul.f32 %v6998, %v6721
        %v7063 = vmul.f32 %v6999, %v6770
        %v7064 = vmul.f32 %v7000, %v6819
        %v7065 = vmul.f32 %v7001, %v6675
        %v7066 = vmul.f32 %v7002, %v6724
        %v7067 = vmul.f32 %v7003, %v6773
        %v7068 = vmul.f32 %v7004, %v6822
        %v7069 = vmul.f32 %v7005, %v6677
        %v7070 = vmul.f32 %v7006, %v6726
        %v7071 = vmul.f32 %v7007, %v6775
        %v7072 = vmul.f32 %v7008, %v6824
        %v7073 = vmul.f32 %v7009, %v6680
        %v7074 = vmul.f32 %v7010, %v6729
        %v7075 = vmul.f32 %v7011, %v6778
        %v7076 = vmul.f32 %v7012, %v6827
        %v7077 = vmul.f32 %v7013, %v6682
        %v7078 = vmul.f32 %v7014, %v6731
        %v7079 = vmul.f32 %v7015, %v6780
        %v7080 = vmul.f32 %v7016, %v6829
        %v7081 = vmul.f32 %v7017, %v6685
        %v7082 = vmul.f32 %v7018, %v6734
        %v7083 = vmul.f32 %v7019, %v6783
        %v7084 = vmul.f32 %v7020, %v6832
        %v7085 = vmul.f32 %v7021, %v6687
        %v7086 = vmul.f32 %v7022, %v6736
        %v7087 = vmul.f32 %v7023, %v6785
        %v7088 = vmul.f32 %v7024, %v6834
        %v7089 = vmul.f32 %v7025, %v6690
        %v7090 = vmul.f32 %v7026, %v6739
        %v7091 = vmul.f32 %v7027, %v6788
        %v7092 = vmul.f32 %v7028, %v6837
        %v7093 = vmul.f32 %v7029, %v6692
        %v7094 = vmul.f32 %v7030, %v6741
        %v7095 = vmul.f32 %v7031, %v6790
        %v7096 = vmul.f32 %v7032, %v6839
        %v7097 = vadd.f32 %v6655, %v7033
        %v7098 = vadd.f32 %v6704, %v7034
        %v7099 = vadd.f32 %v6753, %v7035
        %v7100 = vadd.f32 %v6802, %v7036
        %v7101 = vadd.f32 %v6657, %v7037
        %v7102 = vadd.f32 %v6706, %v7038
        %v7103 = vadd.f32 %v6755, %v7039
        %v7104 = vadd.f32 %v6804, %v7040
        %v7105 = vadd.f32 %v6660, %v7041
        %v7106 = vadd.f32 %v6709, %v7042
        %v7107 = vadd.f32 %v6758, %v7043
        %v7108 = vadd.f32 %v6807, %v7044
        %v7109 = vadd.f32 %v6662, %v7045
        %v7110 = vadd.f32 %v6711, %v7046
        %v7111 = vadd.f32 %v6760, %v7047
        %v7112 = vadd.f32 %v6809, %v7048
        %v7113 = vadd.f32 %v6665, %v7049
        %v7114 = vadd.f32 %v6714, %v7050
        %v7115 = vadd.f32 %v6763, %v7051
        %v7116 = vadd.f32 %v6812, %v7052
        %v7117 = vadd.f32 %v6667, %v7053
        %v7118 = vadd.f32 %v6716, %v7054
        %v7119 = vadd.f32 %v6765, %v7055
        %v7120 = vadd.f32 %v6814, %v7056
        %v7121 = vadd.f32 %v6670, %v7057
        %v7122 = vadd.f32 %v6719, %v7058
        %v7123 = vadd.f32 %v6768, %v7059
        %v7124 = vadd.f32 %v6817, %v7060
        %v7125 = vadd.f32 %v6672, %v7061
        %v7126 = vadd.f32 %v6721, %v7062
        %v7127 = vadd.f32 %v6770, %v7063
        %v7128 = vadd.f32 %v6819, %v7064
        %v7129 = vadd.f32 %v6675, %v7065
        %v7130 = vadd.f32 %v6724, %v7066
        %v7131 = vadd.f32 %v6773, %v7067
        %v7132 = vadd.f32 %v6822, %v7068
        %v7133 = vadd.f32 %v6677, %v7069
        %v7134 = vadd.f32 %v6726, %v7070
        %v7135 = vadd.f32 %v6775, %v7071
        %v7136 = vadd.f32 %v6824, %v7072
        %v7137 = vadd.f32 %v6680, %v7073
        %v7138 = vadd.f32 %v6729, %v7074
        %v7139 = vadd.f32 %v6778, %v7075
        %v7140 = vadd.f32 %v6827, %v7076
        %v7141 = vadd.f32 %v6682, %v7077
        %v7142 = vadd.f32 %v6731, %v7078
        %v7143 = vadd.f32 %v6780, %v7079
        %v7144 = vadd.f32 %v6829, %v7080
        %v7145 = vadd.f32 %v6685, %v7081
        %v7146 = vadd.f32 %v6734, %v7082
        %v7147 = vadd.f32 %v6783, %v7083
        %v7148 = vadd.f32 %v6832, %v7084
        %v7149 = vadd.f32 %v6687, %v7085
        %v7150 = vadd.f32 %v6736, %v7086
        %v7151 = vadd.f32 %v6785, %v7087
        %v7152 = vadd.f32 %v6834, %v7088
        %v7153 = vadd.f32 %v6690, %v7089
        %v7154 = vadd.f32 %v6739, %v7090
        %v7155 = vadd.f32 %v6788, %v7091
        %v7156 = vadd.f32 %v6837, %v7092
        %v7157 = vadd.f32 %v6692, %v7093
        %v7158 = vadd.f32 %v6741, %v7094
        %v7159 = vadd.f32 %v6790, %v7095
        %v7160 = vadd.f32 %v6839, %v7096
        %v7161 = vmul.f32 %v7097, 0.7978846
        %v7162 = vmul.f32 %v7098, 0.7978846
        %v7163 = vmul.f32 %v7099, 0.7978846
        %v7164 = vmul.f32 %v7100, 0.7978846
        %v7165 = vmul.f32 %v7101, 0.7978846
        %v7166 = vmul.f32 %v7102, 0.7978846
        %v7167 = vmul.f32 %v7103, 0.7978846
        %v7168 = vmul.f32 %v7104, 0.7978846
        %v7169 = vmul.f32 %v7105, 0.7978846
        %v7170 = vmul.f32 %v7106, 0.7978846
        %v7171 = vmul.f32 %v7107, 0.7978846
        %v7172 = vmul.f32 %v7108, 0.7978846
        %v7173 = vmul.f32 %v7109, 0.7978846
        %v7174 = vmul.f32 %v7110, 0.7978846
        %v7175 = vmul.f32 %v7111, 0.7978846
        %v7176 = vmul.f32 %v7112, 0.7978846
        %v7177 = vmul.f32 %v7113, 0.7978846
        %v7178 = vmul.f32 %v7114, 0.7978846
        %v7179 = vmul.f32 %v7115, 0.7978846
        %v7180 = vmul.f32 %v7116, 0.7978846
        %v7181 = vmul.f32 %v7117, 0.7978846
        %v7182 = vmul.f32 %v7118, 0.7978846
        %v7183 = vmul.f32 %v7119, 0.7978846
        %v7184 = vmul.f32 %v7120, 0.7978846
        %v7185 = vmul.f32 %v7121, 0.7978846
        %v7186 = vmul.f32 %v7122, 0.7978846
        %v7187 = vmul.f32 %v7123, 0.7978846
        %v7188 = vmul.f32 %v7124, 0.7978846
        %v7189 = vmul.f32 %v7125, 0.7978846
        %v7190 = vmul.f32 %v7126, 0.7978846
        %v7191 = vmul.f32 %v7127, 0.7978846
        %v7192 = vmul.f32 %v7128, 0.7978846
        %v7193 = vmul.f32 %v7129, 0.7978846
        %v7194 = vmul.f32 %v7130, 0.7978846
        %v7195 = vmul.f32 %v7131, 0.7978846
        %v7196 = vmul.f32 %v7132, 0.7978846
        %v7197 = vmul.f32 %v7133, 0.7978846
        %v7198 = vmul.f32 %v7134, 0.7978846
        %v7199 = vmul.f32 %v7135, 0.7978846
        %v7200 = vmul.f32 %v7136, 0.7978846
        %v7201 = vmul.f32 %v7137, 0.7978846
        %v7202 = vmul.f32 %v7138, 0.7978846
        %v7203 = vmul.f32 %v7139, 0.7978846
        %v7204 = vmul.f32 %v7140, 0.7978846
        %v7205 = vmul.f32 %v7141, 0.7978846
        %v7206 = vmul.f32 %v7142, 0.7978846
        %v7207 = vmul.f32 %v7143, 0.7978846
        %v7208 = vmul.f32 %v7144, 0.7978846
        %v7209 = vmul.f32 %v7145, 0.7978846
        %v7210 = vmul.f32 %v7146, 0.7978846
        %v7211 = vmul.f32 %v7147, 0.7978846
        %v7212 = vmul.f32 %v7148, 0.7978846
        %v7213 = vmul.f32 %v7149, 0.7978846
        %v7214 = vmul.f32 %v7150, 0.7978846
        %v7215 = vmul.f32 %v7151, 0.7978846
        %v7216 = vmul.f32 %v7152, 0.7978846
        %v7217 = vmul.f32 %v7153, 0.7978846
        %v7218 = vmul.f32 %v7154, 0.7978846
        %v7219 = vmul.f32 %v7155, 0.7978846
        %v7220 = vmul.f32 %v7156, 0.7978846
        %v7221 = vmul.f32 %v7157, 0.7978846
        %v7222 = vmul.f32 %v7158, 0.7978846
        %v7223 = vmul.f32 %v7159, 0.7978846
        %v7224 = vmul.f32 %v7160, 0.7978846
        %v7225 = vtanh.pop %v7161
        %v7226 = vtanh.pop %v7162
        %v7227 = vtanh.pop %v7163
        %v7228 = vtanh.pop %v7164
        %v7229 = vtanh.pop %v7165
        %v7230 = vtanh.pop %v7166
        %v7231 = vtanh.pop %v7167
        %v7232 = vtanh.pop %v7168
        %v7233 = vtanh.pop %v7169
        %v7234 = vtanh.pop %v7170
        %v7235 = vtanh.pop %v7171
        %v7236 = vtanh.pop %v7172
        %v7237 = vtanh.pop %v7173
        %v7238 = vtanh.pop %v7174
        %v7239 = vtanh.pop %v7175
        %v7240 = vtanh.pop %v7176
        %v7241 = vtanh.pop %v7177
        %v7242 = vtanh.pop %v7178
        %v7243 = vtanh.pop %v7179
        %v7244 = vtanh.pop %v7180
        %v7245 = vtanh.pop %v7181
        %v7246 = vtanh.pop %v7182
        %v7247 = vtanh.pop %v7183
        %v7248 = vtanh.pop %v7184
        %v7249 = vtanh.pop %v7185
        %v7250 = vtanh.pop %v7186
        %v7251 = vtanh.pop %v7187
        %v7252 = vtanh.pop %v7188
        %v7253 = vtanh.pop %v7189
        %v7254 = vtanh.pop %v7190
        %v7255 = vtanh.pop %v7191
        %v7256 = vtanh.pop %v7192
        %v7257 = vtanh.pop %v7193
        %v7258 = vtanh.pop %v7194
        %v7259 = vtanh.pop %v7195
        %v7260 = vtanh.pop %v7196
        %v7261 = vtanh.pop %v7197
        %v7262 = vtanh.pop %v7198
        %v7263 = vtanh.pop %v7199
        %v7264 = vtanh.pop %v7200
        %v7265 = vtanh.pop %v7201
        %v7266 = vtanh.pop %v7202
        %v7267 = vtanh.pop %v7203
        %v7268 = vtanh.pop %v7204
        %v7269 = vtanh.pop %v7205
        %v7270 = vtanh.pop %v7206
        %v7271 = vtanh.pop %v7207
        %v7272 = vtanh.pop %v7208
        %v7273 = vtanh.pop %v7209
        %v7274 = vtanh.pop %v7210
        %v7275 = vtanh.pop %v7211
        %v7276 = vtanh.pop %v7212
        %v7277 = vtanh.pop %v7213
        %v7278 = vtanh.pop %v7214
        %v7279 = vtanh.pop %v7215
        %v7280 = vtanh.pop %v7216
        %v7281 = vtanh.pop %v7217
        %v7282 = vtanh.pop %v7218
        %v7283 = vtanh.pop %v7219
        %v7284 = vtanh.pop %v7220
        %v7285 = vtanh.pop %v7221
        %v7286 = vtanh.pop %v7222
        %v7287 = vtanh.pop %v7223
        %v7288 = vtanh.pop %v7224
        %v7289 = vadd.f32 %v7225, 1.0
        %v7290 = vadd.f32 %v7226, 1.0
        %v7291 = vadd.f32 %v7227, 1.0
        %v7292 = vadd.f32 %v7228, 1.0
        %v7293 = vadd.f32 %v7229, 1.0
        %v7294 = vadd.f32 %v7230, 1.0
        %v7295 = vadd.f32 %v7231, 1.0
        %v7296 = vadd.f32 %v7232, 1.0
        %v7297 = vadd.f32 %v7233, 1.0
        %v7298 = vadd.f32 %v7234, 1.0
        %v7299 = vadd.f32 %v7235, 1.0
        %v7300 = vadd.f32 %v7236, 1.0
        %v7301 = vadd.f32 %v7237, 1.0
        %v7302 = vadd.f32 %v7238, 1.0
        %v7303 = vadd.f32 %v7239, 1.0
        %v7304 = vadd.f32 %v7240, 1.0
        %v7305 = vadd.f32 %v7241, 1.0
        %v7306 = vadd.f32 %v7242, 1.0
        %v7307 = vadd.f32 %v7243, 1.0
        %v7308 = vadd.f32 %v7244, 1.0
        %v7309 = vadd.f32 %v7245, 1.0
        %v7310 = vadd.f32 %v7246, 1.0
        %v7311 = vadd.f32 %v7247, 1.0
        %v7312 = vadd.f32 %v7248, 1.0
        %v7313 = vadd.f32 %v7249, 1.0
        %v7314 = vadd.f32 %v7250, 1.0
        %v7315 = vadd.f32 %v7251, 1.0
        %v7316 = vadd.f32 %v7252, 1.0
        %v7317 = vadd.f32 %v7253, 1.0
        %v7318 = vadd.f32 %v7254, 1.0
        %v7319 = vadd.f32 %v7255, 1.0
        %v7320 = vadd.f32 %v7256, 1.0
        %v7321 = vadd.f32 %v7257, 1.0
        %v7322 = vadd.f32 %v7258, 1.0
        %v7323 = vadd.f32 %v7259, 1.0
        %v7324 = vadd.f32 %v7260, 1.0
        %v7325 = vadd.f32 %v7261, 1.0
        %v7326 = vadd.f32 %v7262, 1.0
        %v7327 = vadd.f32 %v7263, 1.0
        %v7328 = vadd.f32 %v7264, 1.0
        %v7329 = vadd.f32 %v7265, 1.0
        %v7330 = vadd.f32 %v7266, 1.0
        %v7331 = vadd.f32 %v7267, 1.0
        %v7332 = vadd.f32 %v7268, 1.0
        %v7333 = vadd.f32 %v7269, 1.0
        %v7334 = vadd.f32 %v7270, 1.0
        %v7335 = vadd.f32 %v7271, 1.0
        %v7336 = vadd.f32 %v7272, 1.0
        %v7337 = vadd.f32 %v7273, 1.0
        %v7338 = vadd.f32 %v7274, 1.0
        %v7339 = vadd.f32 %v7275, 1.0
        %v7340 = vadd.f32 %v7276, 1.0
        %v7341 = vadd.f32 %v7277, 1.0
        %v7342 = vadd.f32 %v7278, 1.0
        %v7343 = vadd.f32 %v7279, 1.0
        %v7344 = vadd.f32 %v7280, 1.0
        %v7345 = vadd.f32 %v7281, 1.0
        %v7346 = vadd.f32 %v7282, 1.0
        %v7347 = vadd.f32 %v7283, 1.0
        %v7348 = vadd.f32 %v7284, 1.0
        %v7349 = vadd.f32 %v7285, 1.0
        %v7350 = vadd.f32 %v7286, 1.0
        %v7351 = vadd.f32 %v7287, 1.0
        %v7352 = vadd.f32 %v7288, 1.0
        %v7353 = vmul.f32 %v6841, %v7289
        %v7354 = vmul.f32 %v6842, %v7290
        %v7355 = vmul.f32 %v6843, %v7291
        %v7356 = vmul.f32 %v6844, %v7292
        %v7357 = vmul.f32 %v6845, %v7293
        %v7358 = vmul.f32 %v6846, %v7294
        %v7359 = vmul.f32 %v6847, %v7295
        %v7360 = vmul.f32 %v6848, %v7296
        %v7361 = vmul.f32 %v6849, %v7297
        %v7362 = vmul.f32 %v6850, %v7298
        %v7363 = vmul.f32 %v6851, %v7299
        %v7364 = vmul.f32 %v6852, %v7300
        %v7365 = vmul.f32 %v6853, %v7301
        %v7366 = vmul.f32 %v6854, %v7302
        %v7367 = vmul.f32 %v6855, %v7303
        %v7368 = vmul.f32 %v6856, %v7304
        %v7369 = vmul.f32 %v6857, %v7305
        %v7370 = vmul.f32 %v6858, %v7306
        %v7371 = vmul.f32 %v6859, %v7307
        %v7372 = vmul.f32 %v6860, %v7308
        %v7373 = vmul.f32 %v6861, %v7309
        %v7374 = vmul.f32 %v6862, %v7310
        %v7375 = vmul.f32 %v6863, %v7311
        %v7376 = vmul.f32 %v6864, %v7312
        %v7377 = vmul.f32 %v6865, %v7313
        %v7378 = vmul.f32 %v6866, %v7314
        %v7379 = vmul.f32 %v6867, %v7315
        %v7380 = vmul.f32 %v6868, %v7316
        %v7381 = vmul.f32 %v6869, %v7317
        %v7382 = vmul.f32 %v6870, %v7318
        %v7383 = vmul.f32 %v6871, %v7319
        %v7384 = vmul.f32 %v6872, %v7320
        %v7385 = vmul.f32 %v6873, %v7321
        %v7386 = vmul.f32 %v6874, %v7322
        %v7387 = vmul.f32 %v6875, %v7323
        %v7388 = vmul.f32 %v6876, %v7324
        %v7389 = vmul.f32 %v6877, %v7325
        %v7390 = vmul.f32 %v6878, %v7326
        %v7391 = vmul.f32 %v6879, %v7327
        %v7392 = vmul.f32 %v6880, %v7328
        %v7393 = vmul.f32 %v6881, %v7329
        %v7394 = vmul.f32 %v6882, %v7330
        %v7395 = vmul.f32 %v6883, %v7331
        %v7396 = vmul.f32 %v6884, %v7332
        %v7397 = vmul.f32 %v6885, %v7333
        %v7398 = vmul.f32 %v6886, %v7334
        %v7399 = vmul.f32 %v6887, %v7335
        %v7400 = vmul.f32 %v6888, %v7336
        %v7401 = vmul.f32 %v6889, %v7337
        %v7402 = vmul.f32 %v6890, %v7338
        %v7403 = vmul.f32 %v6891, %v7339
        %v7404 = vmul.f32 %v6892, %v7340
        %v7405 = vmul.f32 %v6893, %v7341
        %v7406 = vmul.f32 %v6894, %v7342
        %v7407 = vmul.f32 %v6895, %v7343
        %v7408 = vmul.f32 %v6896, %v7344
        %v7409 = vmul.f32 %v6897, %v7345
        %v7410 = vmul.f32 %v6898, %v7346
        %v7411 = vmul.f32 %v6899, %v7347
        %v7412 = vmul.f32 %v6900, %v7348
        %v7413 = vmul.f32 %v6901, %v7349
        %v7414 = vmul.f32 %v6902, %v7350
        %v7415 = vmul.f32 %v6903, %v7351
        %v7416 = vmul.f32 %v6904, %v7352
        %v7417 = vpack.c.bf16 %v7357, %v7353
        %v7418 = vpack.c.bf16 %v7358, %v7354
        %v7419 = vpack.c.bf16 %v7359, %v7355
        %v7420 = vpack.c.bf16 %v7360, %v7356
        %v7421 = vpack.c.bf16 %v7365, %v7361
        %v7422 = vpack.c.bf16 %v7366, %v7362
        %v7423 = vpack.c.bf16 %v7367, %v7363
        %v7424 = vpack.c.bf16 %v7368, %v7364
        %v7425 = vpack.c.bf16 %v7373, %v7369
        %v7426 = vpack.c.bf16 %v7374, %v7370
        %v7427 = vpack.c.bf16 %v7375, %v7371
        %v7428 = vpack.c.bf16 %v7376, %v7372
        %v7429 = vpack.c.bf16 %v7381, %v7377
        %v7430 = vpack.c.bf16 %v7382, %v7378
        %v7431 = vpack.c.bf16 %v7383, %v7379
        %v7432 = vpack.c.bf16 %v7384, %v7380
        %v7433 = vpack.c.bf16 %v7389, %v7385
        %v7434 = vpack.c.bf16 %v7390, %v7386
        %v7435 = vpack.c.bf16 %v7391, %v7387
        %v7436 = vpack.c.bf16 %v7392, %v7388
        %v7437 = vpack.c.bf16 %v7397, %v7393
        %v7438 = vpack.c.bf16 %v7398, %v7394
        %v7439 = vpack.c.bf16 %v7399, %v7395
        %v7440 = vpack.c.bf16 %v7400, %v7396
        %v7441 = vpack.c.bf16 %v7405, %v7401
        %v7442 = vpack.c.bf16 %v7406, %v7402
        %v7443 = vpack.c.bf16 %v7407, %v7403
        %v7444 = vpack.c.bf16 %v7408, %v7404
        %v7445 = vpack.c.bf16 %v7413, %v7409
        %v7446 = vpack.c.bf16 %v7414, %v7410
        %v7447 = vpack.c.bf16 %v7415, %v7411
        %v7448 = vpack.c.bf16 %v7416, %v7412
        %v7449 = vld [vmem:[#allocation5] sm:$0xf]
        %v7450 = vld [vmem:[#allocation5 + $0x4] sm:$0xf]
        %v7451 = vld [vmem:[#allocation5 + $0x8] sm:$0xf]
        %v7452 = vld [vmem:[#allocation5 + $0xc] sm:$0xf]
        %v7453 = vld [vmem:[#allocation5 + $0x10] sm:$0xf]
        %v7454 = vld [vmem:[#allocation5 + $0x14] sm:$0xf]
        %v7455 = vld [vmem:[#allocation5 + $0x18] sm:$0xf]
        %v7456 = vld [vmem:[#allocation5 + $0x1c] sm:$0xf]
        %v7457 = vld [vmem:[#allocation5 + $0x20] sm:$0xf]
        %v7458 = vld [vmem:[#allocation5 + $0x24] sm:$0xf]
        %v7459 = vld [vmem:[#allocation5 + $0x28] sm:$0xf]
        %v7460 = vld [vmem:[#allocation5 + $0x2c] sm:$0xf]
        %v7461 = vld [vmem:[#allocation5 + $0x30] sm:$0xf]
        %v7462 = vld [vmem:[#allocation5 + $0x34] sm:$0xf]
        %v7463 = vld [vmem:[#allocation5 + $0x38] sm:$0xf]
        %v7464 = vld [vmem:[#allocation5 + $0x3c] sm:$0xf]
        %v7465 = vld [vmem:[#allocation5 + $0x40] sm:$0xf]
        %v7466 = vld [vmem:[#allocation5 + $0x44] sm:$0xf]
        %v7467 = vld [vmem:[#allocation5 + $0x48] sm:$0xf]
        %v7468 = vld [vmem:[#allocation5 + $0x4c] sm:$0xf]
        %v7469 = vld [vmem:[#allocation5 + $0x50] sm:$0xf]
        %v7470 = vld [vmem:[#allocation5 + $0x54] sm:$0xf]
        %v7471 = vld [vmem:[#allocation5 + $0x58] sm:$0xf]
        %v7472 = vld [vmem:[#allocation5 + $0x5c] sm:$0xf]
        %v7473 = vld [vmem:[#allocation5 + $0x60] sm:$0xf]
        %v7474 = vld [vmem:[#allocation5 + $0x64] sm:$0xf]
        %v7475 = vld [vmem:[#allocation5 + $0x68] sm:$0xf]
        %v7476 = vld [vmem:[#allocation5 + $0x6c] sm:$0xf]
        %v7477 = vld [vmem:[#allocation5 + $0x70] sm:$0xf]
        %v7478 = vld [vmem:[#allocation5 + $0x74] sm:$0xf]
        %v7479 = vld [vmem:[#allocation5 + $0x78] sm:$0xf]
        %v7480 = vld [vmem:[#allocation5 + $0x7c] sm:$0xf]
        %v7481 = vld [vmem:[#allocation5 + $0x80] sm:$0xf]
        %v7482 = vld [vmem:[#allocation5 + $0x84] sm:$0xf]
        %v7483 = vld [vmem:[#allocation5 + $0x88] sm:$0xf]
        %v7484 = vld [vmem:[#allocation5 + $0x8c] sm:$0xf]
        %v7485 = vld [vmem:[#allocation5 + $0x90] sm:$0xf]
        %v7486 = vld [vmem:[#allocation5 + $0x94] sm:$0xf]
        %v7487 = vld [vmem:[#allocation5 + $0x98] sm:$0xf]
        %v7488 = vld [vmem:[#allocation5 + $0x9c] sm:$0xf]
        %v7489 = vld [vmem:[#allocation5 + $0xa0] sm:$0xf]
        %v7490 = vld [vmem:[#allocation5 + $0xa4] sm:$0xf]
        %v7491 = vld [vmem:[#allocation5 + $0xa8] sm:$0xf]
        %v7492 = vld [vmem:[#allocation5 + $0xac] sm:$0xf]
        %v7493 = vld [vmem:[#allocation5 + $0xb0] sm:$0xf]
        %v7494 = vld [vmem:[#allocation5 + $0xb4] sm:$0xf]
        %v7495 = vld [vmem:[#allocation5 + $0xb8] sm:$0xf]
        %v7496 = vld [vmem:[#allocation5 + $0xbc] sm:$0xf]
        %v7497 = vld [vmem:[#allocation5 + $0xc0] sm:$0xf]
        %v7498 = vld [vmem:[#allocation5 + $0xc4] sm:$0xf]
        %v7499 = vld [vmem:[#allocation5 + $0xc8] sm:$0xf]
        %v7500 = vld [vmem:[#allocation5 + $0xcc] sm:$0xf]
        %v7501 = vld [vmem:[#allocation5 + $0xd0] sm:$0xf]
        %v7502 = vld [vmem:[#allocation5 + $0xd4] sm:$0xf]
        %v7503 = vld [vmem:[#allocation5 + $0xd8] sm:$0xf]
        %v7504 = vld [vmem:[#allocation5 + $0xdc] sm:$0xf]
        %v7505 = vld [vmem:[#allocation5 + $0xe0] sm:$0xf]
        %v7506 = vld [vmem:[#allocation5 + $0xe4] sm:$0xf]
        %v7507 = vld [vmem:[#allocation5 + $0xe8] sm:$0xf]
        %v7508 = vld [vmem:[#allocation5 + $0xec] sm:$0xf]
        %v7509 = vld [vmem:[#allocation5 + $0xf0] sm:$0xf]
        %v7510 = vld [vmem:[#allocation5 + $0xf4] sm:$0xf]
        %v7511 = vld [vmem:[#allocation5 + $0xf8] sm:$0xf]
        %v7512 = vld [vmem:[#allocation5 + $0xfc] sm:$0xf]
        %v7513 = vld [vmem:[%s6] sm:$0x1]
        %v7515 = vperm.slane %v7513, 0
        %v7581 = vunpack.c.l.b16 %v7449
        %v7582 = vunpack.c.l.b16 %v7450
        %v7583 = vunpack.c.l.b16 %v7451
        %v7584 = vunpack.c.l.b16 %v7452
        %v7585 = vunpack.c.l.b16 %v7453
        %v7586 = vunpack.c.l.b16 %v7454
        %v7587 = vunpack.c.l.b16 %v7455
        %v7588 = vunpack.c.l.b16 %v7456
        %v7589 = vunpack.c.l.b16 %v7457
        %v7590 = vunpack.c.l.b16 %v7458
        %v7591 = vunpack.c.l.b16 %v7459
        %v7592 = vunpack.c.l.b16 %v7460
        %v7593 = vunpack.c.l.b16 %v7461
        %v7594 = vunpack.c.l.b16 %v7462
        %v7595 = vunpack.c.l.b16 %v7463
        %v7596 = vunpack.c.l.b16 %v7464
        %v7597 = vunpack.c.l.b16 %v7465
        %v7598 = vunpack.c.l.b16 %v7466
        %v7599 = vunpack.c.l.b16 %v7467
        %v7600 = vunpack.c.l.b16 %v7468
        %v7601 = vunpack.c.l.b16 %v7469
        %v7602 = vunpack.c.l.b16 %v7470
        %v7603 = vunpack.c.l.b16 %v7471
        %v7604 = vunpack.c.l.b16 %v7472
        %v7605 = vunpack.c.l.b16 %v7473
        %v7606 = vunpack.c.l.b16 %v7474
        %v7607 = vunpack.c.l.b16 %v7475
        %v7608 = vunpack.c.l.b16 %v7476
        %v7609 = vunpack.c.l.b16 %v7477
        %v7610 = vunpack.c.l.b16 %v7478
        %v7611 = vunpack.c.l.b16 %v7479
        %v7612 = vunpack.c.l.b16 %v7480
        %v7613 = vunpack.c.l.b16 %v7481
        %v7614 = vunpack.c.l.b16 %v7482
        %v7615 = vunpack.c.l.b16 %v7483
        %v7616 = vunpack.c.l.b16 %v7484
        %v7617 = vunpack.c.l.b16 %v7485
        %v7618 = vunpack.c.l.b16 %v7486
        %v7619 = vunpack.c.l.b16 %v7487
        %v7620 = vunpack.c.l.b16 %v7488
        %v7621 = vunpack.c.l.b16 %v7489
        %v7622 = vunpack.c.l.b16 %v7490
        %v7623 = vunpack.c.l.b16 %v7491
        %v7624 = vunpack.c.l.b16 %v7492
        %v7625 = vunpack.c.l.b16 %v7493
        %v7626 = vunpack.c.l.b16 %v7494
        %v7627 = vunpack.c.l.b16 %v7495
        %v7628 = vunpack.c.l.b16 %v7496
        %v7629 = vunpack.c.l.b16 %v7497
        %v7630 = vunpack.c.l.b16 %v7498
        %v7631 = vunpack.c.l.b16 %v7499
        %v7632 = vunpack.c.l.b16 %v7500
        %v7633 = vunpack.c.l.b16 %v7501
        %v7634 = vunpack.c.l.b16 %v7502
        %v7635 = vunpack.c.l.b16 %v7503
        %v7636 = vunpack.c.l.b16 %v7504
        %v7637 = vunpack.c.l.b16 %v7505
        %v7638 = vunpack.c.l.b16 %v7506
        %v7639 = vunpack.c.l.b16 %v7507
        %v7640 = vunpack.c.l.b16 %v7508
        %v7641 = vunpack.c.l.b16 %v7509
        %v7642 = vunpack.c.l.b16 %v7510
        %v7643 = vunpack.c.l.b16 %v7511
        %v7644 = vunpack.c.l.b16 %v7512
        %v7645 = vpack.c.b16 %v7582, %v7581
        %v7646 = vpack.c.b16 %v7584, %v7583
        %v7647 = vpack.c.b16 %v7586, %v7585
        %v7648 = vpack.c.b16 %v7588, %v7587
        %v7649 = vpack.c.b16 %v7590, %v7589
        %v7650 = vpack.c.b16 %v7592, %v7591
        %v7651 = vpack.c.b16 %v7594, %v7593
        %v7652 = vpack.c.b16 %v7596, %v7595
        %v7653 = vpack.c.b16 %v7598, %v7597
        %v7654 = vpack.c.b16 %v7600, %v7599
        %v7655 = vpack.c.b16 %v7602, %v7601
        %v7656 = vpack.c.b16 %v7604, %v7603
        %v7657 = vpack.c.b16 %v7606, %v7605
        %v7658 = vpack.c.b16 %v7608, %v7607
        %v7659 = vpack.c.b16 %v7610, %v7609
        %v7660 = vpack.c.b16 %v7612, %v7611
        %v7661 = vpack.c.b16 %v7614, %v7613
        %v7662 = vpack.c.b16 %v7616, %v7615
        %v7663 = vpack.c.b16 %v7618, %v7617
        %v7664 = vpack.c.b16 %v7620, %v7619
        %v7665 = vpack.c.b16 %v7622, %v7621
        %v7666 = vpack.c.b16 %v7624, %v7623
        %v7667 = vpack.c.b16 %v7626, %v7625
        %v7668 = vpack.c.b16 %v7628, %v7627
        %v7669 = vpack.c.b16 %v7630, %v7629
        %v7670 = vpack.c.b16 %v7632, %v7631
        %v7671 = vpack.c.b16 %v7634, %v7633
        %v7672 = vpack.c.b16 %v7636, %v7635
        %v7673 = vpack.c.b16 %v7638, %v7637
        %v7674 = vpack.c.b16 %v7640, %v7639
        %v7675 = vpack.c.b16 %v7642, %v7641
        %v7676 = vpack.c.b16 %v7644, %v7643
        %7709 = vmatpush.bf16.msra.mxu0 %v7652
        %7710 = vmatpush.bf16.msra.mxu0 %v7651
        %7711 = vmatpush.bf16.msra.mxu0 %v7650
        %7712 = vmatpush.bf16.msra.mxu0 %v7649
        %7713 = vmatpush.bf16.msra.mxu0 %v7648
        %7714 = vmatpush.bf16.msra.mxu0 %v7647
        %7715 = vmatpush.bf16.msra.mxu0 %v7646
        %7716 = vmatpush.bf16.msra.mxu0 %v7645
        %7717 = vmatmul.bf16.gmra.mxu0 %v7417
        %v7718 = vpop.f32.mrf.mxu0
        %v7719 = vadd.f32 %v7515, %v7718
        %v7720 = vpop.f32.mrf.mxu0
        %v7721 = vadd.f32 %v7515, %v7720
        %7722 = vmatmul.bf16.gmra.mxu0 %v7421
        %v7723 = vpop.f32.mrf.mxu0
        %v7724 = vadd.f32 %v7515, %v7723
        %v7725 = vpop.f32.mrf.mxu0
        %v7726 = vadd.f32 %v7515, %v7725
        %7727 = vmatmul.bf16.gmra.mxu0 %v7425
        %v7728 = vpop.f32.mrf.mxu0
        %v7729 = vadd.f32 %v7515, %v7728
        %v7730 = vpop.f32.mrf.mxu0
        %v7731 = vadd.f32 %v7515, %v7730
        %7732 = vmatmul.bf16.gmra.mxu0 %v7429
        %v7733 = vpop.f32.mrf.mxu0
        %v7734 = vadd.f32 %v7515, %v7733
        %v7735 = vpop.f32.mrf.mxu0
        %v7736 = vadd.f32 %v7515, %v7735
        %7737 = vmatmul.bf16.gmra.mxu0 %v7433
        %v7738 = vpop.f32.mrf.mxu0
        %v7739 = vadd.f32 %v7515, %v7738
        %v7740 = vpop.f32.mrf.mxu0
        %v7741 = vadd.f32 %v7515, %v7740
        %7742 = vmatmul.bf16.gmra.mxu0 %v7437
        %v7743 = vpop.f32.mrf.mxu0
        %v7744 = vadd.f32 %v7515, %v7743
        %v7745 = vpop.f32.mrf.mxu0
        %v7746 = vadd.f32 %v7515, %v7745
        %7747 = vmatmul.bf16.gmra.mxu0 %v7441
        %v7748 = vpop.f32.mrf.mxu0
        %v7749 = vadd.f32 %v7515, %v7748
        %v7750 = vpop.f32.mrf.mxu0
        %v7751 = vadd.f32 %v7515, %v7750
        %7752 = vmatmul.bf16.gmra.mxu0 %v7445
        %v7753 = vpop.f32.mrf.mxu0
        %v7754 = vadd.f32 %v7515, %v7753
        %v7755 = vpop.f32.mrf.mxu0
        %v7756 = vadd.f32 %v7515, %v7755
        %7757 = vdwg.mxu0
        %7758 = vmatpush.bf16.msra.mxu0 %v7660
        %7759 = vmatpush.bf16.msra.mxu0 %v7659
        %7760 = vmatpush.bf16.msra.mxu0 %v7658
        %7761 = vmatpush.bf16.msra.mxu0 %v7657
        %7762 = vmatpush.bf16.msra.mxu0 %v7656
        %7763 = vmatpush.bf16.msra.mxu0 %v7655
        %7764 = vmatpush.bf16.msra.mxu0 %v7654
        %7765 = vmatpush.bf16.msra.mxu0 %v7653
        %7766 = vmatmul.bf16.gmra.mxu0 %v7418
        %v7767 = vpop.f32.mrf.mxu0
        %v7768 = vadd.f32 %v7719, %v7767
        %v7769 = vpop.f32.mrf.mxu0
        %v7770 = vadd.f32 %v7721, %v7769
        %7771 = vmatmul.bf16.gmra.mxu0 %v7422
        %v7772 = vpop.f32.mrf.mxu0
        %v7773 = vadd.f32 %v7724, %v7772
        %v7774 = vpop.f32.mrf.mxu0
        %v7775 = vadd.f32 %v7726, %v7774
        %7776 = vmatmul.bf16.gmra.mxu0 %v7426
        %v7777 = vpop.f32.mrf.mxu0
        %v7778 = vadd.f32 %v7729, %v7777
        %v7779 = vpop.f32.mrf.mxu0
        %v7780 = vadd.f32 %v7731, %v7779
        %7781 = vmatmul.bf16.gmra.mxu0 %v7430
        %v7782 = vpop.f32.mrf.mxu0
        %v7783 = vadd.f32 %v7734, %v7782
        %v7784 = vpop.f32.mrf.mxu0
        %v7785 = vadd.f32 %v7736, %v7784
        %7786 = vmatmul.bf16.gmra.mxu0 %v7434
        %v7787 = vpop.f32.mrf.mxu0
        %v7788 = vadd.f32 %v7739, %v7787
        %v7789 = vpop.f32.mrf.mxu0
        %v7790 = vadd.f32 %v7741, %v7789
        %7791 = vmatmul.bf16.gmra.mxu0 %v7438
        %v7792 = vpop.f32.mrf.mxu0
        %v7793 = vadd.f32 %v7744, %v7792
        %v7794 = vpop.f32.mrf.mxu0
        %v7795 = vadd.f32 %v7746, %v7794
        %7796 = vmatmul.bf16.gmra.mxu0 %v7442
        %v7797 = vpop.f32.mrf.mxu0
        %v7798 = vadd.f32 %v7749, %v7797
        %v7799 = vpop.f32.mrf.mxu0
        %v7800 = vadd.f32 %v7751, %v7799
        %7801 = vmatmul.bf16.gmra.mxu0 %v7446
        %v7802 = vpop.f32.mrf.mxu0
        %v7803 = vadd.f32 %v7754, %v7802
        %v7804 = vpop.f32.mrf.mxu0
        %v7805 = vadd.f32 %v7756, %v7804
        %7806 = vdwg.mxu0
        %7807 = vmatpush.bf16.msra.mxu0 %v7668
        %7808 = vmatpush.bf16.msra.mxu0 %v7667
        %7809 = vmatpush.bf16.msra.mxu0 %v7666
        %7810 = vmatpush.bf16.msra.mxu0 %v7665
        %7811 = vmatpush.bf16.msra.mxu0 %v7664
        %7812 = vmatpush.bf16.msra.mxu0 %v7663
        %7813 = vmatpush.bf16.msra.mxu0 %v7662
        %7814 = vmatpush.bf16.msra.mxu0 %v7661
        %7815 = vmatmul.bf16.gmra.mxu0 %v7419
        %v7816 = vpop.f32.mrf.mxu0
        %v7817 = vadd.f32 %v7768, %v7816
        %v7818 = vpop.f32.mrf.mxu0
        %v7819 = vadd.f32 %v7770, %v7818
        %7820 = vmatmul.bf16.gmra.mxu0 %v7423
        %v7821 = vpop.f32.mrf.mxu0
        %v7822 = vadd.f32 %v7773, %v7821
        %v7823 = vpop.f32.mrf.mxu0
        %v7824 = vadd.f32 %v7775, %v7823
        %7825 = vmatmul.bf16.gmra.mxu0 %v7427
        %v7826 = vpop.f32.mrf.mxu0
        %v7827 = vadd.f32 %v7778, %v7826
        %v7828 = vpop.f32.mrf.mxu0
        %v7829 = vadd.f32 %v7780, %v7828
        %7830 = vmatmul.bf16.gmra.mxu0 %v7431
        %v7831 = vpop.f32.mrf.mxu0
        %v7832 = vadd.f32 %v7783, %v7831
        %v7833 = vpop.f32.mrf.mxu0
        %v7834 = vadd.f32 %v7785, %v7833
        %7835 = vmatmul.bf16.gmra.mxu0 %v7435
        %v7836 = vpop.f32.mrf.mxu0
        %v7837 = vadd.f32 %v7788, %v7836
        %v7838 = vpop.f32.mrf.mxu0
        %v7839 = vadd.f32 %v7790, %v7838
        %7840 = vmatmul.bf16.gmra.mxu0 %v7439
        %v7841 = vpop.f32.mrf.mxu0
        %v7842 = vadd.f32 %v7793, %v7841
        %v7843 = vpop.f32.mrf.mxu0
        %v7844 = vadd.f32 %v7795, %v7843
        %7845 = vmatmul.bf16.gmra.mxu0 %v7443
        %v7846 = vpop.f32.mrf.mxu0
        %v7847 = vadd.f32 %v7798, %v7846
        %v7848 = vpop.f32.mrf.mxu0
        %v7849 = vadd.f32 %v7800, %v7848
        %7850 = vmatmul.bf16.gmra.mxu0 %v7447
        %v7851 = vpop.f32.mrf.mxu0
        %v7852 = vadd.f32 %v7803, %v7851
        %v7853 = vpop.f32.mrf.mxu0
        %v7854 = vadd.f32 %v7805, %v7853
        %7855 = vdwg.mxu0
        %7856 = vmatpush.bf16.msra.mxu0 %v7676
        %7857 = vmatpush.bf16.msra.mxu0 %v7675
        %7858 = vmatpush.bf16.msra.mxu0 %v7674
        %7859 = vmatpush.bf16.msra.mxu0 %v7673
        %7860 = vmatpush.bf16.msra.mxu0 %v7672
        %7861 = vmatpush.bf16.msra.mxu0 %v7671
        %7862 = vmatpush.bf16.msra.mxu0 %v7670
        %7863 = vmatpush.bf16.msra.mxu0 %v7669
        %7864 = vmatmul.bf16.gmra.mxu0 %v7420
        %v7865 = vpop.f32.mrf.mxu0
        %v7866 = vadd.f32 %v7817, %v7865
        %v7867 = vpop.f32.mrf.mxu0
        %v7868 = vadd.f32 %v7819, %v7867
        %7869 = vmatmul.bf16.gmra.mxu0 %v7424
        %v7870 = vpop.f32.mrf.mxu0
        %v7871 = vadd.f32 %v7822, %v7870
        %v7872 = vpop.f32.mrf.mxu0
        %v7873 = vadd.f32 %v7824, %v7872
        %7874 = vmatmul.bf16.gmra.mxu0 %v7428
        %v7875 = vpop.f32.mrf.mxu0
        %v7876 = vadd.f32 %v7827, %v7875
        %v7877 = vpop.f32.mrf.mxu0
        %v7878 = vadd.f32 %v7829, %v7877
        %7879 = vmatmul.bf16.gmra.mxu0 %v7432
        %v7880 = vpop.f32.mrf.mxu0
        %v7881 = vadd.f32 %v7832, %v7880
        %v7882 = vpop.f32.mrf.mxu0
        %v7883 = vadd.f32 %v7834, %v7882
        %7884 = vmatmul.bf16.gmra.mxu0 %v7436
        %v7885 = vpop.f32.mrf.mxu0
        %v7886 = vadd.f32 %v7837, %v7885
        %v7887 = vpop.f32.mrf.mxu0
        %v7888 = vadd.f32 %v7839, %v7887
        %7889 = vmatmul.bf16.gmra.mxu0 %v7440
        %v7890 = vpop.f32.mrf.mxu0
        %v7891 = vadd.f32 %v7842, %v7890
        %v7892 = vpop.f32.mrf.mxu0
        %v7893 = vadd.f32 %v7844, %v7892
        %7894 = vmatmul.bf16.gmra.mxu0 %v7444
        %v7895 = vpop.f32.mrf.mxu0
        %v7896 = vadd.f32 %v7847, %v7895
        %v7897 = vpop.f32.mrf.mxu0
        %v7898 = vadd.f32 %v7849, %v7897
        %7899 = vmatmul.bf16.gmra.mxu0 %v7448
        %v7900 = vpop.f32.mrf.mxu0
        %v7901 = vadd.f32 %v7852, %v7900
        %v7902 = vpop.f32.mrf.mxu0
        %v7903 = vadd.f32 %v7854, %v7902
        %7904 = vdwg.mxu0
        %v7905 = vld [vmem:[%s295] sm:$0xff]
        %v7906 = vld [vmem:[%s295 + $0x8] sm:$0xff]
        %v7907 = vld [vmem:[%s295 + $0x10] sm:$0xff]
        %v7908 = vld [vmem:[%s295 + $0x18] sm:$0xff]
        %v7909 = vld [vmem:[%s295 + $0x20] sm:$0xff]
        %v7910 = vld [vmem:[%s295 + $0x28] sm:$0xff]
        %v7911 = vld [vmem:[%s295 + $0x30] sm:$0xff]
        %v7912 = vld [vmem:[%s295 + $0x38] sm:$0xff]
        %v7913 = vld [vmem:[%s295 + $0x40] sm:$0xff]
        %v7914 = vld [vmem:[%s295 + $0x48] sm:$0xff]
        %v7915 = vld [vmem:[%s295 + $0x50] sm:$0xff]
        %v7916 = vld [vmem:[%s295 + $0x58] sm:$0xff]
        %v7917 = vld [vmem:[%s295 + $0x60] sm:$0xff]
        %v7918 = vld [vmem:[%s295 + $0x68] sm:$0xff]
        %v7919 = vld [vmem:[%s295 + $0x70] sm:$0xff]
        %v7920 = vld [vmem:[%s295 + $0x78] sm:$0xff]
        %v7921 = vld [vmem:[%s7] sm:$0x1]
        %v7923 = vperm.slane %v7921, 0
        %v7925 = vmul.f32 %v7923, %v7866
        %v7926 = vmul.f32 %v7923, %v7868
        %v7927 = vmul.f32 %v7923, %v7871
        %v7928 = vmul.f32 %v7923, %v7873
        %v7929 = vmul.f32 %v7923, %v7876
        %v7930 = vmul.f32 %v7923, %v7878
        %v7931 = vmul.f32 %v7923, %v7881
        %v7932 = vmul.f32 %v7923, %v7883
        %v7933 = vmul.f32 %v7923, %v7886
        %v7934 = vmul.f32 %v7923, %v7888
        %v7935 = vmul.f32 %v7923, %v7891
        %v7936 = vmul.f32 %v7923, %v7893
        %v7937 = vmul.f32 %v7923, %v7896
        %v7938 = vmul.f32 %v7923, %v7898
        %v7939 = vmul.f32 %v7923, %v7901
        %v7940 = vmul.f32 %v7923, %v7903
        %v7941 = vadd.f32 %v7905, %v7925
        %v7942 = vadd.f32 %v7906, %v7926
        %v7943 = vadd.f32 %v7907, %v7927
        %v7944 = vadd.f32 %v7908, %v7928
        %v7945 = vadd.f32 %v7909, %v7929
        %v7946 = vadd.f32 %v7910, %v7930
        %v7947 = vadd.f32 %v7911, %v7931
        %v7948 = vadd.f32 %v7912, %v7932
        %v7949 = vadd.f32 %v7913, %v7933
        %v7950 = vadd.f32 %v7914, %v7934
        %v7951 = vadd.f32 %v7915, %v7935
        %v7952 = vadd.f32 %v7916, %v7936
        %v7953 = vadd.f32 %v7917, %v7937
        %v7954 = vadd.f32 %v7918, %v7938
        %v7955 = vadd.f32 %v7919, %v7939
        %v7956 = vadd.f32 %v7920, %v7940
        %7957 = vst [vmem:[%s288] sm:$0xff] %v7941
        %7958 = vst [vmem:[%s288 + $0x8] sm:$0xff] %v7942
        %7959 = vst [vmem:[%s288 + $0x10] sm:$0xff] %v7943
        %7960 = vst [vmem:[%s288 + $0x18] sm:$0xff] %v7944
        %7961 = vst [vmem:[%s288 + $0x20] sm:$0xff] %v7945
        %7962 = vst [vmem:[%s288 + $0x28] sm:$0xff] %v7946
        %7963 = vst [vmem:[%s288 + $0x30] sm:$0xff] %v7947
        %7964 = vst [vmem:[%s288 + $0x38] sm:$0xff] %v7948
        %7965 = vst [vmem:[%s288 + $0x40] sm:$0xff] %v7949
        %7966 = vst [vmem:[%s288 + $0x48] sm:$0xff] %v7950
        %7967 = vst [vmem:[%s288 + $0x50] sm:$0xff] %v7951
        %7968 = vst [vmem:[%s288 + $0x58] sm:$0xff] %v7952
        %7969 = vst [vmem:[%s288 + $0x60] sm:$0xff] %v7953
        %7970 = vst [vmem:[%s288 + $0x68] sm:$0xff] %v7954
        %7971 = vst [vmem:[%s288 + $0x70] sm:$0xff] %v7955
        %7972 = vst [vmem:[%s288 + $0x78] sm:$0xff] %v7956
        %s7973 = sand.u32 %s192, 1
        %s7974 = scalar_lea.sflag [#allocation7], %s7973
        %s7975 = sand.u32 %s192, 1
        %s7976 = smul.addr %s7975, 128
        %s7977 = scalar_lea.vmem [#allocation8], %s7976
        // Predicated region
        $region134: #{convnext_block.1} parent=47 // pred_check
          %p7978 = pneg %p202
        $region135: #{convnext_block.1} parent=47 // pred_check_branch
          %7980 = sbr.rel (%p7978) target = $region137
        $region136: #{convnext_block.1} parent=47 // pred_region
          %s7981 = smul.u32 8, %s28
          %7983 = vsyncadd %s7974, 0
          %s7984 = smul.addr %s7981, 2
          %s7985 = smul.addr %s27, 32
          %s7986 = sadd.s32 %s7984, %s7985
          %s7987 = smul.addr %s7986, 8
          %s7988 = scalar_lea.hbm %s8, %s7987
          %s7989 = sshll.u32 %s7977, 4
          %s7990 = int_to_ptr.vmem [resolvable:$true] %s7989
          %s7991 = sshll.u32 %s7988, 4
          %s7992 = int_to_ptr.hbm [resolvable:$true] %s7991
          %7997 = dma.vmem_to_hbm [thread:$0]  %s7990, 2048, %s7992, %s7974, 128, 128, 8
        $region137: #{convnext_block.1} parent=47 // pred_fallthru
          _
      $region48: #{convnext_block.1} parent=5 // pred_fallthru
        _
      %p7998 = scmp.le.s32.totalorder 2, %s18
      // Predicated region
      $region138: #{convnext_block.1} parent=5 // pred_check
        %p7999 = pneg %p7998
      $region139: #{convnext_block.1} parent=5 // pred_check_branch
        %8001 = sbr.rel (%p7999) target = $region141
      $region140: #{convnext_block.1} parent=5 // pred_region
        %s8002 = ssub.s32 %s18, 2
        // Predicated region
        $region142: #{convnext_block.1} parent=140 // pred_check
          %p8003 = pneg %p208
        $region143: #{convnext_block.1} parent=140 // pred_check_branch
          %8005 = sbr.rel (%p8003) target = $region145
        $region144: #{convnext_block.1} parent=140 // pred_region
          %s8006 = sand.u32 %s193, 1
          %s8007 = scalar_lea.sflag [#allocation7], %s8006
          %s8008 = sand.u32 %s193, 1
          %s8009 = smul.addr %s8008, 128
          %s8010 = scalar_lea.vmem [#allocation8], %s8009
          %8012 = dma.done %s8007, 2048
        $region145: #{convnext_block.1} parent=140 // pred_fallthru
          _
      $region141: #{convnext_block.1} parent=5 // pred_fallthru
        _
    $region6: #{convnext_block.1} parent=1 // loop_footer
      %s22 = sadd.s32 1, %s18
    $region7: #{convnext_block.1} parent=1 // loop_footer_branch
      %17 = sbr.rel target = $region3
    $region8: #{convnext_block.1} parent=1 // loop_exit
      _
    %8013 = vsyncpa [#allocation6], 1
    %s8014 = scalar_lea.sflag [#allocation6], 1
    %8015 = vsyncpa %s8014, 1
    %8016 = vsyncpa [#allocation7], 1
    %s8017 = scalar_lea.sflag [#allocation7], 1
    %8018 = vsyncpa %s8017, 1
  %8019 = vsyncmov [#allocation4]
  %s8020 = vpop.sfrf %8019
  %p8021 = scmp.eq.s32.totalorder %s8020, 0
  %p8022 = pneg %p8021
  %8024 = shalt.err (%p8022)
  %s8025 = scalar_lea.sflag [#allocation4], 1
  %8026 = vsyncmov %s8025
  %s8027 = vpop.sfrf %8026
  %p8028 = scmp.eq.s32.totalorder %s8027, 0
  %p8029 = pneg %p8028
  %8031 = shalt.err (%p8029)
  %s8032 = scalar_lea.sflag [#allocation4], 2
  %8033 = vsyncmov %s8032
  %s8034 = vpop.sfrf %8033
  %p8035 = scmp.eq.s32.totalorder %s8034, 0
  %p8036 = pneg %p8035
  %8038 = shalt.err (%p8036)

</llo_original>
